<compile_context>
chip_gen: v6e
topology: v6e:2x2x1
jax: 0.10.0
libtpu: 0.0.40
codegen_flags: <defaults>
</compile_context>

<pallas_src>
import functools

import jax
import jax.numpy as jnp
from jax.experimental import pallas as pl
from jax.experimental.pallas import tpu as pltpu


# --------------------------- in-kernel helpers ------------------------------

def _im2col_cols(m, masks, H, W):
    """3x3 'same' im2col column blocks of a row-major (H*W, Cin) feature map.

    Tap t = 3*ky + kx (dy = ky-1, dx = kx-1) needs m at position r + dy*W + dx
    with zeros where the neighbour falls outside the image.  The shift is a
    sublane rotation (pltpu.roll matches jnp.roll: out[r] = m[(r - shift) % N],
    so shift = (-(dy*W + dx)) % N gives out[r] = m[r + dy*W + dx]) and
    masks[:, t] zeroes the wrapped / out-of-range rows — i.e. zero padding with
    no padded buffer, no halo compute and no partial stores.
    """
    HW = H * W
    cols = []
    for ky in range(3):
        for kx in range(3):
            t = 3 * ky + kx
            d = (ky - 1) * W + (kx - 1)
            if d == 0:
                cols.append(m)                       # centre tap: always valid
            else:
                shifted = pltpu.roll(m, shift=(-d) % HW, axis=0)
                cols.append(shifted * masks[:, t:t + 1])
    return cols


# --------------------------------- kernel -----------------------------------

def _fused_moe_kernel(
        xpatch_ref, masks_ref,
        stem_w_ref, stem_b_ref,
        sg1_w_ref, sg1_b_ref, sg2_w_ref, sg2_b_ref,
        g1_w_ref, g1_b_ref, g2_w_ref, g2_b_ref, invt_ref,
        w1_ref, b1_ref, w2sk_ref, b2sk_ref,
        expand_ref, sumt_ref,
        cls_w_ref, cls_b_ref, fc_w_ref, fc_b_ref,
        o_ref, *, H, W):
    masks = masks_ref[...]                                        # (HW, 9) f32

    # ---- backbone stub: 3x3 conv (BN folded) + ReLU -------------------------
    # (im2col of the tiny raw input was hoisted to XLA)
    feat = jnp.dot(xpatch_ref[0], stem_w_ref[...],
                   preferred_element_type=jnp.float32) + stem_b_ref[...]
    feat = jnp.maximum(feat, 0.0)                                 # (HW, C) f32
    feat_bf = feat.astype(jnp.bfloat16)

    # ---- EnhancedGate: spatial gate -> avg/max pool -> MLP -> softmax(T) ----
    hg = jnp.dot(feat_bf, sg1_w_ref[...],
                 preferred_element_type=jnp.float32) + sg1_b_ref[...]
    hg = jnp.maximum(hg, 0.0)                                     # (HW, C//4)
    # 1x1 conv to a single channel == VPU multiply + lane reduce (no N=1 MXU).
    s = jnp.sum(hg * sg2_w_ref[...], axis=-1, keepdims=True) + sg2_b_ref[...]
    g = feat * jax.nn.sigmoid(s)                                  # gated features, f32
    pooled = jnp.concatenate([jnp.mean(g, axis=0, keepdims=True),
                              jnp.max(g, axis=0, keepdims=True)], axis=-1)
    hh = jnp.dot(pooled.astype(jnp.bfloat16), g1_w_ref[...],
                 preferred_element_type=jnp.float32) + g1_b_ref[...]
    hh = jnp.maximum(hh, 0.0)                                     # Dropout: identity (eval)
    logits = jnp.dot(hh.astype(jnp.bfloat16), g2_w_ref[...],
                     preferred_element_type=jnp.float32) + g2_b_ref[...]
    z = logits * invt_ref[...]                                    # logits / temperature
    z = z - jnp.max(z, axis=-1, keepdims=True)
    pz = jnp.exp(z)
    gate = pz * pl.reciprocal(jnp.sum(pz, axis=-1, keepdims=True), approx=True)  # (1, E)
    # TODO(synk): host-side check_invalid_values (raise on NaN/Inf) removed so
    # the forward stays jittable with no mid-pipeline device->host sync.

    # ---- all E experts fused: conv1 -> conv2 (+1x1 skip in same matmul) -----
    p1 = jnp.concatenate(_im2col_cols(feat, masks, H, W),
                         axis=-1).astype(jnp.bfloat16)            # (HW, 9*C)
    h = jnp.dot(p1, w1_ref[...], preferred_element_type=jnp.float32) + b1_ref[...]
    h = jnp.maximum(h, 0.0)                                       # (HW, E*Hd) f32
    p2 = jnp.concatenate(_im2col_cols(h, masks, H, W) + [feat],
                         axis=-1).astype(jnp.bfloat16)            # (HW, 9*E*Hd + C)
    y = jnp.dot(p2, w2sk_ref[...], preferred_element_type=jnp.float32) + b2sk_ref[...]
    y = jnp.maximum(y, 0.0)                                       # (HW, E*C)

    # gate-weighted combine over experts on the MXU (no sub-vreg slice loop):
    # y columns are [expert0 C-ch | expert1 C-ch | ...]; scale each block by
    # its gate weight, then sum blocks with a stacked-identity matmul.
    gate_row = jnp.dot(gate, expand_ref[...],
                       preferred_element_type=jnp.float32)        # (1, E*C)
    combined = jnp.dot((y * gate_row).astype(jnp.bfloat16), sumt_ref[...],
                       preferred_element_type=jnp.float32)        # (HW, C)

    # ---- classifier: 3x3 conv (BN folded) + ReLU + GAP + Linear -------------
    p3 = jnp.concatenate(_im2col_cols(combined, masks, H, W),
                         axis=-1).astype(jnp.bfloat16)            # (HW, 9*C)
    yc = jnp.dot(p3, cls_w_ref[...], preferred_element_type=jnp.float32) + cls_b_ref[...]
    yc = jnp.maximum(yc, 0.0)
    gap = jnp.mean(yc, axis=0, keepdims=True)                     # (1, C); Dropout: id (eval)
    o_ref[0] = jnp.dot(gap.astype(jnp.bfloat16), fc_w_ref[...],
                       preferred_element_type=jnp.float32) + fc_b_ref[...]


# ------------------------- parameters & preparation -------------------------

def init_params(key, *, in_ch=3, C=16, E=4, Hd=32, NC=10, temp=0.1):
    """Raw parameters mirroring the PyTorch module (eval-mode BN stats)."""
    keys = iter(jax.random.split(key, 64))

    def xavier(shape, fan_in, fan_out):
        lim = (6.0 / (fan_in + fan_out)) ** 0.5
        return jax.random.uniform(next(keys), shape, jnp.float32, -lim, lim)

    def bn(n):  # (gamma, beta, running_mean, running_var)
        return (jnp.ones(n), jnp.zeros(n), jnp.zeros(n), jnp.ones(n))

    zeros = jnp.zeros
    raw = {
        # backbone stub (see TODO(synk) in the module docstring)
        "bb_w": xavier((9, in_ch, C), 9 * in_ch, 9 * C), "bb_bias": zeros(C), "bb_bn": bn(C),
        # EnhancedGate: spatial gate
        "sg1_w": xavier((C, C // 4), C, C // 4), "sg1_bias": zeros(C // 4), "sg1_bn": bn(C // 4),
        "sg2_w": xavier((C // 4, 1), C // 4, 1), "sg2_bias": zeros(1),
        # EnhancedGate: expert gate MLP
        "g1_w": xavier((2 * C, C // 2), 2 * C, C // 2), "g1_b": zeros(C // 2),
        "g2_w": xavier((C // 2, E), C // 2, E), "g2_b": zeros(E),
        "temperature": jnp.full((1,), temp, jnp.float32),
        # classifier
        "cls_w": xavier((9, C, C), 9 * C, 9 * C), "cls_bias": zeros(C), "cls_bn": bn(C),
        "fc_w": xavier((C, NC), C, NC), "fc_b": zeros(NC),
        "experts": [],
    }
    for _ in range(E):
        raw["experts"].append({
            "w1": xavier((9, C, Hd), 9 * C, 9 * Hd), "b1c": zeros(Hd), "bn1": bn(Hd),
            "w2": xavier((9, Hd, C), 9 * Hd, 9 * C), "b2c": zeros(C), "bn2": bn(C),
            "wsk": xavier((C, C), C, C), "bsk": zeros(C), "bnsk": bn(C),
        })
    return raw


def _fold_bn(w, conv_bias, bn_params, eps=1e-5):
    """Fold eval-mode BatchNorm into the conv weights/bias (scale -> weights)."""
    gamma, beta, mean, var = bn_params
    scale = gamma / jnp.sqrt(var + eps)
    return w * scale, (conv_bias - mean) * scale + beta


def prepare_params(raw, *, in_ch=3, C=16, E=4, Hd=32, NC=10, H=16, W=16):
    """Host-side one-time fusion: fold BN, concat experts, build bf16 matmul weights."""
    fp = {}
    w, b = _fold_bn(raw["bb_w"], raw["bb_bias"], raw["bb_bn"])
    fp["stem_w"] = w.reshape(9 * in_ch, C).astype(jnp.bfloat16)
    fp["stem_b"] = b.reshape(1, C)

    w, b = _fold_bn(raw["sg1_w"], raw["sg1_bias"], raw["sg1_bn"])
    fp["sg1_w"] = w.astype(jnp.bfloat16)
    fp["sg1_b"] = b.reshape(1, C // 4)
    fp["sg2_w"] = raw["sg2_w"].reshape(1, C // 4)          # row form for the VPU reduce
    fp["sg2_b"] = raw["sg2_bias"].reshape(1, 1)
    fp["g1_w"] = raw["g1_w"].astype(jnp.bfloat16)
    fp["g1_b"] = raw["g1_b"].reshape(1, C // 2)
    fp["g2_w"] = raw["g2_w"].astype(jnp.bfloat16)
    fp["g2_b"] = raw["g2_b"].reshape(1, E)
    fp["inv_temp"] = (1.0 / raw["temperature"]).reshape(1, 1)

    # experts: conv1 weights concatenated over experts; conv2 block-diagonal
    # with the folded 1x1 skip stacked below (-> conv2 + skip is one matmul).
    w1s, b1s, b2s, wsks, bsks = [], [], [], [], []
    w2_bd = jnp.zeros((9, E * Hd, E * C), jnp.float32)
    for e, ep in enumerate(raw["experts"]):
        w1, b1 = _fold_bn(ep["w1"], ep["b1c"], ep["bn1"])
        w1s.append(w1); b1s.append(b1)
        w2, b2 = _fold_bn(ep["w2"], ep["b2c"], ep["bn2"])
        w2_bd = w2_bd.at[:, e * Hd:(e + 1) * Hd, e * C:(e + 1) * C].set(w2)
        b2s.append(b2)
        wsk, bsk = _fold_bn(ep["wsk"], ep["bsk"], ep["bnsk"])
        wsks.append(wsk); bsks.append(bsk)
    fp["w1"] = jnp.concatenate(w1s, axis=-1).reshape(9 * C, E * Hd).astype(jnp.bfloat16)
    fp["b1"] = jnp.concatenate(b1s).reshape(1, E * Hd)
    w2_flat = w2_bd.reshape(9 * E * Hd, E * C)
    wsk_cat = jnp.concatenate(wsks, axis=-1)               # (C, E*C)
    fp["w2sk"] = jnp.concatenate([w2_flat, wsk_cat], axis=0).astype(jnp.bfloat16)
    fp["b2sk"] = (jnp.concatenate(b2s) + jnp.concatenate(bsks)).reshape(1, E * C)

    # gate-combine helpers: expand[e, e*C+c] = 1 ; sum_tmpl[e*C+c, c] = 1.
    fp["expand"] = jnp.repeat(jnp.eye(E, dtype=jnp.float32), C, axis=1)
    fp["sum_tmpl"] = jnp.tile(jnp.eye(C, dtype=jnp.float32), (E, 1)).astype(jnp.bfloat16)

    w, b = _fold_bn(raw["cls_w"], raw["cls_bias"], raw["cls_bn"])
    fp["cls_w"] = w.reshape(9 * C, C).astype(jnp.bfloat16)
    fp["cls_b"] = b.reshape(1, C)
    fp["fc_w"] = raw["fc_w"].astype(jnp.bfloat16)
    fp["fc_b"] = raw["fc_b"].reshape(1, NC)

    # boundary masks shared by every 3x3 'same' conv at (H, W): mask[r, t] = 1
    # iff output position r = i*W + j has a valid neighbour at tap t.
    r = jnp.arange(H * W)
    i, j = r // W, r % W
    mcols = []
    for ky in range(3):
        for kx in range(3):
            dy, dx = ky - 1, kx - 1
            valid = (i + dy >= 0) & (i + dy < H) & (j + dx >= 0) & (j + dx < W)
            mcols.append(valid.astype(jnp.float32))
    fp["masks"] = jnp.stack(mcols, axis=-1)                # (H*W, 9)
    return fp


# --------------------------------- forward ----------------------------------

def improved_moe_forward(x_nchw, fp):
    """Eval-mode forward of ImprovedMoE (labels=None, return_losses=False)."""
    x = jnp.transpose(x_nchw, (0, 2, 3, 1))                        # NCHW -> NHWC
    B, H, W, Cin = x.shape
    NC = fp["fc_b"].shape[-1]

    # stem im2col hoisted to XLA (tap-major columns, matching stem_w layout)
    xp = jnp.pad(x, ((0, 0), (1, 1), (1, 1), (0, 0)))
    cols = [xp[:, ky:ky + H, kx:kx + W, :].reshape(B, H * W, Cin)
            for ky in range(3) for kx in range(3)]
    xpatch = jnp.concatenate(cols, axis=-1).astype(jnp.bfloat16)   # (B, HW, 9*Cin)

    weights = [fp[k] for k in (
        "masks", "stem_w", "stem_b", "sg1_w", "sg1_b", "sg2_w", "sg2_b",
        "g1_w", "g1_b", "g2_w", "g2_b", "inv_temp",
        "w1", "b1", "w2sk", "b2sk", "expand", "sum_tmpl",
        "cls_w", "cls_b", "fc_w", "fc_b")]

    def _const_spec(a):
        nd = a.ndim
        return pl.BlockSpec(a.shape, lambda b, _nd=nd: (0,) * _nd)

    out = pl.pallas_call(
        functools.partial(_fused_moe_kernel, H=H, W=W),
        out_shape=jax.ShapeDtypeStruct((B, 1, NC), jnp.float32),
        grid=(B,),
        in_specs=[pl.BlockSpec((1, H * W, 9 * Cin), lambda b: (b, 0, 0))]
                 + [_const_spec(a) for a in weights],
        out_specs=pl.BlockSpec((1, 1, NC), lambda b: (b, 0, 0)),
        compiler_params=pltpu.CompilerParams(
            dimension_semantics=("parallel",)),    # one sample per TC (v7x megacore)
    )(xpatch, *weights)
    return out.reshape(B, NC)


if __name__ == "__main__":
    key = jax.random.PRNGKey(0)
    pkey, xkey = jax.random.split(key)
    # small shapes: batch=2, rgb 16x16 input, feature_dim=16, 4 experts, hidden=32
    cfg = dict(in_ch=3, C=16, E=4, Hd=32, NC=10)
    raw = init_params(pkey, temp=0.1, **cfg)
    fp = prepare_params(raw, H=16, W=16, **cfg)
    x = jax.random.normal(xkey, (2, 3, 16, 16), jnp.float32)       # NCHW, like PyTorch
    fwd = jax.jit(improved_moe_forward)
    out = jax.block_until_ready(fwd(x, fp))
    assert out.shape == (2, 10) and out.dtype == jnp.float32
    assert bool(jnp.all(jnp.isfinite(out)))
    print("KERNEL_OK")
</pallas_src>

<mosaic_0001>
module attributes {stable_mosaic.version = 11 : i64} {
  func.func @_fused_moe_kernel(%arg0: i32, %arg1: memref<1x256x27xbf16, #tpu.memory_space<vmem>>, %arg2: memref<256x9xf32, #tpu.memory_space<vmem>>, %arg3: memref<27x16xbf16, #tpu.memory_space<vmem>>, %arg4: memref<1x16xf32, #tpu.memory_space<vmem>>, %arg5: memref<16x4xbf16, #tpu.memory_space<vmem>>, %arg6: memref<1x4xf32, #tpu.memory_space<vmem>>, %arg7: memref<1x4xf32, #tpu.memory_space<vmem>>, %arg8: memref<1x1xf32, #tpu.memory_space<vmem>>, %arg9: memref<32x8xbf16, #tpu.memory_space<vmem>>, %arg10: memref<1x8xf32, #tpu.memory_space<vmem>>, %arg11: memref<8x4xbf16, #tpu.memory_space<vmem>>, %arg12: memref<1x4xf32, #tpu.memory_space<vmem>>, %arg13: memref<1x1xf32, #tpu.memory_space<vmem>>, %arg14: memref<144x128xbf16, #tpu.memory_space<vmem>>, %arg15: memref<1x128xf32, #tpu.memory_space<vmem>>, %arg16: memref<1168x64xbf16, #tpu.memory_space<vmem>>, %arg17: memref<1x64xf32, #tpu.memory_space<vmem>>, %arg18: memref<4x64xf32, #tpu.memory_space<vmem>>, %arg19: memref<64x16xbf16, #tpu.memory_space<vmem>>, %arg20: memref<144x16xbf16, #tpu.memory_space<vmem>>, %arg21: memref<1x16xf32, #tpu.memory_space<vmem>>, %arg22: memref<16x10xbf16, #tpu.memory_space<vmem>>, %arg23: memref<1x10xf32, #tpu.memory_space<vmem>>, %arg24: memref<1x1x10xf32, #tpu.memory_space<vmem>>) attributes {dimension_semantics = [#tpu.dimension_semantics<parallel>], iteration_bounds = array<i64: 2>, scalar_prefetch = 0 : i64, scratch_operands = 0 : i64, tpu.core_type = #tpu.core_type<tc>, window_params = [{transform_indices = @transform_0, window_bounds = array<i64: 1, 256, 27>}, {pipeline_mode = #tpu.pipeline_mode<synchronous>, transform_indices = @transform_1, window_bounds = array<i64: 256, 9>}, {pipeline_mode = #tpu.pipeline_mode<synchronous>, transform_indices = @transform_2, window_bounds = array<i64: 27, 16>}, {pipeline_mode = #tpu.pipeline_mode<synchronous>, transform_indices = @transform_3, window_bounds = array<i64: 1, 16>}, {pipeline_mode = #tpu.pipeline_mode<synchronous>, transform_indices = @transform_4, window_bounds = array<i64: 16, 4>}, {pipeline_mode = #tpu.pipeline_mode<synchronous>, transform_indices = @transform_5, window_bounds = array<i64: 1, 4>}, {pipeline_mode = #tpu.pipeline_mode<synchronous>, transform_indices = @transform_6, window_bounds = array<i64: 1, 4>}, {pipeline_mode = #tpu.pipeline_mode<synchronous>, transform_indices = @transform_7, window_bounds = array<i64: 1, 1>}, {pipeline_mode = #tpu.pipeline_mode<synchronous>, transform_indices = @transform_8, window_bounds = array<i64: 32, 8>}, {pipeline_mode = #tpu.pipeline_mode<synchronous>, transform_indices = @transform_9, window_bounds = array<i64: 1, 8>}, {pipeline_mode = #tpu.pipeline_mode<synchronous>, transform_indices = @transform_10, window_bounds = array<i64: 8, 4>}, {pipeline_mode = #tpu.pipeline_mode<synchronous>, transform_indices = @transform_11, window_bounds = array<i64: 1, 4>}, {pipeline_mode = #tpu.pipeline_mode<synchronous>, transform_indices = @transform_12, window_bounds = array<i64: 1, 1>}, {pipeline_mode = #tpu.pipeline_mode<synchronous>, transform_indices = @transform_13, window_bounds = array<i64: 144, 128>}, {pipeline_mode = #tpu.pipeline_mode<synchronous>, transform_indices = @transform_14, window_bounds = array<i64: 1, 128>}, {pipeline_mode = #tpu.pipeline_mode<synchronous>, transform_indices = @transform_15, window_bounds = array<i64: 1168, 64>}, {pipeline_mode = #tpu.pipeline_mode<synchronous>, transform_indices = @transform_16, window_bounds = array<i64: 1, 64>}, {pipeline_mode = #tpu.pipeline_mode<synchronous>, transform_indices = @transform_17, window_bounds = array<i64: 4, 64>}, {pipeline_mode = #tpu.pipeline_mode<synchronous>, transform_indices = @transform_18, window_bounds = array<i64: 64, 16>}, {pipeline_mode = #tpu.pipeline_mode<synchronous>, transform_indices = @transform_19, window_bounds = array<i64: 144, 16>}, {pipeline_mode = #tpu.pipeline_mode<synchronous>, transform_indices = @transform_20, window_bounds = array<i64: 1, 16>}, {pipeline_mode = #tpu.pipeline_mode<synchronous>, transform_indices = @transform_21, window_bounds = array<i64: 16, 10>}, {pipeline_mode = #tpu.pipeline_mode<synchronous>, transform_indices = @transform_22, window_bounds = array<i64: 1, 10>}, {transform_indices = @transform_23, window_bounds = array<i64: 1, 1, 10>}]} {
    %c0 = arith.constant 0 : index
    %c0_0 = arith.constant 0 : index
    %0 = vector.load %arg2[%c0, %c0_0] : memref<256x9xf32, #tpu.memory_space<vmem>>, vector<256x9xf32>
    %c0_1 = arith.constant 0 : index
    %c0_2 = arith.constant 0 : index
    %c0_3 = arith.constant 0 : index
    %1 = vector.load %arg1[%c0_1, %c0_2, %c0_3] : memref<1x256x27xbf16, #tpu.memory_space<vmem>>, vector<1x256x27xbf16>
    %2 = vector.shape_cast %1 : vector<1x256x27xbf16> to vector<256x27xbf16>
    %c0_4 = arith.constant 0 : index
    %c0_5 = arith.constant 0 : index
    %3 = vector.load %arg3[%c0_4, %c0_5] : memref<27x16xbf16, #tpu.memory_space<vmem>>, vector<27x16xbf16>
    %cst = arith.constant dense<0.000000e+00> : vector<256x16xf32>
    %4 = tpu.matmul %2, %3, %cst {dimension_numbers = #tpu.dot_dimension_numbers<[1], [0], [0], [1], [0, 0, 1, 1], [], []>} : vector<256x27xbf16>, vector<27x16xbf16>, vector<256x16xf32> -> vector<256x16xf32>
    %c0_6 = arith.constant 0 : index
    %c0_7 = arith.constant 0 : index
    %5 = vector.load %arg4[%c0_6, %c0_7] : memref<1x16xf32, #tpu.memory_space<vmem>>, vector<1x16xf32>
    %6 = vector.broadcast %5 : vector<1x16xf32> to vector<256x16xf32>
    %7 = arith.addf %4, %6 : vector<256x16xf32>
    %cst_8 = arith.constant 0.000000e+00 : f32
    %8 = vector.broadcast %cst_8 : f32 to vector<256x16xf32>
    %9 = arith.maximumf %7, %8 : vector<256x16xf32>
    %10 = arith.truncf %9 : vector<256x16xf32> to vector<256x16xbf16>
    %c0_9 = arith.constant 0 : index
    %c0_10 = arith.constant 0 : index
    %11 = vector.load %arg5[%c0_9, %c0_10] : memref<16x4xbf16, #tpu.memory_space<vmem>>, vector<16x4xbf16>
    %cst_11 = arith.constant dense<0.000000e+00> : vector<256x4xf32>
    %12 = tpu.matmul %10, %11, %cst_11 {dimension_numbers = #tpu.dot_dimension_numbers<[1], [0], [0], [1], [0, 0, 1, 1], [], []>} : vector<256x16xbf16>, vector<16x4xbf16>, vector<256x4xf32> -> vector<256x4xf32>
    %c0_12 = arith.constant 0 : index
    %c0_13 = arith.constant 0 : index
    %13 = vector.load %arg6[%c0_12, %c0_13] : memref<1x4xf32, #tpu.memory_space<vmem>>, vector<1x4xf32>
    %14 = vector.broadcast %13 : vector<1x4xf32> to vector<256x4xf32>
    %15 = arith.addf %12, %14 : vector<256x4xf32>
    %cst_14 = arith.constant 0.000000e+00 : f32
    %16 = vector.broadcast %cst_14 : f32 to vector<256x4xf32>
    %17 = arith.maximumf %15, %16 : vector<256x4xf32>
    %c0_15 = arith.constant 0 : index
    %c0_16 = arith.constant 0 : index
    %18 = vector.load %arg7[%c0_15, %c0_16] : memref<1x4xf32, #tpu.memory_space<vmem>>, vector<1x4xf32>
    %19 = vector.broadcast %18 : vector<1x4xf32> to vector<256x4xf32>
    %20 = arith.mulf %17, %19 : vector<256x4xf32>
    %cst_17 = arith.constant dense<0.000000e+00> : vector<256xf32>
    %21 = vector.multi_reduction <add>, %20, %cst_17 [1] : vector<256x4xf32> to vector<256xf32>
    %22 = vector.shape_cast %21 : vector<256xf32> to vector<256x1xf32>
    %c0_18 = arith.constant 0 : index
    %c0_19 = arith.constant 0 : index
    %23 = vector.load %arg8[%c0_18, %c0_19] : memref<1x1xf32, #tpu.memory_space<vmem>>, vector<1x1xf32>
    %24 = vector.broadcast %23 : vector<1x1xf32> to vector<256x1xf32>
    %25 = arith.addf %22, %24 : vector<256x1xf32>
    %26 = arith.negf %25 : vector<256x1xf32>
    %27 = math.exp %26 : vector<256x1xf32>
    %cst_20 = arith.constant 1.000000e+00 : f32
    %28 = vector.broadcast %cst_20 : f32 to vector<256x1xf32>
    %29 = arith.addf %28, %27 : vector<256x1xf32>
    %30 = arith.divf %28, %29 : vector<256x1xf32>
    %31 = vector.broadcast %30 : vector<256x1xf32> to vector<256x16xf32>
    %32 = arith.mulf %9, %31 : vector<256x16xf32>
    %cst_21 = arith.constant dense<0.000000e+00> : vector<16xf32>
    %33 = vector.multi_reduction <add>, %32, %cst_21 [0] : vector<256x16xf32> to vector<16xf32>
    %34 = vector.shape_cast %33 : vector<16xf32> to vector<1x16xf32>
    %cst_22 = arith.constant 2.560000e+02 : f32
    %35 = vector.broadcast %cst_22 : f32 to vector<1x16xf32>
    %36 = arith.divf %34, %35 : vector<1x16xf32>
    %cst_23 = arith.constant dense<0xFF800000> : vector<16xf32>
    %37 = vector.multi_reduction <maximumf>, %32, %cst_23 [0] : vector<256x16xf32> to vector<16xf32>
    %38 = vector.shape_cast %37 : vector<16xf32> to vector<1x16xf32>
    %39 = tpu.concatenate %36, %38 in 1 : vector<1x16xf32>, vector<1x16xf32> -> vector<1x32xf32>
    %40 = arith.truncf %39 : vector<1x32xf32> to vector<1x32xbf16>
    %c0_24 = arith.constant 0 : index
    %c0_25 = arith.constant 0 : index
    %41 = vector.load %arg9[%c0_24, %c0_25] : memref<32x8xbf16, #tpu.memory_space<vmem>>, vector<32x8xbf16>
    %cst_26 = arith.constant dense<0.000000e+00> : vector<1x8xf32>
    %42 = tpu.matmul %40, %41, %cst_26 {dimension_numbers = #tpu.dot_dimension_numbers<[1], [0], [0], [1], [0, 0, 1, 1], [], []>} : vector<1x32xbf16>, vector<32x8xbf16>, vector<1x8xf32> -> vector<1x8xf32>
    %c0_27 = arith.constant 0 : index
    %c0_28 = arith.constant 0 : index
    %43 = vector.load %arg10[%c0_27, %c0_28] : memref<1x8xf32, #tpu.memory_space<vmem>>, vector<1x8xf32>
    %44 = arith.addf %42, %43 : vector<1x8xf32>
    %cst_29 = arith.constant 0.000000e+00 : f32
    %45 = vector.broadcast %cst_29 : f32 to vector<1x8xf32>
    %46 = arith.maximumf %44, %45 : vector<1x8xf32>
    %47 = arith.truncf %46 : vector<1x8xf32> to vector<1x8xbf16>
    %c0_30 = arith.constant 0 : index
    %c0_31 = arith.constant 0 : index
    %48 = vector.load %arg11[%c0_30, %c0_31] : memref<8x4xbf16, #tpu.memory_space<vmem>>, vector<8x4xbf16>
    %cst_32 = arith.constant dense<0.000000e+00> : vector<1x4xf32>
    %49 = tpu.matmul %47, %48, %cst_32 {dimension_numbers = #tpu.dot_dimension_numbers<[1], [0], [0], [1], [0, 0, 1, 1], [], []>} : vector<1x8xbf16>, vector<8x4xbf16>, vector<1x4xf32> -> vector<1x4xf32>
    %c0_33 = arith.constant 0 : index
    %c0_34 = arith.constant 0 : index
    %50 = vector.load %arg12[%c0_33, %c0_34] : memref<1x4xf32, #tpu.memory_space<vmem>>, vector<1x4xf32>
    %51 = arith.addf %49, %50 : vector<1x4xf32>
    %c0_35 = arith.constant 0 : index
    %c0_36 = arith.constant 0 : index
    %52 = vector.load %arg13[%c0_35, %c0_36] : memref<1x1xf32, #tpu.memory_space<vmem>>, vector<1x1xf32>
    %53 = vector.broadcast %52 : vector<1x1xf32> to vector<1x4xf32>
    %54 = arith.mulf %51, %53 : vector<1x4xf32>
    %cst_37 = arith.constant dense<0xFF800000> : vector<1xf32>
    %55 = vector.multi_reduction <maximumf>, %54, %cst_37 [1] : vector<1x4xf32> to vector<1xf32>
    %56 = vector.shape_cast %55 : vector<1xf32> to vector<1x1xf32>
    %57 = vector.broadcast %56 : vector<1x1xf32> to vector<1x4xf32>
    %58 = arith.subf %54, %57 : vector<1x4xf32>
    %59 = math.exp %58 : vector<1x4xf32>
    %cst_38 = arith.constant dense<0.000000e+00> : vector<1xf32>
    %60 = vector.multi_reduction <add>, %59, %cst_38 [1] : vector<1x4xf32> to vector<1xf32>
    %61 = vector.shape_cast %60 : vector<1xf32> to vector<1x1xf32>
    %62 = tpu.reciprocal %61 {approx = true} : vector<1x1xf32> -> vector<1x1xf32>
    %63 = vector.broadcast %62 : vector<1x1xf32> to vector<1x4xf32>
    %64 = arith.mulf %59, %63 : vector<1x4xf32>
    %c17_i32 = arith.constant 17 : i32
    %65 = tpu.dynamic_rotate %9 by %c17_i32 dim 0 : vector<256x16xf32>, i32 -> vector<256x16xf32>
    %66 = vector.extract_strided_slice %0 {offsets = [0, 0], sizes = [256, 1], strides = [1, 1]} : vector<256x9xf32> to vector<256x1xf32>
    %67 = vector.broadcast %66 : vector<256x1xf32> to vector<256x16xf32>
    %68 = arith.mulf %65, %67 : vector<256x16xf32>
    %c16_i32 = arith.constant 16 : i32
    %69 = tpu.dynamic_rotate %9 by %c16_i32 dim 0 : vector<256x16xf32>, i32 -> vector<256x16xf32>
    %70 = vector.extract_strided_slice %0 {offsets = [0, 1], sizes = [256, 1], strides = [1, 1]} : vector<256x9xf32> to vector<256x1xf32>
    %71 = vector.broadcast %70 : vector<256x1xf32> to vector<256x16xf32>
    %72 = arith.mulf %69, %71 : vector<256x16xf32>
    %c15_i32 = arith.constant 15 : i32
    %73 = tpu.dynamic_rotate %9 by %c15_i32 dim 0 : vector<256x16xf32>, i32 -> vector<256x16xf32>
    %74 = vector.extract_strided_slice %0 {offsets = [0, 2], sizes = [256, 1], strides = [1, 1]} : vector<256x9xf32> to vector<256x1xf32>
    %75 = vector.broadcast %74 : vector<256x1xf32> to vector<256x16xf32>
    %76 = arith.mulf %73, %75 : vector<256x16xf32>
    %c1_i32 = arith.constant 1 : i32
    %77 = tpu.dynamic_rotate %9 by %c1_i32 dim 0 : vector<256x16xf32>, i32 -> vector<256x16xf32>
    %78 = vector.extract_strided_slice %0 {offsets = [0, 3], sizes = [256, 1], strides = [1, 1]} : vector<256x9xf32> to vector<256x1xf32>
    %79 = vector.broadcast %78 : vector<256x1xf32> to vector<256x16xf32>
    %80 = arith.mulf %77, %79 : vector<256x16xf32>
    %c255_i32 = arith.constant 255 : i32
    %81 = tpu.dynamic_rotate %9 by %c255_i32 dim 0 : vector<256x16xf32>, i32 -> vector<256x16xf32>
    %82 = vector.extract_strided_slice %0 {offsets = [0, 5], sizes = [256, 1], strides = [1, 1]} : vector<256x9xf32> to vector<256x1xf32>
    %83 = vector.broadcast %82 : vector<256x1xf32> to vector<256x16xf32>
    %84 = arith.mulf %81, %83 : vector<256x16xf32>
    %c241_i32 = arith.constant 241 : i32
    %85 = tpu.dynamic_rotate %9 by %c241_i32 dim 0 : vector<256x16xf32>, i32 -> vector<256x16xf32>
    %86 = vector.extract_strided_slice %0 {offsets = [0, 6], sizes = [256, 1], strides = [1, 1]} : vector<256x9xf32> to vector<256x1xf32>
    %87 = vector.broadcast %86 : vector<256x1xf32> to vector<256x16xf32>
    %88 = arith.mulf %85, %87 : vector<256x16xf32>
    %c240_i32 = arith.constant 240 : i32
    %89 = tpu.dynamic_rotate %9 by %c240_i32 dim 0 : vector<256x16xf32>, i32 -> vector<256x16xf32>
    %90 = vector.extract_strided_slice %0 {offsets = [0, 7], sizes = [256, 1], strides = [1, 1]} : vector<256x9xf32> to vector<256x1xf32>
    %91 = vector.broadcast %90 : vector<256x1xf32> to vector<256x16xf32>
    %92 = arith.mulf %89, %91 : vector<256x16xf32>
    %c239_i32 = arith.constant 239 : i32
    %93 = tpu.dynamic_rotate %9 by %c239_i32 dim 0 : vector<256x16xf32>, i32 -> vector<256x16xf32>
    %94 = vector.extract_strided_slice %0 {offsets = [0, 8], sizes = [256, 1], strides = [1, 1]} : vector<256x9xf32> to vector<256x1xf32>
    %95 = vector.broadcast %94 : vector<256x1xf32> to vector<256x16xf32>
    %96 = arith.mulf %93, %95 : vector<256x16xf32>
    %97 = tpu.concatenate %68, %72, %76, %80, %9, %84, %88, %92, %96 in 1 : vector<256x16xf32>, vector<256x16xf32>, vector<256x16xf32>, vector<256x16xf32>, vector<256x16xf32>, vector<256x16xf32>, vector<256x16xf32>, vector<256x16xf32>, vector<256x16xf32> -> vector<256x144xf32>
    %98 = arith.truncf %97 : vector<256x144xf32> to vector<256x144xbf16>
    %c0_39 = arith.constant 0 : index
    %c0_40 = arith.constant 0 : index
    %99 = vector.load %arg14[%c0_39, %c0_40] : memref<144x128xbf16, #tpu.memory_space<vmem>>, vector<144x128xbf16>
    %cst_41 = arith.constant dense<0.000000e+00> : vector<256x128xf32>
    %100 = tpu.matmul %98, %99, %cst_41 {dimension_numbers = #tpu.dot_dimension_numbers<[1], [0], [0], [1], [0, 0, 1, 1], [], []>} : vector<256x144xbf16>, vector<144x128xbf16>, vector<256x128xf32> -> vector<256x128xf32>
    %c0_42 = arith.constant 0 : index
    %c0_43 = arith.constant 0 : index
    %101 = vector.load %arg15[%c0_42, %c0_43] : memref<1x128xf32, #tpu.memory_space<vmem>>, vector<1x128xf32>
    %102 = vector.broadcast %101 : vector<1x128xf32> to vector<256x128xf32>
    %103 = arith.addf %100, %102 : vector<256x128xf32>
    %cst_44 = arith.constant 0.000000e+00 : f32
    %104 = vector.broadcast %cst_44 : f32 to vector<256x128xf32>
    %105 = arith.maximumf %103, %104 : vector<256x128xf32>
    %c17_i32_45 = arith.constant 17 : i32
    %106 = tpu.dynamic_rotate %105 by %c17_i32_45 dim 0 : vector<256x128xf32>, i32 -> vector<256x128xf32>
    %107 = vector.extract_strided_slice %0 {offsets = [0, 0], sizes = [256, 1], strides = [1, 1]} : vector<256x9xf32> to vector<256x1xf32>
    %108 = vector.broadcast %107 : vector<256x1xf32> to vector<256x128xf32>
    %109 = arith.mulf %106, %108 : vector<256x128xf32>
    %c16_i32_46 = arith.constant 16 : i32
    %110 = tpu.dynamic_rotate %105 by %c16_i32_46 dim 0 : vector<256x128xf32>, i32 -> vector<256x128xf32>
    %111 = vector.extract_strided_slice %0 {offsets = [0, 1], sizes = [256, 1], strides = [1, 1]} : vector<256x9xf32> to vector<256x1xf32>
    %112 = vector.broadcast %111 : vector<256x1xf32> to vector<256x128xf32>
    %113 = arith.mulf %110, %112 : vector<256x128xf32>
    %c15_i32_47 = arith.constant 15 : i32
    %114 = tpu.dynamic_rotate %105 by %c15_i32_47 dim 0 : vector<256x128xf32>, i32 -> vector<256x128xf32>
    %115 = vector.extract_strided_slice %0 {offsets = [0, 2], sizes = [256, 1], strides = [1, 1]} : vector<256x9xf32> to vector<256x1xf32>
    %116 = vector.broadcast %115 : vector<256x1xf32> to vector<256x128xf32>
    %117 = arith.mulf %114, %116 : vector<256x128xf32>
    %c1_i32_48 = arith.constant 1 : i32
    %118 = tpu.dynamic_rotate %105 by %c1_i32_48 dim 0 : vector<256x128xf32>, i32 -> vector<256x128xf32>
    %119 = vector.extract_strided_slice %0 {offsets = [0, 3], sizes = [256, 1], strides = [1, 1]} : vector<256x9xf32> to vector<256x1xf32>
    %120 = vector.broadcast %119 : vector<256x1xf32> to vector<256x128xf32>
    %121 = arith.mulf %118, %120 : vector<256x128xf32>
    %c255_i32_49 = arith.constant 255 : i32
    %122 = tpu.dynamic_rotate %105 by %c255_i32_49 dim 0 : vector<256x128xf32>, i32 -> vector<256x128xf32>
    %123 = vector.extract_strided_slice %0 {offsets = [0, 5], sizes = [256, 1], strides = [1, 1]} : vector<256x9xf32> to vector<256x1xf32>
    %124 = vector.broadcast %123 : vector<256x1xf32> to vector<256x128xf32>
    %125 = arith.mulf %122, %124 : vector<256x128xf32>
    %c241_i32_50 = arith.constant 241 : i32
    %126 = tpu.dynamic_rotate %105 by %c241_i32_50 dim 0 : vector<256x128xf32>, i32 -> vector<256x128xf32>
    %127 = vector.extract_strided_slice %0 {offsets = [0, 6], sizes = [256, 1], strides = [1, 1]} : vector<256x9xf32> to vector<256x1xf32>
    %128 = vector.broadcast %127 : vector<256x1xf32> to vector<256x128xf32>
    %129 = arith.mulf %126, %128 : vector<256x128xf32>
    %c240_i32_51 = arith.constant 240 : i32
    %130 = tpu.dynamic_rotate %105 by %c240_i32_51 dim 0 : vector<256x128xf32>, i32 -> vector<256x128xf32>
    %131 = vector.extract_strided_slice %0 {offsets = [0, 7], sizes = [256, 1], strides = [1, 1]} : vector<256x9xf32> to vector<256x1xf32>
    %132 = vector.broadcast %131 : vector<256x1xf32> to vector<256x128xf32>
    %133 = arith.mulf %130, %132 : vector<256x128xf32>
    %c239_i32_52 = arith.constant 239 : i32
    %134 = tpu.dynamic_rotate %105 by %c239_i32_52 dim 0 : vector<256x128xf32>, i32 -> vector<256x128xf32>
    %135 = vector.extract_strided_slice %0 {offsets = [0, 8], sizes = [256, 1], strides = [1, 1]} : vector<256x9xf32> to vector<256x1xf32>
    %136 = vector.broadcast %135 : vector<256x1xf32> to vector<256x128xf32>
    %137 = arith.mulf %134, %136 : vector<256x128xf32>
    %138 = tpu.concatenate %109, %113, %117, %121, %105, %125, %129, %133, %137, %9 in 1 : vector<256x128xf32>, vector<256x128xf32>, vector<256x128xf32>, vector<256x128xf32>, vector<256x128xf32>, vector<256x128xf32>, vector<256x128xf32>, vector<256x128xf32>, vector<256x128xf32>, vector<256x16xf32> -> vector<256x1168xf32>
    %139 = arith.truncf %138 : vector<256x1168xf32> to vector<256x1168xbf16>
    %c0_53 = arith.constant 0 : index
    %c0_54 = arith.constant 0 : index
    %140 = vector.load %arg16[%c0_53, %c0_54] : memref<1168x64xbf16, #tpu.memory_space<vmem>>, vector<1168x64xbf16>
    %cst_55 = arith.constant dense<0.000000e+00> : vector<256x64xf32>
    %141 = tpu.matmul %139, %140, %cst_55 {dimension_numbers = #tpu.dot_dimension_numbers<[1], [0], [0], [1], [0, 0, 1, 1], [], []>} : vector<256x1168xbf16>, vector<1168x64xbf16>, vector<256x64xf32> -> vector<256x64xf32>
    %c0_56 = arith.constant 0 : index
    %c0_57 = arith.constant 0 : index
    %142 = vector.load %arg17[%c0_56, %c0_57] : memref<1x64xf32, #tpu.memory_space<vmem>>, vector<1x64xf32>
    %143 = vector.broadcast %142 : vector<1x64xf32> to vector<256x64xf32>
    %144 = arith.addf %141, %143 : vector<256x64xf32>
    %cst_58 = arith.constant 0.000000e+00 : f32
    %145 = vector.broadcast %cst_58 : f32 to vector<256x64xf32>
    %146 = arith.maximumf %144, %145 : vector<256x64xf32>
    %c0_59 = arith.constant 0 : index
    %c0_60 = arith.constant 0 : index
    %147 = vector.load %arg18[%c0_59, %c0_60] : memref<4x64xf32, #tpu.memory_space<vmem>>, vector<4x64xf32>
    %cst_61 = arith.constant dense<0.000000e+00> : vector<1x64xf32>
    %148 = tpu.matmul %64, %147, %cst_61 {dimension_numbers = #tpu.dot_dimension_numbers<[1], [0], [0], [1], [0, 0, 1, 1], [], []>} : vector<1x4xf32>, vector<4x64xf32>, vector<1x64xf32> -> vector<1x64xf32>
    %149 = vector.broadcast %148 : vector<1x64xf32> to vector<256x64xf32>
    %150 = arith.mulf %146, %149 : vector<256x64xf32>
    %151 = arith.truncf %150 : vector<256x64xf32> to vector<256x64xbf16>
    %c0_62 = arith.constant 0 : index
    %c0_63 = arith.constant 0 : index
    %152 = vector.load %arg19[%c0_62, %c0_63] : memref<64x16xbf16, #tpu.memory_space<vmem>>, vector<64x16xbf16>
    %cst_64 = arith.constant dense<0.000000e+00> : vector<256x16xf32>
    %153 = tpu.matmul %151, %152, %cst_64 {dimension_numbers = #tpu.dot_dimension_numbers<[1], [0], [0], [1], [0, 0, 1, 1], [], []>} : vector<256x64xbf16>, vector<64x16xbf16>, vector<256x16xf32> -> vector<256x16xf32>
    %c17_i32_65 = arith.constant 17 : i32
    %154 = tpu.dynamic_rotate %153 by %c17_i32_65 dim 0 : vector<256x16xf32>, i32 -> vector<256x16xf32>
    %155 = vector.extract_strided_slice %0 {offsets = [0, 0], sizes = [256, 1], strides = [1, 1]} : vector<256x9xf32> to vector<256x1xf32>
    %156 = vector.broadcast %155 : vector<256x1xf32> to vector<256x16xf32>
    %157 = arith.mulf %154, %156 : vector<256x16xf32>
    %c16_i32_66 = arith.constant 16 : i32
    %158 = tpu.dynamic_rotate %153 by %c16_i32_66 dim 0 : vector<256x16xf32>, i32 -> vector<256x16xf32>
    %159 = vector.extract_strided_slice %0 {offsets = [0, 1], sizes = [256, 1], strides = [1, 1]} : vector<256x9xf32> to vector<256x1xf32>
    %160 = vector.broadcast %159 : vector<256x1xf32> to vector<256x16xf32>
    %161 = arith.mulf %158, %160 : vector<256x16xf32>
    %c15_i32_67 = arith.constant 15 : i32
    %162 = tpu.dynamic_rotate %153 by %c15_i32_67 dim 0 : vector<256x16xf32>, i32 -> vector<256x16xf32>
    %163 = vector.extract_strided_slice %0 {offsets = [0, 2], sizes = [256, 1], strides = [1, 1]} : vector<256x9xf32> to vector<256x1xf32>
    %164 = vector.broadcast %163 : vector<256x1xf32> to vector<256x16xf32>
    %165 = arith.mulf %162, %164 : vector<256x16xf32>
    %c1_i32_68 = arith.constant 1 : i32
    %166 = tpu.dynamic_rotate %153 by %c1_i32_68 dim 0 : vector<256x16xf32>, i32 -> vector<256x16xf32>
    %167 = vector.extract_strided_slice %0 {offsets = [0, 3], sizes = [256, 1], strides = [1, 1]} : vector<256x9xf32> to vector<256x1xf32>
    %168 = vector.broadcast %167 : vector<256x1xf32> to vector<256x16xf32>
    %169 = arith.mulf %166, %168 : vector<256x16xf32>
    %c255_i32_69 = arith.constant 255 : i32
    %170 = tpu.dynamic_rotate %153 by %c255_i32_69 dim 0 : vector<256x16xf32>, i32 -> vector<256x16xf32>
    %171 = vector.extract_strided_slice %0 {offsets = [0, 5], sizes = [256, 1], strides = [1, 1]} : vector<256x9xf32> to vector<256x1xf32>
    %172 = vector.broadcast %171 : vector<256x1xf32> to vector<256x16xf32>
    %173 = arith.mulf %170, %172 : vector<256x16xf32>
    %c241_i32_70 = arith.constant 241 : i32
    %174 = tpu.dynamic_rotate %153 by %c241_i32_70 dim 0 : vector<256x16xf32>, i32 -> vector<256x16xf32>
    %175 = vector.extract_strided_slice %0 {offsets = [0, 6], sizes = [256, 1], strides = [1, 1]} : vector<256x9xf32> to vector<256x1xf32>
    %176 = vector.broadcast %175 : vector<256x1xf32> to vector<256x16xf32>
    %177 = arith.mulf %174, %176 : vector<256x16xf32>
    %c240_i32_71 = arith.constant 240 : i32
    %178 = tpu.dynamic_rotate %153 by %c240_i32_71 dim 0 : vector<256x16xf32>, i32 -> vector<256x16xf32>
    %179 = vector.extract_strided_slice %0 {offsets = [0, 7], sizes = [256, 1], strides = [1, 1]} : vector<256x9xf32> to vector<256x1xf32>
    %180 = vector.broadcast %179 : vector<256x1xf32> to vector<256x16xf32>
    %181 = arith.mulf %178, %180 : vector<256x16xf32>
    %c239_i32_72 = arith.constant 239 : i32
    %182 = tpu.dynamic_rotate %153 by %c239_i32_72 dim 0 : vector<256x16xf32>, i32 -> vector<256x16xf32>
    %183 = vector.extract_strided_slice %0 {offsets = [0, 8], sizes = [256, 1], strides = [1, 1]} : vector<256x9xf32> to vector<256x1xf32>
    %184 = vector.broadcast %183 : vector<256x1xf32> to vector<256x16xf32>
    %185 = arith.mulf %182, %184 : vector<256x16xf32>
    %186 = tpu.concatenate %157, %161, %165, %169, %153, %173, %177, %181, %185 in 1 : vector<256x16xf32>, vector<256x16xf32>, vector<256x16xf32>, vector<256x16xf32>, vector<256x16xf32>, vector<256x16xf32>, vector<256x16xf32>, vector<256x16xf32>, vector<256x16xf32> -> vector<256x144xf32>
    %187 = arith.truncf %186 : vector<256x144xf32> to vector<256x144xbf16>
    %c0_73 = arith.constant 0 : index
    %c0_74 = arith.constant 0 : index
    %188 = vector.load %arg20[%c0_73, %c0_74] : memref<144x16xbf16, #tpu.memory_space<vmem>>, vector<144x16xbf16>
    %cst_75 = arith.constant dense<0.000000e+00> : vector<256x16xf32>
    %189 = tpu.matmul %187, %188, %cst_75 {dimension_numbers = #tpu.dot_dimension_numbers<[1], [0], [0], [1], [0, 0, 1, 1], [], []>} : vector<256x144xbf16>, vector<144x16xbf16>, vector<256x16xf32> -> vector<256x16xf32>
    %c0_76 = arith.constant 0 : index
    %c0_77 = arith.constant 0 : index
    %190 = vector.load %arg21[%c0_76, %c0_77] : memref<1x16xf32, #tpu.memory_space<vmem>>, vector<1x16xf32>
    %191 = vector.broadcast %190 : vector<1x16xf32> to vector<256x16xf32>
    %192 = arith.addf %189, %191 : vector<256x16xf32>
    %cst_78 = arith.constant 0.000000e+00 : f32
    %193 = vector.broadcast %cst_78 : f32 to vector<256x16xf32>
    %194 = arith.maximumf %192, %193 : vector<256x16xf32>
    %cst_79 = arith.constant dense<0.000000e+00> : vector<16xf32>
    %195 = vector.multi_reduction <add>, %194, %cst_79 [0] : vector<256x16xf32> to vector<16xf32>
    %196 = vector.shape_cast %195 : vector<16xf32> to vector<1x16xf32>
    %cst_80 = arith.constant 2.560000e+02 : f32
    %197 = vector.broadcast %cst_80 : f32 to vector<1x16xf32>
    %198 = arith.divf %196, %197 : vector<1x16xf32>
    %199 = arith.truncf %198 : vector<1x16xf32> to vector<1x16xbf16>
    %c0_81 = arith.constant 0 : index
    %c0_82 = arith.constant 0 : index
    %200 = vector.load %arg22[%c0_81, %c0_82] : memref<16x10xbf16, #tpu.memory_space<vmem>>, vector<16x10xbf16>
    %cst_83 = arith.constant dense<0.000000e+00> : vector<1x10xf32>
    %201 = tpu.matmul %199, %200, %cst_83 {dimension_numbers = #tpu.dot_dimension_numbers<[1], [0], [0], [1], [0, 0, 1, 1], [], []>} : vector<1x16xbf16>, vector<16x10xbf16>, vector<1x10xf32> -> vector<1x10xf32>
    %c0_84 = arith.constant 0 : index
    %c0_85 = arith.constant 0 : index
    %202 = vector.load %arg23[%c0_84, %c0_85] : memref<1x10xf32, #tpu.memory_space<vmem>>, vector<1x10xf32>
    %203 = arith.addf %201, %202 : vector<1x10xf32>
    %c0_86 = arith.constant 0 : index
    %c0_87 = arith.constant 0 : index
    %c0_88 = arith.constant 0 : index
    %204 = vector.load %arg24[%c0_86, %c0_87, %c0_88] : memref<1x1x10xf32, #tpu.memory_space<vmem>>, vector<1x1x10xf32>
    %205 = vector.shape_cast %204 : vector<1x1x10xf32> to vector<1x10xf32>
    %206 = vector.shape_cast %203 : vector<1x10xf32> to vector<1x1x10xf32>
    tpu.vector_store %arg24[%c0_86, %c0_87, %c0_88], %206 {strides = array<i32>} : memref<1x1x10xf32, #tpu.memory_space<vmem>>, vector<1x1x10xf32>,
    return
  }
  func.func @transform_0(%arg0: i32) -> (i32, i32, i32) {
    %c0_i32 = arith.constant 0 : i32
    %c0_i32_0 = arith.constant 0 : i32
    %c0_i32_1 = arith.constant 0 : i32
    return %arg0, %c0_i32, %c0_i32_0 : i32, i32, i32
  }
  func.func @transform_1(%arg0: i32) -> (i32, i32) {
    %c0_i32 = arith.constant 0 : i32
    %c0_i32_0 = arith.constant 0 : i32
    %c0_i32_1 = arith.constant 0 : i32
    return %c0_i32, %c0_i32_0 : i32, i32
  }
  func.func @transform_2(%arg0: i32) -> (i32, i32) {
    %c0_i32 = arith.constant 0 : i32
    %c0_i32_0 = arith.constant 0 : i32
    %c0_i32_1 = arith.constant 0 : i32
    return %c0_i32, %c0_i32_0 : i32, i32
  }
  func.func @transform_3(%arg0: i32) -> (i32, i32) {
    %c0_i32 = arith.constant 0 : i32
    %c0_i32_0 = arith.constant 0 : i32
    %c0_i32_1 = arith.constant 0 : i32
    return %c0_i32, %c0_i32_0 : i32, i32
  }
  func.func @transform_4(%arg0: i32) -> (i32, i32) {
    %c0_i32 = arith.constant 0 : i32
    %c0_i32_0 = arith.constant 0 : i32
    %c0_i32_1 = arith.constant 0 : i32
    return %c0_i32, %c0_i32_0 : i32, i32
  }
  func.func @transform_5(%arg0: i32) -> (i32, i32) {
    %c0_i32 = arith.constant 0 : i32
    %c0_i32_0 = arith.constant 0 : i32
    %c0_i32_1 = arith.constant 0 : i32
    return %c0_i32, %c0_i32_0 : i32, i32
  }
  func.func @transform_6(%arg0: i32) -> (i32, i32) {
    %c0_i32 = arith.constant 0 : i32
    %c0_i32_0 = arith.constant 0 : i32
    %c0_i32_1 = arith.constant 0 : i32
    return %c0_i32, %c0_i32_0 : i32, i32
  }
  func.func @transform_7(%arg0: i32) -> (i32, i32) {
    %c0_i32 = arith.constant 0 : i32
    %c0_i32_0 = arith.constant 0 : i32
    %c0_i32_1 = arith.constant 0 : i32
    return %c0_i32, %c0_i32_0 : i32, i32
  }
  func.func @transform_8(%arg0: i32) -> (i32, i32) {
    %c0_i32 = arith.constant 0 : i32
    %c0_i32_0 = arith.constant 0 : i32
    %c0_i32_1 = arith.constant 0 : i32
    return %c0_i32, %c0_i32_0 : i32, i32
  }
  func.func @transform_9(%arg0: i32) -> (i32, i32) {
    %c0_i32 = arith.constant 0 : i32
    %c0_i32_0 = arith.constant 0 : i32
    %c0_i32_1 = arith.constant 0 : i32
    return %c0_i32, %c0_i32_0 : i32, i32
  }
  func.func @transform_10(%arg0: i32) -> (i32, i32) {
    %c0_i32 = arith.constant 0 : i32
    %c0_i32_0 = arith.constant 0 : i32
    %c0_i32_1 = arith.constant 0 : i32
    return %c0_i32, %c0_i32_0 : i32, i32
  }
  func.func @transform_11(%arg0: i32) -> (i32, i32) {
    %c0_i32 = arith.constant 0 : i32
    %c0_i32_0 = arith.constant 0 : i32
    %c0_i32_1 = arith.constant 0 : i32
    return %c0_i32, %c0_i32_0 : i32, i32
  }
  func.func @transform_12(%arg0: i32) -> (i32, i32) {
    %c0_i32 = arith.constant 0 : i32
    %c0_i32_0 = arith.constant 0 : i32
    %c0_i32_1 = arith.constant 0 : i32
    return %c0_i32, %c0_i32_0 : i32, i32
  }
  func.func @transform_13(%arg0: i32) -> (i32, i32) {
    %c0_i32 = arith.constant 0 : i32
    %c0_i32_0 = arith.constant 0 : i32
    %c0_i32_1 = arith.constant 0 : i32
    return %c0_i32, %c0_i32_0 : i32, i32
  }
  func.func @transform_14(%arg0: i32) -> (i32, i32) {
    %c0_i32 = arith.constant 0 : i32
    %c0_i32_0 = arith.constant 0 : i32
    %c0_i32_1 = arith.constant 0 : i32
    return %c0_i32, %c0_i32_0 : i32, i32
  }
  func.func @transform_15(%arg0: i32) -> (i32, i32) {
    %c0_i32 = arith.constant 0 : i32
    %c0_i32_0 = arith.constant 0 : i32
    %c0_i32_1 = arith.constant 0 : i32
    return %c0_i32, %c0_i32_0 : i32, i32
  }
  func.func @transform_16(%arg0: i32) -> (i32, i32) {
    %c0_i32 = arith.constant 0 : i32
    %c0_i32_0 = arith.constant 0 : i32
    %c0_i32_1 = arith.constant 0 : i32
    return %c0_i32, %c0_i32_0 : i32, i32
  }
  func.func @transform_17(%arg0: i32) -> (i32, i32) {
    %c0_i32 = arith.constant 0 : i32
    %c0_i32_0 = arith.constant 0 : i32
    %c0_i32_1 = arith.constant 0 : i32
    return %c0_i32, %c0_i32_0 : i32, i32
  }
  func.func @transform_18(%arg0: i32) -> (i32, i32) {
    %c0_i32 = arith.constant 0 : i32
    %c0_i32_0 = arith.constant 0 : i32
    %c0_i32_1 = arith.constant 0 : i32
    return %c0_i32, %c0_i32_0 : i32, i32
  }
  func.func @transform_19(%arg0: i32) -> (i32, i32) {
    %c0_i32 = arith.constant 0 : i32
    %c0_i32_0 = arith.constant 0 : i32
    %c0_i32_1 = arith.constant 0 : i32
    return %c0_i32, %c0_i32_0 : i32, i32
  }
  func.func @transform_20(%arg0: i32) -> (i32, i32) {
    %c0_i32 = arith.constant 0 : i32
    %c0_i32_0 = arith.constant 0 : i32
    %c0_i32_1 = arith.constant 0 : i32
    return %c0_i32, %c0_i32_0 : i32, i32
  }
  func.func @transform_21(%arg0: i32) -> (i32, i32) {
    %c0_i32 = arith.constant 0 : i32
    %c0_i32_0 = arith.constant 0 : i32
    %c0_i32_1 = arith.constant 0 : i32
    return %c0_i32, %c0_i32_0 : i32, i32
  }
  func.func @transform_22(%arg0: i32) -> (i32, i32) {
    %c0_i32 = arith.constant 0 : i32
    %c0_i32_0 = arith.constant 0 : i32
    %c0_i32_1 = arith.constant 0 : i32
    return %c0_i32, %c0_i32_0 : i32, i32
  }
  func.func @transform_23(%arg0: i32) -> (i32, i32, i32) {
    %c0_i32 = arith.constant 0 : i32
    %c0_i32_0 = arith.constant 0 : i32
    %c0_i32_1 = arith.constant 0 : i32
    return %arg0, %c0_i32, %c0_i32_0 : i32, i32, i32
  }
}

</mosaic_0001>

<llo_original>
// kernel: improved_moe_forward.1
$region0: #{improved_moe_forward.1}
  #allocation0 [shape = 'u32[]', space=smem, size = 0x4, offset = 0x4, fixed_abs, tag = 'smem constant byte address 0x4 - core index']
  #allocation1 [shape = 'u32[144,128]{1,0:T(1,128)}', space=vmem, size = 0x12000, scoped, tag = 'internal scratch']
  #allocation2 [shape = 'f32[1,1]{1,0:T(1,128)S(1)}', space=vmem, size = 0x200, scoped, tag = 'scoped memory for improved_moe_forward.1']
  #allocation3 [shape = 'f32[1,1]{1,0:T(1,128)S(1)}', space=vmem, size = 0x200, scoped, tag = 'scoped memory for improved_moe_forward.1']
  %s0 = inlined_call_operand.vmem [shape: bf16[2,256,27], index: 0, kind: input, shape index: {}]
  %s1 = inlined_call_operand.vmem [shape: f32[256,9], index: 1, kind: input, shape index: {}]
  %s2 = inlined_call_operand.vmem [shape: bf16[27,16], index: 2, kind: input, shape index: {}]
  %s3 = inlined_call_operand.vmem [shape: f32[1,16], index: 3, kind: input, shape index: {}]
  %s4 = inlined_call_operand.vmem [shape: bf16[16,4], index: 4, kind: input, shape index: {}]
  %s5 = inlined_call_operand.vmem [shape: f32[1,4], index: 5, kind: input, shape index: {}]
  %s6 = inlined_call_operand.vmem [shape: f32[1,4], index: 6, kind: input, shape index: {}]
  %s7 = inlined_call_operand.<no memory space> [shape: f32[1,1], index: 7, kind: input, shape index: {}]
  %s8 = inlined_call_operand.vmem [shape: bf16[32,8], index: 8, kind: input, shape index: {}]
  %s9 = inlined_call_operand.vmem [shape: f32[1,8], index: 9, kind: input, shape index: {}]
  %s10 = inlined_call_operand.vmem [shape: bf16[8,4], index: 10, kind: input, shape index: {}]
  %s11 = inlined_call_operand.vmem [shape: f32[1,4], index: 11, kind: input, shape index: {}]
  %s12 = inlined_call_operand.<no memory space> [shape: f32[1,1], index: 12, kind: input, shape index: {}]
  %s13 = inlined_call_operand.vmem [shape: bf16[144,128], index: 13, kind: input, shape index: {}]
  %s14 = inlined_call_operand.vmem [shape: f32[1,128], index: 14, kind: input, shape index: {}]
  %s15 = inlined_call_operand.vmem [shape: bf16[1168,64], index: 15, kind: input, shape index: {}]
  %s16 = inlined_call_operand.vmem [shape: f32[1,64], index: 16, kind: input, shape index: {}]
  %s17 = inlined_call_operand.vmem [shape: f32[4,64], index: 17, kind: input, shape index: {}]
  %s18 = inlined_call_operand.vmem [shape: bf16[64,16], index: 18, kind: input, shape index: {}]
  %s19 = inlined_call_operand.vmem [shape: bf16[144,16], index: 19, kind: input, shape index: {}]
  %s20 = inlined_call_operand.vmem [shape: f32[1,16], index: 20, kind: input, shape index: {}]
  %s21 = inlined_call_operand.vmem [shape: bf16[16,10], index: 21, kind: input, shape index: {}]
  %s22 = inlined_call_operand.vmem [shape: f32[1,10], index: 22, kind: input, shape index: {}]
  %s23 = inlined_call_operand.hbm [shape: f32[2,1,10], index: 23, kind: output, shape index: {}]
  %s24 = sld [smem:[#allocation0]]
  $region125: #{improved_moe_forward.1} parent=0
    _
  %s26 = ssub.s32 1, %s24
  %s27 = scalar_select 0, %s26, %s24
  %v28 = vstv %s7
  %29 = vst [vmem:[#allocation2] sm:$0x1] %v28
  %v30 = vstv %s12
  %31 = vst [vmem:[#allocation3] sm:$0x1] %v30
  $region1: #{improved_moe_forward.1} parent=0
    #allocation4 [shape = 'u8[1024]{0}', space=vmem, size = 0x400, scoped, tag = 'output window, operand 0']
    #allocation5 [shape = 's32[2]{0}', space=sflag, size = 0x8, scoped, tag = 'scoped memory for improved_moe_forward.1']
    %32 = vsyncpa [#allocation5], 0
    %s33 = scalar_lea.sflag [#allocation5], 1
    %34 = vsyncpa %s33, 0
    loop: start=0, step=1, limit=4
    $region2: #{improved_moe_forward.1} parent=1 // loop_pre_header
      _
    $region3: #{improved_moe_forward.1} parent=1 // loop_header
      %s36 = sphi 0, %s40
      %p37 = scmp.ge.s32.totalorder %s36, 4
      %s46 = sphi 0, %s48
      %s49 = sphi 0, %s46
      %s50 = sphi 0, %s49
      %s66 = sphi 0, %s50
      %s70 = sphi 0, %s70
      %s72 = sphi 0, %s70
      %s73 = sphi 0, %s72
      %s87 = sphi 0, %s73
      %s91 = sphi 0, %s91
      %s93 = sphi 0, %s91
      %s94 = sphi 0, %s93
      %s108 = sphi 0, %s94
      %s112 = sphi 0, %s112
      %s114 = sphi 0, %s112
      %s115 = sphi 0, %s114
      %s129 = sphi 0, %s115
      %s133 = sphi 0, %s133
      %s135 = sphi 0, %s133
      %s136 = sphi 0, %s135
      %s150 = sphi 0, %s136
      %s154 = sphi 0, %s154
      %s156 = sphi 0, %s154
      %s157 = sphi 0, %s156
      %s171 = sphi 0, %s157
      %s175 = sphi 0, %s175
      %s177 = sphi 0, %s175
      %s178 = sphi 0, %s177
      %s192 = sphi 0, %s178
      %s196 = sphi 0, %s196
      %s198 = sphi 0, %s196
      %s199 = sphi 0, %s198
      %s213 = sphi 0, %s199
      %s217 = sphi 0, %s217
      %s219 = sphi 0, %s217
      %s220 = sphi 0, %s219
      %s234 = sphi 0, %s220
      %s238 = sphi 0, %s238
      %s240 = sphi 0, %s238
      %s241 = sphi 0, %s240
      %s255 = sphi 0, %s241
      %s259 = sphi 0, %s259
      %s261 = sphi 0, %s259
      %s262 = sphi 0, %s261
      %s276 = sphi 0, %s262
      %s280 = sphi 0, %s280
      %s282 = sphi 0, %s280
      %s283 = sphi 0, %s282
      %s297 = sphi 0, %s283
      %s301 = sphi 0, %s301
      %s303 = sphi 0, %s301
      %s304 = sphi 0, %s303
      %s318 = sphi 0, %s304
      %s322 = sphi 0, %s322
      %s324 = sphi 0, %s322
      %s325 = sphi 0, %s324
      %s339 = sphi 0, %s325
      %s343 = sphi 0, %s343
      %s345 = sphi 0, %s343
      %s346 = sphi 0, %s345
      %s360 = sphi 0, %s346
      %s364 = sphi 0, %s364
      %s366 = sphi 0, %s364
      %s367 = sphi 0, %s366
      %s381 = sphi 0, %s367
      %s385 = sphi 0, %s385
      %s387 = sphi 0, %s385
      %s388 = sphi 0, %s387
      %s402 = sphi 0, %s388
      %s406 = sphi 0, %s406
      %s408 = sphi 0, %s406
      %s409 = sphi 0, %s408
      %s423 = sphi 0, %s409
      %s427 = sphi 0, %s427
      %s429 = sphi 0, %s427
      %s430 = sphi 0, %s429
      %s444 = sphi 0, %s430
      %s448 = sphi 0, %s448
      %s450 = sphi 0, %s448
      %s451 = sphi 0, %s450
      %s465 = sphi 0, %s451
      %s469 = sphi 0, %s469
      %s471 = sphi 0, %s469
      %s472 = sphi 0, %s471
      %s486 = sphi 0, %s472
      %s490 = sphi 0, %s490
      %s492 = sphi 0, %s490
      %s493 = sphi 0, %s492
      %s507 = sphi 0, %s493
      %s511 = sphi 0, %s511
      %s513 = sphi 0, %s511
      %s514 = sphi 0, %s513
      %s528 = sphi 0, %s514
      %s534 = sphi 0, %s536
      %s537 = sphi 0, %s534
      %s538 = sphi 0, %s537
      %s554 = sphi 0, %s538
    $region4: #{improved_moe_forward.1} parent=1 // loop_header_branch
      %39 = sbr.rel (%p37) target = $region8
    $region5: #{improved_moe_forward.1} parent=1 // loop_body
      %s41 = ssub.s32 %s36, 1
      %s42 = ssub.s32 %s36, 2
      %s43 = sadd.s32 %s36, 1
      %s44 = ssub.s32 %s36, %s43
      %p45 = scmp.eq.s32.totalorder %s44, 0
      %s47 = sadd.s32 %s46, 1
      %s48 = scalar_select %p45, %s46, %s47
      %p51 = pneg %p45
      %p52 = scmp.eq.s32.totalorder %s36, 1
      %p53 = por %p51, %p52
      %p54 = scmp.ne.s32.totalorder %s46, %s49
      %p55 = scmp.eq.s32.totalorder %s36, 0
      %p56 = por %p54, %p55
      %p57 = scmp.ne.s32.totalorder %s46, %s49
      %p58 = scmp.eq.s32.totalorder %s41, 1
      %p59 = por %p57, %p58
      %p60 = scmp.ne.s32.totalorder %s49, %s50
      %p61 = scmp.eq.s32.totalorder %s41, 0
      %p62 = por %p60, %p61
      %p63 = scmp.ne.s32.totalorder %s49, %s50
      %p64 = scmp.eq.s32.totalorder %s42, 1
      %p65 = por %p63, %p64
      %p67 = scmp.ne.s32.totalorder %s50, %s66
      %p68 = scmp.eq.s32.totalorder %s42, 0
      %p69 = por %p67, %p68
      %s71 = sadd.s32 %s70, 1
      %p74 = scmp.eq.s32.totalorder %s36, 1
      %p75 = scmp.ne.s32.totalorder %s70, %s72
      %p76 = scmp.eq.s32.totalorder %s36, 0
      %p77 = por %p75, %p76
      %p78 = scmp.ne.s32.totalorder %s70, %s72
      %p79 = scmp.eq.s32.totalorder %s41, 1
      %p80 = por %p78, %p79
      %p81 = scmp.ne.s32.totalorder %s72, %s73
      %p82 = scmp.eq.s32.totalorder %s41, 0
      %p83 = por %p81, %p82
      %p84 = scmp.ne.s32.totalorder %s72, %s73
      %p85 = scmp.eq.s32.totalorder %s42, 1
      %p86 = por %p84, %p85
      %p88 = scmp.ne.s32.totalorder %s73, %s87
      %p89 = scmp.eq.s32.totalorder %s42, 0
      %p90 = por %p88, %p89
      %s92 = sadd.s32 %s91, 1
      %p95 = scmp.eq.s32.totalorder %s36, 1
      %p96 = scmp.ne.s32.totalorder %s91, %s93
      %p97 = scmp.eq.s32.totalorder %s36, 0
      %p98 = por %p96, %p97
      %p99 = scmp.ne.s32.totalorder %s91, %s93
      %p100 = scmp.eq.s32.totalorder %s41, 1
      %p101 = por %p99, %p100
      %p102 = scmp.ne.s32.totalorder %s93, %s94
      %p103 = scmp.eq.s32.totalorder %s41, 0
      %p104 = por %p102, %p103
      %p105 = scmp.ne.s32.totalorder %s93, %s94
      %p106 = scmp.eq.s32.totalorder %s42, 1
      %p107 = por %p105, %p106
      %p109 = scmp.ne.s32.totalorder %s94, %s108
      %p110 = scmp.eq.s32.totalorder %s42, 0
      %p111 = por %p109, %p110
      %s113 = sadd.s32 %s112, 1
      %p116 = scmp.eq.s32.totalorder %s36, 1
      %p117 = scmp.ne.s32.totalorder %s112, %s114
      %p118 = scmp.eq.s32.totalorder %s36, 0
      %p119 = por %p117, %p118
      %p120 = scmp.ne.s32.totalorder %s112, %s114
      %p121 = scmp.eq.s32.totalorder %s41, 1
      %p122 = por %p120, %p121
      %p123 = scmp.ne.s32.totalorder %s114, %s115
      %p124 = scmp.eq.s32.totalorder %s41, 0
      %p125 = por %p123, %p124
      %p126 = scmp.ne.s32.totalorder %s114, %s115
      %p127 = scmp.eq.s32.totalorder %s42, 1
      %p128 = por %p126, %p127
      %p130 = scmp.ne.s32.totalorder %s115, %s129
      %p131 = scmp.eq.s32.totalorder %s42, 0
      %p132 = por %p130, %p131
      %s134 = sadd.s32 %s133, 1
      %p137 = scmp.eq.s32.totalorder %s36, 1
      %p138 = scmp.ne.s32.totalorder %s133, %s135
      %p139 = scmp.eq.s32.totalorder %s36, 0
      %p140 = por %p138, %p139
      %p141 = scmp.ne.s32.totalorder %s133, %s135
      %p142 = scmp.eq.s32.totalorder %s41, 1
      %p143 = por %p141, %p142
      %p144 = scmp.ne.s32.totalorder %s135, %s136
      %p145 = scmp.eq.s32.totalorder %s41, 0
      %p146 = por %p144, %p145
      %p147 = scmp.ne.s32.totalorder %s135, %s136
      %p148 = scmp.eq.s32.totalorder %s42, 1
      %p149 = por %p147, %p148
      %p151 = scmp.ne.s32.totalorder %s136, %s150
      %p152 = scmp.eq.s32.totalorder %s42, 0
      %p153 = por %p151, %p152
      %s155 = sadd.s32 %s154, 1
      %p158 = scmp.eq.s32.totalorder %s36, 1
      %p159 = scmp.ne.s32.totalorder %s154, %s156
      %p160 = scmp.eq.s32.totalorder %s36, 0
      %p161 = por %p159, %p160
      %p162 = scmp.ne.s32.totalorder %s154, %s156
      %p163 = scmp.eq.s32.totalorder %s41, 1
      %p164 = por %p162, %p163
      %p165 = scmp.ne.s32.totalorder %s156, %s157
      %p166 = scmp.eq.s32.totalorder %s41, 0
      %p167 = por %p165, %p166
      %p168 = scmp.ne.s32.totalorder %s156, %s157
      %p169 = scmp.eq.s32.totalorder %s42, 1
      %p170 = por %p168, %p169
      %p172 = scmp.ne.s32.totalorder %s157, %s171
      %p173 = scmp.eq.s32.totalorder %s42, 0
      %p174 = por %p172, %p173
      %s176 = sadd.s32 %s175, 1
      %p179 = scmp.eq.s32.totalorder %s36, 1
      %p180 = scmp.ne.s32.totalorder %s175, %s177
      %p181 = scmp.eq.s32.totalorder %s36, 0
      %p182 = por %p180, %p181
      %p183 = scmp.ne.s32.totalorder %s175, %s177
      %p184 = scmp.eq.s32.totalorder %s41, 1
      %p185 = por %p183, %p184
      %p186 = scmp.ne.s32.totalorder %s177, %s178
      %p187 = scmp.eq.s32.totalorder %s41, 0
      %p188 = por %p186, %p187
      %p189 = scmp.ne.s32.totalorder %s177, %s178
      %p190 = scmp.eq.s32.totalorder %s42, 1
      %p191 = por %p189, %p190
      %p193 = scmp.ne.s32.totalorder %s178, %s192
      %p194 = scmp.eq.s32.totalorder %s42, 0
      %p195 = por %p193, %p194
      %s197 = sadd.s32 %s196, 1
      %p200 = scmp.eq.s32.totalorder %s36, 1
      %p201 = scmp.ne.s32.totalorder %s196, %s198
      %p202 = scmp.eq.s32.totalorder %s36, 0
      %p203 = por %p201, %p202
      %p204 = scmp.ne.s32.totalorder %s196, %s198
      %p205 = scmp.eq.s32.totalorder %s41, 1
      %p206 = por %p204, %p205
      %p207 = scmp.ne.s32.totalorder %s198, %s199
      %p208 = scmp.eq.s32.totalorder %s41, 0
      %p209 = por %p207, %p208
      %p210 = scmp.ne.s32.totalorder %s198, %s199
      %p211 = scmp.eq.s32.totalorder %s42, 1
      %p212 = por %p210, %p211
      %p214 = scmp.ne.s32.totalorder %s199, %s213
      %p215 = scmp.eq.s32.totalorder %s42, 0
      %p216 = por %p214, %p215
      %s218 = sadd.s32 %s217, 1
      %p221 = scmp.eq.s32.totalorder %s36, 1
      %p222 = scmp.ne.s32.totalorder %s217, %s219
      %p223 = scmp.eq.s32.totalorder %s36, 0
      %p224 = por %p222, %p223
      %p225 = scmp.ne.s32.totalorder %s217, %s219
      %p226 = scmp.eq.s32.totalorder %s41, 1
      %p227 = por %p225, %p226
      %p228 = scmp.ne.s32.totalorder %s219, %s220
      %p229 = scmp.eq.s32.totalorder %s41, 0
      %p230 = por %p228, %p229
      %p231 = scmp.ne.s32.totalorder %s219, %s220
      %p232 = scmp.eq.s32.totalorder %s42, 1
      %p233 = por %p231, %p232
      %p235 = scmp.ne.s32.totalorder %s220, %s234
      %p236 = scmp.eq.s32.totalorder %s42, 0
      %p237 = por %p235, %p236
      %s239 = sadd.s32 %s238, 1
      %p242 = scmp.eq.s32.totalorder %s36, 1
      %p243 = scmp.ne.s32.totalorder %s238, %s240
      %p244 = scmp.eq.s32.totalorder %s36, 0
      %p245 = por %p243, %p244
      %p246 = scmp.ne.s32.totalorder %s238, %s240
      %p247 = scmp.eq.s32.totalorder %s41, 1
      %p248 = por %p246, %p247
      %p249 = scmp.ne.s32.totalorder %s240, %s241
      %p250 = scmp.eq.s32.totalorder %s41, 0
      %p251 = por %p249, %p250
      %p252 = scmp.ne.s32.totalorder %s240, %s241
      %p253 = scmp.eq.s32.totalorder %s42, 1
      %p254 = por %p252, %p253
      %p256 = scmp.ne.s32.totalorder %s241, %s255
      %p257 = scmp.eq.s32.totalorder %s42, 0
      %p258 = por %p256, %p257
      %s260 = sadd.s32 %s259, 1
      %p263 = scmp.eq.s32.totalorder %s36, 1
      %p264 = scmp.ne.s32.totalorder %s259, %s261
      %p265 = scmp.eq.s32.totalorder %s36, 0
      %p266 = por %p264, %p265
      %p267 = scmp.ne.s32.totalorder %s259, %s261
      %p268 = scmp.eq.s32.totalorder %s41, 1
      %p269 = por %p267, %p268
      %p270 = scmp.ne.s32.totalorder %s261, %s262
      %p271 = scmp.eq.s32.totalorder %s41, 0
      %p272 = por %p270, %p271
      %p273 = scmp.ne.s32.totalorder %s261, %s262
      %p274 = scmp.eq.s32.totalorder %s42, 1
      %p275 = por %p273, %p274
      %p277 = scmp.ne.s32.totalorder %s262, %s276
      %p278 = scmp.eq.s32.totalorder %s42, 0
      %p279 = por %p277, %p278
      %s281 = sadd.s32 %s280, 1
      %p284 = scmp.eq.s32.totalorder %s36, 1
      %p285 = scmp.ne.s32.totalorder %s280, %s282
      %p286 = scmp.eq.s32.totalorder %s36, 0
      %p287 = por %p285, %p286
      %p288 = scmp.ne.s32.totalorder %s280, %s282
      %p289 = scmp.eq.s32.totalorder %s41, 1
      %p290 = por %p288, %p289
      %p291 = scmp.ne.s32.totalorder %s282, %s283
      %p292 = scmp.eq.s32.totalorder %s41, 0
      %p293 = por %p291, %p292
      %p294 = scmp.ne.s32.totalorder %s282, %s283
      %p295 = scmp.eq.s32.totalorder %s42, 1
      %p296 = por %p294, %p295
      %p298 = scmp.ne.s32.totalorder %s283, %s297
      %p299 = scmp.eq.s32.totalorder %s42, 0
      %p300 = por %p298, %p299
      %s302 = sadd.s32 %s301, 1
      %p305 = scmp.eq.s32.totalorder %s36, 1
      %p306 = scmp.ne.s32.totalorder %s301, %s303
      %p307 = scmp.eq.s32.totalorder %s36, 0
      %p308 = por %p306, %p307
      %p309 = scmp.ne.s32.totalorder %s301, %s303
      %p310 = scmp.eq.s32.totalorder %s41, 1
      %p311 = por %p309, %p310
      %p312 = scmp.ne.s32.totalorder %s303, %s304
      %p313 = scmp.eq.s32.totalorder %s41, 0
      %p314 = por %p312, %p313
      %p315 = scmp.ne.s32.totalorder %s303, %s304
      %p316 = scmp.eq.s32.totalorder %s42, 1
      %p317 = por %p315, %p316
      %p319 = scmp.ne.s32.totalorder %s304, %s318
      %p320 = scmp.eq.s32.totalorder %s42, 0
      %p321 = por %p319, %p320
      %s323 = sadd.s32 %s322, 1
      %p326 = scmp.eq.s32.totalorder %s36, 1
      %p327 = scmp.ne.s32.totalorder %s322, %s324
      %p328 = scmp.eq.s32.totalorder %s36, 0
      %p329 = por %p327, %p328
      %p330 = scmp.ne.s32.totalorder %s322, %s324
      %p331 = scmp.eq.s32.totalorder %s41, 1
      %p332 = por %p330, %p331
      %p333 = scmp.ne.s32.totalorder %s324, %s325
      %p334 = scmp.eq.s32.totalorder %s41, 0
      %p335 = por %p333, %p334
      %p336 = scmp.ne.s32.totalorder %s324, %s325
      %p337 = scmp.eq.s32.totalorder %s42, 1
      %p338 = por %p336, %p337
      %p340 = scmp.ne.s32.totalorder %s325, %s339
      %p341 = scmp.eq.s32.totalorder %s42, 0
      %p342 = por %p340, %p341
      %s344 = sadd.s32 %s343, 1
      %p347 = scmp.eq.s32.totalorder %s36, 1
      %p348 = scmp.ne.s32.totalorder %s343, %s345
      %p349 = scmp.eq.s32.totalorder %s36, 0
      %p350 = por %p348, %p349
      %p351 = scmp.ne.s32.totalorder %s343, %s345
      %p352 = scmp.eq.s32.totalorder %s41, 1
      %p353 = por %p351, %p352
      %p354 = scmp.ne.s32.totalorder %s345, %s346
      %p355 = scmp.eq.s32.totalorder %s41, 0
      %p356 = por %p354, %p355
      %p357 = scmp.ne.s32.totalorder %s345, %s346
      %p358 = scmp.eq.s32.totalorder %s42, 1
      %p359 = por %p357, %p358
      %p361 = scmp.ne.s32.totalorder %s346, %s360
      %p362 = scmp.eq.s32.totalorder %s42, 0
      %p363 = por %p361, %p362
      %s365 = sadd.s32 %s364, 1
      %p368 = scmp.eq.s32.totalorder %s36, 1
      %p369 = scmp.ne.s32.totalorder %s364, %s366
      %p370 = scmp.eq.s32.totalorder %s36, 0
      %p371 = por %p369, %p370
      %p372 = scmp.ne.s32.totalorder %s364, %s366
      %p373 = scmp.eq.s32.totalorder %s41, 1
      %p374 = por %p372, %p373
      %p375 = scmp.ne.s32.totalorder %s366, %s367
      %p376 = scmp.eq.s32.totalorder %s41, 0
      %p377 = por %p375, %p376
      %p378 = scmp.ne.s32.totalorder %s366, %s367
      %p379 = scmp.eq.s32.totalorder %s42, 1
      %p380 = por %p378, %p379
      %p382 = scmp.ne.s32.totalorder %s367, %s381
      %p383 = scmp.eq.s32.totalorder %s42, 0
      %p384 = por %p382, %p383
      %s386 = sadd.s32 %s385, 1
      %p389 = scmp.eq.s32.totalorder %s36, 1
      %p390 = scmp.ne.s32.totalorder %s385, %s387
      %p391 = scmp.eq.s32.totalorder %s36, 0
      %p392 = por %p390, %p391
      %p393 = scmp.ne.s32.totalorder %s385, %s387
      %p394 = scmp.eq.s32.totalorder %s41, 1
      %p395 = por %p393, %p394
      %p396 = scmp.ne.s32.totalorder %s387, %s388
      %p397 = scmp.eq.s32.totalorder %s41, 0
      %p398 = por %p396, %p397
      %p399 = scmp.ne.s32.totalorder %s387, %s388
      %p400 = scmp.eq.s32.totalorder %s42, 1
      %p401 = por %p399, %p400
      %p403 = scmp.ne.s32.totalorder %s388, %s402
      %p404 = scmp.eq.s32.totalorder %s42, 0
      %p405 = por %p403, %p404
      %s407 = sadd.s32 %s406, 1
      %p410 = scmp.eq.s32.totalorder %s36, 1
      %p411 = scmp.ne.s32.totalorder %s406, %s408
      %p412 = scmp.eq.s32.totalorder %s36, 0
      %p413 = por %p411, %p412
      %p414 = scmp.ne.s32.totalorder %s406, %s408
      %p415 = scmp.eq.s32.totalorder %s41, 1
      %p416 = por %p414, %p415
      %p417 = scmp.ne.s32.totalorder %s408, %s409
      %p418 = scmp.eq.s32.totalorder %s41, 0
      %p419 = por %p417, %p418
      %p420 = scmp.ne.s32.totalorder %s408, %s409
      %p421 = scmp.eq.s32.totalorder %s42, 1
      %p422 = por %p420, %p421
      %p424 = scmp.ne.s32.totalorder %s409, %s423
      %p425 = scmp.eq.s32.totalorder %s42, 0
      %p426 = por %p424, %p425
      %s428 = sadd.s32 %s427, 1
      %p431 = scmp.eq.s32.totalorder %s36, 1
      %p432 = scmp.ne.s32.totalorder %s427, %s429
      %p433 = scmp.eq.s32.totalorder %s36, 0
      %p434 = por %p432, %p433
      %p435 = scmp.ne.s32.totalorder %s427, %s429
      %p436 = scmp.eq.s32.totalorder %s41, 1
      %p437 = por %p435, %p436
      %p438 = scmp.ne.s32.totalorder %s429, %s430
      %p439 = scmp.eq.s32.totalorder %s41, 0
      %p440 = por %p438, %p439
      %p441 = scmp.ne.s32.totalorder %s429, %s430
      %p442 = scmp.eq.s32.totalorder %s42, 1
      %p443 = por %p441, %p442
      %p445 = scmp.ne.s32.totalorder %s430, %s444
      %p446 = scmp.eq.s32.totalorder %s42, 0
      %p447 = por %p445, %p446
      %s449 = sadd.s32 %s448, 1
      %p452 = scmp.eq.s32.totalorder %s36, 1
      %p453 = scmp.ne.s32.totalorder %s448, %s450
      %p454 = scmp.eq.s32.totalorder %s36, 0
      %p455 = por %p453, %p454
      %p456 = scmp.ne.s32.totalorder %s448, %s450
      %p457 = scmp.eq.s32.totalorder %s41, 1
      %p458 = por %p456, %p457
      %p459 = scmp.ne.s32.totalorder %s450, %s451
      %p460 = scmp.eq.s32.totalorder %s41, 0
      %p461 = por %p459, %p460
      %p462 = scmp.ne.s32.totalorder %s450, %s451
      %p463 = scmp.eq.s32.totalorder %s42, 1
      %p464 = por %p462, %p463
      %p466 = scmp.ne.s32.totalorder %s451, %s465
      %p467 = scmp.eq.s32.totalorder %s42, 0
      %p468 = por %p466, %p467
      %s470 = sadd.s32 %s469, 1
      %p473 = scmp.eq.s32.totalorder %s36, 1
      %p474 = scmp.ne.s32.totalorder %s469, %s471
      %p475 = scmp.eq.s32.totalorder %s36, 0
      %p476 = por %p474, %p475
      %p477 = scmp.ne.s32.totalorder %s469, %s471
      %p478 = scmp.eq.s32.totalorder %s41, 1
      %p479 = por %p477, %p478
      %p480 = scmp.ne.s32.totalorder %s471, %s472
      %p481 = scmp.eq.s32.totalorder %s41, 0
      %p482 = por %p480, %p481
      %p483 = scmp.ne.s32.totalorder %s471, %s472
      %p484 = scmp.eq.s32.totalorder %s42, 1
      %p485 = por %p483, %p484
      %p487 = scmp.ne.s32.totalorder %s472, %s486
      %p488 = scmp.eq.s32.totalorder %s42, 0
      %p489 = por %p487, %p488
      %s491 = sadd.s32 %s490, 1
      %p494 = scmp.eq.s32.totalorder %s36, 1
      %p495 = scmp.ne.s32.totalorder %s490, %s492
      %p496 = scmp.eq.s32.totalorder %s36, 0
      %p497 = por %p495, %p496
      %p498 = scmp.ne.s32.totalorder %s490, %s492
      %p499 = scmp.eq.s32.totalorder %s41, 1
      %p500 = por %p498, %p499
      %p501 = scmp.ne.s32.totalorder %s492, %s493
      %p502 = scmp.eq.s32.totalorder %s41, 0
      %p503 = por %p501, %p502
      %p504 = scmp.ne.s32.totalorder %s492, %s493
      %p505 = scmp.eq.s32.totalorder %s42, 1
      %p506 = por %p504, %p505
      %p508 = scmp.ne.s32.totalorder %s493, %s507
      %p509 = scmp.eq.s32.totalorder %s42, 0
      %p510 = por %p508, %p509
      %s512 = sadd.s32 %s511, 1
      %p515 = scmp.eq.s32.totalorder %s36, 1
      %p516 = scmp.ne.s32.totalorder %s511, %s513
      %p517 = scmp.eq.s32.totalorder %s36, 0
      %p518 = por %p516, %p517
      %p519 = scmp.ne.s32.totalorder %s511, %s513
      %p520 = scmp.eq.s32.totalorder %s41, 1
      %p521 = por %p519, %p520
      %p522 = scmp.ne.s32.totalorder %s513, %s514
      %p523 = scmp.eq.s32.totalorder %s41, 0
      %p524 = por %p522, %p523
      %p525 = scmp.ne.s32.totalorder %s513, %s514
      %p526 = scmp.eq.s32.totalorder %s42, 1
      %p527 = por %p525, %p526
      %p529 = scmp.ne.s32.totalorder %s514, %s528
      %p530 = scmp.eq.s32.totalorder %s42, 0
      %p531 = por %p529, %p530
      %s532 = ssub.s32 %s36, %s43
      %p533 = scmp.eq.s32.totalorder %s532, 0
      %s535 = sadd.s32 %s534, 1
      %s536 = scalar_select %p533, %s534, %s535
      %p539 = pneg %p533
      %p540 = scmp.eq.s32.totalorder %s36, 1
      %p541 = por %p539, %p540
      %p542 = scmp.ne.s32.totalorder %s534, %s537
      %p543 = scmp.eq.s32.totalorder %s36, 0
      %p544 = por %p542, %p543
      %p545 = scmp.ne.s32.totalorder %s534, %s537
      %p546 = scmp.eq.s32.totalorder %s41, 1
      %p547 = por %p545, %p546
      %p548 = scmp.ne.s32.totalorder %s537, %s538
      %p549 = scmp.eq.s32.totalorder %s41, 0
      %p550 = por %p548, %p549
      %p551 = scmp.ne.s32.totalorder %s537, %s538
      %p552 = scmp.eq.s32.totalorder %s42, 1
      %p553 = por %p551, %p552
      %p555 = scmp.ne.s32.totalorder %s538, %s554
      %p556 = scmp.eq.s32.totalorder %s42, 0
      %p557 = por %p555, %p556
      %p558 = scmp.le.s32.totalorder 1, %s36
      %p559 = scmp.lt.s32.totalorder %s36, 3
      %p560 = pnand %p558, %p559
      %p561 = pneg %p560
      // Predicated region
      $region9: #{improved_moe_forward.1} parent=5 // pred_check
        _
      $region10: #{improved_moe_forward.1} parent=5 // pred_check_branch
        %563 = sbr.rel (%p560) target = $region12
      $region11: #{improved_moe_forward.1} parent=5 // pred_region
        %s564 = ssub.s32 %s36, 1
        // Predicated region
        $region13: #{improved_moe_forward.1} parent=11 // pred_check
          %p565 = pneg %p83
        $region14: #{improved_moe_forward.1} parent=11 // pred_check_branch
          %567 = sbr.rel (%p565) target = $region16
        $region15: #{improved_moe_forward.1} parent=11 // pred_region
          _
        $region16: #{improved_moe_forward.1} parent=11 // pred_fallthru
          _
        // Predicated region
        $region17: #{improved_moe_forward.1} parent=11 // pred_check
          %p568 = pneg %p104
        $region18: #{improved_moe_forward.1} parent=11 // pred_check_branch
          %570 = sbr.rel (%p568) target = $region20
        $region19: #{improved_moe_forward.1} parent=11 // pred_region
          _
        $region20: #{improved_moe_forward.1} parent=11 // pred_fallthru
          _
        // Predicated region
        $region21: #{improved_moe_forward.1} parent=11 // pred_check
          %p571 = pneg %p125
        $region22: #{improved_moe_forward.1} parent=11 // pred_check_branch
          %573 = sbr.rel (%p571) target = $region24
        $region23: #{improved_moe_forward.1} parent=11 // pred_region
          _
        $region24: #{improved_moe_forward.1} parent=11 // pred_fallthru
          _
        // Predicated region
        $region25: #{improved_moe_forward.1} parent=11 // pred_check
          %p574 = pneg %p146
        $region26: #{improved_moe_forward.1} parent=11 // pred_check_branch
          %576 = sbr.rel (%p574) target = $region28
        $region27: #{improved_moe_forward.1} parent=11 // pred_region
          _
        $region28: #{improved_moe_forward.1} parent=11 // pred_fallthru
          _
        // Predicated region
        $region29: #{improved_moe_forward.1} parent=11 // pred_check
          %p577 = pneg %p167
        $region30: #{improved_moe_forward.1} parent=11 // pred_check_branch
          %579 = sbr.rel (%p577) target = $region32
        $region31: #{improved_moe_forward.1} parent=11 // pred_region
          _
        $region32: #{improved_moe_forward.1} parent=11 // pred_fallthru
          _
        // Predicated region
        $region33: #{improved_moe_forward.1} parent=11 // pred_check
          %p580 = pneg %p188
        $region34: #{improved_moe_forward.1} parent=11 // pred_check_branch
          %582 = sbr.rel (%p580) target = $region36
        $region35: #{improved_moe_forward.1} parent=11 // pred_region
          _
        $region36: #{improved_moe_forward.1} parent=11 // pred_fallthru
          _
        // Predicated region
        $region37: #{improved_moe_forward.1} parent=11 // pred_check
          %p583 = pneg %p209
        $region38: #{improved_moe_forward.1} parent=11 // pred_check_branch
          %585 = sbr.rel (%p583) target = $region40
        $region39: #{improved_moe_forward.1} parent=11 // pred_region
          _
        $region40: #{improved_moe_forward.1} parent=11 // pred_fallthru
          _
        // Predicated region
        $region41: #{improved_moe_forward.1} parent=11 // pred_check
          %p586 = pneg %p230
        $region42: #{improved_moe_forward.1} parent=11 // pred_check_branch
          %588 = sbr.rel (%p586) target = $region44
        $region43: #{improved_moe_forward.1} parent=11 // pred_region
          _
        $region44: #{improved_moe_forward.1} parent=11 // pred_fallthru
          _
        // Predicated region
        $region45: #{improved_moe_forward.1} parent=11 // pred_check
          %p589 = pneg %p251
        $region46: #{improved_moe_forward.1} parent=11 // pred_check_branch
          %591 = sbr.rel (%p589) target = $region48
        $region47: #{improved_moe_forward.1} parent=11 // pred_region
          _
        $region48: #{improved_moe_forward.1} parent=11 // pred_fallthru
          _
        // Predicated region
        $region49: #{improved_moe_forward.1} parent=11 // pred_check
          %p592 = pneg %p272
        $region50: #{improved_moe_forward.1} parent=11 // pred_check_branch
          %594 = sbr.rel (%p592) target = $region52
        $region51: #{improved_moe_forward.1} parent=11 // pred_region
          _
        $region52: #{improved_moe_forward.1} parent=11 // pred_fallthru
          _
        // Predicated region
        $region53: #{improved_moe_forward.1} parent=11 // pred_check
          %p595 = pneg %p293
        $region54: #{improved_moe_forward.1} parent=11 // pred_check_branch
          %597 = sbr.rel (%p595) target = $region56
        $region55: #{improved_moe_forward.1} parent=11 // pred_region
          _
        $region56: #{improved_moe_forward.1} parent=11 // pred_fallthru
          _
        // Predicated region
        $region57: #{improved_moe_forward.1} parent=11 // pred_check
          %p598 = pneg %p314
        $region58: #{improved_moe_forward.1} parent=11 // pred_check_branch
          %600 = sbr.rel (%p598) target = $region60
        $region59: #{improved_moe_forward.1} parent=11 // pred_region
          _
        $region60: #{improved_moe_forward.1} parent=11 // pred_fallthru
          _
        // Predicated region
        $region61: #{improved_moe_forward.1} parent=11 // pred_check
          %p601 = pneg %p335
        $region62: #{improved_moe_forward.1} parent=11 // pred_check_branch
          %603 = sbr.rel (%p601) target = $region64
        $region63: #{improved_moe_forward.1} parent=11 // pred_region
          _
        $region64: #{improved_moe_forward.1} parent=11 // pred_fallthru
          _
        // Predicated region
        $region65: #{improved_moe_forward.1} parent=11 // pred_check
          %p604 = pneg %p356
        $region66: #{improved_moe_forward.1} parent=11 // pred_check_branch
          %606 = sbr.rel (%p604) target = $region68
        $region67: #{improved_moe_forward.1} parent=11 // pred_region
          _
        $region68: #{improved_moe_forward.1} parent=11 // pred_fallthru
          _
        // Predicated region
        $region69: #{improved_moe_forward.1} parent=11 // pred_check
          %p607 = pneg %p377
        $region70: #{improved_moe_forward.1} parent=11 // pred_check_branch
          %609 = sbr.rel (%p607) target = $region72
        $region71: #{improved_moe_forward.1} parent=11 // pred_region
          _
        $region72: #{improved_moe_forward.1} parent=11 // pred_fallthru
          _
        // Predicated region
        $region73: #{improved_moe_forward.1} parent=11 // pred_check
          %p610 = pneg %p398
        $region74: #{improved_moe_forward.1} parent=11 // pred_check_branch
          %612 = sbr.rel (%p610) target = $region76
        $region75: #{improved_moe_forward.1} parent=11 // pred_region
          _
        $region76: #{improved_moe_forward.1} parent=11 // pred_fallthru
          _
        // Predicated region
        $region77: #{improved_moe_forward.1} parent=11 // pred_check
          %p613 = pneg %p419
        $region78: #{improved_moe_forward.1} parent=11 // pred_check_branch
          %615 = sbr.rel (%p613) target = $region80
        $region79: #{improved_moe_forward.1} parent=11 // pred_region
          _
        $region80: #{improved_moe_forward.1} parent=11 // pred_fallthru
          _
        // Predicated region
        $region81: #{improved_moe_forward.1} parent=11 // pred_check
          %p616 = pneg %p440
        $region82: #{improved_moe_forward.1} parent=11 // pred_check_branch
          %618 = sbr.rel (%p616) target = $region84
        $region83: #{improved_moe_forward.1} parent=11 // pred_region
          _
        $region84: #{improved_moe_forward.1} parent=11 // pred_fallthru
          _
        // Predicated region
        $region85: #{improved_moe_forward.1} parent=11 // pred_check
          %p619 = pneg %p461
        $region86: #{improved_moe_forward.1} parent=11 // pred_check_branch
          %621 = sbr.rel (%p619) target = $region88
        $region87: #{improved_moe_forward.1} parent=11 // pred_region
          _
        $region88: #{improved_moe_forward.1} parent=11 // pred_fallthru
          _
        // Predicated region
        $region89: #{improved_moe_forward.1} parent=11 // pred_check
          %p622 = pneg %p482
        $region90: #{improved_moe_forward.1} parent=11 // pred_check_branch
          %624 = sbr.rel (%p622) target = $region92
        $region91: #{improved_moe_forward.1} parent=11 // pred_region
          _
        $region92: #{improved_moe_forward.1} parent=11 // pred_fallthru
          _
        // Predicated region
        $region93: #{improved_moe_forward.1} parent=11 // pred_check
          %p625 = pneg %p503
        $region94: #{improved_moe_forward.1} parent=11 // pred_check_branch
          %627 = sbr.rel (%p625) target = $region96
        $region95: #{improved_moe_forward.1} parent=11 // pred_region
          _
        $region96: #{improved_moe_forward.1} parent=11 // pred_fallthru
          _
        // Predicated region
        $region97: #{improved_moe_forward.1} parent=11 // pred_check
          %p628 = pneg %p524
        $region98: #{improved_moe_forward.1} parent=11 // pred_check_branch
          %630 = sbr.rel (%p628) target = $region100
        $region99: #{improved_moe_forward.1} parent=11 // pred_region
          _
        $region100: #{improved_moe_forward.1} parent=11 // pred_fallthru
          _
      $region12: #{improved_moe_forward.1} parent=5 // pred_fallthru
        _
      %p631 = scmp.lt.s32.totalorder %s36, 2
      // Predicated region
      $region101: #{improved_moe_forward.1} parent=5 // pred_check
        %p632 = pneg %p631
      $region102: #{improved_moe_forward.1} parent=5 // pred_check_branch
        %634 = sbr.rel (%p632) target = $region104
      $region103: #{improved_moe_forward.1} parent=5 // pred_region
        // Predicated region
        $region105: #{improved_moe_forward.1} parent=103 // pred_check
          %p635 = pneg %p56
        $region106: #{improved_moe_forward.1} parent=103 // pred_check_branch
          %637 = sbr.rel (%p635) target = $region108
        $region107: #{improved_moe_forward.1} parent=103 // pred_region
          %p638 = scmp.lt.s32.totalorder %s36, 1
          %s639 = scalar_select %p638, %s36, 1
          %s640 = smul.addr %s639, 32
          %s641 = smul.addr %s640, 4
          %s642 = scalar_lea.vmem %s0, %s641
        $region108: #{improved_moe_forward.1} parent=103 // pred_fallthru
          _
      $region104: #{improved_moe_forward.1} parent=5 // pred_fallthru
        _
      %p643 = scmp.le.s32.totalorder 1, %s36
      %p644 = scmp.lt.s32.totalorder %s36, 3
      %p645 = pnand %p643, %p644
      %p646 = pneg %p645
      // Predicated region
      $region109: #{improved_moe_forward.1} parent=5 // pred_check
        _
      $region110: #{improved_moe_forward.1} parent=5 // pred_check_branch
        %648 = sbr.rel (%p645) target = $region112
      $region111: #{improved_moe_forward.1} parent=5 // pred_region
        %s649 = ssub.s32 %s36, 1
        %p650 = scmp.lt.s32.totalorder %s41, 1
        %s651 = scalar_select %p650, %s41, 1
        %s652 = smul.addr %s651, 32
        %s653 = smul.addr %s652, 4
        %s654 = scalar_lea.vmem %s0, %s653
        %p655 = pneg %p62
        %p656 = pneg %p59
        %p657 = pneg %p83
        %p658 = pneg %p80
        %p659 = pneg %p104
        %p660 = pneg %p101
        %p661 = pneg %p125
        %p662 = pneg %p122
        %p663 = pneg %p146
        %p664 = pneg %p143
        %p665 = pneg %p167
        %p666 = pneg %p164
        %p667 = pneg %p188
        %p668 = pneg %p185
        %p669 = pneg %p209
        %p670 = pneg %p206
        %p671 = pneg %p230
        %p672 = pneg %p227
        %p673 = pneg %p251
        %p674 = pneg %p248
        %p675 = pneg %p272
        %p676 = pneg %p269
        %p677 = pneg %p293
        %p678 = pneg %p290
        %p679 = pneg %p314
        %p680 = pneg %p311
        %p681 = pneg %p335
        %p682 = pneg %p332
        %p683 = pneg %p356
        %p684 = pneg %p353
        %p685 = pneg %p377
        %p686 = pneg %p374
        %p687 = pneg %p398
        %p688 = pneg %p395
        %p689 = pneg %p419
        %p690 = pneg %p416
        %p691 = pneg %p440
        %p692 = pneg %p437
        %p693 = pneg %p461
        %p694 = pneg %p458
        %p695 = pneg %p482
        %p696 = pneg %p479
        %p697 = pneg %p503
        %p698 = pneg %p500
        %p699 = pneg %p524
        %p700 = pneg %p521
        %p701 = pneg %p550
        %p702 = pneg %p547
        %s703 = sand.u32 %s537, 1
        %s704 = scalar_lea.sflag [#allocation5], %s703
        %s705 = sand.u32 %s537, 1
        %s706 = scalar_lea.vmem [#allocation4], %s705
        %p707 = scmp.lt.s32.totalorder %s41, 1
        %s708 = scalar_select %p707, %s41, 1
        %s709 = smul.addr %s708, 32
        %s710 = smul.addr %s709, 4
        %s711 = scalar_lea.vmem %s0, %s710
        %v713 = vld [vmem:[%s1] sm:$0xff]
        %v714 = vld [vmem:[%s1 + $0x8] sm:$0xff]
        %v715 = vld [vmem:[%s1 + $0x10] sm:$0xff]
        %v716 = vld [vmem:[%s1 + $0x18] sm:$0xff]
        %v717 = vld [vmem:[%s1 + $0x20] sm:$0xff]
        %v718 = vld [vmem:[%s1 + $0x28] sm:$0xff]
        %v719 = vld [vmem:[%s1 + $0x30] sm:$0xff]
        %v720 = vld [vmem:[%s1 + $0x38] sm:$0xff]
        %v721 = vld [vmem:[%s1 + $0x40] sm:$0xff]
        %v722 = vld [vmem:[%s1 + $0x48] sm:$0xff]
        %v723 = vld [vmem:[%s1 + $0x50] sm:$0xff]
        %v724 = vld [vmem:[%s1 + $0x58] sm:$0xff]
        %v725 = vld [vmem:[%s1 + $0x60] sm:$0xff]
        %v726 = vld [vmem:[%s1 + $0x68] sm:$0xff]
        %v727 = vld [vmem:[%s1 + $0x70] sm:$0xff]
        %v728 = vld [vmem:[%s1 + $0x78] sm:$0xff]
        %v729 = vld [vmem:[%s1 + $0x80] sm:$0xff]
        %v730 = vld [vmem:[%s1 + $0x88] sm:$0xff]
        %v731 = vld [vmem:[%s1 + $0x90] sm:$0xff]
        %v732 = vld [vmem:[%s1 + $0x98] sm:$0xff]
        %v733 = vld [vmem:[%s1 + $0xa0] sm:$0xff]
        %v734 = vld [vmem:[%s1 + $0xa8] sm:$0xff]
        %v735 = vld [vmem:[%s1 + $0xb0] sm:$0xff]
        %v736 = vld [vmem:[%s1 + $0xb8] sm:$0xff]
        %v737 = vld [vmem:[%s1 + $0xc0] sm:$0xff]
        %v738 = vld [vmem:[%s1 + $0xc8] sm:$0xff]
        %v739 = vld [vmem:[%s1 + $0xd0] sm:$0xff]
        %v740 = vld [vmem:[%s1 + $0xd8] sm:$0xff]
        %v741 = vld [vmem:[%s1 + $0xe0] sm:$0xff]
        %v742 = vld [vmem:[%s1 + $0xe8] sm:$0xff]
        %v743 = vld [vmem:[%s1 + $0xf0] sm:$0xff]
        %v744 = vld [vmem:[%s1 + $0xf8] sm:$0xff]
        %v745 = vld [vmem:[%s711] sm:$0xf]
        %v746 = vld [vmem:[%s711 + $0x4] sm:$0xf]
        %v747 = vld [vmem:[%s711 + $0x8] sm:$0xf]
        %v748 = vld [vmem:[%s711 + $0xc] sm:$0xf]
        %v749 = vld [vmem:[%s711 + $0x10] sm:$0xf]
        %v750 = vld [vmem:[%s711 + $0x14] sm:$0xf]
        %v751 = vld [vmem:[%s711 + $0x18] sm:$0xf]
        %v752 = vld [vmem:[%s711 + $0x1c] sm:$0xf]
        %v753 = vld [vmem:[%s711 + $0x20] sm:$0xf]
        %v754 = vld [vmem:[%s711 + $0x24] sm:$0xf]
        %v755 = vld [vmem:[%s711 + $0x28] sm:$0xf]
        %v756 = vld [vmem:[%s711 + $0x2c] sm:$0xf]
        %v757 = vld [vmem:[%s711 + $0x30] sm:$0xf]
        %v758 = vld [vmem:[%s711 + $0x34] sm:$0xf]
        %v759 = vld [vmem:[%s711 + $0x38] sm:$0xf]
        %v760 = vld [vmem:[%s711 + $0x3c] sm:$0xf]
        %v761 = vld [vmem:[%s711 + $0x40] sm:$0xf]
        %v762 = vld [vmem:[%s711 + $0x44] sm:$0xf]
        %v763 = vld [vmem:[%s711 + $0x48] sm:$0xf]
        %v764 = vld [vmem:[%s711 + $0x4c] sm:$0xf]
        %v765 = vld [vmem:[%s711 + $0x50] sm:$0xf]
        %v766 = vld [vmem:[%s711 + $0x54] sm:$0xf]
        %v767 = vld [vmem:[%s711 + $0x58] sm:$0xf]
        %v768 = vld [vmem:[%s711 + $0x5c] sm:$0xf]
        %v769 = vld [vmem:[%s711 + $0x60] sm:$0xf]
        %v770 = vld [vmem:[%s711 + $0x64] sm:$0xf]
        %v771 = vld [vmem:[%s711 + $0x68] sm:$0xf]
        %v772 = vld [vmem:[%s711 + $0x6c] sm:$0xf]
        %v773 = vld [vmem:[%s711 + $0x70] sm:$0xf]
        %v774 = vld [vmem:[%s711 + $0x74] sm:$0xf]
        %v775 = vld [vmem:[%s711 + $0x78] sm:$0xf]
        %v776 = vld [vmem:[%s711 + $0x7c] sm:$0xf]
        %v777 = vld [vmem:[%s2] sm:$0xf]
        %v778 = vld [vmem:[%s2 + $0x4] sm:$0xf]
        %v779 = vld [vmem:[%s2 + $0x8] sm:$0xf]
        %v780 = vld [vmem:[%s2 + $0xc] sm:$0x3]
        %v781 = vld [vmem:[%s3] sm:$0x1]
        %v783 = vlaneseq
        %v784 = vshrl.u32 %v783, 7
        %v785 = vsub.s32 0, %v784
        %v786 = vrot.slane %v781, %v785
        %v820 = vunpack.c.l.b16 %v745
        %v821 = vunpack.c.l.b16 %v746
        %v822 = vunpack.c.l.b16 %v747
        %v823 = vunpack.c.l.b16 %v748
        %v824 = vunpack.c.l.b16 %v749
        %v825 = vunpack.c.l.b16 %v750
        %v826 = vunpack.c.l.b16 %v751
        %v827 = vunpack.c.l.b16 %v752
        %v828 = vunpack.c.l.b16 %v753
        %v829 = vunpack.c.l.b16 %v754
        %v830 = vunpack.c.l.b16 %v755
        %v831 = vunpack.c.l.b16 %v756
        %v832 = vunpack.c.l.b16 %v757
        %v833 = vunpack.c.l.b16 %v758
        %v834 = vunpack.c.l.b16 %v759
        %v835 = vunpack.c.l.b16 %v760
        %v836 = vunpack.c.l.b16 %v761
        %v837 = vunpack.c.l.b16 %v762
        %v838 = vunpack.c.l.b16 %v763
        %v839 = vunpack.c.l.b16 %v764
        %v840 = vunpack.c.l.b16 %v765
        %v841 = vunpack.c.l.b16 %v766
        %v842 = vunpack.c.l.b16 %v767
        %v843 = vunpack.c.l.b16 %v768
        %v844 = vunpack.c.l.b16 %v769
        %v845 = vunpack.c.l.b16 %v770
        %v846 = vunpack.c.l.b16 %v771
        %v847 = vunpack.c.l.b16 %v772
        %v848 = vunpack.c.l.b16 %v773
        %v849 = vunpack.c.l.b16 %v774
        %v850 = vunpack.c.l.b16 %v775
        %v851 = vunpack.c.l.b16 %v776
        %v852 = vpack.c.b16 %v821, %v820
        %v853 = vpack.c.b16 %v823, %v822
        %v854 = vpack.c.b16 %v825, %v824
        %v855 = vpack.c.b16 %v827, %v826
        %v856 = vpack.c.b16 %v829, %v828
        %v857 = vpack.c.b16 %v831, %v830
        %v858 = vpack.c.b16 %v833, %v832
        %v859 = vpack.c.b16 %v835, %v834
        %v860 = vpack.c.b16 %v837, %v836
        %v861 = vpack.c.b16 %v839, %v838
        %v862 = vpack.c.b16 %v841, %v840
        %v863 = vpack.c.b16 %v843, %v842
        %v864 = vpack.c.b16 %v845, %v844
        %v865 = vpack.c.b16 %v847, %v846
        %v866 = vpack.c.b16 %v849, %v848
        %v867 = vpack.c.b16 %v851, %v850
        %v872 = vunpack.c.l.b16 %v777
        %v873 = vunpack.c.l.b16 %v778
        %v874 = vunpack.c.l.b16 %v779
        %v875 = vunpack.c.l.b16 %v780
        %v876 = vpack.c.b16 %v873, %v872
        %v877 = vpack.c.b16 %v875, %v874
        %vm879 = vcmask 220160
        %v881 = vsel %vm879, %v852, 0
        %v884 = vsel %vm879, %v853, 0
        %v887 = vsel %vm879, %v854, 0
        %v890 = vsel %vm879, %v855, 0
        %v893 = vsel %vm879, %v856, 0
        %v896 = vsel %vm879, %v857, 0
        %v899 = vsel %vm879, %v858, 0
        %v902 = vsel %vm879, %v859, 0
        %v905 = vsel %vm879, %v860, 0
        %v908 = vsel %vm879, %v861, 0
        %v911 = vsel %vm879, %v862, 0
        %v914 = vsel %vm879, %v863, 0
        %v917 = vsel %vm879, %v864, 0
        %v920 = vsel %vm879, %v865, 0
        %v923 = vsel %vm879, %v866, 0
        %v926 = vsel %vm879, %v867, 0
        %vm928 = vcmask 1044480
        %vm929 = vcmask 1045504
        %v930 = vsel %vm928, 4294967295, 65535
        %v931 = vsel %vm929, %v930, 0
        %v933 = vand.u32 %v877, %v931
        %935 = vmatprep.subr.bf16.mxu0 0
        %936 = vmatpush1.bf16.msra.mxu0 0
        %937 = vmatprep.subr.bf16.mxu0 0
        %938 = vmatpush1.bf16.msra.mxu0 0
        %939 = vmatprep.subr.bf16.mxu0 0
        %940 = vmatpush1.bf16.msra.mxu0 0
        %941 = vmatprep.subr.bf16.mxu0 0
        %942 = vmatpush1.bf16.msra.mxu0 0
        %943 = vmatprep.subr.bf16.mxu0 0
        %944 = vmatpush1.bf16.msra.mxu0 0
        %945 = vmatprep.subr.bf16.mxu0 0
        %946 = vmatpush1.bf16.msra.mxu0 0
        %947 = vmatprep.subr.bf16.mxu0 0
        %948 = vmatpush1.bf16.msra.mxu0 %v933
        %949 = vmatprep.subr.bf16.mxu0 0
        %950 = vmatpush1.bf16.msra.mxu0 %v876
        %951 = vmatprep.subr.bf16.mxu0 0
        %952 = vmatpush2.bf16.msra.mxu0 0
        %953 = vmatprep.subr.bf16.mxu0 0
        %954 = vmatpush2.bf16.msra.mxu0 0
        %955 = vmatprep.subr.bf16.mxu0 0
        %956 = vmatpush2.bf16.msra.mxu0 0
        %957 = vmatprep.subr.bf16.mxu0 0
        %958 = vmatpush2.bf16.msra.mxu0 0
        %959 = vmatprep.subr.bf16.mxu0 0
        %960 = vmatpush2.bf16.msra.mxu0 0
        %961 = vmatprep.subr.bf16.mxu0 0
        %962 = vmatpush2.bf16.msra.mxu0 0
        %963 = vmatprep.subr.bf16.mxu0 0
        %964 = vmatpush2.bf16.msra.mxu0 0
        %965 = vmatprep.subr.bf16.mxu0 0
        %966 = vmatpush2.bf16.msra.mxu0 0
        %967 = vmatprep.mubr.bf16.mxu0 0
        %968 = vmatmul.mubr.bf16.gmra.mxu0 %v881
        %v969 = vpop.f32.mrf.mxu0
        %v970 = vadd.f32 %v786, %v969
        %v971 = vpop.f32.mrf.mxu0
        %v972 = vpop.f32.mrf.mxu0
        %v973 = vadd.f32 %v786, %v972
        %v974 = vpop.f32.mrf.mxu0
        %975 = vmatprep.mubr.bf16.mxu0 0
        %976 = vmatmul.mubr.bf16.gmra.mxu0 %v884
        %v977 = vpop.f32.mrf.mxu0
        %v978 = vadd.f32 %v786, %v977
        %v979 = vpop.f32.mrf.mxu0
        %v980 = vpop.f32.mrf.mxu0
        %v981 = vadd.f32 %v786, %v980
        %v982 = vpop.f32.mrf.mxu0
        %983 = vmatprep.mubr.bf16.mxu0 0
        %984 = vmatmul.mubr.bf16.gmra.mxu0 %v887
        %v985 = vpop.f32.mrf.mxu0
        %v986 = vadd.f32 %v786, %v985
        %v987 = vpop.f32.mrf.mxu0
        %v988 = vpop.f32.mrf.mxu0
        %v989 = vadd.f32 %v786, %v988
        %v990 = vpop.f32.mrf.mxu0
        %991 = vmatprep.mubr.bf16.mxu0 0
        %992 = vmatmul.mubr.bf16.gmra.mxu0 %v890
        %v993 = vpop.f32.mrf.mxu0
        %v994 = vadd.f32 %v786, %v993
        %v995 = vpop.f32.mrf.mxu0
        %v996 = vpop.f32.mrf.mxu0
        %v997 = vadd.f32 %v786, %v996
        %v998 = vpop.f32.mrf.mxu0
        %999 = vmatprep.mubr.bf16.mxu0 0
        %1000 = vmatmul.mubr.bf16.gmra.mxu0 %v893
        %v1001 = vpop.f32.mrf.mxu0
        %v1002 = vadd.f32 %v786, %v1001
        %v1003 = vpop.f32.mrf.mxu0
        %v1004 = vpop.f32.mrf.mxu0
        %v1005 = vadd.f32 %v786, %v1004
        %v1006 = vpop.f32.mrf.mxu0
        %1007 = vmatprep.mubr.bf16.mxu0 0
        %1008 = vmatmul.mubr.bf16.gmra.mxu0 %v896
        %v1009 = vpop.f32.mrf.mxu0
        %v1010 = vadd.f32 %v786, %v1009
        %v1011 = vpop.f32.mrf.mxu0
        %v1012 = vpop.f32.mrf.mxu0
        %v1013 = vadd.f32 %v786, %v1012
        %v1014 = vpop.f32.mrf.mxu0
        %1015 = vmatprep.mubr.bf16.mxu0 0
        %1016 = vmatmul.mubr.bf16.gmra.mxu0 %v899
        %v1017 = vpop.f32.mrf.mxu0
        %v1018 = vadd.f32 %v786, %v1017
        %v1019 = vpop.f32.mrf.mxu0
        %v1020 = vpop.f32.mrf.mxu0
        %v1021 = vadd.f32 %v786, %v1020
        %v1022 = vpop.f32.mrf.mxu0
        %1023 = vmatprep.mubr.bf16.mxu0 0
        %1024 = vmatmul.mubr.bf16.gmra.mxu0 %v902
        %v1025 = vpop.f32.mrf.mxu0
        %v1026 = vadd.f32 %v786, %v1025
        %v1027 = vpop.f32.mrf.mxu0
        %v1028 = vpop.f32.mrf.mxu0
        %v1029 = vadd.f32 %v786, %v1028
        %v1030 = vpop.f32.mrf.mxu0
        %1031 = vmatprep.mubr.bf16.mxu0 0
        %1032 = vmatmul.mubr.bf16.gmra.mxu0 %v905
        %v1033 = vpop.f32.mrf.mxu0
        %v1034 = vadd.f32 %v786, %v1033
        %v1035 = vpop.f32.mrf.mxu0
        %v1036 = vpop.f32.mrf.mxu0
        %v1037 = vadd.f32 %v786, %v1036
        %v1038 = vpop.f32.mrf.mxu0
        %1039 = vmatprep.mubr.bf16.mxu0 0
        %1040 = vmatmul.mubr.bf16.gmra.mxu0 %v908
        %v1041 = vpop.f32.mrf.mxu0
        %v1042 = vadd.f32 %v786, %v1041
        %v1043 = vpop.f32.mrf.mxu0
        %v1044 = vpop.f32.mrf.mxu0
        %v1045 = vadd.f32 %v786, %v1044
        %v1046 = vpop.f32.mrf.mxu0
        %1047 = vmatprep.mubr.bf16.mxu0 0
        %1048 = vmatmul.mubr.bf16.gmra.mxu0 %v911
        %v1049 = vpop.f32.mrf.mxu0
        %v1050 = vadd.f32 %v786, %v1049
        %v1051 = vpop.f32.mrf.mxu0
        %v1052 = vpop.f32.mrf.mxu0
        %v1053 = vadd.f32 %v786, %v1052
        %v1054 = vpop.f32.mrf.mxu0
        %1055 = vmatprep.mubr.bf16.mxu0 0
        %1056 = vmatmul.mubr.bf16.gmra.mxu0 %v914
        %v1057 = vpop.f32.mrf.mxu0
        %v1058 = vadd.f32 %v786, %v1057
        %v1059 = vpop.f32.mrf.mxu0
        %v1060 = vpop.f32.mrf.mxu0
        %v1061 = vadd.f32 %v786, %v1060
        %v1062 = vpop.f32.mrf.mxu0
        %1063 = vmatprep.mubr.bf16.mxu0 0
        %1064 = vmatmul.mubr.bf16.gmra.mxu0 %v917
        %v1065 = vpop.f32.mrf.mxu0
        %v1066 = vadd.f32 %v786, %v1065
        %v1067 = vpop.f32.mrf.mxu0
        %v1068 = vpop.f32.mrf.mxu0
        %v1069 = vadd.f32 %v786, %v1068
        %v1070 = vpop.f32.mrf.mxu0
        %1071 = vmatprep.mubr.bf16.mxu0 0
        %1072 = vmatmul.mubr.bf16.gmra.mxu0 %v920
        %v1073 = vpop.f32.mrf.mxu0
        %v1074 = vadd.f32 %v786, %v1073
        %v1075 = vpop.f32.mrf.mxu0
        %v1076 = vpop.f32.mrf.mxu0
        %v1077 = vadd.f32 %v786, %v1076
        %v1078 = vpop.f32.mrf.mxu0
        %1079 = vmatprep.mubr.bf16.mxu0 0
        %1080 = vmatmul.mubr.bf16.gmra.mxu0 %v923
        %v1081 = vpop.f32.mrf.mxu0
        %v1082 = vadd.f32 %v786, %v1081
        %v1083 = vpop.f32.mrf.mxu0
        %v1084 = vpop.f32.mrf.mxu0
        %v1085 = vadd.f32 %v786, %v1084
        %v1086 = vpop.f32.mrf.mxu0
        %1087 = vmatprep.mubr.bf16.mxu0 0
        %1088 = vmatmul.mubr.bf16.gmra.mxu0 %v926
        %v1089 = vpop.f32.mrf.mxu0
        %v1090 = vadd.f32 %v786, %v1089
        %v1091 = vpop.f32.mrf.mxu0
        %v1092 = vpop.f32.mrf.mxu0
        %v1093 = vadd.f32 %v786, %v1092
        %v1094 = vpop.f32.mrf.mxu0
        %1095 = vdwg.mxu0
        %v1096 = vmax.f32 %v970, 0.0
        %v1097 = vmax.f32 %v973, 0.0
        %v1098 = vmax.f32 %v978, 0.0
        %v1099 = vmax.f32 %v981, 0.0
        %v1100 = vmax.f32 %v986, 0.0
        %v1101 = vmax.f32 %v989, 0.0
        %v1102 = vmax.f32 %v994, 0.0
        %v1103 = vmax.f32 %v997, 0.0
        %v1104 = vmax.f32 %v1002, 0.0
        %v1105 = vmax.f32 %v1005, 0.0
        %v1106 = vmax.f32 %v1010, 0.0
        %v1107 = vmax.f32 %v1013, 0.0
        %v1108 = vmax.f32 %v1018, 0.0
        %v1109 = vmax.f32 %v1021, 0.0
        %v1110 = vmax.f32 %v1026, 0.0
        %v1111 = vmax.f32 %v1029, 0.0
        %v1112 = vmax.f32 %v1034, 0.0
        %v1113 = vmax.f32 %v1037, 0.0
        %v1114 = vmax.f32 %v1042, 0.0
        %v1115 = vmax.f32 %v1045, 0.0
        %v1116 = vmax.f32 %v1050, 0.0
        %v1117 = vmax.f32 %v1053, 0.0
        %v1118 = vmax.f32 %v1058, 0.0
        %v1119 = vmax.f32 %v1061, 0.0
        %v1120 = vmax.f32 %v1066, 0.0
        %v1121 = vmax.f32 %v1069, 0.0
        %v1122 = vmax.f32 %v1074, 0.0
        %v1123 = vmax.f32 %v1077, 0.0
        %v1124 = vmax.f32 %v1082, 0.0
        %v1125 = vmax.f32 %v1085, 0.0
        %v1126 = vmax.f32 %v1090, 0.0
        %v1127 = vmax.f32 %v1093, 0.0
        %v1128 = vpack.c.bf16 %v1097, %v1096
        %v1129 = vpack.c.bf16 %v1099, %v1098
        %v1130 = vpack.c.bf16 %v1101, %v1100
        %v1131 = vpack.c.bf16 %v1103, %v1102
        %v1132 = vpack.c.bf16 %v1105, %v1104
        %v1133 = vpack.c.bf16 %v1107, %v1106
        %v1134 = vpack.c.bf16 %v1109, %v1108
        %v1135 = vpack.c.bf16 %v1111, %v1110
        %v1136 = vpack.c.bf16 %v1113, %v1112
        %v1137 = vpack.c.bf16 %v1115, %v1114
        %v1138 = vpack.c.bf16 %v1117, %v1116
        %v1139 = vpack.c.bf16 %v1119, %v1118
        %v1140 = vpack.c.bf16 %v1121, %v1120
        %v1141 = vpack.c.bf16 %v1123, %v1122
        %v1142 = vpack.c.bf16 %v1125, %v1124
        %v1143 = vpack.c.bf16 %v1127, %v1126
        %v1144 = vld [vmem:[%s4] sm:$0xf]
        %v1145 = vld [vmem:[%s4 + $0x4] sm:$0xf]
        %v1146 = vld [vmem:[%s5] sm:$0x1]
        %v1148 = vlaneseq
        %v1149 = vshrl.u32 %v1148, 7
        %v1150 = vsub.s32 0, %v1149
        %v1151 = vrot.slane %v1146, %v1150
        %v1155 = vunpack.c.l.b16 %v1144
        %v1156 = vunpack.c.l.b16 %v1145
        %v1157 = vpack.c.b16 %v1156, %v1155
        %vm1159 = vcmask 130048
        %v1161 = vsel %vm1159, %v1128, 0
        %v1164 = vsel %vm1159, %v1129, 0
        %v1167 = vsel %vm1159, %v1130, 0
        %v1170 = vsel %vm1159, %v1131, 0
        %v1173 = vsel %vm1159, %v1132, 0
        %v1176 = vsel %vm1159, %v1133, 0
        %v1179 = vsel %vm1159, %v1134, 0
        %v1182 = vsel %vm1159, %v1135, 0
        %v1185 = vsel %vm1159, %v1136, 0
        %v1188 = vsel %vm1159, %v1137, 0
        %v1191 = vsel %vm1159, %v1138, 0
        %v1194 = vsel %vm1159, %v1139, 0
        %v1197 = vsel %vm1159, %v1140, 0
        %v1200 = vsel %vm1159, %v1141, 0
        %v1203 = vsel %vm1159, %v1142, 0
        %v1206 = vsel %vm1159, %v1143, 0
        %1208 = vmatprep.subr.bf16.mxu0 0
        %1209 = vmatpush1.bf16.msra.mxu0 0
        %1210 = vmatprep.subr.bf16.mxu0 0
        %1211 = vmatpush1.bf16.msra.mxu0 0
        %1212 = vmatprep.subr.bf16.mxu0 0
        %1213 = vmatpush1.bf16.msra.mxu0 0
        %1214 = vmatprep.subr.bf16.mxu0 0
        %1215 = vmatpush1.bf16.msra.mxu0 0
        %1216 = vmatprep.subr.bf16.mxu0 0
        %1217 = vmatpush1.bf16.msra.mxu0 0
        %1218 = vmatprep.subr.bf16.mxu0 0
        %1219 = vmatpush1.bf16.msra.mxu0 0
        %1220 = vmatprep.subr.bf16.mxu0 0
        %1221 = vmatpush1.bf16.msra.mxu0 0
        %1222 = vmatprep.subr.bf16.mxu0 0
        %1223 = vmatpush1.bf16.msra.mxu0 %v1157
        %1224 = vmatprep.subr.bf16.mxu0 0
        %1225 = vmatpush2.bf16.msra.mxu0 0
        %1226 = vmatprep.subr.bf16.mxu0 0
        %1227 = vmatpush2.bf16.msra.mxu0 0
        %1228 = vmatprep.subr.bf16.mxu0 0
        %1229 = vmatpush2.bf16.msra.mxu0 0
        %1230 = vmatprep.subr.bf16.mxu0 0
        %1231 = vmatpush2.bf16.msra.mxu0 0
        %1232 = vmatprep.subr.bf16.mxu0 0
        %1233 = vmatpush2.bf16.msra.mxu0 0
        %1234 = vmatprep.subr.bf16.mxu0 0
        %1235 = vmatpush2.bf16.msra.mxu0 0
        %1236 = vmatprep.subr.bf16.mxu0 0
        %1237 = vmatpush2.bf16.msra.mxu0 0
        %1238 = vmatprep.subr.bf16.mxu0 0
        %1239 = vmatpush2.bf16.msra.mxu0 0
        %1240 = vmatprep.mubr.bf16.mxu0 0
        %1241 = vmatmul.mubr.bf16.gmra.mxu0 %v1161
        %v1242 = vpop.f32.mrf.mxu0
        %v1243 = vadd.f32 %v1151, %v1242
        %v1244 = vpop.f32.mrf.mxu0
        %v1245 = vpop.f32.mrf.mxu0
        %v1246 = vadd.f32 %v1151, %v1245
        %v1247 = vpop.f32.mrf.mxu0
        %1248 = vmatprep.mubr.bf16.mxu0 0
        %1249 = vmatmul.mubr.bf16.gmra.mxu0 %v1164
        %v1250 = vpop.f32.mrf.mxu0
        %v1251 = vadd.f32 %v1151, %v1250
        %v1252 = vpop.f32.mrf.mxu0
        %v1253 = vpop.f32.mrf.mxu0
        %v1254 = vadd.f32 %v1151, %v1253
        %v1255 = vpop.f32.mrf.mxu0
        %1256 = vmatprep.mubr.bf16.mxu0 0
        %1257 = vmatmul.mubr.bf16.gmra.mxu0 %v1167
        %v1258 = vpop.f32.mrf.mxu0
        %v1259 = vadd.f32 %v1151, %v1258
        %v1260 = vpop.f32.mrf.mxu0
        %v1261 = vpop.f32.mrf.mxu0
        %v1262 = vadd.f32 %v1151, %v1261
        %v1263 = vpop.f32.mrf.mxu0
        %1264 = vmatprep.mubr.bf16.mxu0 0
        %1265 = vmatmul.mubr.bf16.gmra.mxu0 %v1170
        %v1266 = vpop.f32.mrf.mxu0
        %v1267 = vadd.f32 %v1151, %v1266
        %v1268 = vpop.f32.mrf.mxu0
        %v1269 = vpop.f32.mrf.mxu0
        %v1270 = vadd.f32 %v1151, %v1269
        %v1271 = vpop.f32.mrf.mxu0
        %1272 = vmatprep.mubr.bf16.mxu0 0
        %1273 = vmatmul.mubr.bf16.gmra.mxu0 %v1173
        %v1274 = vpop.f32.mrf.mxu0
        %v1275 = vadd.f32 %v1151, %v1274
        %v1276 = vpop.f32.mrf.mxu0
        %v1277 = vpop.f32.mrf.mxu0
        %v1278 = vadd.f32 %v1151, %v1277
        %v1279 = vpop.f32.mrf.mxu0
        %1280 = vmatprep.mubr.bf16.mxu0 0
        %1281 = vmatmul.mubr.bf16.gmra.mxu0 %v1176
        %v1282 = vpop.f32.mrf.mxu0
        %v1283 = vadd.f32 %v1151, %v1282
        %v1284 = vpop.f32.mrf.mxu0
        %v1285 = vpop.f32.mrf.mxu0
        %v1286 = vadd.f32 %v1151, %v1285
        %v1287 = vpop.f32.mrf.mxu0
        %1288 = vmatprep.mubr.bf16.mxu0 0
        %1289 = vmatmul.mubr.bf16.gmra.mxu0 %v1179
        %v1290 = vpop.f32.mrf.mxu0
        %v1291 = vadd.f32 %v1151, %v1290
        %v1292 = vpop.f32.mrf.mxu0
        %v1293 = vpop.f32.mrf.mxu0
        %v1294 = vadd.f32 %v1151, %v1293
        %v1295 = vpop.f32.mrf.mxu0
        %1296 = vmatprep.mubr.bf16.mxu0 0
        %1297 = vmatmul.mubr.bf16.gmra.mxu0 %v1182
        %v1298 = vpop.f32.mrf.mxu0
        %v1299 = vadd.f32 %v1151, %v1298
        %v1300 = vpop.f32.mrf.mxu0
        %v1301 = vpop.f32.mrf.mxu0
        %v1302 = vadd.f32 %v1151, %v1301
        %v1303 = vpop.f32.mrf.mxu0
        %1304 = vmatprep.mubr.bf16.mxu0 0
        %1305 = vmatmul.mubr.bf16.gmra.mxu0 %v1185
        %v1306 = vpop.f32.mrf.mxu0
        %v1307 = vadd.f32 %v1151, %v1306
        %v1308 = vpop.f32.mrf.mxu0
        %v1309 = vpop.f32.mrf.mxu0
        %v1310 = vadd.f32 %v1151, %v1309
        %v1311 = vpop.f32.mrf.mxu0
        %1312 = vmatprep.mubr.bf16.mxu0 0
        %1313 = vmatmul.mubr.bf16.gmra.mxu0 %v1188
        %v1314 = vpop.f32.mrf.mxu0
        %v1315 = vadd.f32 %v1151, %v1314
        %v1316 = vpop.f32.mrf.mxu0
        %v1317 = vpop.f32.mrf.mxu0
        %v1318 = vadd.f32 %v1151, %v1317
        %v1319 = vpop.f32.mrf.mxu0
        %1320 = vmatprep.mubr.bf16.mxu0 0
        %1321 = vmatmul.mubr.bf16.gmra.mxu0 %v1191
        %v1322 = vpop.f32.mrf.mxu0
        %v1323 = vadd.f32 %v1151, %v1322
        %v1324 = vpop.f32.mrf.mxu0
        %v1325 = vpop.f32.mrf.mxu0
        %v1326 = vadd.f32 %v1151, %v1325
        %v1327 = vpop.f32.mrf.mxu0
        %1328 = vmatprep.mubr.bf16.mxu0 0
        %1329 = vmatmul.mubr.bf16.gmra.mxu0 %v1194
        %v1330 = vpop.f32.mrf.mxu0
        %v1331 = vadd.f32 %v1151, %v1330
        %v1332 = vpop.f32.mrf.mxu0
        %v1333 = vpop.f32.mrf.mxu0
        %v1334 = vadd.f32 %v1151, %v1333
        %v1335 = vpop.f32.mrf.mxu0
        %1336 = vmatprep.mubr.bf16.mxu0 0
        %1337 = vmatmul.mubr.bf16.gmra.mxu0 %v1197
        %v1338 = vpop.f32.mrf.mxu0
        %v1339 = vadd.f32 %v1151, %v1338
        %v1340 = vpop.f32.mrf.mxu0
        %v1341 = vpop.f32.mrf.mxu0
        %v1342 = vadd.f32 %v1151, %v1341
        %v1343 = vpop.f32.mrf.mxu0
        %1344 = vmatprep.mubr.bf16.mxu0 0
        %1345 = vmatmul.mubr.bf16.gmra.mxu0 %v1200
        %v1346 = vpop.f32.mrf.mxu0
        %v1347 = vadd.f32 %v1151, %v1346
        %v1348 = vpop.f32.mrf.mxu0
        %v1349 = vpop.f32.mrf.mxu0
        %v1350 = vadd.f32 %v1151, %v1349
        %v1351 = vpop.f32.mrf.mxu0
        %1352 = vmatprep.mubr.bf16.mxu0 0
        %1353 = vmatmul.mubr.bf16.gmra.mxu0 %v1203
        %v1354 = vpop.f32.mrf.mxu0
        %v1355 = vadd.f32 %v1151, %v1354
        %v1356 = vpop.f32.mrf.mxu0
        %v1357 = vpop.f32.mrf.mxu0
        %v1358 = vadd.f32 %v1151, %v1357
        %v1359 = vpop.f32.mrf.mxu0
        %1360 = vmatprep.mubr.bf16.mxu0 0
        %1361 = vmatmul.mubr.bf16.gmra.mxu0 %v1206
        %v1362 = vpop.f32.mrf.mxu0
        %v1363 = vadd.f32 %v1151, %v1362
        %v1364 = vpop.f32.mrf.mxu0
        %v1365 = vpop.f32.mrf.mxu0
        %v1366 = vadd.f32 %v1151, %v1365
        %v1367 = vpop.f32.mrf.mxu0
        %1368 = vdwg.mxu0
        %v1369 = vmax.f32 %v1243, 0.0
        %v1370 = vmax.f32 %v1246, 0.0
        %v1371 = vmax.f32 %v1251, 0.0
        %v1372 = vmax.f32 %v1254, 0.0
        %v1373 = vmax.f32 %v1259, 0.0
        %v1374 = vmax.f32 %v1262, 0.0
        %v1375 = vmax.f32 %v1267, 0.0
        %v1376 = vmax.f32 %v1270, 0.0
        %v1377 = vmax.f32 %v1275, 0.0
        %v1378 = vmax.f32 %v1278, 0.0
        %v1379 = vmax.f32 %v1283, 0.0
        %v1380 = vmax.f32 %v1286, 0.0
        %v1381 = vmax.f32 %v1291, 0.0
        %v1382 = vmax.f32 %v1294, 0.0
        %v1383 = vmax.f32 %v1299, 0.0
        %v1384 = vmax.f32 %v1302, 0.0
        %v1385 = vmax.f32 %v1307, 0.0
        %v1386 = vmax.f32 %v1310, 0.0
        %v1387 = vmax.f32 %v1315, 0.0
        %v1388 = vmax.f32 %v1318, 0.0
        %v1389 = vmax.f32 %v1323, 0.0
        %v1390 = vmax.f32 %v1326, 0.0
        %v1391 = vmax.f32 %v1331, 0.0
        %v1392 = vmax.f32 %v1334, 0.0
        %v1393 = vmax.f32 %v1339, 0.0
        %v1394 = vmax.f32 %v1342, 0.0
        %v1395 = vmax.f32 %v1347, 0.0
        %v1396 = vmax.f32 %v1350, 0.0
        %v1397 = vmax.f32 %v1355, 0.0
        %v1398 = vmax.f32 %v1358, 0.0
        %v1399 = vmax.f32 %v1363, 0.0
        %v1400 = vmax.f32 %v1366, 0.0
        %v1401 = vld [vmem:[%s6] sm:$0x1]
        %v1403 = vlaneseq
        %v1404 = vshrl.u32 %v1403, 7
        %v1405 = vsub.s32 0, %v1404
        %v1406 = vrot.slane %v1401, %v1405
        %v1408 = vmul.f32 %v1369, %v1406
        %v1409 = vmul.f32 %v1370, %v1406
        %v1410 = vmul.f32 %v1371, %v1406
        %v1411 = vmul.f32 %v1372, %v1406
        %v1412 = vmul.f32 %v1373, %v1406
        %v1413 = vmul.f32 %v1374, %v1406
        %v1414 = vmul.f32 %v1375, %v1406
        %v1415 = vmul.f32 %v1376, %v1406
        %v1416 = vmul.f32 %v1377, %v1406
        %v1417 = vmul.f32 %v1378, %v1406
        %v1418 = vmul.f32 %v1379, %v1406
        %v1419 = vmul.f32 %v1380, %v1406
        %v1420 = vmul.f32 %v1381, %v1406
        %v1421 = vmul.f32 %v1382, %v1406
        %v1422 = vmul.f32 %v1383, %v1406
        %v1423 = vmul.f32 %v1384, %v1406
        %v1424 = vmul.f32 %v1385, %v1406
        %v1425 = vmul.f32 %v1386, %v1406
        %v1426 = vmul.f32 %v1387, %v1406
        %v1427 = vmul.f32 %v1388, %v1406
        %v1428 = vmul.f32 %v1389, %v1406
        %v1429 = vmul.f32 %v1390, %v1406
        %v1430 = vmul.f32 %v1391, %v1406
        %v1431 = vmul.f32 %v1392, %v1406
        %v1432 = vmul.f32 %v1393, %v1406
        %v1433 = vmul.f32 %v1394, %v1406
        %v1434 = vmul.f32 %v1395, %v1406
        %v1435 = vmul.f32 %v1396, %v1406
        %v1436 = vmul.f32 %v1397, %v1406
        %v1437 = vmul.f32 %v1398, %v1406
        %v1438 = vmul.f32 %v1399, %v1406
        %v1439 = vmul.f32 %v1400, %v1406
        %vm1440 = vcmask 31744
        %v1441 = vsel %vm1440, %v1408, 0.0
        %1442 = vadd.xlane.f32.xlu0 %v1441
        %v1443 = vpop.xlane.xlu0 %1442
        %v1444 = vsel %vm1440, %v1409, 0.0
        %1445 = vadd.xlane.f32.xlu0 %v1444
        %v1446 = vpop.xlane.xlu0 %1445
        %v1447 = vsel %vm1440, %v1410, 0.0
        %1448 = vadd.xlane.f32.xlu0 %v1447
        %v1449 = vpop.xlane.xlu0 %1448
        %v1450 = vsel %vm1440, %v1411, 0.0
        %1451 = vadd.xlane.f32.xlu0 %v1450
        %v1452 = vpop.xlane.xlu0 %1451
        %v1453 = vsel %vm1440, %v1412, 0.0
        %1454 = vadd.xlane.f32.xlu0 %v1453
        %v1455 = vpop.xlane.xlu0 %1454
        %v1456 = vsel %vm1440, %v1413, 0.0
        %1457 = vadd.xlane.f32.xlu0 %v1456
        %v1458 = vpop.xlane.xlu0 %1457
        %v1459 = vsel %vm1440, %v1414, 0.0
        %1460 = vadd.xlane.f32.xlu0 %v1459
        %v1461 = vpop.xlane.xlu0 %1460
        %v1462 = vsel %vm1440, %v1415, 0.0
        %1463 = vadd.xlane.f32.xlu0 %v1462
        %v1464 = vpop.xlane.xlu0 %1463
        %v1465 = vsel %vm1440, %v1416, 0.0
        %1466 = vadd.xlane.f32.xlu0 %v1465
        %v1467 = vpop.xlane.xlu0 %1466
        %v1468 = vsel %vm1440, %v1417, 0.0
        %1469 = vadd.xlane.f32.xlu0 %v1468
        %v1470 = vpop.xlane.xlu0 %1469
        %v1471 = vsel %vm1440, %v1418, 0.0
        %1472 = vadd.xlane.f32.xlu0 %v1471
        %v1473 = vpop.xlane.xlu0 %1472
        %v1474 = vsel %vm1440, %v1419, 0.0
        %1475 = vadd.xlane.f32.xlu0 %v1474
        %v1476 = vpop.xlane.xlu0 %1475
        %v1477 = vsel %vm1440, %v1420, 0.0
        %1478 = vadd.xlane.f32.xlu0 %v1477
        %v1479 = vpop.xlane.xlu0 %1478
        %v1480 = vsel %vm1440, %v1421, 0.0
        %1481 = vadd.xlane.f32.xlu0 %v1480
        %v1482 = vpop.xlane.xlu0 %1481
        %v1483 = vsel %vm1440, %v1422, 0.0
        %1484 = vadd.xlane.f32.xlu0 %v1483
        %v1485 = vpop.xlane.xlu0 %1484
        %v1486 = vsel %vm1440, %v1423, 0.0
        %1487 = vadd.xlane.f32.xlu0 %v1486
        %v1488 = vpop.xlane.xlu0 %1487
        %v1489 = vsel %vm1440, %v1424, 0.0
        %1490 = vadd.xlane.f32.xlu0 %v1489
        %v1491 = vpop.xlane.xlu0 %1490
        %v1492 = vsel %vm1440, %v1425, 0.0
        %1493 = vadd.xlane.f32.xlu0 %v1492
        %v1494 = vpop.xlane.xlu0 %1493
        %v1495 = vsel %vm1440, %v1426, 0.0
        %1496 = vadd.xlane.f32.xlu0 %v1495
        %v1497 = vpop.xlane.xlu0 %1496
        %v1498 = vsel %vm1440, %v1427, 0.0
        %1499 = vadd.xlane.f32.xlu0 %v1498
        %v1500 = vpop.xlane.xlu0 %1499
        %v1501 = vsel %vm1440, %v1428, 0.0
        %1502 = vadd.xlane.f32.xlu0 %v1501
        %v1503 = vpop.xlane.xlu0 %1502
        %v1504 = vsel %vm1440, %v1429, 0.0
        %1505 = vadd.xlane.f32.xlu0 %v1504
        %v1506 = vpop.xlane.xlu0 %1505
        %v1507 = vsel %vm1440, %v1430, 0.0
        %1508 = vadd.xlane.f32.xlu0 %v1507
        %v1509 = vpop.xlane.xlu0 %1508
        %v1510 = vsel %vm1440, %v1431, 0.0
        %1511 = vadd.xlane.f32.xlu0 %v1510
        %v1512 = vpop.xlane.xlu0 %1511
        %v1513 = vsel %vm1440, %v1432, 0.0
        %1514 = vadd.xlane.f32.xlu0 %v1513
        %v1515 = vpop.xlane.xlu0 %1514
        %v1516 = vsel %vm1440, %v1433, 0.0
        %1517 = vadd.xlane.f32.xlu0 %v1516
        %v1518 = vpop.xlane.xlu0 %1517
        %v1519 = vsel %vm1440, %v1434, 0.0
        %1520 = vadd.xlane.f32.xlu0 %v1519
        %v1521 = vpop.xlane.xlu0 %1520
        %v1522 = vsel %vm1440, %v1435, 0.0
        %1523 = vadd.xlane.f32.xlu0 %v1522
        %v1524 = vpop.xlane.xlu0 %1523
        %v1525 = vsel %vm1440, %v1436, 0.0
        %1526 = vadd.xlane.f32.xlu0 %v1525
        %v1527 = vpop.xlane.xlu0 %1526
        %v1528 = vsel %vm1440, %v1437, 0.0
        %1529 = vadd.xlane.f32.xlu0 %v1528
        %v1530 = vpop.xlane.xlu0 %1529
        %v1531 = vsel %vm1440, %v1438, 0.0
        %1532 = vadd.xlane.f32.xlu0 %v1531
        %v1533 = vpop.xlane.xlu0 %1532
        %v1534 = vsel %vm1440, %v1439, 0.0
        %1535 = vadd.xlane.f32.xlu0 %v1534
        %v1536 = vpop.xlane.xlu0 %1535
        %v1537 = vld [vmem:[#allocation2] sm:$0x1]
        %v1539 = vlaneseq
        %v1540 = vshrl.u32 %v1539, 7
        %v1541 = vsub.s32 0, %v1540
        %v1542 = vrot.slane %v1537, %v1541
        %v1544 = vadd.f32 %v1443, %v1542
        %v1545 = vadd.f32 %v1446, %v1542
        %v1546 = vadd.f32 %v1449, %v1542
        %v1547 = vadd.f32 %v1452, %v1542
        %v1548 = vadd.f32 %v1455, %v1542
        %v1549 = vadd.f32 %v1458, %v1542
        %v1550 = vadd.f32 %v1461, %v1542
        %v1551 = vadd.f32 %v1464, %v1542
        %v1552 = vadd.f32 %v1467, %v1542
        %v1553 = vadd.f32 %v1470, %v1542
        %v1554 = vadd.f32 %v1473, %v1542
        %v1555 = vadd.f32 %v1476, %v1542
        %v1556 = vadd.f32 %v1479, %v1542
        %v1557 = vadd.f32 %v1482, %v1542
        %v1558 = vadd.f32 %v1485, %v1542
        %v1559 = vadd.f32 %v1488, %v1542
        %v1560 = vadd.f32 %v1491, %v1542
        %v1561 = vadd.f32 %v1494, %v1542
        %v1562 = vadd.f32 %v1497, %v1542
        %v1563 = vadd.f32 %v1500, %v1542
        %v1564 = vadd.f32 %v1503, %v1542
        %v1565 = vadd.f32 %v1506, %v1542
        %v1566 = vadd.f32 %v1509, %v1542
        %v1567 = vadd.f32 %v1512, %v1542
        %v1568 = vadd.f32 %v1515, %v1542
        %v1569 = vadd.f32 %v1518, %v1542
        %v1570 = vadd.f32 %v1521, %v1542
        %v1571 = vadd.f32 %v1524, %v1542
        %v1572 = vadd.f32 %v1527, %v1542
        %v1573 = vadd.f32 %v1530, %v1542
        %v1574 = vadd.f32 %v1533, %v1542
        %v1575 = vadd.f32 %v1536, %v1542
        %v1576 = vxor.u32 %v1544, 2147483648
        %v1577 = vxor.u32 %v1545, 2147483648
        %v1578 = vxor.u32 %v1546, 2147483648
        %v1579 = vxor.u32 %v1547, 2147483648
        %v1580 = vxor.u32 %v1548, 2147483648
        %v1581 = vxor.u32 %v1549, 2147483648
        %v1582 = vxor.u32 %v1550, 2147483648
        %v1583 = vxor.u32 %v1551, 2147483648
        %v1584 = vxor.u32 %v1552, 2147483648
        %v1585 = vxor.u32 %v1553, 2147483648
        %v1586 = vxor.u32 %v1554, 2147483648
        %v1587 = vxor.u32 %v1555, 2147483648
        %v1588 = vxor.u32 %v1556, 2147483648
        %v1589 = vxor.u32 %v1557, 2147483648
        %v1590 = vxor.u32 %v1558, 2147483648
        %v1591 = vxor.u32 %v1559, 2147483648
        %v1592 = vxor.u32 %v1560, 2147483648
        %v1593 = vxor.u32 %v1561, 2147483648
        %v1594 = vxor.u32 %v1562, 2147483648
        %v1595 = vxor.u32 %v1563, 2147483648
        %v1596 = vxor.u32 %v1564, 2147483648
        %v1597 = vxor.u32 %v1565, 2147483648
        %v1598 = vxor.u32 %v1566, 2147483648
        %v1599 = vxor.u32 %v1567, 2147483648
        %v1600 = vxor.u32 %v1568, 2147483648
        %v1601 = vxor.u32 %v1569, 2147483648
        %v1602 = vxor.u32 %v1570, 2147483648
        %v1603 = vxor.u32 %v1571, 2147483648
        %v1604 = vxor.u32 %v1572, 2147483648
        %v1605 = vxor.u32 %v1573, 2147483648
        %v1606 = vxor.u32 %v1574, 2147483648
        %v1607 = vxor.u32 %v1575, 2147483648
        %v1608 = vmul.f32 %v1576, 1.442695
        %v1609 = vpow.pop %v1608
        %v1610 = vmul.f32 %v1577, 1.442695
        %v1611 = vpow.pop %v1610
        %v1612 = vmul.f32 %v1578, 1.442695
        %v1613 = vpow.pop %v1612
        %v1614 = vmul.f32 %v1579, 1.442695
        %v1615 = vpow.pop %v1614
        %v1616 = vmul.f32 %v1580, 1.442695
        %v1617 = vpow.pop %v1616
        %v1618 = vmul.f32 %v1581, 1.442695
        %v1619 = vpow.pop %v1618
        %v1620 = vmul.f32 %v1582, 1.442695
        %v1621 = vpow.pop %v1620
        %v1622 = vmul.f32 %v1583, 1.442695
        %v1623 = vpow.pop %v1622
        %v1624 = vmul.f32 %v1584, 1.442695
        %v1625 = vpow.pop %v1624
        %v1626 = vmul.f32 %v1585, 1.442695
        %v1627 = vpow.pop %v1626
        %v1628 = vmul.f32 %v1586, 1.442695
        %v1629 = vpow.pop %v1628
        %v1630 = vmul.f32 %v1587, 1.442695
        %v1631 = vpow.pop %v1630
        %v1632 = vmul.f32 %v1588, 1.442695
        %v1633 = vpow.pop %v1632
        %v1634 = vmul.f32 %v1589, 1.442695
        %v1635 = vpow.pop %v1634
        %v1636 = vmul.f32 %v1590, 1.442695
        %v1637 = vpow.pop %v1636
        %v1638 = vmul.f32 %v1591, 1.442695
        %v1639 = vpow.pop %v1638
        %v1640 = vmul.f32 %v1592, 1.442695
        %v1641 = vpow.pop %v1640
        %v1642 = vmul.f32 %v1593, 1.442695
        %v1643 = vpow.pop %v1642
        %v1644 = vmul.f32 %v1594, 1.442695
        %v1645 = vpow.pop %v1644
        %v1646 = vmul.f32 %v1595, 1.442695
        %v1647 = vpow.pop %v1646
        %v1648 = vmul.f32 %v1596, 1.442695
        %v1649 = vpow.pop %v1648
        %v1650 = vmul.f32 %v1597, 1.442695
        %v1651 = vpow.pop %v1650
        %v1652 = vmul.f32 %v1598, 1.442695
        %v1653 = vpow.pop %v1652
        %v1654 = vmul.f32 %v1599, 1.442695
        %v1655 = vpow.pop %v1654
        %v1656 = vmul.f32 %v1600, 1.442695
        %v1657 = vpow.pop %v1656
        %v1658 = vmul.f32 %v1601, 1.442695
        %v1659 = vpow.pop %v1658
        %v1660 = vmul.f32 %v1602, 1.442695
        %v1661 = vpow.pop %v1660
        %v1662 = vmul.f32 %v1603, 1.442695
        %v1663 = vpow.pop %v1662
        %v1664 = vmul.f32 %v1604, 1.442695
        %v1665 = vpow.pop %v1664
        %v1666 = vmul.f32 %v1605, 1.442695
        %v1667 = vpow.pop %v1666
        %v1668 = vmul.f32 %v1606, 1.442695
        %v1669 = vpow.pop %v1668
        %v1670 = vmul.f32 %v1607, 1.442695
        %v1671 = vpow.pop %v1670
        %v1672 = vadd.f32 %v1609, 1.0
        %v1673 = vadd.f32 %v1611, 1.0
        %v1674 = vadd.f32 %v1613, 1.0
        %v1675 = vadd.f32 %v1615, 1.0
        %v1676 = vadd.f32 %v1617, 1.0
        %v1677 = vadd.f32 %v1619, 1.0
        %v1678 = vadd.f32 %v1621, 1.0
        %v1679 = vadd.f32 %v1623, 1.0
        %v1680 = vadd.f32 %v1625, 1.0
        %v1681 = vadd.f32 %v1627, 1.0
        %v1682 = vadd.f32 %v1629, 1.0
        %v1683 = vadd.f32 %v1631, 1.0
        %v1684 = vadd.f32 %v1633, 1.0
        %v1685 = vadd.f32 %v1635, 1.0
        %v1686 = vadd.f32 %v1637, 1.0
        %v1687 = vadd.f32 %v1639, 1.0
        %v1688 = vadd.f32 %v1641, 1.0
        %v1689 = vadd.f32 %v1643, 1.0
        %v1690 = vadd.f32 %v1645, 1.0
        %v1691 = vadd.f32 %v1647, 1.0
        %v1692 = vadd.f32 %v1649, 1.0
        %v1693 = vadd.f32 %v1651, 1.0
        %v1694 = vadd.f32 %v1653, 1.0
        %v1695 = vadd.f32 %v1655, 1.0
        %v1696 = vadd.f32 %v1657, 1.0
        %v1697 = vadd.f32 %v1659, 1.0
        %v1698 = vadd.f32 %v1661, 1.0
        %v1699 = vadd.f32 %v1663, 1.0
        %v1700 = vadd.f32 %v1665, 1.0
        %v1701 = vadd.f32 %v1667, 1.0
        %v1702 = vadd.f32 %v1669, 1.0
        %v1703 = vadd.f32 %v1671, 1.0
        %v1704 = vrcp.pop %v1672
        %v1705 = vmul.f32 1.0, %v1704
        %v1706 = vrcp.pop %v1673
        %v1707 = vmul.f32 1.0, %v1706
        %v1708 = vrcp.pop %v1674
        %v1709 = vmul.f32 1.0, %v1708
        %v1710 = vrcp.pop %v1675
        %v1711 = vmul.f32 1.0, %v1710
        %v1712 = vrcp.pop %v1676
        %v1713 = vmul.f32 1.0, %v1712
        %v1714 = vrcp.pop %v1677
        %v1715 = vmul.f32 1.0, %v1714
        %v1716 = vrcp.pop %v1678
        %v1717 = vmul.f32 1.0, %v1716
        %v1718 = vrcp.pop %v1679
        %v1719 = vmul.f32 1.0, %v1718
        %v1720 = vrcp.pop %v1680
        %v1721 = vmul.f32 1.0, %v1720
        %v1722 = vrcp.pop %v1681
        %v1723 = vmul.f32 1.0, %v1722
        %v1724 = vrcp.pop %v1682
        %v1725 = vmul.f32 1.0, %v1724
        %v1726 = vrcp.pop %v1683
        %v1727 = vmul.f32 1.0, %v1726
        %v1728 = vrcp.pop %v1684
        %v1729 = vmul.f32 1.0, %v1728
        %v1730 = vrcp.pop %v1685
        %v1731 = vmul.f32 1.0, %v1730
        %v1732 = vrcp.pop %v1686
        %v1733 = vmul.f32 1.0, %v1732
        %v1734 = vrcp.pop %v1687
        %v1735 = vmul.f32 1.0, %v1734
        %v1736 = vrcp.pop %v1688
        %v1737 = vmul.f32 1.0, %v1736
        %v1738 = vrcp.pop %v1689
        %v1739 = vmul.f32 1.0, %v1738
        %v1740 = vrcp.pop %v1690
        %v1741 = vmul.f32 1.0, %v1740
        %v1742 = vrcp.pop %v1691
        %v1743 = vmul.f32 1.0, %v1742
        %v1744 = vrcp.pop %v1692
        %v1745 = vmul.f32 1.0, %v1744
        %v1746 = vrcp.pop %v1693
        %v1747 = vmul.f32 1.0, %v1746
        %v1748 = vrcp.pop %v1694
        %v1749 = vmul.f32 1.0, %v1748
        %v1750 = vrcp.pop %v1695
        %v1751 = vmul.f32 1.0, %v1750
        %v1752 = vrcp.pop %v1696
        %v1753 = vmul.f32 1.0, %v1752
        %v1754 = vrcp.pop %v1697
        %v1755 = vmul.f32 1.0, %v1754
        %v1756 = vrcp.pop %v1698
        %v1757 = vmul.f32 1.0, %v1756
        %v1758 = vrcp.pop %v1699
        %v1759 = vmul.f32 1.0, %v1758
        %v1760 = vrcp.pop %v1700
        %v1761 = vmul.f32 1.0, %v1760
        %v1762 = vrcp.pop %v1701
        %v1763 = vmul.f32 1.0, %v1762
        %v1764 = vrcp.pop %v1702
        %v1765 = vmul.f32 1.0, %v1764
        %v1766 = vrcp.pop %v1703
        %v1767 = vmul.f32 1.0, %v1766
        %1769 = vset.pattern.permute.xlu0 0
        %1770 = vperm.xlu0 %1769, %v1705
        %v1771 = vpop.permute.xlu0 %1770
        %1774 = vset.pattern.permute.xlu0 0
        %1775 = vperm.xlu0 %1774, %v1707
        %v1776 = vpop.permute.xlu0 %1775
        %1779 = vset.pattern.permute.xlu0 0
        %1780 = vperm.xlu0 %1779, %v1709
        %v1781 = vpop.permute.xlu0 %1780
        %1784 = vset.pattern.permute.xlu0 0
        %1785 = vperm.xlu0 %1784, %v1711
        %v1786 = vpop.permute.xlu0 %1785
        %1789 = vset.pattern.permute.xlu0 0
        %1790 = vperm.xlu0 %1789, %v1713
        %v1791 = vpop.permute.xlu0 %1790
        %1794 = vset.pattern.permute.xlu0 0
        %1795 = vperm.xlu0 %1794, %v1715
        %v1796 = vpop.permute.xlu0 %1795
        %1799 = vset.pattern.permute.xlu0 0
        %1800 = vperm.xlu0 %1799, %v1717
        %v1801 = vpop.permute.xlu0 %1800
        %1804 = vset.pattern.permute.xlu0 0
        %1805 = vperm.xlu0 %1804, %v1719
        %v1806 = vpop.permute.xlu0 %1805
        %1809 = vset.pattern.permute.xlu0 0
        %1810 = vperm.xlu0 %1809, %v1721
        %v1811 = vpop.permute.xlu0 %1810
        %1814 = vset.pattern.permute.xlu0 0
        %1815 = vperm.xlu0 %1814, %v1723
        %v1816 = vpop.permute.xlu0 %1815
        %1819 = vset.pattern.permute.xlu0 0
        %1820 = vperm.xlu0 %1819, %v1725
        %v1821 = vpop.permute.xlu0 %1820
        %1824 = vset.pattern.permute.xlu0 0
        %1825 = vperm.xlu0 %1824, %v1727
        %v1826 = vpop.permute.xlu0 %1825
        %1829 = vset.pattern.permute.xlu0 0
        %1830 = vperm.xlu0 %1829, %v1729
        %v1831 = vpop.permute.xlu0 %1830
        %1834 = vset.pattern.permute.xlu0 0
        %1835 = vperm.xlu0 %1834, %v1731
        %v1836 = vpop.permute.xlu0 %1835
        %1839 = vset.pattern.permute.xlu0 0
        %1840 = vperm.xlu0 %1839, %v1733
        %v1841 = vpop.permute.xlu0 %1840
        %1844 = vset.pattern.permute.xlu0 0
        %1845 = vperm.xlu0 %1844, %v1735
        %v1846 = vpop.permute.xlu0 %1845
        %1849 = vset.pattern.permute.xlu0 0
        %1850 = vperm.xlu0 %1849, %v1737
        %v1851 = vpop.permute.xlu0 %1850
        %1854 = vset.pattern.permute.xlu0 0
        %1855 = vperm.xlu0 %1854, %v1739
        %v1856 = vpop.permute.xlu0 %1855
        %1859 = vset.pattern.permute.xlu0 0
        %1860 = vperm.xlu0 %1859, %v1741
        %v1861 = vpop.permute.xlu0 %1860
        %1864 = vset.pattern.permute.xlu0 0
        %1865 = vperm.xlu0 %1864, %v1743
        %v1866 = vpop.permute.xlu0 %1865
        %1869 = vset.pattern.permute.xlu0 0
        %1870 = vperm.xlu0 %1869, %v1745
        %v1871 = vpop.permute.xlu0 %1870
        %1874 = vset.pattern.permute.xlu0 0
        %1875 = vperm.xlu0 %1874, %v1747
        %v1876 = vpop.permute.xlu0 %1875
        %1879 = vset.pattern.permute.xlu0 0
        %1880 = vperm.xlu0 %1879, %v1749
        %v1881 = vpop.permute.xlu0 %1880
        %1884 = vset.pattern.permute.xlu0 0
        %1885 = vperm.xlu0 %1884, %v1751
        %v1886 = vpop.permute.xlu0 %1885
        %1889 = vset.pattern.permute.xlu0 0
        %1890 = vperm.xlu0 %1889, %v1753
        %v1891 = vpop.permute.xlu0 %1890
        %1894 = vset.pattern.permute.xlu0 0
        %1895 = vperm.xlu0 %1894, %v1755
        %v1896 = vpop.permute.xlu0 %1895
        %1899 = vset.pattern.permute.xlu0 0
        %1900 = vperm.xlu0 %1899, %v1757
        %v1901 = vpop.permute.xlu0 %1900
        %1904 = vset.pattern.permute.xlu0 0
        %1905 = vperm.xlu0 %1904, %v1759
        %v1906 = vpop.permute.xlu0 %1905
        %1909 = vset.pattern.permute.xlu0 0
        %1910 = vperm.xlu0 %1909, %v1761
        %v1911 = vpop.permute.xlu0 %1910
        %1914 = vset.pattern.permute.xlu0 0
        %1915 = vperm.xlu0 %1914, %v1763
        %v1916 = vpop.permute.xlu0 %1915
        %1919 = vset.pattern.permute.xlu0 0
        %1920 = vperm.xlu0 %1919, %v1765
        %v1921 = vpop.permute.xlu0 %1920
        %1924 = vset.pattern.permute.xlu0 0
        %1925 = vperm.xlu0 %1924, %v1767
        %v1926 = vpop.permute.xlu0 %1925
        %v1928 = vmul.f32 %v1096, %v1771
        %v1929 = vmul.f32 %v1097, %v1776
        %v1930 = vmul.f32 %v1098, %v1781
        %v1931 = vmul.f32 %v1099, %v1786
        %v1932 = vmul.f32 %v1100, %v1791
        %v1933 = vmul.f32 %v1101, %v1796
        %v1934 = vmul.f32 %v1102, %v1801
        %v1935 = vmul.f32 %v1103, %v1806
        %v1936 = vmul.f32 %v1104, %v1811
        %v1937 = vmul.f32 %v1105, %v1816
        %v1938 = vmul.f32 %v1106, %v1821
        %v1939 = vmul.f32 %v1107, %v1826
        %v1940 = vmul.f32 %v1108, %v1831
        %v1941 = vmul.f32 %v1109, %v1836
        %v1942 = vmul.f32 %v1110, %v1841
        %v1943 = vmul.f32 %v1111, %v1846
        %v1944 = vmul.f32 %v1112, %v1851
        %v1945 = vmul.f32 %v1113, %v1856
        %v1946 = vmul.f32 %v1114, %v1861
        %v1947 = vmul.f32 %v1115, %v1866
        %v1948 = vmul.f32 %v1116, %v1871
        %v1949 = vmul.f32 %v1117, %v1876
        %v1950 = vmul.f32 %v1118, %v1881
        %v1951 = vmul.f32 %v1119, %v1886
        %v1952 = vmul.f32 %v1120, %v1891
        %v1953 = vmul.f32 %v1121, %v1896
        %v1954 = vmul.f32 %v1122, %v1901
        %v1955 = vmul.f32 %v1123, %v1906
        %v1956 = vmul.f32 %v1124, %v1911
        %v1957 = vmul.f32 %v1125, %v1916
        %v1958 = vmul.f32 %v1126, %v1921
        %v1959 = vmul.f32 %v1127, %v1926
        %v1960 = vsel %vm1159, %v1928, 0.0
        %v1961 = vsel %vm1159, %v1929, 0.0
        %v1962 = vadd.f32 %v1960, %v1961
        %v1963 = vsel %vm1159, %v1930, 0.0
        %v1964 = vadd.f32 %v1962, %v1963
        %v1965 = vsel %vm1159, %v1931, 0.0
        %v1966 = vadd.f32 %v1964, %v1965
        %v1967 = vsel %vm1159, %v1932, 0.0
        %v1968 = vadd.f32 %v1966, %v1967
        %v1969 = vsel %vm1159, %v1933, 0.0
        %v1970 = vadd.f32 %v1968, %v1969
        %v1971 = vsel %vm1159, %v1934, 0.0
        %v1972 = vadd.f32 %v1970, %v1971
        %v1973 = vsel %vm1159, %v1935, 0.0
        %v1974 = vadd.f32 %v1972, %v1973
        %v1975 = vsel %vm1159, %v1936, 0.0
        %v1976 = vadd.f32 %v1974, %v1975
        %v1977 = vsel %vm1159, %v1937, 0.0
        %v1978 = vadd.f32 %v1976, %v1977
        %v1979 = vsel %vm1159, %v1938, 0.0
        %v1980 = vadd.f32 %v1978, %v1979
        %v1981 = vsel %vm1159, %v1939, 0.0
        %v1982 = vadd.f32 %v1980, %v1981
        %v1983 = vsel %vm1159, %v1940, 0.0
        %v1984 = vadd.f32 %v1982, %v1983
        %v1985 = vsel %vm1159, %v1941, 0.0
        %v1986 = vadd.f32 %v1984, %v1985
        %v1987 = vsel %vm1159, %v1942, 0.0
        %v1988 = vadd.f32 %v1986, %v1987
        %v1989 = vsel %vm1159, %v1943, 0.0
        %v1990 = vadd.f32 %v1988, %v1989
        %v1991 = vsel %vm1159, %v1944, 0.0
        %v1992 = vadd.f32 %v1990, %v1991
        %v1993 = vsel %vm1159, %v1945, 0.0
        %v1994 = vadd.f32 %v1992, %v1993
        %v1995 = vsel %vm1159, %v1946, 0.0
        %v1996 = vadd.f32 %v1994, %v1995
        %v1997 = vsel %vm1159, %v1947, 0.0
        %v1998 = vadd.f32 %v1996, %v1997
        %v1999 = vsel %vm1159, %v1948, 0.0
        %v2000 = vadd.f32 %v1998, %v1999
        %v2001 = vsel %vm1159, %v1949, 0.0
        %v2002 = vadd.f32 %v2000, %v2001
        %v2003 = vsel %vm1159, %v1950, 0.0
        %v2004 = vadd.f32 %v2002, %v2003
        %v2005 = vsel %vm1159, %v1951, 0.0
        %v2006 = vadd.f32 %v2004, %v2005
        %v2007 = vsel %vm1159, %v1952, 0.0
        %v2008 = vadd.f32 %v2006, %v2007
        %v2009 = vsel %vm1159, %v1953, 0.0
        %v2010 = vadd.f32 %v2008, %v2009
        %v2011 = vsel %vm1159, %v1954, 0.0
        %v2012 = vadd.f32 %v2010, %v2011
        %v2013 = vsel %vm1159, %v1955, 0.0
        %v2014 = vadd.f32 %v2012, %v2013
        %v2015 = vsel %vm1159, %v1956, 0.0
        %v2016 = vadd.f32 %v2014, %v2015
        %v2017 = vsel %vm1159, %v1957, 0.0
        %v2018 = vadd.f32 %v2016, %v2017
        %v2019 = vsel %vm1159, %v1958, 0.0
        %v2020 = vadd.f32 %v2018, %v2019
        %v2021 = vsel %vm1159, %v1959, 0.0
        %v2022 = vadd.f32 %v2020, %v2021
        %v2023 = vrot.slane %v2022, 4
        %v2024 = vadd.f32 %v2022, %v2023
        %v2025 = vrot.slane %v2024, 2
        %v2026 = vadd.f32 %v2024, %v2025
        %v2027 = vrot.slane %v2026, 1
        %v2028 = vadd.f32 %v2026, %v2027
        %v2029 = vrcp.pop 256.0
        %v2030 = vmul.f32 %v2028, %v2029
        %v2031 = vsel %vm1159, %v1928, -inf
        %v2032 = vsel %vm1159, %v1929, -inf
        %v2033 = vsel %vm1159, %v1930, -inf
        %v2034 = vsel %vm1159, %v1931, -inf
        %v2035 = vsel %vm1159, %v1932, -inf
        %v2036 = vmax.f32 %v2031, %v2035
        %v2037 = vsel %vm1159, %v1933, -inf
        %v2038 = vmax.f32 %v2032, %v2037
        %v2039 = vsel %vm1159, %v1934, -inf
        %v2040 = vmax.f32 %v2033, %v2039
        %v2041 = vsel %vm1159, %v1935, -inf
        %v2042 = vmax.f32 %v2034, %v2041
        %v2043 = vsel %vm1159, %v1936, -inf
        %v2044 = vmax.f32 %v2036, %v2043
        %v2045 = vsel %vm1159, %v1937, -inf
        %v2046 = vmax.f32 %v2038, %v2045
        %v2047 = vsel %vm1159, %v1938, -inf
        %v2048 = vmax.f32 %v2040, %v2047
        %v2049 = vsel %vm1159, %v1939, -inf
        %v2050 = vmax.f32 %v2042, %v2049
        %v2051 = vsel %vm1159, %v1940, -inf
        %v2052 = vmax.f32 %v2044, %v2051
        %v2053 = vsel %vm1159, %v1941, -inf
        %v2054 = vmax.f32 %v2046, %v2053
        %v2055 = vsel %vm1159, %v1942, -inf
        %v2056 = vmax.f32 %v2048, %v2055
        %v2057 = vsel %vm1159, %v1943, -inf
        %v2058 = vmax.f32 %v2050, %v2057
        %v2059 = vsel %vm1159, %v1944, -inf
        %v2060 = vmax.f32 %v2052, %v2059
        %v2061 = vsel %vm1159, %v1945, -inf
        %v2062 = vmax.f32 %v2054, %v2061
        %v2063 = vsel %vm1159, %v1946, -inf
        %v2064 = vmax.f32 %v2056, %v2063
        %v2065 = vsel %vm1159, %v1947, -inf
        %v2066 = vmax.f32 %v2058, %v2065
        %v2067 = vsel %vm1159, %v1948, -inf
        %v2068 = vmax.f32 %v2060, %v2067
        %v2069 = vsel %vm1159, %v1949, -inf
        %v2070 = vmax.f32 %v2062, %v2069
        %v2071 = vsel %vm1159, %v1950, -inf
        %v2072 = vmax.f32 %v2064, %v2071
        %v2073 = vsel %vm1159, %v1951, -inf
        %v2074 = vmax.f32 %v2066, %v2073
        %v2075 = vsel %vm1159, %v1952, -inf
        %v2076 = vmax.f32 %v2068, %v2075
        %v2077 = vsel %vm1159, %v1953, -inf
        %v2078 = vmax.f32 %v2070, %v2077
        %v2079 = vsel %vm1159, %v1954, -inf
        %v2080 = vmax.f32 %v2072, %v2079
        %v2081 = vsel %vm1159, %v1955, -inf
        %v2082 = vmax.f32 %v2074, %v2081
        %v2083 = vsel %vm1159, %v1956, -inf
        %v2084 = vmax.f32 %v2076, %v2083
        %v2085 = vsel %vm1159, %v1957, -inf
        %v2086 = vmax.f32 %v2078, %v2085
        %v2087 = vsel %vm1159, %v1958, -inf
        %v2088 = vmax.f32 %v2080, %v2087
        %v2089 = vsel %vm1159, %v1959, -inf
        %v2090 = vmax.f32 %v2082, %v2089
        %v2091 = vmax.f32 %v2084, %v2086
        %v2092 = vmax.f32 %v2088, %v2090
        %v2093 = vmax.f32 %v2091, %v2092
        %v2094 = vrot.slane %v2093, 4
        %v2095 = vmax.f32 %v2093, %v2094
        %v2096 = vrot.slane %v2095, 2
        %v2097 = vmax.f32 %v2095, %v2096
        %v2098 = vrot.slane %v2097, 1
        %v2099 = vmax.f32 %v2097, %v2098
        %2101 = vrot.lane.b32.xlu0 %v2099, 16
        %v2102 = vpop.permute.xlu0 %2101
        %v2104 = vsel %vm1159, %v2030, %v2102
        %v2105 = vpack.c.bf16 %v2104, %v2104
        %v2106 = vld [vmem:[%s8] sm:$0xf]
        %v2107 = vld [vmem:[%s8 + $0x4] sm:$0xf]
        %v2108 = vld [vmem:[%s8 + $0x8] sm:$0xf]
        %v2109 = vld [vmem:[%s8 + $0xc] sm:$0xf]
        %v2110 = vld [vmem:[%s9] sm:$0x1]
        %v2115 = vunpack.c.l.b16 %v2106
        %v2116 = vunpack.c.l.b16 %v2107
        %v2117 = vunpack.c.l.b16 %v2108
        %v2118 = vunpack.c.l.b16 %v2109
        %v2119 = vpack.c.b16 %v2116, %v2115
        %v2120 = vpack.c.b16 %v2118, %v2117
        %vm2123 = vcmask 261120
        %v2125 = vsel %vm2123, %v2105, 0
        %2127 = vmatprep.subr.bf16.mxu0 0
        %2128 = vmatpush1.bf16.msra.mxu0 0
        %2129 = vmatprep.subr.bf16.mxu0 0
        %2130 = vmatpush1.bf16.msra.mxu0 0
        %2131 = vmatprep.subr.bf16.mxu0 0
        %2132 = vmatpush1.bf16.msra.mxu0 0
        %2133 = vmatprep.subr.bf16.mxu0 0
        %2134 = vmatpush1.bf16.msra.mxu0 0
        %2135 = vmatprep.subr.bf16.mxu0 0
        %2136 = vmatpush1.bf16.msra.mxu0 0
        %2137 = vmatprep.subr.bf16.mxu0 0
        %2138 = vmatpush1.bf16.msra.mxu0 0
        %2139 = vmatprep.subr.bf16.mxu0 0
        %2140 = vmatpush1.bf16.msra.mxu0 %v2120
        %2141 = vmatprep.subr.bf16.mxu0 0
        %2142 = vmatpush1.bf16.msra.mxu0 %v2119
        %2143 = vmatprep.subr.bf16.mxu0 0
        %2144 = vmatpush2.bf16.msra.mxu0 0
        %2145 = vmatprep.subr.bf16.mxu0 0
        %2146 = vmatpush2.bf16.msra.mxu0 0
        %2147 = vmatprep.subr.bf16.mxu0 0
        %2148 = vmatpush2.bf16.msra.mxu0 0
        %2149 = vmatprep.subr.bf16.mxu0 0
        %2150 = vmatpush2.bf16.msra.mxu0 0
        %2151 = vmatprep.subr.bf16.mxu0 0
        %2152 = vmatpush2.bf16.msra.mxu0 0
        %2153 = vmatprep.subr.bf16.mxu0 0
        %2154 = vmatpush2.bf16.msra.mxu0 0
        %2155 = vmatprep.subr.bf16.mxu0 0
        %2156 = vmatpush2.bf16.msra.mxu0 0
        %2157 = vmatprep.subr.bf16.mxu0 0
        %2158 = vmatpush2.bf16.msra.mxu0 0
        %2159 = vmatprep.mubr.bf16.mxu0 0
        %2160 = vmatmul.mubr.bf16.gmra.mxu0 %v2125
        %v2161 = vpop.f32.mrf.mxu0
        %v2162 = vadd.f32 %v2110, %v2161
        %v2163 = vpop.f32.mrf.mxu0
        %v2164 = vpop.f32.mrf.mxu0
        %v2165 = vpop.f32.mrf.mxu0
        %2166 = vdwg.mxu0
        %v2167 = vmax.f32 %v2162, 0.0
        %v2168 = vpack.c.bf16 %v2167, %v2167
        %v2169 = vld [vmem:[%s10] sm:$0xf]
        %v2170 = vld [vmem:[%s11] sm:$0x1]
        %vm2171 = vcmask 64512
        %v2173 = vsel %vm2171, %v2168, 0
        %vm2175 = vcmask 1043456
        %v2177 = vsel %vm2175, %v2169, 0
        %2179 = vmatprep.subr.bf16.mxu0 0
        %2180 = vmatpush1.bf16.msra.mxu0 0
        %2181 = vmatprep.subr.bf16.mxu0 0
        %2182 = vmatpush1.bf16.msra.mxu0 0
        %2183 = vmatprep.subr.bf16.mxu0 0
        %2184 = vmatpush1.bf16.msra.mxu0 0
        %2185 = vmatprep.subr.bf16.mxu0 0
        %2186 = vmatpush1.bf16.msra.mxu0 0
        %2187 = vmatprep.subr.bf16.mxu0 0
        %2188 = vmatpush1.bf16.msra.mxu0 0
        %2189 = vmatprep.subr.bf16.mxu0 0
        %2190 = vmatpush1.bf16.msra.mxu0 0
        %2191 = vmatprep.subr.bf16.mxu0 0
        %2192 = vmatpush1.bf16.msra.mxu0 0
        %2193 = vmatprep.subr.bf16.mxu0 0
        %2194 = vmatpush1.bf16.msra.mxu0 %v2177
        %2195 = vmatprep.subr.bf16.mxu0 0
        %2196 = vmatpush2.bf16.msra.mxu0 0
        %2197 = vmatprep.subr.bf16.mxu0 0
        %2198 = vmatpush2.bf16.msra.mxu0 0
        %2199 = vmatprep.subr.bf16.mxu0 0
        %2200 = vmatpush2.bf16.msra.mxu0 0
        %2201 = vmatprep.subr.bf16.mxu0 0
        %2202 = vmatpush2.bf16.msra.mxu0 0
        %2203 = vmatprep.subr.bf16.mxu0 0
        %2204 = vmatpush2.bf16.msra.mxu0 0
        %2205 = vmatprep.subr.bf16.mxu0 0
        %2206 = vmatpush2.bf16.msra.mxu0 0
        %2207 = vmatprep.subr.bf16.mxu0 0
        %2208 = vmatpush2.bf16.msra.mxu0 0
        %2209 = vmatprep.subr.bf16.mxu0 0
        %2210 = vmatpush2.bf16.msra.mxu0 0
        %2211 = vmatprep.mubr.bf16.mxu0 0
        %2212 = vmatmul.mubr.bf16.gmra.mxu0 %v2173
        %v2213 = vpop.f32.mrf.mxu0
        %v2214 = vadd.f32 %v2170, %v2213
        %v2215 = vpop.f32.mrf.mxu0
        %v2216 = vpop.f32.mrf.mxu0
        %v2217 = vpop.f32.mrf.mxu0
        %2218 = vdwg.mxu0
        %v2219 = vld [vmem:[#allocation3] sm:$0x1]
        %2221 = vset.pattern.permute.xlu0 0
        %2222 = vperm.xlu0 %2221, %v2219
        %v2223 = vpop.permute.xlu0 %2222
        %v2225 = vlaneseq
        %v2226 = vshrl.u32 %v2225, 7
        %v2227 = vsub.s32 0, %v2226
        %v2228 = vrot.slane %v2223, %v2227
        %v2229 = vmul.f32 %v2214, %v2228
        %vm2230 = vcmask 24576
        %v2231 = vsel %vm2230, %v2229, -inf
        %2232 = vmax.xlane.f32.xlu0 %v2231
        %v2233 = vpop.xlane.xlu0 %2232
        %v2234 = vsub.f32 %v2229, %v2233
        %v2235 = vmul.f32 %v2234, 1.442695
        %v2236 = vpow.pop %v2235
        %v2237 = vsel %vm2230, %v2236, 0.0
        %2238 = vadd.xlane.f32.xlu0 %v2237
        %v2239 = vpop.xlane.xlu0 %2238
        %v2240 = vrcp.pop %v2239
        %v2241 = vmul.f32 %v2236, %v2240
        %v2242 = vrot.slane %v1096, 7
        %v2243 = vrot.slane %v1097, 7
        %v2244 = vrot.slane %v1098, 7
        %v2245 = vrot.slane %v1099, 7
        %v2246 = vrot.slane %v1100, 7
        %v2247 = vrot.slane %v1101, 7
        %v2248 = vrot.slane %v1102, 7
        %v2249 = vrot.slane %v1103, 7
        %v2250 = vrot.slane %v1104, 7
        %v2251 = vrot.slane %v1105, 7
        %v2252 = vrot.slane %v1106, 7
        %v2253 = vrot.slane %v1107, 7
        %v2254 = vrot.slane %v1108, 7
        %v2255 = vrot.slane %v1109, 7
        %v2256 = vrot.slane %v1110, 7
        %v2257 = vrot.slane %v1111, 7
        %v2258 = vrot.slane %v1112, 7
        %v2259 = vrot.slane %v1113, 7
        %v2260 = vrot.slane %v1114, 7
        %v2261 = vrot.slane %v1115, 7
        %v2262 = vrot.slane %v1116, 7
        %v2263 = vrot.slane %v1117, 7
        %v2264 = vrot.slane %v1118, 7
        %v2265 = vrot.slane %v1119, 7
        %v2266 = vrot.slane %v1120, 7
        %v2267 = vrot.slane %v1121, 7
        %v2268 = vrot.slane %v1122, 7
        %v2269 = vrot.slane %v1123, 7
        %v2270 = vrot.slane %v1124, 7
        %v2271 = vrot.slane %v1125, 7
        %v2272 = vrot.slane %v1126, 7
        %v2273 = vrot.slane %v1127, 7
        %v2274 = vlaneseq
        %v2275 = vshrl.u32 %v2274, 7
        %vm2276 = vcmp.lt.s32.totalorder %v2275, 1
        %v2277 = vsel %vm2276, %v2272, %v2273
        %v2278 = vsel %vm2276, %v2271, %v2272
        %v2279 = vsel %vm2276, %v2270, %v2271
        %v2280 = vsel %vm2276, %v2269, %v2270
        %v2281 = vsel %vm2276, %v2268, %v2269
        %v2282 = vsel %vm2276, %v2267, %v2268
        %v2283 = vsel %vm2276, %v2266, %v2267
        %v2284 = vsel %vm2276, %v2265, %v2266
        %v2285 = vsel %vm2276, %v2264, %v2265
        %v2286 = vsel %vm2276, %v2263, %v2264
        %v2287 = vsel %vm2276, %v2262, %v2263
        %v2288 = vsel %vm2276, %v2261, %v2262
        %v2289 = vsel %vm2276, %v2260, %v2261
        %v2290 = vsel %vm2276, %v2259, %v2260
        %v2291 = vsel %vm2276, %v2258, %v2259
        %v2292 = vsel %vm2276, %v2257, %v2258
        %v2293 = vsel %vm2276, %v2256, %v2257
        %v2294 = vsel %vm2276, %v2255, %v2256
        %v2295 = vsel %vm2276, %v2254, %v2255
        %v2296 = vsel %vm2276, %v2253, %v2254
        %v2297 = vsel %vm2276, %v2252, %v2253
        %v2298 = vsel %vm2276, %v2251, %v2252
        %v2299 = vsel %vm2276, %v2250, %v2251
        %v2300 = vsel %vm2276, %v2249, %v2250
        %v2301 = vsel %vm2276, %v2248, %v2249
        %v2302 = vsel %vm2276, %v2247, %v2248
        %v2303 = vsel %vm2276, %v2246, %v2247
        %v2304 = vsel %vm2276, %v2245, %v2246
        %v2305 = vsel %vm2276, %v2244, %v2245
        %v2306 = vsel %vm2276, %v2243, %v2244
        %v2307 = vsel %vm2276, %v2242, %v2243
        %v2308 = vsel %vm2276, %v2273, %v2242
        %2310 = vset.pattern.permute.xlu0 0
        %2311 = vperm.xlu0 %2310, %v713
        %v2312 = vpop.permute.xlu0 %2311
        %2315 = vset.pattern.permute.xlu0 0
        %2316 = vperm.xlu0 %2315, %v714
        %v2317 = vpop.permute.xlu0 %2316
        %2320 = vset.pattern.permute.xlu0 0
        %2321 = vperm.xlu0 %2320, %v715
        %v2322 = vpop.permute.xlu0 %2321
        %2325 = vset.pattern.permute.xlu0 0
        %2326 = vperm.xlu0 %2325, %v716
        %v2327 = vpop.permute.xlu0 %2326
        %2330 = vset.pattern.permute.xlu0 0
        %2331 = vperm.xlu0 %2330, %v717
        %v2332 = vpop.permute.xlu0 %2331
        %2335 = vset.pattern.permute.xlu0 0
        %2336 = vperm.xlu0 %2335, %v718
        %v2337 = vpop.permute.xlu0 %2336
        %2340 = vset.pattern.permute.xlu0 0
        %2341 = vperm.xlu0 %2340, %v719
        %v2342 = vpop.permute.xlu0 %2341
        %2345 = vset.pattern.permute.xlu0 0
        %2346 = vperm.xlu0 %2345, %v720
        %v2347 = vpop.permute.xlu0 %2346
        %2350 = vset.pattern.permute.xlu0 0
        %2351 = vperm.xlu0 %2350, %v721
        %v2352 = vpop.permute.xlu0 %2351
        %2355 = vset.pattern.permute.xlu0 0
        %2356 = vperm.xlu0 %2355, %v722
        %v2357 = vpop.permute.xlu0 %2356
        %2360 = vset.pattern.permute.xlu0 0
        %2361 = vperm.xlu0 %2360, %v723
        %v2362 = vpop.permute.xlu0 %2361
        %2365 = vset.pattern.permute.xlu0 0
        %2366 = vperm.xlu0 %2365, %v724
        %v2367 = vpop.permute.xlu0 %2366
        %2370 = vset.pattern.permute.xlu0 0
        %2371 = vperm.xlu0 %2370, %v725
        %v2372 = vpop.permute.xlu0 %2371
        %2375 = vset.pattern.permute.xlu0 0
        %2376 = vperm.xlu0 %2375, %v726
        %v2377 = vpop.permute.xlu0 %2376
        %2380 = vset.pattern.permute.xlu0 0
        %2381 = vperm.xlu0 %2380, %v727
        %v2382 = vpop.permute.xlu0 %2381
        %2385 = vset.pattern.permute.xlu0 0
        %2386 = vperm.xlu0 %2385, %v728
        %v2387 = vpop.permute.xlu0 %2386
        %2390 = vset.pattern.permute.xlu0 0
        %2391 = vperm.xlu0 %2390, %v729
        %v2392 = vpop.permute.xlu0 %2391
        %2395 = vset.pattern.permute.xlu0 0
        %2396 = vperm.xlu0 %2395, %v730
        %v2397 = vpop.permute.xlu0 %2396
        %2400 = vset.pattern.permute.xlu0 0
        %2401 = vperm.xlu0 %2400, %v731
        %v2402 = vpop.permute.xlu0 %2401
        %2405 = vset.pattern.permute.xlu0 0
        %2406 = vperm.xlu0 %2405, %v732
        %v2407 = vpop.permute.xlu0 %2406
        %2410 = vset.pattern.permute.xlu0 0
        %2411 = vperm.xlu0 %2410, %v733
        %v2412 = vpop.permute.xlu0 %2411
        %2415 = vset.pattern.permute.xlu0 0
        %2416 = vperm.xlu0 %2415, %v734
        %v2417 = vpop.permute.xlu0 %2416
        %2420 = vset.pattern.permute.xlu0 0
        %2421 = vperm.xlu0 %2420, %v735
        %v2422 = vpop.permute.xlu0 %2421
        %2425 = vset.pattern.permute.xlu0 0
        %2426 = vperm.xlu0 %2425, %v736
        %v2427 = vpop.permute.xlu0 %2426
        %2430 = vset.pattern.permute.xlu0 0
        %2431 = vperm.xlu0 %2430, %v737
        %v2432 = vpop.permute.xlu0 %2431
        %2435 = vset.pattern.permute.xlu0 0
        %2436 = vperm.xlu0 %2435, %v738
        %v2437 = vpop.permute.xlu0 %2436
        %2440 = vset.pattern.permute.xlu0 0
        %2441 = vperm.xlu0 %2440, %v739
        %v2442 = vpop.permute.xlu0 %2441
        %2445 = vset.pattern.permute.xlu0 0
        %2446 = vperm.xlu0 %2445, %v740
        %v2447 = vpop.permute.xlu0 %2446
        %2450 = vset.pattern.permute.xlu0 0
        %2451 = vperm.xlu0 %2450, %v741
        %v2452 = vpop.permute.xlu0 %2451
        %2455 = vset.pattern.permute.xlu0 0
        %2456 = vperm.xlu0 %2455, %v742
        %v2457 = vpop.permute.xlu0 %2456
        %2460 = vset.pattern.permute.xlu0 0
        %2461 = vperm.xlu0 %2460, %v743
        %v2462 = vpop.permute.xlu0 %2461
        %2465 = vset.pattern.permute.xlu0 0
        %2466 = vperm.xlu0 %2465, %v744
        %v2467 = vpop.permute.xlu0 %2466
        %v2469 = vmul.f32 %v2278, %v2312
        %v2470 = vmul.f32 %v2277, %v2317
        %v2471 = vmul.f32 %v2308, %v2322
        %v2472 = vmul.f32 %v2307, %v2327
        %v2473 = vmul.f32 %v2306, %v2332
        %v2474 = vmul.f32 %v2305, %v2337
        %v2475 = vmul.f32 %v2304, %v2342
        %v2476 = vmul.f32 %v2303, %v2347
        %v2477 = vmul.f32 %v2302, %v2352
        %v2478 = vmul.f32 %v2301, %v2357
        %v2479 = vmul.f32 %v2300, %v2362
        %v2480 = vmul.f32 %v2299, %v2367
        %v2481 = vmul.f32 %v2298, %v2372
        %v2482 = vmul.f32 %v2297, %v2377
        %v2483 = vmul.f32 %v2296, %v2382
        %v2484 = vmul.f32 %v2295, %v2387
        %v2485 = vmul.f32 %v2294, %v2392
        %v2486 = vmul.f32 %v2293, %v2397
        %v2487 = vmul.f32 %v2292, %v2402
        %v2488 = vmul.f32 %v2291, %v2407
        %v2489 = vmul.f32 %v2290, %v2412
        %v2490 = vmul.f32 %v2289, %v2417
        %v2491 = vmul.f32 %v2288, %v2422
        %v2492 = vmul.f32 %v2287, %v2427
        %v2493 = vmul.f32 %v2286, %v2432
        %v2494 = vmul.f32 %v2285, %v2437
        %v2495 = vmul.f32 %v2284, %v2442
        %v2496 = vmul.f32 %v2283, %v2447
        %v2497 = vmul.f32 %v2282, %v2452
        %v2498 = vmul.f32 %v2281, %v2457
        %v2499 = vmul.f32 %v2280, %v2462
        %v2500 = vmul.f32 %v2279, %v2467
        %2501 = vset.pattern.permute.xlu0 1
        %2502 = vperm.xlu0 %2501, %v713
        %v2503 = vpop.permute.xlu0 %2502
        %2505 = vset.pattern.permute.xlu0 1
        %2506 = vperm.xlu0 %2505, %v714
        %v2507 = vpop.permute.xlu0 %2506
        %2509 = vset.pattern.permute.xlu0 1
        %2510 = vperm.xlu0 %2509, %v715
        %v2511 = vpop.permute.xlu0 %2510
        %2513 = vset.pattern.permute.xlu0 1
        %2514 = vperm.xlu0 %2513, %v716
        %v2515 = vpop.permute.xlu0 %2514
        %2517 = vset.pattern.permute.xlu0 1
        %2518 = vperm.xlu0 %2517, %v717
        %v2519 = vpop.permute.xlu0 %2518
        %2521 = vset.pattern.permute.xlu0 1
        %2522 = vperm.xlu0 %2521, %v718
        %v2523 = vpop.permute.xlu0 %2522
        %2525 = vset.pattern.permute.xlu0 1
        %2526 = vperm.xlu0 %2525, %v719
        %v2527 = vpop.permute.xlu0 %2526
        %2529 = vset.pattern.permute.xlu0 1
        %2530 = vperm.xlu0 %2529, %v720
        %v2531 = vpop.permute.xlu0 %2530
        %2533 = vset.pattern.permute.xlu0 1
        %2534 = vperm.xlu0 %2533, %v721
        %v2535 = vpop.permute.xlu0 %2534
        %2537 = vset.pattern.permute.xlu0 1
        %2538 = vperm.xlu0 %2537, %v722
        %v2539 = vpop.permute.xlu0 %2538
        %2541 = vset.pattern.permute.xlu0 1
        %2542 = vperm.xlu0 %2541, %v723
        %v2543 = vpop.permute.xlu0 %2542
        %2545 = vset.pattern.permute.xlu0 1
        %2546 = vperm.xlu0 %2545, %v724
        %v2547 = vpop.permute.xlu0 %2546
        %2549 = vset.pattern.permute.xlu0 1
        %2550 = vperm.xlu0 %2549, %v725
        %v2551 = vpop.permute.xlu0 %2550
        %2553 = vset.pattern.permute.xlu0 1
        %2554 = vperm.xlu0 %2553, %v726
        %v2555 = vpop.permute.xlu0 %2554
        %2557 = vset.pattern.permute.xlu0 1
        %2558 = vperm.xlu0 %2557, %v727
        %v2559 = vpop.permute.xlu0 %2558
        %2561 = vset.pattern.permute.xlu0 1
        %2562 = vperm.xlu0 %2561, %v728
        %v2563 = vpop.permute.xlu0 %2562
        %2565 = vset.pattern.permute.xlu0 1
        %2566 = vperm.xlu0 %2565, %v729
        %v2567 = vpop.permute.xlu0 %2566
        %2569 = vset.pattern.permute.xlu0 1
        %2570 = vperm.xlu0 %2569, %v730
        %v2571 = vpop.permute.xlu0 %2570
        %2573 = vset.pattern.permute.xlu0 1
        %2574 = vperm.xlu0 %2573, %v731
        %v2575 = vpop.permute.xlu0 %2574
        %2577 = vset.pattern.permute.xlu0 1
        %2578 = vperm.xlu0 %2577, %v732
        %v2579 = vpop.permute.xlu0 %2578
        %2581 = vset.pattern.permute.xlu0 1
        %2582 = vperm.xlu0 %2581, %v733
        %v2583 = vpop.permute.xlu0 %2582
        %2585 = vset.pattern.permute.xlu0 1
        %2586 = vperm.xlu0 %2585, %v734
        %v2587 = vpop.permute.xlu0 %2586
        %2589 = vset.pattern.permute.xlu0 1
        %2590 = vperm.xlu0 %2589, %v735
        %v2591 = vpop.permute.xlu0 %2590
        %2593 = vset.pattern.permute.xlu0 1
        %2594 = vperm.xlu0 %2593, %v736
        %v2595 = vpop.permute.xlu0 %2594
        %2597 = vset.pattern.permute.xlu0 1
        %2598 = vperm.xlu0 %2597, %v737
        %v2599 = vpop.permute.xlu0 %2598
        %2601 = vset.pattern.permute.xlu0 1
        %2602 = vperm.xlu0 %2601, %v738
        %v2603 = vpop.permute.xlu0 %2602
        %2605 = vset.pattern.permute.xlu0 1
        %2606 = vperm.xlu0 %2605, %v739
        %v2607 = vpop.permute.xlu0 %2606
        %2609 = vset.pattern.permute.xlu0 1
        %2610 = vperm.xlu0 %2609, %v740
        %v2611 = vpop.permute.xlu0 %2610
        %2613 = vset.pattern.permute.xlu0 1
        %2614 = vperm.xlu0 %2613, %v741
        %v2615 = vpop.permute.xlu0 %2614
        %2617 = vset.pattern.permute.xlu0 1
        %2618 = vperm.xlu0 %2617, %v742
        %v2619 = vpop.permute.xlu0 %2618
        %2621 = vset.pattern.permute.xlu0 1
        %2622 = vperm.xlu0 %2621, %v743
        %v2623 = vpop.permute.xlu0 %2622
        %2625 = vset.pattern.permute.xlu0 1
        %2626 = vperm.xlu0 %2625, %v744
        %v2627 = vpop.permute.xlu0 %2626
        %v2629 = vmul.f32 %v1126, %v2503
        %v2630 = vmul.f32 %v1127, %v2507
        %v2631 = vmul.f32 %v1096, %v2511
        %v2632 = vmul.f32 %v1097, %v2515
        %v2633 = vmul.f32 %v1098, %v2519
        %v2634 = vmul.f32 %v1099, %v2523
        %v2635 = vmul.f32 %v1100, %v2527
        %v2636 = vmul.f32 %v1101, %v2531
        %v2637 = vmul.f32 %v1102, %v2535
        %v2638 = vmul.f32 %v1103, %v2539
        %v2639 = vmul.f32 %v1104, %v2543
        %v2640 = vmul.f32 %v1105, %v2547
        %v2641 = vmul.f32 %v1106, %v2551
        %v2642 = vmul.f32 %v1107, %v2555
        %v2643 = vmul.f32 %v1108, %v2559
        %v2644 = vmul.f32 %v1109, %v2563
        %v2645 = vmul.f32 %v1110, %v2567
        %v2646 = vmul.f32 %v1111, %v2571
        %v2647 = vmul.f32 %v1112, %v2575
        %v2648 = vmul.f32 %v1113, %v2579
        %v2649 = vmul.f32 %v1114, %v2583
        %v2650 = vmul.f32 %v1115, %v2587
        %v2651 = vmul.f32 %v1116, %v2591
        %v2652 = vmul.f32 %v1117, %v2595
        %v2653 = vmul.f32 %v1118, %v2599
        %v2654 = vmul.f32 %v1119, %v2603
        %v2655 = vmul.f32 %v1120, %v2607
        %v2656 = vmul.f32 %v1121, %v2611
        %v2657 = vmul.f32 %v1122, %v2615
        %v2658 = vmul.f32 %v1123, %v2619
        %v2659 = vmul.f32 %v1124, %v2623
        %v2660 = vmul.f32 %v1125, %v2627
        %v2661 = vrot.slane %v1096, 1
        %v2662 = vrot.slane %v1097, 1
        %v2663 = vrot.slane %v1098, 1
        %v2664 = vrot.slane %v1099, 1
        %v2665 = vrot.slane %v1100, 1
        %v2666 = vrot.slane %v1101, 1
        %v2667 = vrot.slane %v1102, 1
        %v2668 = vrot.slane %v1103, 1
        %v2669 = vrot.slane %v1104, 1
        %v2670 = vrot.slane %v1105, 1
        %v2671 = vrot.slane %v1106, 1
        %v2672 = vrot.slane %v1107, 1
        %v2673 = vrot.slane %v1108, 1
        %v2674 = vrot.slane %v1109, 1
        %v2675 = vrot.slane %v1110, 1
        %v2676 = vrot.slane %v1111, 1
        %v2677 = vrot.slane %v1112, 1
        %v2678 = vrot.slane %v1113, 1
        %v2679 = vrot.slane %v1114, 1
        %v2680 = vrot.slane %v1115, 1
        %v2681 = vrot.slane %v1116, 1
        %v2682 = vrot.slane %v1117, 1
        %v2683 = vrot.slane %v1118, 1
        %v2684 = vrot.slane %v1119, 1
        %v2685 = vrot.slane %v1120, 1
        %v2686 = vrot.slane %v1121, 1
        %v2687 = vrot.slane %v1122, 1
        %v2688 = vrot.slane %v1123, 1
        %v2689 = vrot.slane %v1124, 1
        %v2690 = vrot.slane %v1125, 1
        %v2691 = vrot.slane %v1126, 1
        %v2692 = vrot.slane %v1127, 1
        %vm2693 = vcmp.lt.s32.totalorder %v2275, 7
        %v2694 = vsel %vm2693, %v2691, %v2692
        %v2695 = vsel %vm2693, %v2690, %v2691
        %v2696 = vsel %vm2693, %v2689, %v2690
        %v2697 = vsel %vm2693, %v2688, %v2689
        %v2698 = vsel %vm2693, %v2687, %v2688
        %v2699 = vsel %vm2693, %v2686, %v2687
        %v2700 = vsel %vm2693, %v2685, %v2686
        %v2701 = vsel %vm2693, %v2684, %v2685
        %v2702 = vsel %vm2693, %v2683, %v2684
        %v2703 = vsel %vm2693, %v2682, %v2683
        %v2704 = vsel %vm2693, %v2681, %v2682
        %v2705 = vsel %vm2693, %v2680, %v2681
        %v2706 = vsel %vm2693, %v2679, %v2680
        %v2707 = vsel %vm2693, %v2678, %v2679
        %v2708 = vsel %vm2693, %v2677, %v2678
        %v2709 = vsel %vm2693, %v2676, %v2677
        %v2710 = vsel %vm2693, %v2675, %v2676
        %v2711 = vsel %vm2693, %v2674, %v2675
        %v2712 = vsel %vm2693, %v2673, %v2674
        %v2713 = vsel %vm2693, %v2672, %v2673
        %v2714 = vsel %vm2693, %v2671, %v2672
        %v2715 = vsel %vm2693, %v2670, %v2671
        %v2716 = vsel %vm2693, %v2669, %v2670
        %v2717 = vsel %vm2693, %v2668, %v2669
        %v2718 = vsel %vm2693, %v2667, %v2668
        %v2719 = vsel %vm2693, %v2666, %v2667
        %v2720 = vsel %vm2693, %v2665, %v2666
        %v2721 = vsel %vm2693, %v2664, %v2665
        %v2722 = vsel %vm2693, %v2663, %v2664
        %v2723 = vsel %vm2693, %v2662, %v2663
        %v2724 = vsel %vm2693, %v2661, %v2662
        %v2725 = vsel %vm2693, %v2692, %v2661
        %2726 = vset.pattern.permute.xlu0 2
        %2727 = vperm.xlu0 %2726, %v713
        %v2728 = vpop.permute.xlu0 %2727
        %2730 = vset.pattern.permute.xlu0 2
        %2731 = vperm.xlu0 %2730, %v714
        %v2732 = vpop.permute.xlu0 %2731
        %2734 = vset.pattern.permute.xlu0 2
        %2735 = vperm.xlu0 %2734, %v715
        %v2736 = vpop.permute.xlu0 %2735
        %2738 = vset.pattern.permute.xlu0 2
        %2739 = vperm.xlu0 %2738, %v716
        %v2740 = vpop.permute.xlu0 %2739
        %2742 = vset.pattern.permute.xlu0 2
        %2743 = vperm.xlu0 %2742, %v717
        %v2744 = vpop.permute.xlu0 %2743
        %2746 = vset.pattern.permute.xlu0 2
        %2747 = vperm.xlu0 %2746, %v718
        %v2748 = vpop.permute.xlu0 %2747
        %2750 = vset.pattern.permute.xlu0 2
        %2751 = vperm.xlu0 %2750, %v719
        %v2752 = vpop.permute.xlu0 %2751
        %2754 = vset.pattern.permute.xlu0 2
        %2755 = vperm.xlu0 %2754, %v720
        %v2756 = vpop.permute.xlu0 %2755
        %2758 = vset.pattern.permute.xlu0 2
        %2759 = vperm.xlu0 %2758, %v721
        %v2760 = vpop.permute.xlu0 %2759
        %2762 = vset.pattern.permute.xlu0 2
        %2763 = vperm.xlu0 %2762, %v722
        %v2764 = vpop.permute.xlu0 %2763
        %2766 = vset.pattern.permute.xlu0 2
        %2767 = vperm.xlu0 %2766, %v723
        %v2768 = vpop.permute.xlu0 %2767
        %2770 = vset.pattern.permute.xlu0 2
        %2771 = vperm.xlu0 %2770, %v724
        %v2772 = vpop.permute.xlu0 %2771
        %2774 = vset.pattern.permute.xlu0 2
        %2775 = vperm.xlu0 %2774, %v725
        %v2776 = vpop.permute.xlu0 %2775
        %2778 = vset.pattern.permute.xlu0 2
        %2779 = vperm.xlu0 %2778, %v726
        %v2780 = vpop.permute.xlu0 %2779
        %2782 = vset.pattern.permute.xlu0 2
        %2783 = vperm.xlu0 %2782, %v727
        %v2784 = vpop.permute.xlu0 %2783
        %2786 = vset.pattern.permute.xlu0 2
        %2787 = vperm.xlu0 %2786, %v728
        %v2788 = vpop.permute.xlu0 %2787
        %2790 = vset.pattern.permute.xlu0 2
        %2791 = vperm.xlu0 %2790, %v729
        %v2792 = vpop.permute.xlu0 %2791
        %2794 = vset.pattern.permute.xlu0 2
        %2795 = vperm.xlu0 %2794, %v730
        %v2796 = vpop.permute.xlu0 %2795
        %2798 = vset.pattern.permute.xlu0 2
        %2799 = vperm.xlu0 %2798, %v731
        %v2800 = vpop.permute.xlu0 %2799
        %2802 = vset.pattern.permute.xlu0 2
        %2803 = vperm.xlu0 %2802, %v732
        %v2804 = vpop.permute.xlu0 %2803
        %2806 = vset.pattern.permute.xlu0 2
        %2807 = vperm.xlu0 %2806, %v733
        %v2808 = vpop.permute.xlu0 %2807
        %2810 = vset.pattern.permute.xlu0 2
        %2811 = vperm.xlu0 %2810, %v734
        %v2812 = vpop.permute.xlu0 %2811
        %2814 = vset.pattern.permute.xlu0 2
        %2815 = vperm.xlu0 %2814, %v735
        %v2816 = vpop.permute.xlu0 %2815
        %2818 = vset.pattern.permute.xlu0 2
        %2819 = vperm.xlu0 %2818, %v736
        %v2820 = vpop.permute.xlu0 %2819
        %2822 = vset.pattern.permute.xlu0 2
        %2823 = vperm.xlu0 %2822, %v737
        %v2824 = vpop.permute.xlu0 %2823
        %2826 = vset.pattern.permute.xlu0 2
        %2827 = vperm.xlu0 %2826, %v738
        %v2828 = vpop.permute.xlu0 %2827
        %2830 = vset.pattern.permute.xlu0 2
        %2831 = vperm.xlu0 %2830, %v739
        %v2832 = vpop.permute.xlu0 %2831
        %2834 = vset.pattern.permute.xlu0 2
        %2835 = vperm.xlu0 %2834, %v740
        %v2836 = vpop.permute.xlu0 %2835
        %2838 = vset.pattern.permute.xlu0 2
        %2839 = vperm.xlu0 %2838, %v741
        %v2840 = vpop.permute.xlu0 %2839
        %2842 = vset.pattern.permute.xlu0 2
        %2843 = vperm.xlu0 %2842, %v742
        %v2844 = vpop.permute.xlu0 %2843
        %2846 = vset.pattern.permute.xlu0 2
        %2847 = vperm.xlu0 %2846, %v743
        %v2848 = vpop.permute.xlu0 %2847
        %2850 = vset.pattern.permute.xlu0 2
        %2851 = vperm.xlu0 %2850, %v744
        %v2852 = vpop.permute.xlu0 %2851
        %v2854 = vmul.f32 %v2694, %v2728
        %v2855 = vmul.f32 %v2725, %v2732
        %v2856 = vmul.f32 %v2724, %v2736
        %v2857 = vmul.f32 %v2723, %v2740
        %v2858 = vmul.f32 %v2722, %v2744
        %v2859 = vmul.f32 %v2721, %v2748
        %v2860 = vmul.f32 %v2720, %v2752
        %v2861 = vmul.f32 %v2719, %v2756
        %v2862 = vmul.f32 %v2718, %v2760
        %v2863 = vmul.f32 %v2717, %v2764
        %v2864 = vmul.f32 %v2716, %v2768
        %v2865 = vmul.f32 %v2715, %v2772
        %v2866 = vmul.f32 %v2714, %v2776
        %v2867 = vmul.f32 %v2713, %v2780
        %v2868 = vmul.f32 %v2712, %v2784
        %v2869 = vmul.f32 %v2711, %v2788
        %v2870 = vmul.f32 %v2710, %v2792
        %v2871 = vmul.f32 %v2709, %v2796
        %v2872 = vmul.f32 %v2708, %v2800
        %v2873 = vmul.f32 %v2707, %v2804
        %v2874 = vmul.f32 %v2706, %v2808
        %v2875 = vmul.f32 %v2705, %v2812
        %v2876 = vmul.f32 %v2704, %v2816
        %v2877 = vmul.f32 %v2703, %v2820
        %v2878 = vmul.f32 %v2702, %v2824
        %v2879 = vmul.f32 %v2701, %v2828
        %v2880 = vmul.f32 %v2700, %v2832
        %v2881 = vmul.f32 %v2699, %v2836
        %v2882 = vmul.f32 %v2698, %v2840
        %v2883 = vmul.f32 %v2697, %v2844
        %v2884 = vmul.f32 %v2696, %v2848
        %v2885 = vmul.f32 %v2695, %v2852
        %2886 = vset.pattern.permute.xlu0 3
        %2887 = vperm.xlu0 %2886, %v713
        %v2888 = vpop.permute.xlu0 %2887
        %2890 = vset.pattern.permute.xlu0 3
        %2891 = vperm.xlu0 %2890, %v714
        %v2892 = vpop.permute.xlu0 %2891
        %2894 = vset.pattern.permute.xlu0 3
        %2895 = vperm.xlu0 %2894, %v715
        %v2896 = vpop.permute.xlu0 %2895
        %2898 = vset.pattern.permute.xlu0 3
        %2899 = vperm.xlu0 %2898, %v716
        %v2900 = vpop.permute.xlu0 %2899
        %2902 = vset.pattern.permute.xlu0 3
        %2903 = vperm.xlu0 %2902, %v717
        %v2904 = vpop.permute.xlu0 %2903
        %2906 = vset.pattern.permute.xlu0 3
        %2907 = vperm.xlu0 %2906, %v718
        %v2908 = vpop.permute.xlu0 %2907
        %2910 = vset.pattern.permute.xlu0 3
        %2911 = vperm.xlu0 %2910, %v719
        %v2912 = vpop.permute.xlu0 %2911
        %2914 = vset.pattern.permute.xlu0 3
        %2915 = vperm.xlu0 %2914, %v720
        %v2916 = vpop.permute.xlu0 %2915
        %2918 = vset.pattern.permute.xlu0 3
        %2919 = vperm.xlu0 %2918, %v721
        %v2920 = vpop.permute.xlu0 %2919
        %2922 = vset.pattern.permute.xlu0 3
        %2923 = vperm.xlu0 %2922, %v722
        %v2924 = vpop.permute.xlu0 %2923
        %2926 = vset.pattern.permute.xlu0 3
        %2927 = vperm.xlu0 %2926, %v723
        %v2928 = vpop.permute.xlu0 %2927
        %2930 = vset.pattern.permute.xlu0 3
        %2931 = vperm.xlu0 %2930, %v724
        %v2932 = vpop.permute.xlu0 %2931
        %2934 = vset.pattern.permute.xlu0 3
        %2935 = vperm.xlu0 %2934, %v725
        %v2936 = vpop.permute.xlu0 %2935
        %2938 = vset.pattern.permute.xlu0 3
        %2939 = vperm.xlu0 %2938, %v726
        %v2940 = vpop.permute.xlu0 %2939
        %2942 = vset.pattern.permute.xlu0 3
        %2943 = vperm.xlu0 %2942, %v727
        %v2944 = vpop.permute.xlu0 %2943
        %2946 = vset.pattern.permute.xlu0 3
        %2947 = vperm.xlu0 %2946, %v728
        %v2948 = vpop.permute.xlu0 %2947
        %2950 = vset.pattern.permute.xlu0 3
        %2951 = vperm.xlu0 %2950, %v729
        %v2952 = vpop.permute.xlu0 %2951
        %2954 = vset.pattern.permute.xlu0 3
        %2955 = vperm.xlu0 %2954, %v730
        %v2956 = vpop.permute.xlu0 %2955
        %2958 = vset.pattern.permute.xlu0 3
        %2959 = vperm.xlu0 %2958, %v731
        %v2960 = vpop.permute.xlu0 %2959
        %2962 = vset.pattern.permute.xlu0 3
        %2963 = vperm.xlu0 %2962, %v732
        %v2964 = vpop.permute.xlu0 %2963
        %2966 = vset.pattern.permute.xlu0 3
        %2967 = vperm.xlu0 %2966, %v733
        %v2968 = vpop.permute.xlu0 %2967
        %2970 = vset.pattern.permute.xlu0 3
        %2971 = vperm.xlu0 %2970, %v734
        %v2972 = vpop.permute.xlu0 %2971
        %2974 = vset.pattern.permute.xlu0 3
        %2975 = vperm.xlu0 %2974, %v735
        %v2976 = vpop.permute.xlu0 %2975
        %2978 = vset.pattern.permute.xlu0 3
        %2979 = vperm.xlu0 %2978, %v736
        %v2980 = vpop.permute.xlu0 %2979
        %2982 = vset.pattern.permute.xlu0 3
        %2983 = vperm.xlu0 %2982, %v737
        %v2984 = vpop.permute.xlu0 %2983
        %2986 = vset.pattern.permute.xlu0 3
        %2987 = vperm.xlu0 %2986, %v738
        %v2988 = vpop.permute.xlu0 %2987
        %2990 = vset.pattern.permute.xlu0 3
        %2991 = vperm.xlu0 %2990, %v739
        %v2992 = vpop.permute.xlu0 %2991
        %2994 = vset.pattern.permute.xlu0 3
        %2995 = vperm.xlu0 %2994, %v740
        %v2996 = vpop.permute.xlu0 %2995
        %2998 = vset.pattern.permute.xlu0 3
        %2999 = vperm.xlu0 %2998, %v741
        %v3000 = vpop.permute.xlu0 %2999
        %3002 = vset.pattern.permute.xlu0 3
        %3003 = vperm.xlu0 %3002, %v742
        %v3004 = vpop.permute.xlu0 %3003
        %3006 = vset.pattern.permute.xlu0 3
        %3007 = vperm.xlu0 %3006, %v743
        %v3008 = vpop.permute.xlu0 %3007
        %3010 = vset.pattern.permute.xlu0 3
        %3011 = vperm.xlu0 %3010, %v744
        %v3012 = vpop.permute.xlu0 %3011
        %v3014 = vmul.f32 %v2308, %v2888
        %v3015 = vmul.f32 %v2307, %v2892
        %v3016 = vmul.f32 %v2306, %v2896
        %v3017 = vmul.f32 %v2305, %v2900
        %v3018 = vmul.f32 %v2304, %v2904
        %v3019 = vmul.f32 %v2303, %v2908
        %v3020 = vmul.f32 %v2302, %v2912
        %v3021 = vmul.f32 %v2301, %v2916
        %v3022 = vmul.f32 %v2300, %v2920
        %v3023 = vmul.f32 %v2299, %v2924
        %v3024 = vmul.f32 %v2298, %v2928
        %v3025 = vmul.f32 %v2297, %v2932
        %v3026 = vmul.f32 %v2296, %v2936
        %v3027 = vmul.f32 %v2295, %v2940
        %v3028 = vmul.f32 %v2294, %v2944
        %v3029 = vmul.f32 %v2293, %v2948
        %v3030 = vmul.f32 %v2292, %v2952
        %v3031 = vmul.f32 %v2291, %v2956
        %v3032 = vmul.f32 %v2290, %v2960
        %v3033 = vmul.f32 %v2289, %v2964
        %v3034 = vmul.f32 %v2288, %v2968
        %v3035 = vmul.f32 %v2287, %v2972
        %v3036 = vmul.f32 %v2286, %v2976
        %v3037 = vmul.f32 %v2285, %v2980
        %v3038 = vmul.f32 %v2284, %v2984
        %v3039 = vmul.f32 %v2283, %v2988
        %v3040 = vmul.f32 %v2282, %v2992
        %v3041 = vmul.f32 %v2281, %v2996
        %v3042 = vmul.f32 %v2280, %v3000
        %v3043 = vmul.f32 %v2279, %v3004
        %v3044 = vmul.f32 %v2278, %v3008
        %v3045 = vmul.f32 %v2277, %v3012
        %3046 = vset.pattern.permute.xlu0 5
        %3047 = vperm.xlu0 %3046, %v713
        %v3048 = vpop.permute.xlu0 %3047
        %3050 = vset.pattern.permute.xlu0 5
        %3051 = vperm.xlu0 %3050, %v714
        %v3052 = vpop.permute.xlu0 %3051
        %3054 = vset.pattern.permute.xlu0 5
        %3055 = vperm.xlu0 %3054, %v715
        %v3056 = vpop.permute.xlu0 %3055
        %3058 = vset.pattern.permute.xlu0 5
        %3059 = vperm.xlu0 %3058, %v716
        %v3060 = vpop.permute.xlu0 %3059
        %3062 = vset.pattern.permute.xlu0 5
        %3063 = vperm.xlu0 %3062, %v717
        %v3064 = vpop.permute.xlu0 %3063
        %3066 = vset.pattern.permute.xlu0 5
        %3067 = vperm.xlu0 %3066, %v718
        %v3068 = vpop.permute.xlu0 %3067
        %3070 = vset.pattern.permute.xlu0 5
        %3071 = vperm.xlu0 %3070, %v719
        %v3072 = vpop.permute.xlu0 %3071
        %3074 = vset.pattern.permute.xlu0 5
        %3075 = vperm.xlu0 %3074, %v720
        %v3076 = vpop.permute.xlu0 %3075
        %3078 = vset.pattern.permute.xlu0 5
        %3079 = vperm.xlu0 %3078, %v721
        %v3080 = vpop.permute.xlu0 %3079
        %3082 = vset.pattern.permute.xlu0 5
        %3083 = vperm.xlu0 %3082, %v722
        %v3084 = vpop.permute.xlu0 %3083
        %3086 = vset.pattern.permute.xlu0 5
        %3087 = vperm.xlu0 %3086, %v723
        %v3088 = vpop.permute.xlu0 %3087
        %3090 = vset.pattern.permute.xlu0 5
        %3091 = vperm.xlu0 %3090, %v724
        %v3092 = vpop.permute.xlu0 %3091
        %3094 = vset.pattern.permute.xlu0 5
        %3095 = vperm.xlu0 %3094, %v725
        %v3096 = vpop.permute.xlu0 %3095
        %3098 = vset.pattern.permute.xlu0 5
        %3099 = vperm.xlu0 %3098, %v726
        %v3100 = vpop.permute.xlu0 %3099
        %3102 = vset.pattern.permute.xlu0 5
        %3103 = vperm.xlu0 %3102, %v727
        %v3104 = vpop.permute.xlu0 %3103
        %3106 = vset.pattern.permute.xlu0 5
        %3107 = vperm.xlu0 %3106, %v728
        %v3108 = vpop.permute.xlu0 %3107
        %3110 = vset.pattern.permute.xlu0 5
        %3111 = vperm.xlu0 %3110, %v729
        %v3112 = vpop.permute.xlu0 %3111
        %3114 = vset.pattern.permute.xlu0 5
        %3115 = vperm.xlu0 %3114, %v730
        %v3116 = vpop.permute.xlu0 %3115
        %3118 = vset.pattern.permute.xlu0 5
        %3119 = vperm.xlu0 %3118, %v731
        %v3120 = vpop.permute.xlu0 %3119
        %3122 = vset.pattern.permute.xlu0 5
        %3123 = vperm.xlu0 %3122, %v732
        %v3124 = vpop.permute.xlu0 %3123
        %3126 = vset.pattern.permute.xlu0 5
        %3127 = vperm.xlu0 %3126, %v733
        %v3128 = vpop.permute.xlu0 %3127
        %3130 = vset.pattern.permute.xlu0 5
        %3131 = vperm.xlu0 %3130, %v734
        %v3132 = vpop.permute.xlu0 %3131
        %3134 = vset.pattern.permute.xlu0 5
        %3135 = vperm.xlu0 %3134, %v735
        %v3136 = vpop.permute.xlu0 %3135
        %3138 = vset.pattern.permute.xlu0 5
        %3139 = vperm.xlu0 %3138, %v736
        %v3140 = vpop.permute.xlu0 %3139
        %3142 = vset.pattern.permute.xlu0 5
        %3143 = vperm.xlu0 %3142, %v737
        %v3144 = vpop.permute.xlu0 %3143
        %3146 = vset.pattern.permute.xlu0 5
        %3147 = vperm.xlu0 %3146, %v738
        %v3148 = vpop.permute.xlu0 %3147
        %3150 = vset.pattern.permute.xlu0 5
        %3151 = vperm.xlu0 %3150, %v739
        %v3152 = vpop.permute.xlu0 %3151
        %3154 = vset.pattern.permute.xlu0 5
        %3155 = vperm.xlu0 %3154, %v740
        %v3156 = vpop.permute.xlu0 %3155
        %3158 = vset.pattern.permute.xlu0 5
        %3159 = vperm.xlu0 %3158, %v741
        %v3160 = vpop.permute.xlu0 %3159
        %3162 = vset.pattern.permute.xlu0 5
        %3163 = vperm.xlu0 %3162, %v742
        %v3164 = vpop.permute.xlu0 %3163
        %3166 = vset.pattern.permute.xlu0 5
        %3167 = vperm.xlu0 %3166, %v743
        %v3168 = vpop.permute.xlu0 %3167
        %3170 = vset.pattern.permute.xlu0 5
        %3171 = vperm.xlu0 %3170, %v744
        %v3172 = vpop.permute.xlu0 %3171
        %v3174 = vmul.f32 %v2724, %v3048
        %v3175 = vmul.f32 %v2723, %v3052
        %v3176 = vmul.f32 %v2722, %v3056
        %v3177 = vmul.f32 %v2721, %v3060
        %v3178 = vmul.f32 %v2720, %v3064
        %v3179 = vmul.f32 %v2719, %v3068
        %v3180 = vmul.f32 %v2718, %v3072
        %v3181 = vmul.f32 %v2717, %v3076
        %v3182 = vmul.f32 %v2716, %v3080
        %v3183 = vmul.f32 %v2715, %v3084
        %v3184 = vmul.f32 %v2714, %v3088
        %v3185 = vmul.f32 %v2713, %v3092
        %v3186 = vmul.f32 %v2712, %v3096
        %v3187 = vmul.f32 %v2711, %v3100
        %v3188 = vmul.f32 %v2710, %v3104
        %v3189 = vmul.f32 %v2709, %v3108
        %v3190 = vmul.f32 %v2708, %v3112
        %v3191 = vmul.f32 %v2707, %v3116
        %v3192 = vmul.f32 %v2706, %v3120
        %v3193 = vmul.f32 %v2705, %v3124
        %v3194 = vmul.f32 %v2704, %v3128
        %v3195 = vmul.f32 %v2703, %v3132
        %v3196 = vmul.f32 %v2702, %v3136
        %v3197 = vmul.f32 %v2701, %v3140
        %v3198 = vmul.f32 %v2700, %v3144
        %v3199 = vmul.f32 %v2699, %v3148
        %v3200 = vmul.f32 %v2698, %v3152
        %v3201 = vmul.f32 %v2697, %v3156
        %v3202 = vmul.f32 %v2696, %v3160
        %v3203 = vmul.f32 %v2695, %v3164
        %v3204 = vmul.f32 %v2694, %v3168
        %v3205 = vmul.f32 %v2725, %v3172
        %3206 = vset.pattern.permute.xlu0 6
        %3207 = vperm.xlu0 %3206, %v713
        %v3208 = vpop.permute.xlu0 %3207
        %3210 = vset.pattern.permute.xlu0 6
        %3211 = vperm.xlu0 %3210, %v714
        %v3212 = vpop.permute.xlu0 %3211
        %3214 = vset.pattern.permute.xlu0 6
        %3215 = vperm.xlu0 %3214, %v715
        %v3216 = vpop.permute.xlu0 %3215
        %3218 = vset.pattern.permute.xlu0 6
        %3219 = vperm.xlu0 %3218, %v716
        %v3220 = vpop.permute.xlu0 %3219
        %3222 = vset.pattern.permute.xlu0 6
        %3223 = vperm.xlu0 %3222, %v717
        %v3224 = vpop.permute.xlu0 %3223
        %3226 = vset.pattern.permute.xlu0 6
        %3227 = vperm.xlu0 %3226, %v718
        %v3228 = vpop.permute.xlu0 %3227
        %3230 = vset.pattern.permute.xlu0 6
        %3231 = vperm.xlu0 %3230, %v719
        %v3232 = vpop.permute.xlu0 %3231
        %3234 = vset.pattern.permute.xlu0 6
        %3235 = vperm.xlu0 %3234, %v720
        %v3236 = vpop.permute.xlu0 %3235
        %3238 = vset.pattern.permute.xlu0 6
        %3239 = vperm.xlu0 %3238, %v721
        %v3240 = vpop.permute.xlu0 %3239
        %3242 = vset.pattern.permute.xlu0 6
        %3243 = vperm.xlu0 %3242, %v722
        %v3244 = vpop.permute.xlu0 %3243
        %3246 = vset.pattern.permute.xlu0 6
        %3247 = vperm.xlu0 %3246, %v723
        %v3248 = vpop.permute.xlu0 %3247
        %3250 = vset.pattern.permute.xlu0 6
        %3251 = vperm.xlu0 %3250, %v724
        %v3252 = vpop.permute.xlu0 %3251
        %3254 = vset.pattern.permute.xlu0 6
        %3255 = vperm.xlu0 %3254, %v725
        %v3256 = vpop.permute.xlu0 %3255
        %3258 = vset.pattern.permute.xlu0 6
        %3259 = vperm.xlu0 %3258, %v726
        %v3260 = vpop.permute.xlu0 %3259
        %3262 = vset.pattern.permute.xlu0 6
        %3263 = vperm.xlu0 %3262, %v727
        %v3264 = vpop.permute.xlu0 %3263
        %3266 = vset.pattern.permute.xlu0 6
        %3267 = vperm.xlu0 %3266, %v728
        %v3268 = vpop.permute.xlu0 %3267
        %3270 = vset.pattern.permute.xlu0 6
        %3271 = vperm.xlu0 %3270, %v729
        %v3272 = vpop.permute.xlu0 %3271
        %3274 = vset.pattern.permute.xlu0 6
        %3275 = vperm.xlu0 %3274, %v730
        %v3276 = vpop.permute.xlu0 %3275
        %3278 = vset.pattern.permute.xlu0 6
        %3279 = vperm.xlu0 %3278, %v731
        %v3280 = vpop.permute.xlu0 %3279
        %3282 = vset.pattern.permute.xlu0 6
        %3283 = vperm.xlu0 %3282, %v732
        %v3284 = vpop.permute.xlu0 %3283
        %3286 = vset.pattern.permute.xlu0 6
        %3287 = vperm.xlu0 %3286, %v733
        %v3288 = vpop.permute.xlu0 %3287
        %3290 = vset.pattern.permute.xlu0 6
        %3291 = vperm.xlu0 %3290, %v734
        %v3292 = vpop.permute.xlu0 %3291
        %3294 = vset.pattern.permute.xlu0 6
        %3295 = vperm.xlu0 %3294, %v735
        %v3296 = vpop.permute.xlu0 %3295
        %3298 = vset.pattern.permute.xlu0 6
        %3299 = vperm.xlu0 %3298, %v736
        %v3300 = vpop.permute.xlu0 %3299
        %3302 = vset.pattern.permute.xlu0 6
        %3303 = vperm.xlu0 %3302, %v737
        %v3304 = vpop.permute.xlu0 %3303
        %3306 = vset.pattern.permute.xlu0 6
        %3307 = vperm.xlu0 %3306, %v738
        %v3308 = vpop.permute.xlu0 %3307
        %3310 = vset.pattern.permute.xlu0 6
        %3311 = vperm.xlu0 %3310, %v739
        %v3312 = vpop.permute.xlu0 %3311
        %3314 = vset.pattern.permute.xlu0 6
        %3315 = vperm.xlu0 %3314, %v740
        %v3316 = vpop.permute.xlu0 %3315
        %3318 = vset.pattern.permute.xlu0 6
        %3319 = vperm.xlu0 %3318, %v741
        %v3320 = vpop.permute.xlu0 %3319
        %3322 = vset.pattern.permute.xlu0 6
        %3323 = vperm.xlu0 %3322, %v742
        %v3324 = vpop.permute.xlu0 %3323
        %3326 = vset.pattern.permute.xlu0 6
        %3327 = vperm.xlu0 %3326, %v743
        %v3328 = vpop.permute.xlu0 %3327
        %3330 = vset.pattern.permute.xlu0 6
        %3331 = vperm.xlu0 %3330, %v744
        %v3332 = vpop.permute.xlu0 %3331
        %v3334 = vmul.f32 %v2306, %v3208
        %v3335 = vmul.f32 %v2305, %v3212
        %v3336 = vmul.f32 %v2304, %v3216
        %v3337 = vmul.f32 %v2303, %v3220
        %v3338 = vmul.f32 %v2302, %v3224
        %v3339 = vmul.f32 %v2301, %v3228
        %v3340 = vmul.f32 %v2300, %v3232
        %v3341 = vmul.f32 %v2299, %v3236
        %v3342 = vmul.f32 %v2298, %v3240
        %v3343 = vmul.f32 %v2297, %v3244
        %v3344 = vmul.f32 %v2296, %v3248
        %v3345 = vmul.f32 %v2295, %v3252
        %v3346 = vmul.f32 %v2294, %v3256
        %v3347 = vmul.f32 %v2293, %v3260
        %v3348 = vmul.f32 %v2292, %v3264
        %v3349 = vmul.f32 %v2291, %v3268
        %v3350 = vmul.f32 %v2290, %v3272
        %v3351 = vmul.f32 %v2289, %v3276
        %v3352 = vmul.f32 %v2288, %v3280
        %v3353 = vmul.f32 %v2287, %v3284
        %v3354 = vmul.f32 %v2286, %v3288
        %v3355 = vmul.f32 %v2285, %v3292
        %v3356 = vmul.f32 %v2284, %v3296
        %v3357 = vmul.f32 %v2283, %v3300
        %v3358 = vmul.f32 %v2282, %v3304
        %v3359 = vmul.f32 %v2281, %v3308
        %v3360 = vmul.f32 %v2280, %v3312
        %v3361 = vmul.f32 %v2279, %v3316
        %v3362 = vmul.f32 %v2278, %v3320
        %v3363 = vmul.f32 %v2277, %v3324
        %v3364 = vmul.f32 %v2308, %v3328
        %v3365 = vmul.f32 %v2307, %v3332
        %3366 = vset.pattern.permute.xlu0 7
        %3367 = vperm.xlu0 %3366, %v713
        %v3368 = vpop.permute.xlu0 %3367
        %3370 = vset.pattern.permute.xlu0 7
        %3371 = vperm.xlu0 %3370, %v714
        %v3372 = vpop.permute.xlu0 %3371
        %3374 = vset.pattern.permute.xlu0 7
        %3375 = vperm.xlu0 %3374, %v715
        %v3376 = vpop.permute.xlu0 %3375
        %3378 = vset.pattern.permute.xlu0 7
        %3379 = vperm.xlu0 %3378, %v716
        %v3380 = vpop.permute.xlu0 %3379
        %3382 = vset.pattern.permute.xlu0 7
        %3383 = vperm.xlu0 %3382, %v717
        %v3384 = vpop.permute.xlu0 %3383
        %3386 = vset.pattern.permute.xlu0 7
        %3387 = vperm.xlu0 %3386, %v718
        %v3388 = vpop.permute.xlu0 %3387
        %3390 = vset.pattern.permute.xlu0 7
        %3391 = vperm.xlu0 %3390, %v719
        %v3392 = vpop.permute.xlu0 %3391
        %3394 = vset.pattern.permute.xlu0 7
        %3395 = vperm.xlu0 %3394, %v720
        %v3396 = vpop.permute.xlu0 %3395
        %3398 = vset.pattern.permute.xlu0 7
        %3399 = vperm.xlu0 %3398, %v721
        %v3400 = vpop.permute.xlu0 %3399
        %3402 = vset.pattern.permute.xlu0 7
        %3403 = vperm.xlu0 %3402, %v722
        %v3404 = vpop.permute.xlu0 %3403
        %3406 = vset.pattern.permute.xlu0 7
        %3407 = vperm.xlu0 %3406, %v723
        %v3408 = vpop.permute.xlu0 %3407
        %3410 = vset.pattern.permute.xlu0 7
        %3411 = vperm.xlu0 %3410, %v724
        %v3412 = vpop.permute.xlu0 %3411
        %3414 = vset.pattern.permute.xlu0 7
        %3415 = vperm.xlu0 %3414, %v725
        %v3416 = vpop.permute.xlu0 %3415
        %3418 = vset.pattern.permute.xlu0 7
        %3419 = vperm.xlu0 %3418, %v726
        %v3420 = vpop.permute.xlu0 %3419
        %3422 = vset.pattern.permute.xlu0 7
        %3423 = vperm.xlu0 %3422, %v727
        %v3424 = vpop.permute.xlu0 %3423
        %3426 = vset.pattern.permute.xlu0 7
        %3427 = vperm.xlu0 %3426, %v728
        %v3428 = vpop.permute.xlu0 %3427
        %3430 = vset.pattern.permute.xlu0 7
        %3431 = vperm.xlu0 %3430, %v729
        %v3432 = vpop.permute.xlu0 %3431
        %3434 = vset.pattern.permute.xlu0 7
        %3435 = vperm.xlu0 %3434, %v730
        %v3436 = vpop.permute.xlu0 %3435
        %3438 = vset.pattern.permute.xlu0 7
        %3439 = vperm.xlu0 %3438, %v731
        %v3440 = vpop.permute.xlu0 %3439
        %3442 = vset.pattern.permute.xlu0 7
        %3443 = vperm.xlu0 %3442, %v732
        %v3444 = vpop.permute.xlu0 %3443
        %3446 = vset.pattern.permute.xlu0 7
        %3447 = vperm.xlu0 %3446, %v733
        %v3448 = vpop.permute.xlu0 %3447
        %3450 = vset.pattern.permute.xlu0 7
        %3451 = vperm.xlu0 %3450, %v734
        %v3452 = vpop.permute.xlu0 %3451
        %3454 = vset.pattern.permute.xlu0 7
        %3455 = vperm.xlu0 %3454, %v735
        %v3456 = vpop.permute.xlu0 %3455
        %3458 = vset.pattern.permute.xlu0 7
        %3459 = vperm.xlu0 %3458, %v736
        %v3460 = vpop.permute.xlu0 %3459
        %3462 = vset.pattern.permute.xlu0 7
        %3463 = vperm.xlu0 %3462, %v737
        %v3464 = vpop.permute.xlu0 %3463
        %3466 = vset.pattern.permute.xlu0 7
        %3467 = vperm.xlu0 %3466, %v738
        %v3468 = vpop.permute.xlu0 %3467
        %3470 = vset.pattern.permute.xlu0 7
        %3471 = vperm.xlu0 %3470, %v739
        %v3472 = vpop.permute.xlu0 %3471
        %3474 = vset.pattern.permute.xlu0 7
        %3475 = vperm.xlu0 %3474, %v740
        %v3476 = vpop.permute.xlu0 %3475
        %3478 = vset.pattern.permute.xlu0 7
        %3479 = vperm.xlu0 %3478, %v741
        %v3480 = vpop.permute.xlu0 %3479
        %3482 = vset.pattern.permute.xlu0 7
        %3483 = vperm.xlu0 %3482, %v742
        %v3484 = vpop.permute.xlu0 %3483
        %3486 = vset.pattern.permute.xlu0 7
        %3487 = vperm.xlu0 %3486, %v743
        %v3488 = vpop.permute.xlu0 %3487
        %3490 = vset.pattern.permute.xlu0 7
        %3491 = vperm.xlu0 %3490, %v744
        %v3492 = vpop.permute.xlu0 %3491
        %v3494 = vmul.f32 %v1098, %v3368
        %v3495 = vmul.f32 %v1099, %v3372
        %v3496 = vmul.f32 %v1100, %v3376
        %v3497 = vmul.f32 %v1101, %v3380
        %v3498 = vmul.f32 %v1102, %v3384
        %v3499 = vmul.f32 %v1103, %v3388
        %v3500 = vmul.f32 %v1104, %v3392
        %v3501 = vmul.f32 %v1105, %v3396
        %v3502 = vmul.f32 %v1106, %v3400
        %v3503 = vmul.f32 %v1107, %v3404
        %v3504 = vmul.f32 %v1108, %v3408
        %v3505 = vmul.f32 %v1109, %v3412
        %v3506 = vmul.f32 %v1110, %v3416
        %v3507 = vmul.f32 %v1111, %v3420
        %v3508 = vmul.f32 %v1112, %v3424
        %v3509 = vmul.f32 %v1113, %v3428
        %v3510 = vmul.f32 %v1114, %v3432
        %v3511 = vmul.f32 %v1115, %v3436
        %v3512 = vmul.f32 %v1116, %v3440
        %v3513 = vmul.f32 %v1117, %v3444
        %v3514 = vmul.f32 %v1118, %v3448
        %v3515 = vmul.f32 %v1119, %v3452
        %v3516 = vmul.f32 %v1120, %v3456
        %v3517 = vmul.f32 %v1121, %v3460
        %v3518 = vmul.f32 %v1122, %v3464
        %v3519 = vmul.f32 %v1123, %v3468
        %v3520 = vmul.f32 %v1124, %v3472
        %v3521 = vmul.f32 %v1125, %v3476
        %v3522 = vmul.f32 %v1126, %v3480
        %v3523 = vmul.f32 %v1127, %v3484
        %v3524 = vmul.f32 %v1096, %v3488
        %v3525 = vmul.f32 %v1097, %v3492
        %3526 = vset.pattern.permute.xlu0 8
        %3527 = vperm.xlu0 %3526, %v713
        %v3528 = vpop.permute.xlu0 %3527
        %3530 = vset.pattern.permute.xlu0 8
        %3531 = vperm.xlu0 %3530, %v714
        %v3532 = vpop.permute.xlu0 %3531
        %3534 = vset.pattern.permute.xlu0 8
        %3535 = vperm.xlu0 %3534, %v715
        %v3536 = vpop.permute.xlu0 %3535
        %3538 = vset.pattern.permute.xlu0 8
        %3539 = vperm.xlu0 %3538, %v716
        %v3540 = vpop.permute.xlu0 %3539
        %3542 = vset.pattern.permute.xlu0 8
        %3543 = vperm.xlu0 %3542, %v717
        %v3544 = vpop.permute.xlu0 %3543
        %3546 = vset.pattern.permute.xlu0 8
        %3547 = vperm.xlu0 %3546, %v718
        %v3548 = vpop.permute.xlu0 %3547
        %3550 = vset.pattern.permute.xlu0 8
        %3551 = vperm.xlu0 %3550, %v719
        %v3552 = vpop.permute.xlu0 %3551
        %3554 = vset.pattern.permute.xlu0 8
        %3555 = vperm.xlu0 %3554, %v720
        %v3556 = vpop.permute.xlu0 %3555
        %3558 = vset.pattern.permute.xlu0 8
        %3559 = vperm.xlu0 %3558, %v721
        %v3560 = vpop.permute.xlu0 %3559
        %3562 = vset.pattern.permute.xlu0 8
        %3563 = vperm.xlu0 %3562, %v722
        %v3564 = vpop.permute.xlu0 %3563
        %3566 = vset.pattern.permute.xlu0 8
        %3567 = vperm.xlu0 %3566, %v723
        %v3568 = vpop.permute.xlu0 %3567
        %3570 = vset.pattern.permute.xlu0 8
        %3571 = vperm.xlu0 %3570, %v724
        %v3572 = vpop.permute.xlu0 %3571
        %3574 = vset.pattern.permute.xlu0 8
        %3575 = vperm.xlu0 %3574, %v725
        %v3576 = vpop.permute.xlu0 %3575
        %3578 = vset.pattern.permute.xlu0 8
        %3579 = vperm.xlu0 %3578, %v726
        %v3580 = vpop.permute.xlu0 %3579
        %3582 = vset.pattern.permute.xlu0 8
        %3583 = vperm.xlu0 %3582, %v727
        %v3584 = vpop.permute.xlu0 %3583
        %3586 = vset.pattern.permute.xlu0 8
        %3587 = vperm.xlu0 %3586, %v728
        %v3588 = vpop.permute.xlu0 %3587
        %3590 = vset.pattern.permute.xlu0 8
        %3591 = vperm.xlu0 %3590, %v729
        %v3592 = vpop.permute.xlu0 %3591
        %3594 = vset.pattern.permute.xlu0 8
        %3595 = vperm.xlu0 %3594, %v730
        %v3596 = vpop.permute.xlu0 %3595
        %3598 = vset.pattern.permute.xlu0 8
        %3599 = vperm.xlu0 %3598, %v731
        %v3600 = vpop.permute.xlu0 %3599
        %3602 = vset.pattern.permute.xlu0 8
        %3603 = vperm.xlu0 %3602, %v732
        %v3604 = vpop.permute.xlu0 %3603
        %3606 = vset.pattern.permute.xlu0 8
        %3607 = vperm.xlu0 %3606, %v733
        %v3608 = vpop.permute.xlu0 %3607
        %3610 = vset.pattern.permute.xlu0 8
        %3611 = vperm.xlu0 %3610, %v734
        %v3612 = vpop.permute.xlu0 %3611
        %3614 = vset.pattern.permute.xlu0 8
        %3615 = vperm.xlu0 %3614, %v735
        %v3616 = vpop.permute.xlu0 %3615
        %3618 = vset.pattern.permute.xlu0 8
        %3619 = vperm.xlu0 %3618, %v736
        %v3620 = vpop.permute.xlu0 %3619
        %3622 = vset.pattern.permute.xlu0 8
        %3623 = vperm.xlu0 %3622, %v737
        %v3624 = vpop.permute.xlu0 %3623
        %3626 = vset.pattern.permute.xlu0 8
        %3627 = vperm.xlu0 %3626, %v738
        %v3628 = vpop.permute.xlu0 %3627
        %3630 = vset.pattern.permute.xlu0 8
        %3631 = vperm.xlu0 %3630, %v739
        %v3632 = vpop.permute.xlu0 %3631
        %3634 = vset.pattern.permute.xlu0 8
        %3635 = vperm.xlu0 %3634, %v740
        %v3636 = vpop.permute.xlu0 %3635
        %3638 = vset.pattern.permute.xlu0 8
        %3639 = vperm.xlu0 %3638, %v741
        %v3640 = vpop.permute.xlu0 %3639
        %3642 = vset.pattern.permute.xlu0 8
        %3643 = vperm.xlu0 %3642, %v742
        %v3644 = vpop.permute.xlu0 %3643
        %3646 = vset.pattern.permute.xlu0 8
        %3647 = vperm.xlu0 %3646, %v743
        %v3648 = vpop.permute.xlu0 %3647
        %3650 = vset.pattern.permute.xlu0 8
        %3651 = vperm.xlu0 %3650, %v744
        %v3652 = vpop.permute.xlu0 %3651
        %v3654 = vmul.f32 %v2722, %v3528
        %v3655 = vmul.f32 %v2721, %v3532
        %v3656 = vmul.f32 %v2720, %v3536
        %v3657 = vmul.f32 %v2719, %v3540
        %v3658 = vmul.f32 %v2718, %v3544
        %v3659 = vmul.f32 %v2717, %v3548
        %v3660 = vmul.f32 %v2716, %v3552
        %v3661 = vmul.f32 %v2715, %v3556
        %v3662 = vmul.f32 %v2714, %v3560
        %v3663 = vmul.f32 %v2713, %v3564
        %v3664 = vmul.f32 %v2712, %v3568
        %v3665 = vmul.f32 %v2711, %v3572
        %v3666 = vmul.f32 %v2710, %v3576
        %v3667 = vmul.f32 %v2709, %v3580
        %v3668 = vmul.f32 %v2708, %v3584
        %v3669 = vmul.f32 %v2707, %v3588
        %v3670 = vmul.f32 %v2706, %v3592
        %v3671 = vmul.f32 %v2705, %v3596
        %v3672 = vmul.f32 %v2704, %v3600
        %v3673 = vmul.f32 %v2703, %v3604
        %v3674 = vmul.f32 %v2702, %v3608
        %v3675 = vmul.f32 %v2701, %v3612
        %v3676 = vmul.f32 %v2700, %v3616
        %v3677 = vmul.f32 %v2699, %v3620
        %v3678 = vmul.f32 %v2698, %v3624
        %v3679 = vmul.f32 %v2697, %v3628
        %v3680 = vmul.f32 %v2696, %v3632
        %v3681 = vmul.f32 %v2695, %v3636
        %v3682 = vmul.f32 %v2694, %v3640
        %v3683 = vmul.f32 %v2725, %v3644
        %v3684 = vmul.f32 %v2724, %v3648
        %v3685 = vmul.f32 %v2723, %v3652
        %3718 = vrot.lane.b32.xlu0 %v2629, 16
        %v3719 = vpop.permute.xlu0 %3718
        %3720 = vrot.lane.b32.xlu0 %v2630, 16
        %v3721 = vpop.permute.xlu0 %3720
        %3722 = vrot.lane.b32.xlu0 %v2631, 16
        %v3723 = vpop.permute.xlu0 %3722
        %3724 = vrot.lane.b32.xlu0 %v2632, 16
        %v3725 = vpop.permute.xlu0 %3724
        %3726 = vrot.lane.b32.xlu0 %v2633, 16
        %v3727 = vpop.permute.xlu0 %3726
        %3728 = vrot.lane.b32.xlu0 %v2634, 16
        %v3729 = vpop.permute.xlu0 %3728
        %3730 = vrot.lane.b32.xlu0 %v2635, 16
        %v3731 = vpop.permute.xlu0 %3730
        %3732 = vrot.lane.b32.xlu0 %v2636, 16
        %v3733 = vpop.permute.xlu0 %3732
        %3734 = vrot.lane.b32.xlu0 %v2637, 16
        %v3735 = vpop.permute.xlu0 %3734
        %3736 = vrot.lane.b32.xlu0 %v2638, 16
        %v3737 = vpop.permute.xlu0 %3736
        %3738 = vrot.lane.b32.xlu0 %v2639, 16
        %v3739 = vpop.permute.xlu0 %3738
        %3740 = vrot.lane.b32.xlu0 %v2640, 16
        %v3741 = vpop.permute.xlu0 %3740
        %3742 = vrot.lane.b32.xlu0 %v2641, 16
        %v3743 = vpop.permute.xlu0 %3742
        %3744 = vrot.lane.b32.xlu0 %v2642, 16
        %v3745 = vpop.permute.xlu0 %3744
        %3746 = vrot.lane.b32.xlu0 %v2643, 16
        %v3747 = vpop.permute.xlu0 %3746
        %3748 = vrot.lane.b32.xlu0 %v2644, 16
        %v3749 = vpop.permute.xlu0 %3748
        %3750 = vrot.lane.b32.xlu0 %v2645, 16
        %v3751 = vpop.permute.xlu0 %3750
        %3752 = vrot.lane.b32.xlu0 %v2646, 16
        %v3753 = vpop.permute.xlu0 %3752
        %3754 = vrot.lane.b32.xlu0 %v2647, 16
        %v3755 = vpop.permute.xlu0 %3754
        %3756 = vrot.lane.b32.xlu0 %v2648, 16
        %v3757 = vpop.permute.xlu0 %3756
        %3758 = vrot.lane.b32.xlu0 %v2649, 16
        %v3759 = vpop.permute.xlu0 %3758
        %3760 = vrot.lane.b32.xlu0 %v2650, 16
        %v3761 = vpop.permute.xlu0 %3760
        %3762 = vrot.lane.b32.xlu0 %v2651, 16
        %v3763 = vpop.permute.xlu0 %3762
        %3764 = vrot.lane.b32.xlu0 %v2652, 16
        %v3765 = vpop.permute.xlu0 %3764
        %3766 = vrot.lane.b32.xlu0 %v2653, 16
        %v3767 = vpop.permute.xlu0 %3766
        %3768 = vrot.lane.b32.xlu0 %v2654, 16
        %v3769 = vpop.permute.xlu0 %3768
        %3770 = vrot.lane.b32.xlu0 %v2655, 16
        %v3771 = vpop.permute.xlu0 %3770
        %3772 = vrot.lane.b32.xlu0 %v2656, 16
        %v3773 = vpop.permute.xlu0 %3772
        %3774 = vrot.lane.b32.xlu0 %v2657, 16
        %v3775 = vpop.permute.xlu0 %3774
        %3776 = vrot.lane.b32.xlu0 %v2658, 16
        %v3777 = vpop.permute.xlu0 %3776
        %3778 = vrot.lane.b32.xlu0 %v2659, 16
        %v3779 = vpop.permute.xlu0 %3778
        %3780 = vrot.lane.b32.xlu0 %v2660, 16
        %v3781 = vpop.permute.xlu0 %3780
        %3846 = vrot.lane.b32.xlu0 %v2854, 32
        %v3847 = vpop.permute.xlu0 %3846
        %3848 = vrot.lane.b32.xlu0 %v2855, 32
        %v3849 = vpop.permute.xlu0 %3848
        %3850 = vrot.lane.b32.xlu0 %v2856, 32
        %v3851 = vpop.permute.xlu0 %3850
        %3852 = vrot.lane.b32.xlu0 %v2857, 32
        %v3853 = vpop.permute.xlu0 %3852
        %3854 = vrot.lane.b32.xlu0 %v2858, 32
        %v3855 = vpop.permute.xlu0 %3854
        %3856 = vrot.lane.b32.xlu0 %v2859, 32
        %v3857 = vpop.permute.xlu0 %3856
        %3858 = vrot.lane.b32.xlu0 %v2860, 32
        %v3859 = vpop.permute.xlu0 %3858
        %3860 = vrot.lane.b32.xlu0 %v2861, 32
        %v3861 = vpop.permute.xlu0 %3860
        %3862 = vrot.lane.b32.xlu0 %v2862, 32
        %v3863 = vpop.permute.xlu0 %3862
        %3864 = vrot.lane.b32.xlu0 %v2863, 32
        %v3865 = vpop.permute.xlu0 %3864
        %3866 = vrot.lane.b32.xlu0 %v2864, 32
        %v3867 = vpop.permute.xlu0 %3866
        %3868 = vrot.lane.b32.xlu0 %v2865, 32
        %v3869 = vpop.permute.xlu0 %3868
        %3870 = vrot.lane.b32.xlu0 %v2866, 32
        %v3871 = vpop.permute.xlu0 %3870
        %3872 = vrot.lane.b32.xlu0 %v2867, 32
        %v3873 = vpop.permute.xlu0 %3872
        %3874 = vrot.lane.b32.xlu0 %v2868, 32
        %v3875 = vpop.permute.xlu0 %3874
        %3876 = vrot.lane.b32.xlu0 %v2869, 32
        %v3877 = vpop.permute.xlu0 %3876
        %3878 = vrot.lane.b32.xlu0 %v2870, 32
        %v3879 = vpop.permute.xlu0 %3878
        %3880 = vrot.lane.b32.xlu0 %v2871, 32
        %v3881 = vpop.permute.xlu0 %3880
        %3882 = vrot.lane.b32.xlu0 %v2872, 32
        %v3883 = vpop.permute.xlu0 %3882
        %3884 = vrot.lane.b32.xlu0 %v2873, 32
        %v3885 = vpop.permute.xlu0 %3884
        %3886 = vrot.lane.b32.xlu0 %v2874, 32
        %v3887 = vpop.permute.xlu0 %3886
        %3888 = vrot.lane.b32.xlu0 %v2875, 32
        %v3889 = vpop.permute.xlu0 %3888
        %3890 = vrot.lane.b32.xlu0 %v2876, 32
        %v3891 = vpop.permute.xlu0 %3890
        %3892 = vrot.lane.b32.xlu0 %v2877, 32
        %v3893 = vpop.permute.xlu0 %3892
        %3894 = vrot.lane.b32.xlu0 %v2878, 32
        %v3895 = vpop.permute.xlu0 %3894
        %3896 = vrot.lane.b32.xlu0 %v2879, 32
        %v3897 = vpop.permute.xlu0 %3896
        %3898 = vrot.lane.b32.xlu0 %v2880, 32
        %v3899 = vpop.permute.xlu0 %3898
        %3900 = vrot.lane.b32.xlu0 %v2881, 32
        %v3901 = vpop.permute.xlu0 %3900
        %3902 = vrot.lane.b32.xlu0 %v2882, 32
        %v3903 = vpop.permute.xlu0 %3902
        %3904 = vrot.lane.b32.xlu0 %v2883, 32
        %v3905 = vpop.permute.xlu0 %3904
        %3906 = vrot.lane.b32.xlu0 %v2884, 32
        %v3907 = vpop.permute.xlu0 %3906
        %3908 = vrot.lane.b32.xlu0 %v2885, 32
        %v3909 = vpop.permute.xlu0 %3908
        %3974 = vrot.lane.b32.xlu0 %v3014, 48
        %v3975 = vpop.permute.xlu0 %3974
        %3976 = vrot.lane.b32.xlu0 %v3015, 48
        %v3977 = vpop.permute.xlu0 %3976
        %3978 = vrot.lane.b32.xlu0 %v3016, 48
        %v3979 = vpop.permute.xlu0 %3978
        %3980 = vrot.lane.b32.xlu0 %v3017, 48
        %v3981 = vpop.permute.xlu0 %3980
        %3982 = vrot.lane.b32.xlu0 %v3018, 48
        %v3983 = vpop.permute.xlu0 %3982
        %3984 = vrot.lane.b32.xlu0 %v3019, 48
        %v3985 = vpop.permute.xlu0 %3984
        %3986 = vrot.lane.b32.xlu0 %v3020, 48
        %v3987 = vpop.permute.xlu0 %3986
        %3988 = vrot.lane.b32.xlu0 %v3021, 48
        %v3989 = vpop.permute.xlu0 %3988
        %3990 = vrot.lane.b32.xlu0 %v3022, 48
        %v3991 = vpop.permute.xlu0 %3990
        %3992 = vrot.lane.b32.xlu0 %v3023, 48
        %v3993 = vpop.permute.xlu0 %3992
        %3994 = vrot.lane.b32.xlu0 %v3024, 48
        %v3995 = vpop.permute.xlu0 %3994
        %3996 = vrot.lane.b32.xlu0 %v3025, 48
        %v3997 = vpop.permute.xlu0 %3996
        %3998 = vrot.lane.b32.xlu0 %v3026, 48
        %v3999 = vpop.permute.xlu0 %3998
        %4000 = vrot.lane.b32.xlu0 %v3027, 48
        %v4001 = vpop.permute.xlu0 %4000
        %4002 = vrot.lane.b32.xlu0 %v3028, 48
        %v4003 = vpop.permute.xlu0 %4002
        %4004 = vrot.lane.b32.xlu0 %v3029, 48
        %v4005 = vpop.permute.xlu0 %4004
        %4006 = vrot.lane.b32.xlu0 %v3030, 48
        %v4007 = vpop.permute.xlu0 %4006
        %4008 = vrot.lane.b32.xlu0 %v3031, 48
        %v4009 = vpop.permute.xlu0 %4008
        %4010 = vrot.lane.b32.xlu0 %v3032, 48
        %v4011 = vpop.permute.xlu0 %4010
        %4012 = vrot.lane.b32.xlu0 %v3033, 48
        %v4013 = vpop.permute.xlu0 %4012
        %4014 = vrot.lane.b32.xlu0 %v3034, 48
        %v4015 = vpop.permute.xlu0 %4014
        %4016 = vrot.lane.b32.xlu0 %v3035, 48
        %v4017 = vpop.permute.xlu0 %4016
        %4018 = vrot.lane.b32.xlu0 %v3036, 48
        %v4019 = vpop.permute.xlu0 %4018
        %4020 = vrot.lane.b32.xlu0 %v3037, 48
        %v4021 = vpop.permute.xlu0 %4020
        %4022 = vrot.lane.b32.xlu0 %v3038, 48
        %v4023 = vpop.permute.xlu0 %4022
        %4024 = vrot.lane.b32.xlu0 %v3039, 48
        %v4025 = vpop.permute.xlu0 %4024
        %4026 = vrot.lane.b32.xlu0 %v3040, 48
        %v4027 = vpop.permute.xlu0 %4026
        %4028 = vrot.lane.b32.xlu0 %v3041, 48
        %v4029 = vpop.permute.xlu0 %4028
        %4030 = vrot.lane.b32.xlu0 %v3042, 48
        %v4031 = vpop.permute.xlu0 %4030
        %4032 = vrot.lane.b32.xlu0 %v3043, 48
        %v4033 = vpop.permute.xlu0 %4032
        %4034 = vrot.lane.b32.xlu0 %v3044, 48
        %v4035 = vpop.permute.xlu0 %4034
        %4036 = vrot.lane.b32.xlu0 %v3045, 48
        %v4037 = vpop.permute.xlu0 %4036
        %4102 = vrot.lane.b32.xlu0 %v1096, 64
        %v4103 = vpop.permute.xlu0 %4102
        %4104 = vrot.lane.b32.xlu0 %v1097, 64
        %v4105 = vpop.permute.xlu0 %4104
        %4106 = vrot.lane.b32.xlu0 %v1098, 64
        %v4107 = vpop.permute.xlu0 %4106
        %4108 = vrot.lane.b32.xlu0 %v1099, 64
        %v4109 = vpop.permute.xlu0 %4108
        %4110 = vrot.lane.b32.xlu0 %v1100, 64
        %v4111 = vpop.permute.xlu0 %4110
        %4112 = vrot.lane.b32.xlu0 %v1101, 64
        %v4113 = vpop.permute.xlu0 %4112
        %4114 = vrot.lane.b32.xlu0 %v1102, 64
        %v4115 = vpop.permute.xlu0 %4114
        %4116 = vrot.lane.b32.xlu0 %v1103, 64
        %v4117 = vpop.permute.xlu0 %4116
        %4118 = vrot.lane.b32.xlu0 %v1104, 64
        %v4119 = vpop.permute.xlu0 %4118
        %4120 = vrot.lane.b32.xlu0 %v1105, 64
        %v4121 = vpop.permute.xlu0 %4120
        %4122 = vrot.lane.b32.xlu0 %v1106, 64
        %v4123 = vpop.permute.xlu0 %4122
        %4124 = vrot.lane.b32.xlu0 %v1107, 64
        %v4125 = vpop.permute.xlu0 %4124
        %4126 = vrot.lane.b32.xlu0 %v1108, 64
        %v4127 = vpop.permute.xlu0 %4126
        %4128 = vrot.lane.b32.xlu0 %v1109, 64
        %v4129 = vpop.permute.xlu0 %4128
        %4130 = vrot.lane.b32.xlu0 %v1110, 64
        %v4131 = vpop.permute.xlu0 %4130
        %4132 = vrot.lane.b32.xlu0 %v1111, 64
        %v4133 = vpop.permute.xlu0 %4132
        %4134 = vrot.lane.b32.xlu0 %v1112, 64
        %v4135 = vpop.permute.xlu0 %4134
        %4136 = vrot.lane.b32.xlu0 %v1113, 64
        %v4137 = vpop.permute.xlu0 %4136
        %4138 = vrot.lane.b32.xlu0 %v1114, 64
        %v4139 = vpop.permute.xlu0 %4138
        %4140 = vrot.lane.b32.xlu0 %v1115, 64
        %v4141 = vpop.permute.xlu0 %4140
        %4142 = vrot.lane.b32.xlu0 %v1116, 64
        %v4143 = vpop.permute.xlu0 %4142
        %4144 = vrot.lane.b32.xlu0 %v1117, 64
        %v4145 = vpop.permute.xlu0 %4144
        %4146 = vrot.lane.b32.xlu0 %v1118, 64
        %v4147 = vpop.permute.xlu0 %4146
        %4148 = vrot.lane.b32.xlu0 %v1119, 64
        %v4149 = vpop.permute.xlu0 %4148
        %4150 = vrot.lane.b32.xlu0 %v1120, 64
        %v4151 = vpop.permute.xlu0 %4150
        %4152 = vrot.lane.b32.xlu0 %v1121, 64
        %v4153 = vpop.permute.xlu0 %4152
        %4154 = vrot.lane.b32.xlu0 %v1122, 64
        %v4155 = vpop.permute.xlu0 %4154
        %4156 = vrot.lane.b32.xlu0 %v1123, 64
        %v4157 = vpop.permute.xlu0 %4156
        %4158 = vrot.lane.b32.xlu0 %v1124, 64
        %v4159 = vpop.permute.xlu0 %4158
        %4160 = vrot.lane.b32.xlu0 %v1125, 64
        %v4161 = vpop.permute.xlu0 %4160
        %4162 = vrot.lane.b32.xlu0 %v1126, 64
        %v4163 = vpop.permute.xlu0 %4162
        %4164 = vrot.lane.b32.xlu0 %v1127, 64
        %v4165 = vpop.permute.xlu0 %4164
        %4230 = vrot.lane.b32.xlu0 %v3174, 80
        %v4231 = vpop.permute.xlu0 %4230
        %4232 = vrot.lane.b32.xlu0 %v3175, 80
        %v4233 = vpop.permute.xlu0 %4232
        %4234 = vrot.lane.b32.xlu0 %v3176, 80
        %v4235 = vpop.permute.xlu0 %4234
        %4236 = vrot.lane.b32.xlu0 %v3177, 80
        %v4237 = vpop.permute.xlu0 %4236
        %4238 = vrot.lane.b32.xlu0 %v3178, 80
        %v4239 = vpop.permute.xlu0 %4238
        %4240 = vrot.lane.b32.xlu0 %v3179, 80
        %v4241 = vpop.permute.xlu0 %4240
        %4242 = vrot.lane.b32.xlu0 %v3180, 80
        %v4243 = vpop.permute.xlu0 %4242
        %4244 = vrot.lane.b32.xlu0 %v3181, 80
        %v4245 = vpop.permute.xlu0 %4244
        %4246 = vrot.lane.b32.xlu0 %v3182, 80
        %v4247 = vpop.permute.xlu0 %4246
        %4248 = vrot.lane.b32.xlu0 %v3183, 80
        %v4249 = vpop.permute.xlu0 %4248
        %4250 = vrot.lane.b32.xlu0 %v3184, 80
        %v4251 = vpop.permute.xlu0 %4250
        %4252 = vrot.lane.b32.xlu0 %v3185, 80
        %v4253 = vpop.permute.xlu0 %4252
        %4254 = vrot.lane.b32.xlu0 %v3186, 80
        %v4255 = vpop.permute.xlu0 %4254
        %4256 = vrot.lane.b32.xlu0 %v3187, 80
        %v4257 = vpop.permute.xlu0 %4256
        %4258 = vrot.lane.b32.xlu0 %v3188, 80
        %v4259 = vpop.permute.xlu0 %4258
        %4260 = vrot.lane.b32.xlu0 %v3189, 80
        %v4261 = vpop.permute.xlu0 %4260
        %4262 = vrot.lane.b32.xlu0 %v3190, 80
        %v4263 = vpop.permute.xlu0 %4262
        %4264 = vrot.lane.b32.xlu0 %v3191, 80
        %v4265 = vpop.permute.xlu0 %4264
        %4266 = vrot.lane.b32.xlu0 %v3192, 80
        %v4267 = vpop.permute.xlu0 %4266
        %4268 = vrot.lane.b32.xlu0 %v3193, 80
        %v4269 = vpop.permute.xlu0 %4268
        %4270 = vrot.lane.b32.xlu0 %v3194, 80
        %v4271 = vpop.permute.xlu0 %4270
        %4272 = vrot.lane.b32.xlu0 %v3195, 80
        %v4273 = vpop.permute.xlu0 %4272
        %4274 = vrot.lane.b32.xlu0 %v3196, 80
        %v4275 = vpop.permute.xlu0 %4274
        %4276 = vrot.lane.b32.xlu0 %v3197, 80
        %v4277 = vpop.permute.xlu0 %4276
        %4278 = vrot.lane.b32.xlu0 %v3198, 80
        %v4279 = vpop.permute.xlu0 %4278
        %4280 = vrot.lane.b32.xlu0 %v3199, 80
        %v4281 = vpop.permute.xlu0 %4280
        %4282 = vrot.lane.b32.xlu0 %v3200, 80
        %v4283 = vpop.permute.xlu0 %4282
        %4284 = vrot.lane.b32.xlu0 %v3201, 80
        %v4285 = vpop.permute.xlu0 %4284
        %4286 = vrot.lane.b32.xlu0 %v3202, 80
        %v4287 = vpop.permute.xlu0 %4286
        %4288 = vrot.lane.b32.xlu0 %v3203, 80
        %v4289 = vpop.permute.xlu0 %4288
        %4290 = vrot.lane.b32.xlu0 %v3204, 80
        %v4291 = vpop.permute.xlu0 %4290
        %4292 = vrot.lane.b32.xlu0 %v3205, 80
        %v4293 = vpop.permute.xlu0 %4292
        %4358 = vrot.lane.b32.xlu0 %v3334, 96
        %v4359 = vpop.permute.xlu0 %4358
        %4360 = vrot.lane.b32.xlu0 %v3335, 96
        %v4361 = vpop.permute.xlu0 %4360
        %4362 = vrot.lane.b32.xlu0 %v3336, 96
        %v4363 = vpop.permute.xlu0 %4362
        %4364 = vrot.lane.b32.xlu0 %v3337, 96
        %v4365 = vpop.permute.xlu0 %4364
        %4366 = vrot.lane.b32.xlu0 %v3338, 96
        %v4367 = vpop.permute.xlu0 %4366
        %4368 = vrot.lane.b32.xlu0 %v3339, 96
        %v4369 = vpop.permute.xlu0 %4368
        %4370 = vrot.lane.b32.xlu0 %v3340, 96
        %v4371 = vpop.permute.xlu0 %4370
        %4372 = vrot.lane.b32.xlu0 %v3341, 96
        %v4373 = vpop.permute.xlu0 %4372
        %4374 = vrot.lane.b32.xlu0 %v3342, 96
        %v4375 = vpop.permute.xlu0 %4374
        %4376 = vrot.lane.b32.xlu0 %v3343, 96
        %v4377 = vpop.permute.xlu0 %4376
        %4378 = vrot.lane.b32.xlu0 %v3344, 96
        %v4379 = vpop.permute.xlu0 %4378
        %4380 = vrot.lane.b32.xlu0 %v3345, 96
        %v4381 = vpop.permute.xlu0 %4380
        %4382 = vrot.lane.b32.xlu0 %v3346, 96
        %v4383 = vpop.permute.xlu0 %4382
        %4384 = vrot.lane.b32.xlu0 %v3347, 96
        %v4385 = vpop.permute.xlu0 %4384
        %4386 = vrot.lane.b32.xlu0 %v3348, 96
        %v4387 = vpop.permute.xlu0 %4386
        %4388 = vrot.lane.b32.xlu0 %v3349, 96
        %v4389 = vpop.permute.xlu0 %4388
        %4390 = vrot.lane.b32.xlu0 %v3350, 96
        %v4391 = vpop.permute.xlu0 %4390
        %4392 = vrot.lane.b32.xlu0 %v3351, 96
        %v4393 = vpop.permute.xlu0 %4392
        %4394 = vrot.lane.b32.xlu0 %v3352, 96
        %v4395 = vpop.permute.xlu0 %4394
        %4396 = vrot.lane.b32.xlu0 %v3353, 96
        %v4397 = vpop.permute.xlu0 %4396
        %4398 = vrot.lane.b32.xlu0 %v3354, 96
        %v4399 = vpop.permute.xlu0 %4398
        %4400 = vrot.lane.b32.xlu0 %v3355, 96
        %v4401 = vpop.permute.xlu0 %4400
        %4402 = vrot.lane.b32.xlu0 %v3356, 96
        %v4403 = vpop.permute.xlu0 %4402
        %4404 = vrot.lane.b32.xlu0 %v3357, 96
        %v4405 = vpop.permute.xlu0 %4404
        %4406 = vrot.lane.b32.xlu0 %v3358, 96
        %v4407 = vpop.permute.xlu0 %4406
        %4408 = vrot.lane.b32.xlu0 %v3359, 96
        %v4409 = vpop.permute.xlu0 %4408
        %4410 = vrot.lane.b32.xlu0 %v3360, 96
        %v4411 = vpop.permute.xlu0 %4410
        %4412 = vrot.lane.b32.xlu0 %v3361, 96
        %v4413 = vpop.permute.xlu0 %4412
        %4414 = vrot.lane.b32.xlu0 %v3362, 96
        %v4415 = vpop.permute.xlu0 %4414
        %4416 = vrot.lane.b32.xlu0 %v3363, 96
        %v4417 = vpop.permute.xlu0 %4416
        %4418 = vrot.lane.b32.xlu0 %v3364, 96
        %v4419 = vpop.permute.xlu0 %4418
        %4420 = vrot.lane.b32.xlu0 %v3365, 96
        %v4421 = vpop.permute.xlu0 %4420
        %4486 = vrot.lane.b32.xlu0 %v3494, 112
        %v4487 = vpop.permute.xlu0 %4486
        %4488 = vrot.lane.b32.xlu0 %v3495, 112
        %v4489 = vpop.permute.xlu0 %4488
        %4490 = vrot.lane.b32.xlu0 %v3496, 112
        %v4491 = vpop.permute.xlu0 %4490
        %4492 = vrot.lane.b32.xlu0 %v3497, 112
        %v4493 = vpop.permute.xlu0 %4492
        %4494 = vrot.lane.b32.xlu0 %v3498, 112
        %v4495 = vpop.permute.xlu0 %4494
        %4496 = vrot.lane.b32.xlu0 %v3499, 112
        %v4497 = vpop.permute.xlu0 %4496
        %4498 = vrot.lane.b32.xlu0 %v3500, 112
        %v4499 = vpop.permute.xlu0 %4498
        %4500 = vrot.lane.b32.xlu0 %v3501, 112
        %v4501 = vpop.permute.xlu0 %4500
        %4502 = vrot.lane.b32.xlu0 %v3502, 112
        %v4503 = vpop.permute.xlu0 %4502
        %4504 = vrot.lane.b32.xlu0 %v3503, 112
        %v4505 = vpop.permute.xlu0 %4504
        %4506 = vrot.lane.b32.xlu0 %v3504, 112
        %v4507 = vpop.permute.xlu0 %4506
        %4508 = vrot.lane.b32.xlu0 %v3505, 112
        %v4509 = vpop.permute.xlu0 %4508
        %4510 = vrot.lane.b32.xlu0 %v3506, 112
        %v4511 = vpop.permute.xlu0 %4510
        %4512 = vrot.lane.b32.xlu0 %v3507, 112
        %v4513 = vpop.permute.xlu0 %4512
        %4514 = vrot.lane.b32.xlu0 %v3508, 112
        %v4515 = vpop.permute.xlu0 %4514
        %4516 = vrot.lane.b32.xlu0 %v3509, 112
        %v4517 = vpop.permute.xlu0 %4516
        %4518 = vrot.lane.b32.xlu0 %v3510, 112
        %v4519 = vpop.permute.xlu0 %4518
        %4520 = vrot.lane.b32.xlu0 %v3511, 112
        %v4521 = vpop.permute.xlu0 %4520
        %4522 = vrot.lane.b32.xlu0 %v3512, 112
        %v4523 = vpop.permute.xlu0 %4522
        %4524 = vrot.lane.b32.xlu0 %v3513, 112
        %v4525 = vpop.permute.xlu0 %4524
        %4526 = vrot.lane.b32.xlu0 %v3514, 112
        %v4527 = vpop.permute.xlu0 %4526
        %4528 = vrot.lane.b32.xlu0 %v3515, 112
        %v4529 = vpop.permute.xlu0 %4528
        %4530 = vrot.lane.b32.xlu0 %v3516, 112
        %v4531 = vpop.permute.xlu0 %4530
        %4532 = vrot.lane.b32.xlu0 %v3517, 112
        %v4533 = vpop.permute.xlu0 %4532
        %4534 = vrot.lane.b32.xlu0 %v3518, 112
        %v4535 = vpop.permute.xlu0 %4534
        %4536 = vrot.lane.b32.xlu0 %v3519, 112
        %v4537 = vpop.permute.xlu0 %4536
        %4538 = vrot.lane.b32.xlu0 %v3520, 112
        %v4539 = vpop.permute.xlu0 %4538
        %4540 = vrot.lane.b32.xlu0 %v3521, 112
        %v4541 = vpop.permute.xlu0 %4540
        %4542 = vrot.lane.b32.xlu0 %v3522, 112
        %v4543 = vpop.permute.xlu0 %4542
        %4544 = vrot.lane.b32.xlu0 %v3523, 112
        %v4545 = vpop.permute.xlu0 %4544
        %4546 = vrot.lane.b32.xlu0 %v3524, 112
        %v4547 = vpop.permute.xlu0 %4546
        %4548 = vrot.lane.b32.xlu0 %v3525, 112
        %v4549 = vpop.permute.xlu0 %4548
        %v4582 = vsel %vm1159, %v2469, %v3719
        %v4583 = vsel %vm1159, %v2470, %v3721
        %v4584 = vsel %vm1159, %v2471, %v3723
        %v4585 = vsel %vm1159, %v2472, %v3725
        %v4586 = vsel %vm1159, %v2473, %v3727
        %v4587 = vsel %vm1159, %v2474, %v3729
        %v4588 = vsel %vm1159, %v2475, %v3731
        %v4589 = vsel %vm1159, %v2476, %v3733
        %v4590 = vsel %vm1159, %v2477, %v3735
        %v4591 = vsel %vm1159, %v2478, %v3737
        %v4592 = vsel %vm1159, %v2479, %v3739
        %v4593 = vsel %vm1159, %v2480, %v3741
        %v4594 = vsel %vm1159, %v2481, %v3743
        %v4595 = vsel %vm1159, %v2482, %v3745
        %v4596 = vsel %vm1159, %v2483, %v3747
        %v4597 = vsel %vm1159, %v2484, %v3749
        %v4598 = vsel %vm1159, %v2485, %v3751
        %v4599 = vsel %vm1159, %v2486, %v3753
        %v4600 = vsel %vm1159, %v2487, %v3755
        %v4601 = vsel %vm1159, %v2488, %v3757
        %v4602 = vsel %vm1159, %v2489, %v3759
        %v4603 = vsel %vm1159, %v2490, %v3761
        %v4604 = vsel %vm1159, %v2491, %v3763
        %v4605 = vsel %vm1159, %v2492, %v3765
        %v4606 = vsel %vm1159, %v2493, %v3767
        %v4607 = vsel %vm1159, %v2494, %v3769
        %v4608 = vsel %vm1159, %v2495, %v3771
        %v4609 = vsel %vm1159, %v2496, %v3773
        %v4610 = vsel %vm1159, %v2497, %v3775
        %v4611 = vsel %vm1159, %v2498, %v3777
        %v4612 = vsel %vm1159, %v2499, %v3779
        %v4613 = vsel %vm1159, %v2500, %v3781
        %v4614 = vsel %vm2123, %v4582, %v3847
        %v4615 = vsel %vm2123, %v4583, %v3849
        %v4616 = vsel %vm2123, %v4584, %v3851
        %v4617 = vsel %vm2123, %v4585, %v3853
        %v4618 = vsel %vm2123, %v4586, %v3855
        %v4619 = vsel %vm2123, %v4587, %v3857
        %v4620 = vsel %vm2123, %v4588, %v3859
        %v4621 = vsel %vm2123, %v4589, %v3861
        %v4622 = vsel %vm2123, %v4590, %v3863
        %v4623 = vsel %vm2123, %v4591, %v3865
        %v4624 = vsel %vm2123, %v4592, %v3867
        %v4625 = vsel %vm2123, %v4593, %v3869
        %v4626 = vsel %vm2123, %v4594, %v3871
        %v4627 = vsel %vm2123, %v4595, %v3873
        %v4628 = vsel %vm2123, %v4596, %v3875
        %v4629 = vsel %vm2123, %v4597, %v3877
        %v4630 = vsel %vm2123, %v4598, %v3879
        %v4631 = vsel %vm2123, %v4599, %v3881
        %v4632 = vsel %vm2123, %v4600, %v3883
        %v4633 = vsel %vm2123, %v4601, %v3885
        %v4634 = vsel %vm2123, %v4602, %v3887
        %v4635 = vsel %vm2123, %v4603, %v3889
        %v4636 = vsel %vm2123, %v4604, %v3891
        %v4637 = vsel %vm2123, %v4605, %v3893
        %v4638 = vsel %vm2123, %v4606, %v3895
        %v4639 = vsel %vm2123, %v4607, %v3897
        %v4640 = vsel %vm2123, %v4608, %v3899
        %v4641 = vsel %vm2123, %v4609, %v3901
        %v4642 = vsel %vm2123, %v4610, %v3903
        %v4643 = vsel %vm2123, %v4611, %v3905
        %v4644 = vsel %vm2123, %v4612, %v3907
        %v4645 = vsel %vm2123, %v4613, %v3909
        %vm4646 = vcmask 392192
        %v4647 = vsel %vm4646, %v4614, %v3975
        %v4648 = vsel %vm4646, %v4615, %v3977
        %v4649 = vsel %vm4646, %v4616, %v3979
        %v4650 = vsel %vm4646, %v4617, %v3981
        %v4651 = vsel %vm4646, %v4618, %v3983
        %v4652 = vsel %vm4646, %v4619, %v3985
        %v4653 = vsel %vm4646, %v4620, %v3987
        %v4654 = vsel %vm4646, %v4621, %v3989
        %v4655 = vsel %vm4646, %v4622, %v3991
        %v4656 = vsel %vm4646, %v4623, %v3993
        %v4657 = vsel %vm4646, %v4624, %v3995
        %v4658 = vsel %vm4646, %v4625, %v3997
        %v4659 = vsel %vm4646, %v4626, %v3999
        %v4660 = vsel %vm4646, %v4627, %v4001
        %v4661 = vsel %vm4646, %v4628, %v4003
        %v4662 = vsel %vm4646, %v4629, %v4005
        %v4663 = vsel %vm4646, %v4630, %v4007
        %v4664 = vsel %vm4646, %v4631, %v4009
        %v4665 = vsel %vm4646, %v4632, %v4011
        %v4666 = vsel %vm4646, %v4633, %v4013
        %v4667 = vsel %vm4646, %v4634, %v4015
        %v4668 = vsel %vm4646, %v4635, %v4017
        %v4669 = vsel %vm4646, %v4636, %v4019
        %v4670 = vsel %vm4646, %v4637, %v4021
        %v4671 = vsel %vm4646, %v4638, %v4023
        %v4672 = vsel %vm4646, %v4639, %v4025
        %v4673 = vsel %vm4646, %v4640, %v4027
        %v4674 = vsel %vm4646, %v4641, %v4029
        %v4675 = vsel %vm4646, %v4642, %v4031
        %v4676 = vsel %vm4646, %v4643, %v4033
        %v4677 = vsel %vm4646, %v4644, %v4035
        %v4678 = vsel %vm4646, %v4645, %v4037
        %vm4679 = vcmask 523264
        %v4680 = vsel %vm4679, %v4647, %v4103
        %v4681 = vsel %vm4679, %v4648, %v4105
        %v4682 = vsel %vm4679, %v4649, %v4107
        %v4683 = vsel %vm4679, %v4650, %v4109
        %v4684 = vsel %vm4679, %v4651, %v4111
        %v4685 = vsel %vm4679, %v4652, %v4113
        %v4686 = vsel %vm4679, %v4653, %v4115
        %v4687 = vsel %vm4679, %v4654, %v4117
        %v4688 = vsel %vm4679, %v4655, %v4119
        %v4689 = vsel %vm4679, %v4656, %v4121
        %v4690 = vsel %vm4679, %v4657, %v4123
        %v4691 = vsel %vm4679, %v4658, %v4125
        %v4692 = vsel %vm4679, %v4659, %v4127
        %v4693 = vsel %vm4679, %v4660, %v4129
        %v4694 = vsel %vm4679, %v4661, %v4131
        %v4695 = vsel %vm4679, %v4662, %v4133
        %v4696 = vsel %vm4679, %v4663, %v4135
        %v4697 = vsel %vm4679, %v4664, %v4137
        %v4698 = vsel %vm4679, %v4665, %v4139
        %v4699 = vsel %vm4679, %v4666, %v4141
        %v4700 = vsel %vm4679, %v4667, %v4143
        %v4701 = vsel %vm4679, %v4668, %v4145
        %v4702 = vsel %vm4679, %v4669, %v4147
        %v4703 = vsel %vm4679, %v4670, %v4149
        %v4704 = vsel %vm4679, %v4671, %v4151
        %v4705 = vsel %vm4679, %v4672, %v4153
        %v4706 = vsel %vm4679, %v4673, %v4155
        %v4707 = vsel %vm4679, %v4674, %v4157
        %v4708 = vsel %vm4679, %v4675, %v4159
        %v4709 = vsel %vm4679, %v4676, %v4161
        %v4710 = vsel %vm4679, %v4677, %v4163
        %v4711 = vsel %vm4679, %v4678, %v4165
        %vm4712 = vcmask 654336
        %v4713 = vsel %vm4712, %v4680, %v4231
        %v4714 = vsel %vm4712, %v4681, %v4233
        %v4715 = vsel %vm4712, %v4682, %v4235
        %v4716 = vsel %vm4712, %v4683, %v4237
        %v4717 = vsel %vm4712, %v4684, %v4239
        %v4718 = vsel %vm4712, %v4685, %v4241
        %v4719 = vsel %vm4712, %v4686, %v4243
        %v4720 = vsel %vm4712, %v4687, %v4245
        %v4721 = vsel %vm4712, %v4688, %v4247
        %v4722 = vsel %vm4712, %v4689, %v4249
        %v4723 = vsel %vm4712, %v4690, %v4251
        %v4724 = vsel %vm4712, %v4691, %v4253
        %v4725 = vsel %vm4712, %v4692, %v4255
        %v4726 = vsel %vm4712, %v4693, %v4257
        %v4727 = vsel %vm4712, %v4694, %v4259
        %v4728 = vsel %vm4712, %v4695, %v4261
        %v4729 = vsel %vm4712, %v4696, %v4263
        %v4730 = vsel %vm4712, %v4697, %v4265
        %v4731 = vsel %vm4712, %v4698, %v4267
        %v4732 = vsel %vm4712, %v4699, %v4269
        %v4733 = vsel %vm4712, %v4700, %v4271
        %v4734 = vsel %vm4712, %v4701, %v4273
        %v4735 = vsel %vm4712, %v4702, %v4275
        %v4736 = vsel %vm4712, %v4703, %v4277
        %v4737 = vsel %vm4712, %v4704, %v4279
        %v4738 = vsel %vm4712, %v4705, %v4281
        %v4739 = vsel %vm4712, %v4706, %v4283
        %v4740 = vsel %vm4712, %v4707, %v4285
        %v4741 = vsel %vm4712, %v4708, %v4287
        %v4742 = vsel %vm4712, %v4709, %v4289
        %v4743 = vsel %vm4712, %v4710, %v4291
        %v4744 = vsel %vm4712, %v4711, %v4293
        %vm4745 = vcmask 785408
        %v4746 = vsel %vm4745, %v4713, %v4359
        %v4747 = vsel %vm4745, %v4714, %v4361
        %v4748 = vsel %vm4745, %v4715, %v4363
        %v4749 = vsel %vm4745, %v4716, %v4365
        %v4750 = vsel %vm4745, %v4717, %v4367
        %v4751 = vsel %vm4745, %v4718, %v4369
        %v4752 = vsel %vm4745, %v4719, %v4371
        %v4753 = vsel %vm4745, %v4720, %v4373
        %v4754 = vsel %vm4745, %v4721, %v4375
        %v4755 = vsel %vm4745, %v4722, %v4377
        %v4756 = vsel %vm4745, %v4723, %v4379
        %v4757 = vsel %vm4745, %v4724, %v4381
        %v4758 = vsel %vm4745, %v4725, %v4383
        %v4759 = vsel %vm4745, %v4726, %v4385
        %v4760 = vsel %vm4745, %v4727, %v4387
        %v4761 = vsel %vm4745, %v4728, %v4389
        %v4762 = vsel %vm4745, %v4729, %v4391
        %v4763 = vsel %vm4745, %v4730, %v4393
        %v4764 = vsel %vm4745, %v4731, %v4395
        %v4765 = vsel %vm4745, %v4732, %v4397
        %v4766 = vsel %vm4745, %v4733, %v4399
        %v4767 = vsel %vm4745, %v4734, %v4401
        %v4768 = vsel %vm4745, %v4735, %v4403
        %v4769 = vsel %vm4745, %v4736, %v4405
        %v4770 = vsel %vm4745, %v4737, %v4407
        %v4771 = vsel %vm4745, %v4738, %v4409
        %v4772 = vsel %vm4745, %v4739, %v4411
        %v4773 = vsel %vm4745, %v4740, %v4413
        %v4774 = vsel %vm4745, %v4741, %v4415
        %v4775 = vsel %vm4745, %v4742, %v4417
        %v4776 = vsel %vm4745, %v4743, %v4419
        %v4777 = vsel %vm4745, %v4744, %v4421
        %vm4778 = vcmask 916480
        %v4779 = vsel %vm4778, %v4746, %v4487
        %v4780 = vsel %vm4778, %v4747, %v4489
        %v4781 = vsel %vm4778, %v4748, %v4491
        %v4782 = vsel %vm4778, %v4749, %v4493
        %v4783 = vsel %vm4778, %v4750, %v4495
        %v4784 = vsel %vm4778, %v4751, %v4497
        %v4785 = vsel %vm4778, %v4752, %v4499
        %v4786 = vsel %vm4778, %v4753, %v4501
        %v4787 = vsel %vm4778, %v4754, %v4503
        %v4788 = vsel %vm4778, %v4755, %v4505
        %v4789 = vsel %vm4778, %v4756, %v4507
        %v4790 = vsel %vm4778, %v4757, %v4509
        %v4791 = vsel %vm4778, %v4758, %v4511
        %v4792 = vsel %vm4778, %v4759, %v4513
        %v4793 = vsel %vm4778, %v4760, %v4515
        %v4794 = vsel %vm4778, %v4761, %v4517
        %v4795 = vsel %vm4778, %v4762, %v4519
        %v4796 = vsel %vm4778, %v4763, %v4521
        %v4797 = vsel %vm4778, %v4764, %v4523
        %v4798 = vsel %vm4778, %v4765, %v4525
        %v4799 = vsel %vm4778, %v4766, %v4527
        %v4800 = vsel %vm4778, %v4767, %v4529
        %v4801 = vsel %vm4778, %v4768, %v4531
        %v4802 = vsel %vm4778, %v4769, %v4533
        %v4803 = vsel %vm4778, %v4770, %v4535
        %v4804 = vsel %vm4778, %v4771, %v4537
        %v4805 = vsel %vm4778, %v4772, %v4539
        %v4806 = vsel %vm4778, %v4773, %v4541
        %v4807 = vsel %vm4778, %v4774, %v4543
        %v4808 = vsel %vm4778, %v4775, %v4545
        %v4809 = vsel %vm4778, %v4776, %v4547
        %v4810 = vsel %vm4778, %v4777, %v4549
        %v4811 = vpack.c.bf16 %v4780, %v4779
        %v4812 = vpack.c.bf16 %v3655, %v3654
        %v4813 = vpack.c.bf16 %v4782, %v4781
        %v4814 = vpack.c.bf16 %v3657, %v3656
        %v4815 = vpack.c.bf16 %v4784, %v4783
        %v4816 = vpack.c.bf16 %v3659, %v3658
        %v4817 = vpack.c.bf16 %v4786, %v4785
        %v4818 = vpack.c.bf16 %v3661, %v3660
        %v4819 = vpack.c.bf16 %v4788, %v4787
        %v4820 = vpack.c.bf16 %v3663, %v3662
        %v4821 = vpack.c.bf16 %v4790, %v4789
        %v4822 = vpack.c.bf16 %v3665, %v3664
        %v4823 = vpack.c.bf16 %v4792, %v4791
        %v4824 = vpack.c.bf16 %v3667, %v3666
        %v4825 = vpack.c.bf16 %v4794, %v4793
        %v4826 = vpack.c.bf16 %v3669, %v3668
        %v4827 = vpack.c.bf16 %v4796, %v4795
        %v4828 = vpack.c.bf16 %v3671, %v3670
        %v4829 = vpack.c.bf16 %v4798, %v4797
        %v4830 = vpack.c.bf16 %v3673, %v3672
        %v4831 = vpack.c.bf16 %v4800, %v4799
        %v4832 = vpack.c.bf16 %v3675, %v3674
        %v4833 = vpack.c.bf16 %v4802, %v4801
        %v4834 = vpack.c.bf16 %v3677, %v3676
        %v4835 = vpack.c.bf16 %v4804, %v4803
        %v4836 = vpack.c.bf16 %v3679, %v3678
        %v4837 = vpack.c.bf16 %v4806, %v4805
        %v4838 = vpack.c.bf16 %v3681, %v3680
        %v4839 = vpack.c.bf16 %v4808, %v4807
        %v4840 = vpack.c.bf16 %v3683, %v3682
        %v4841 = vpack.c.bf16 %v4810, %v4809
        %v4842 = vpack.c.bf16 %v3685, %v3684
        %v4843 = vld [vmem:[%s13] sm:$0xf]
        %v4844 = vld [vmem:[%s13 + $0x4] sm:$0xf]
        %v4845 = vld [vmem:[%s13 + $0x8] sm:$0xf]
        %v4846 = vld [vmem:[%s13 + $0xc] sm:$0xf]
        %v4847 = vld [vmem:[%s13 + $0x10] sm:$0xf]
        %v4848 = vld [vmem:[%s13 + $0x14] sm:$0xf]
        %v4849 = vld [vmem:[%s13 + $0x18] sm:$0xf]
        %v4850 = vld [vmem:[%s13 + $0x1c] sm:$0xf]
        %v4851 = vld [vmem:[%s13 + $0x20] sm:$0xf]
        %v4852 = vld [vmem:[%s13 + $0x24] sm:$0xf]
        %v4853 = vld [vmem:[%s13 + $0x28] sm:$0xf]
        %v4854 = vld [vmem:[%s13 + $0x2c] sm:$0xf]
        %v4855 = vld [vmem:[%s13 + $0x30] sm:$0xf]
        %v4856 = vld [vmem:[%s13 + $0x34] sm:$0xf]
        %v4857 = vld [vmem:[%s13 + $0x38] sm:$0xf]
        %v4858 = vld [vmem:[%s13 + $0x3c] sm:$0xf]
        %v4859 = vld [vmem:[%s13 + $0x40] sm:$0xf]
        %v4860 = vld [vmem:[%s13 + $0x44] sm:$0xf]
        %v4861 = vld [vmem:[%s14] sm:$0x1]
        %v4863 = vlaneseq
        %v4864 = vshrl.u32 %v4863, 7
        %v4865 = vsub.s32 0, %v4864
        %v4866 = vrot.slane %v4861, %v4865
        %v4886 = vunpack.c.l.b16 %v4843
        %v4887 = vunpack.c.l.b16 %v4844
        %v4888 = vunpack.c.l.b16 %v4845
        %v4889 = vunpack.c.l.b16 %v4846
        %v4890 = vunpack.c.l.b16 %v4847
        %v4891 = vunpack.c.l.b16 %v4848
        %v4892 = vunpack.c.l.b16 %v4849
        %v4893 = vunpack.c.l.b16 %v4850
        %v4894 = vunpack.c.l.b16 %v4851
        %v4895 = vunpack.c.l.b16 %v4852
        %v4896 = vunpack.c.l.b16 %v4853
        %v4897 = vunpack.c.l.b16 %v4854
        %v4898 = vunpack.c.l.b16 %v4855
        %v4899 = vunpack.c.l.b16 %v4856
        %v4900 = vunpack.c.l.b16 %v4857
        %v4901 = vunpack.c.l.b16 %v4858
        %v4902 = vunpack.c.l.b16 %v4859
        %v4903 = vunpack.c.l.b16 %v4860
        %v4904 = vpack.c.b16 %v4887, %v4886
        %v4905 = vpack.c.b16 %v4889, %v4888
        %v4906 = vpack.c.b16 %v4891, %v4890
        %v4907 = vpack.c.b16 %v4893, %v4892
        %v4908 = vpack.c.b16 %v4895, %v4894
        %v4909 = vpack.c.b16 %v4897, %v4896
        %v4910 = vpack.c.b16 %v4899, %v4898
        %v4911 = vpack.c.b16 %v4901, %v4900
        %v4912 = vpack.c.b16 %v4903, %v4902
        %v4923 = vsel %vm1159, %v4812, 0
        %v4926 = vsel %vm1159, %v4814, 0
        %v4929 = vsel %vm1159, %v4816, 0
        %v4932 = vsel %vm1159, %v4818, 0
        %v4935 = vsel %vm1159, %v4820, 0
        %v4938 = vsel %vm1159, %v4822, 0
        %v4941 = vsel %vm1159, %v4824, 0
        %v4944 = vsel %vm1159, %v4826, 0
        %v4947 = vsel %vm1159, %v4828, 0
        %v4950 = vsel %vm1159, %v4830, 0
        %v4953 = vsel %vm1159, %v4832, 0
        %v4956 = vsel %vm1159, %v4834, 0
        %v4959 = vsel %vm1159, %v4836, 0
        %v4962 = vsel %vm1159, %v4838, 0
        %v4965 = vsel %vm1159, %v4840, 0
        %v4968 = vsel %vm1159, %v4842, 0
        %4970 = vmatprep.subr.bf16.mxu0 0
        %4971 = vmatpush1.bf16.msra.mxu0 %v4911
        %4972 = vmatprep.subr.bf16.mxu0 0
        %4973 = vmatpush1.bf16.msra.mxu0 %v4910
        %4974 = vmatprep.subr.bf16.mxu0 0
        %4975 = vmatpush1.bf16.msra.mxu0 %v4909
        %4976 = vmatprep.subr.bf16.mxu0 0
        %4977 = vmatpush1.bf16.msra.mxu0 %v4908
        %4978 = vmatprep.subr.bf16.mxu0 0
        %4979 = vmatpush1.bf16.msra.mxu0 %v4907
        %4980 = vmatprep.subr.bf16.mxu0 0
        %4981 = vmatpush1.bf16.msra.mxu0 %v4906
        %4982 = vmatprep.subr.bf16.mxu0 0
        %4983 = vmatpush1.bf16.msra.mxu0 %v4905
        %4984 = vmatprep.subr.bf16.mxu0 0
        %4985 = vmatpush1.bf16.msra.mxu0 %v4904
        %4986 = vmatprep.subr.bf16.mxu0 0
        %4987 = vmatpush2.bf16.msra.mxu0 0
        %4988 = vmatprep.subr.bf16.mxu0 0
        %4989 = vmatpush2.bf16.msra.mxu0 0
        %4990 = vmatprep.subr.bf16.mxu0 0
        %4991 = vmatpush2.bf16.msra.mxu0 0
        %4992 = vmatprep.subr.bf16.mxu0 0
        %4993 = vmatpush2.bf16.msra.mxu0 0
        %4994 = vmatprep.subr.bf16.mxu0 0
        %4995 = vmatpush2.bf16.msra.mxu0 0
        %4996 = vmatprep.subr.bf16.mxu0 0
        %4997 = vmatpush2.bf16.msra.mxu0 0
        %4998 = vmatprep.subr.bf16.mxu0 0
        %4999 = vmatpush2.bf16.msra.mxu0 0
        %5000 = vmatprep.subr.bf16.mxu0 0
        %5001 = vmatpush2.bf16.msra.mxu0 %v4912
        %5002 = vmatprep.mubr.bf16.mxu0 %v4923
        %5003 = vmatmul.mubr.bf16.gmra.mxu0 %v4811
        %v5004 = vpop.f32.mrf.mxu0
        %v5005 = vadd.f32 %v4866, %v5004
        %v5006 = vpop.f32.mrf.mxu0
        %v5007 = vpop.f32.mrf.mxu0
        %v5008 = vadd.f32 %v4866, %v5007
        %v5009 = vpop.f32.mrf.mxu0
        %5010 = vmatprep.mubr.bf16.mxu0 %v4926
        %5011 = vmatmul.mubr.bf16.gmra.mxu0 %v4813
        %v5012 = vpop.f32.mrf.mxu0
        %v5013 = vadd.f32 %v4866, %v5012
        %v5014 = vpop.f32.mrf.mxu0
        %v5015 = vpop.f32.mrf.mxu0
        %v5016 = vadd.f32 %v4866, %v5015
        %v5017 = vpop.f32.mrf.mxu0
        %5018 = vmatprep.mubr.bf16.mxu0 %v4929
        %5019 = vmatmul.mubr.bf16.gmra.mxu0 %v4815
        %v5020 = vpop.f32.mrf.mxu0
        %v5021 = vadd.f32 %v4866, %v5020
        %v5022 = vpop.f32.mrf.mxu0
        %v5023 = vpop.f32.mrf.mxu0
        %v5024 = vadd.f32 %v4866, %v5023
        %v5025 = vpop.f32.mrf.mxu0
        %5026 = vmatprep.mubr.bf16.mxu0 %v4932
        %5027 = vmatmul.mubr.bf16.gmra.mxu0 %v4817
        %v5028 = vpop.f32.mrf.mxu0
        %v5029 = vadd.f32 %v4866, %v5028
        %v5030 = vpop.f32.mrf.mxu0
        %v5031 = vpop.f32.mrf.mxu0
        %v5032 = vadd.f32 %v4866, %v5031
        %v5033 = vpop.f32.mrf.mxu0
        %5034 = vmatprep.mubr.bf16.mxu0 %v4935
        %5035 = vmatmul.mubr.bf16.gmra.mxu0 %v4819
        %v5036 = vpop.f32.mrf.mxu0
        %v5037 = vadd.f32 %v4866, %v5036
        %v5038 = vpop.f32.mrf.mxu0
        %v5039 = vpop.f32.mrf.mxu0
        %v5040 = vadd.f32 %v4866, %v5039
        %v5041 = vpop.f32.mrf.mxu0
        %5042 = vmatprep.mubr.bf16.mxu0 %v4938
        %5043 = vmatmul.mubr.bf16.gmra.mxu0 %v4821
        %v5044 = vpop.f32.mrf.mxu0
        %v5045 = vadd.f32 %v4866, %v5044
        %v5046 = vpop.f32.mrf.mxu0
        %v5047 = vpop.f32.mrf.mxu0
        %v5048 = vadd.f32 %v4866, %v5047
        %v5049 = vpop.f32.mrf.mxu0
        %5050 = vmatprep.mubr.bf16.mxu0 %v4941
        %5051 = vmatmul.mubr.bf16.gmra.mxu0 %v4823
        %v5052 = vpop.f32.mrf.mxu0
        %v5053 = vadd.f32 %v4866, %v5052
        %v5054 = vpop.f32.mrf.mxu0
        %v5055 = vpop.f32.mrf.mxu0
        %v5056 = vadd.f32 %v4866, %v5055
        %v5057 = vpop.f32.mrf.mxu0
        %5058 = vmatprep.mubr.bf16.mxu0 %v4944
        %5059 = vmatmul.mubr.bf16.gmra.mxu0 %v4825
        %v5060 = vpop.f32.mrf.mxu0
        %v5061 = vadd.f32 %v4866, %v5060
        %v5062 = vpop.f32.mrf.mxu0
        %v5063 = vpop.f32.mrf.mxu0
        %v5064 = vadd.f32 %v4866, %v5063
        %v5065 = vpop.f32.mrf.mxu0
        %5066 = vmatprep.mubr.bf16.mxu0 %v4947
        %5067 = vmatmul.mubr.bf16.gmra.mxu0 %v4827
        %v5068 = vpop.f32.mrf.mxu0
        %v5069 = vadd.f32 %v4866, %v5068
        %v5070 = vpop.f32.mrf.mxu0
        %v5071 = vpop.f32.mrf.mxu0
        %v5072 = vadd.f32 %v4866, %v5071
        %v5073 = vpop.f32.mrf.mxu0
        %5074 = vmatprep.mubr.bf16.mxu0 %v4950
        %5075 = vmatmul.mubr.bf16.gmra.mxu0 %v4829
        %v5076 = vpop.f32.mrf.mxu0
        %v5077 = vadd.f32 %v4866, %v5076
        %v5078 = vpop.f32.mrf.mxu0
        %v5079 = vpop.f32.mrf.mxu0
        %v5080 = vadd.f32 %v4866, %v5079
        %v5081 = vpop.f32.mrf.mxu0
        %5082 = vmatprep.mubr.bf16.mxu0 %v4953
        %5083 = vmatmul.mubr.bf16.gmra.mxu0 %v4831
        %v5084 = vpop.f32.mrf.mxu0
        %v5085 = vadd.f32 %v4866, %v5084
        %v5086 = vpop.f32.mrf.mxu0
        %v5087 = vpop.f32.mrf.mxu0
        %v5088 = vadd.f32 %v4866, %v5087
        %v5089 = vpop.f32.mrf.mxu0
        %5090 = vmatprep.mubr.bf16.mxu0 %v4956
        %5091 = vmatmul.mubr.bf16.gmra.mxu0 %v4833
        %v5092 = vpop.f32.mrf.mxu0
        %v5093 = vadd.f32 %v4866, %v5092
        %v5094 = vpop.f32.mrf.mxu0
        %v5095 = vpop.f32.mrf.mxu0
        %v5096 = vadd.f32 %v4866, %v5095
        %v5097 = vpop.f32.mrf.mxu0
        %5098 = vmatprep.mubr.bf16.mxu0 %v4959
        %5099 = vmatmul.mubr.bf16.gmra.mxu0 %v4835
        %v5100 = vpop.f32.mrf.mxu0
        %v5101 = vadd.f32 %v4866, %v5100
        %v5102 = vpop.f32.mrf.mxu0
        %v5103 = vpop.f32.mrf.mxu0
        %v5104 = vadd.f32 %v4866, %v5103
        %v5105 = vpop.f32.mrf.mxu0
        %5106 = vmatprep.mubr.bf16.mxu0 %v4962
        %5107 = vmatmul.mubr.bf16.gmra.mxu0 %v4837
        %v5108 = vpop.f32.mrf.mxu0
        %v5109 = vadd.f32 %v4866, %v5108
        %v5110 = vpop.f32.mrf.mxu0
        %v5111 = vpop.f32.mrf.mxu0
        %v5112 = vadd.f32 %v4866, %v5111
        %v5113 = vpop.f32.mrf.mxu0
        %5114 = vmatprep.mubr.bf16.mxu0 %v4965
        %5115 = vmatmul.mubr.bf16.gmra.mxu0 %v4839
        %v5116 = vpop.f32.mrf.mxu0
        %v5117 = vadd.f32 %v4866, %v5116
        %v5118 = vpop.f32.mrf.mxu0
        %v5119 = vpop.f32.mrf.mxu0
        %v5120 = vadd.f32 %v4866, %v5119
        %v5121 = vpop.f32.mrf.mxu0
        %5122 = vmatprep.mubr.bf16.mxu0 %v4968
        %5123 = vmatmul.mubr.bf16.gmra.mxu0 %v4841
        %v5124 = vpop.f32.mrf.mxu0
        %v5125 = vadd.f32 %v4866, %v5124
        %v5126 = vpop.f32.mrf.mxu0
        %v5127 = vpop.f32.mrf.mxu0
        %v5128 = vadd.f32 %v4866, %v5127
        %v5129 = vpop.f32.mrf.mxu0
        %5130 = vdwg.mxu0
        %v5131 = vmax.f32 %v5005, 0.0
        %v5132 = vmax.f32 %v5008, 0.0
        %v5133 = vmax.f32 %v5013, 0.0
        %v5134 = vmax.f32 %v5016, 0.0
        %v5135 = vmax.f32 %v5021, 0.0
        %v5136 = vmax.f32 %v5024, 0.0
        %v5137 = vmax.f32 %v5029, 0.0
        %v5138 = vmax.f32 %v5032, 0.0
        %v5139 = vmax.f32 %v5037, 0.0
        %v5140 = vmax.f32 %v5040, 0.0
        %v5141 = vmax.f32 %v5045, 0.0
        %v5142 = vmax.f32 %v5048, 0.0
        %v5143 = vmax.f32 %v5053, 0.0
        %v5144 = vmax.f32 %v5056, 0.0
        %v5145 = vmax.f32 %v5061, 0.0
        %v5146 = vmax.f32 %v5064, 0.0
        %v5147 = vmax.f32 %v5069, 0.0
        %v5148 = vmax.f32 %v5072, 0.0
        %v5149 = vmax.f32 %v5077, 0.0
        %v5150 = vmax.f32 %v5080, 0.0
        %v5151 = vmax.f32 %v5085, 0.0
        %v5152 = vmax.f32 %v5088, 0.0
        %v5153 = vmax.f32 %v5093, 0.0
        %v5154 = vmax.f32 %v5096, 0.0
        %v5155 = vmax.f32 %v5101, 0.0
        %v5156 = vmax.f32 %v5104, 0.0
        %v5157 = vmax.f32 %v5109, 0.0
        %v5158 = vmax.f32 %v5112, 0.0
        %v5159 = vmax.f32 %v5117, 0.0
        %v5160 = vmax.f32 %v5120, 0.0
        %v5161 = vmax.f32 %v5125, 0.0
        %v5162 = vmax.f32 %v5128, 0.0
        %v5163 = vrot.slane %v5131, 7
        %v5164 = vrot.slane %v5132, 7
        %v5165 = vrot.slane %v5133, 7
        %v5166 = vrot.slane %v5134, 7
        %v5167 = vrot.slane %v5135, 7
        %v5168 = vrot.slane %v5136, 7
        %v5169 = vrot.slane %v5137, 7
        %v5170 = vrot.slane %v5138, 7
        %v5171 = vrot.slane %v5139, 7
        %v5172 = vrot.slane %v5140, 7
        %v5173 = vrot.slane %v5141, 7
        %v5174 = vrot.slane %v5142, 7
        %v5175 = vrot.slane %v5143, 7
        %v5176 = vrot.slane %v5144, 7
        %v5177 = vrot.slane %v5145, 7
        %v5178 = vrot.slane %v5146, 7
        %v5179 = vrot.slane %v5147, 7
        %v5180 = vrot.slane %v5148, 7
        %v5181 = vrot.slane %v5149, 7
        %v5182 = vrot.slane %v5150, 7
        %v5183 = vrot.slane %v5151, 7
        %v5184 = vrot.slane %v5152, 7
        %v5185 = vrot.slane %v5153, 7
        %v5186 = vrot.slane %v5154, 7
        %v5187 = vrot.slane %v5155, 7
        %v5188 = vrot.slane %v5156, 7
        %v5189 = vrot.slane %v5157, 7
        %v5190 = vrot.slane %v5158, 7
        %v5191 = vrot.slane %v5159, 7
        %v5192 = vrot.slane %v5160, 7
        %v5193 = vrot.slane %v5161, 7
        %v5194 = vrot.slane %v5162, 7
        %v5195 = vsel %vm2276, %v5193, %v5194
        %v5196 = vsel %vm2276, %v5192, %v5193
        %v5197 = vsel %vm2276, %v5191, %v5192
        %v5198 = vsel %vm2276, %v5190, %v5191
        %v5199 = vsel %vm2276, %v5189, %v5190
        %v5200 = vsel %vm2276, %v5188, %v5189
        %v5201 = vsel %vm2276, %v5187, %v5188
        %v5202 = vsel %vm2276, %v5186, %v5187
        %v5203 = vsel %vm2276, %v5185, %v5186
        %v5204 = vsel %vm2276, %v5184, %v5185
        %v5205 = vsel %vm2276, %v5183, %v5184
        %v5206 = vsel %vm2276, %v5182, %v5183
        %v5207 = vsel %vm2276, %v5181, %v5182
        %v5208 = vsel %vm2276, %v5180, %v5181
        %v5209 = vsel %vm2276, %v5179, %v5180
        %v5210 = vsel %vm2276, %v5178, %v5179
        %v5211 = vsel %vm2276, %v5177, %v5178
        %v5212 = vsel %vm2276, %v5176, %v5177
        %v5213 = vsel %vm2276, %v5175, %v5176
        %v5214 = vsel %vm2276, %v5174, %v5175
        %v5215 = vsel %vm2276, %v5173, %v5174
        %v5216 = vsel %vm2276, %v5172, %v5173
        %v5217 = vsel %vm2276, %v5171, %v5172
        %v5218 = vsel %vm2276, %v5170, %v5171
        %v5219 = vsel %vm2276, %v5169, %v5170
        %v5220 = vsel %vm2276, %v5168, %v5169
        %v5221 = vsel %vm2276, %v5167, %v5168
        %v5222 = vsel %vm2276, %v5166, %v5167
        %v5223 = vsel %vm2276, %v5165, %v5166
        %v5224 = vsel %vm2276, %v5164, %v5165
        %v5225 = vsel %vm2276, %v5163, %v5164
        %v5226 = vsel %vm2276, %v5194, %v5163
        %v5227 = vmul.f32 %v5196, %v2312
        %v5228 = vmul.f32 %v5195, %v2317
        %v5229 = vmul.f32 %v5226, %v2322
        %v5230 = vmul.f32 %v5225, %v2327
        %v5231 = vmul.f32 %v5224, %v2332
        %v5232 = vmul.f32 %v5223, %v2337
        %v5233 = vmul.f32 %v5222, %v2342
        %v5234 = vmul.f32 %v5221, %v2347
        %v5235 = vmul.f32 %v5220, %v2352
        %v5236 = vmul.f32 %v5219, %v2357
        %v5237 = vmul.f32 %v5218, %v2362
        %v5238 = vmul.f32 %v5217, %v2367
        %v5239 = vmul.f32 %v5216, %v2372
        %v5240 = vmul.f32 %v5215, %v2377
        %v5241 = vmul.f32 %v5214, %v2382
        %v5242 = vmul.f32 %v5213, %v2387
        %v5243 = vmul.f32 %v5212, %v2392
        %v5244 = vmul.f32 %v5211, %v2397
        %v5245 = vmul.f32 %v5210, %v2402
        %v5246 = vmul.f32 %v5209, %v2407
        %v5247 = vmul.f32 %v5208, %v2412
        %v5248 = vmul.f32 %v5207, %v2417
        %v5249 = vmul.f32 %v5206, %v2422
        %v5250 = vmul.f32 %v5205, %v2427
        %v5251 = vmul.f32 %v5204, %v2432
        %v5252 = vmul.f32 %v5203, %v2437
        %v5253 = vmul.f32 %v5202, %v2442
        %v5254 = vmul.f32 %v5201, %v2447
        %v5255 = vmul.f32 %v5200, %v2452
        %v5256 = vmul.f32 %v5199, %v2457
        %v5257 = vmul.f32 %v5198, %v2462
        %v5258 = vmul.f32 %v5197, %v2467
        %v5259 = vmul.f32 %v5161, %v2503
        %v5260 = vmul.f32 %v5162, %v2507
        %v5261 = vmul.f32 %v5131, %v2511
        %v5262 = vmul.f32 %v5132, %v2515
        %v5263 = vmul.f32 %v5133, %v2519
        %v5264 = vmul.f32 %v5134, %v2523
        %v5265 = vmul.f32 %v5135, %v2527
        %v5266 = vmul.f32 %v5136, %v2531
        %v5267 = vmul.f32 %v5137, %v2535
        %v5268 = vmul.f32 %v5138, %v2539
        %v5269 = vmul.f32 %v5139, %v2543
        %v5270 = vmul.f32 %v5140, %v2547
        %v5271 = vmul.f32 %v5141, %v2551
        %v5272 = vmul.f32 %v5142, %v2555
        %v5273 = vmul.f32 %v5143, %v2559
        %v5274 = vmul.f32 %v5144, %v2563
        %v5275 = vmul.f32 %v5145, %v2567
        %v5276 = vmul.f32 %v5146, %v2571
        %v5277 = vmul.f32 %v5147, %v2575
        %v5278 = vmul.f32 %v5148, %v2579
        %v5279 = vmul.f32 %v5149, %v2583
        %v5280 = vmul.f32 %v5150, %v2587
        %v5281 = vmul.f32 %v5151, %v2591
        %v5282 = vmul.f32 %v5152, %v2595
        %v5283 = vmul.f32 %v5153, %v2599
        %v5284 = vmul.f32 %v5154, %v2603
        %v5285 = vmul.f32 %v5155, %v2607
        %v5286 = vmul.f32 %v5156, %v2611
        %v5287 = vmul.f32 %v5157, %v2615
        %v5288 = vmul.f32 %v5158, %v2619
        %v5289 = vmul.f32 %v5159, %v2623
        %v5290 = vmul.f32 %v5160, %v2627
        %v5291 = vrot.slane %v5131, 1
        %v5292 = vrot.slane %v5132, 1
        %v5293 = vrot.slane %v5133, 1
        %v5294 = vrot.slane %v5134, 1
        %v5295 = vrot.slane %v5135, 1
        %v5296 = vrot.slane %v5136, 1
        %v5297 = vrot.slane %v5137, 1
        %v5298 = vrot.slane %v5138, 1
        %v5299 = vrot.slane %v5139, 1
        %v5300 = vrot.slane %v5140, 1
        %v5301 = vrot.slane %v5141, 1
        %v5302 = vrot.slane %v5142, 1
        %v5303 = vrot.slane %v5143, 1
        %v5304 = vrot.slane %v5144, 1
        %v5305 = vrot.slane %v5145, 1
        %v5306 = vrot.slane %v5146, 1
        %v5307 = vrot.slane %v5147, 1
        %v5308 = vrot.slane %v5148, 1
        %v5309 = vrot.slane %v5149, 1
        %v5310 = vrot.slane %v5150, 1
        %v5311 = vrot.slane %v5151, 1
        %v5312 = vrot.slane %v5152, 1
        %v5313 = vrot.slane %v5153, 1
        %v5314 = vrot.slane %v5154, 1
        %v5315 = vrot.slane %v5155, 1
        %v5316 = vrot.slane %v5156, 1
        %v5317 = vrot.slane %v5157, 1
        %v5318 = vrot.slane %v5158, 1
        %v5319 = vrot.slane %v5159, 1
        %v5320 = vrot.slane %v5160, 1
        %v5321 = vrot.slane %v5161, 1
        %v5322 = vrot.slane %v5162, 1
        %v5323 = vsel %vm2693, %v5321, %v5322
        %v5324 = vsel %vm2693, %v5320, %v5321
        %v5325 = vsel %vm2693, %v5319, %v5320
        %v5326 = vsel %vm2693, %v5318, %v5319
        %v5327 = vsel %vm2693, %v5317, %v5318
        %v5328 = vsel %vm2693, %v5316, %v5317
        %v5329 = vsel %vm2693, %v5315, %v5316
        %v5330 = vsel %vm2693, %v5314, %v5315
        %v5331 = vsel %vm2693, %v5313, %v5314
        %v5332 = vsel %vm2693, %v5312, %v5313
        %v5333 = vsel %vm2693, %v5311, %v5312
        %v5334 = vsel %vm2693, %v5310, %v5311
        %v5335 = vsel %vm2693, %v5309, %v5310
        %v5336 = vsel %vm2693, %v5308, %v5309
        %v5337 = vsel %vm2693, %v5307, %v5308
        %v5338 = vsel %vm2693, %v5306, %v5307
        %v5339 = vsel %vm2693, %v5305, %v5306
        %v5340 = vsel %vm2693, %v5304, %v5305
        %v5341 = vsel %vm2693, %v5303, %v5304
        %v5342 = vsel %vm2693, %v5302, %v5303
        %v5343 = vsel %vm2693, %v5301, %v5302
        %v5344 = vsel %vm2693, %v5300, %v5301
        %v5345 = vsel %vm2693, %v5299, %v5300
        %v5346 = vsel %vm2693, %v5298, %v5299
        %v5347 = vsel %vm2693, %v5297, %v5298
        %v5348 = vsel %vm2693, %v5296, %v5297
        %v5349 = vsel %vm2693, %v5295, %v5296
        %v5350 = vsel %vm2693, %v5294, %v5295
        %v5351 = vsel %vm2693, %v5293, %v5294
        %v5352 = vsel %vm2693, %v5292, %v5293
        %v5353 = vsel %vm2693, %v5291, %v5292
        %v5354 = vsel %vm2693, %v5322, %v5291
        %v5355 = vmul.f32 %v5323, %v2728
        %v5356 = vmul.f32 %v5354, %v2732
        %v5357 = vmul.f32 %v5353, %v2736
        %v5358 = vmul.f32 %v5352, %v2740
        %v5359 = vmul.f32 %v5351, %v2744
        %v5360 = vmul.f32 %v5350, %v2748
        %v5361 = vmul.f32 %v5349, %v2752
        %v5362 = vmul.f32 %v5348, %v2756
        %v5363 = vmul.f32 %v5347, %v2760
        %v5364 = vmul.f32 %v5346, %v2764
        %v5365 = vmul.f32 %v5345, %v2768
        %v5366 = vmul.f32 %v5344, %v2772
        %v5367 = vmul.f32 %v5343, %v2776
        %v5368 = vmul.f32 %v5342, %v2780
        %v5369 = vmul.f32 %v5341, %v2784
        %v5370 = vmul.f32 %v5340, %v2788
        %v5371 = vmul.f32 %v5339, %v2792
        %v5372 = vmul.f32 %v5338, %v2796
        %v5373 = vmul.f32 %v5337, %v2800
        %v5374 = vmul.f32 %v5336, %v2804
        %v5375 = vmul.f32 %v5335, %v2808
        %v5376 = vmul.f32 %v5334, %v2812
        %v5377 = vmul.f32 %v5333, %v2816
        %v5378 = vmul.f32 %v5332, %v2820
        %v5379 = vmul.f32 %v5331, %v2824
        %v5380 = vmul.f32 %v5330, %v2828
        %v5381 = vmul.f32 %v5329, %v2832
        %v5382 = vmul.f32 %v5328, %v2836
        %v5383 = vmul.f32 %v5327, %v2840
        %v5384 = vmul.f32 %v5326, %v2844
        %v5385 = vmul.f32 %v5325, %v2848
        %v5386 = vmul.f32 %v5324, %v2852
        %v5387 = vmul.f32 %v5226, %v2888
        %v5388 = vmul.f32 %v5225, %v2892
        %v5389 = vmul.f32 %v5224, %v2896
        %v5390 = vmul.f32 %v5223, %v2900
        %v5391 = vmul.f32 %v5222, %v2904
        %v5392 = vmul.f32 %v5221, %v2908
        %v5393 = vmul.f32 %v5220, %v2912
        %v5394 = vmul.f32 %v5219, %v2916
        %v5395 = vmul.f32 %v5218, %v2920
        %v5396 = vmul.f32 %v5217, %v2924
        %v5397 = vmul.f32 %v5216, %v2928
        %v5398 = vmul.f32 %v5215, %v2932
        %v5399 = vmul.f32 %v5214, %v2936
        %v5400 = vmul.f32 %v5213, %v2940
        %v5401 = vmul.f32 %v5212, %v2944
        %v5402 = vmul.f32 %v5211, %v2948
        %v5403 = vmul.f32 %v5210, %v2952
        %v5404 = vmul.f32 %v5209, %v2956
        %v5405 = vmul.f32 %v5208, %v2960
        %v5406 = vmul.f32 %v5207, %v2964
        %v5407 = vmul.f32 %v5206, %v2968
        %v5408 = vmul.f32 %v5205, %v2972
        %v5409 = vmul.f32 %v5204, %v2976
        %v5410 = vmul.f32 %v5203, %v2980
        %v5411 = vmul.f32 %v5202, %v2984
        %v5412 = vmul.f32 %v5201, %v2988
        %v5413 = vmul.f32 %v5200, %v2992
        %v5414 = vmul.f32 %v5199, %v2996
        %v5415 = vmul.f32 %v5198, %v3000
        %v5416 = vmul.f32 %v5197, %v3004
        %v5417 = vmul.f32 %v5196, %v3008
        %v5418 = vmul.f32 %v5195, %v3012
        %v5419 = vmul.f32 %v5353, %v3048
        %v5420 = vmul.f32 %v5352, %v3052
        %v5421 = vmul.f32 %v5351, %v3056
        %v5422 = vmul.f32 %v5350, %v3060
        %v5423 = vmul.f32 %v5349, %v3064
        %v5424 = vmul.f32 %v5348, %v3068
        %v5425 = vmul.f32 %v5347, %v3072
        %v5426 = vmul.f32 %v5346, %v3076
        %v5427 = vmul.f32 %v5345, %v3080
        %v5428 = vmul.f32 %v5344, %v3084
        %v5429 = vmul.f32 %v5343, %v3088
        %v5430 = vmul.f32 %v5342, %v3092
        %v5431 = vmul.f32 %v5341, %v3096
        %v5432 = vmul.f32 %v5340, %v3100
        %v5433 = vmul.f32 %v5339, %v3104
        %v5434 = vmul.f32 %v5338, %v3108
        %v5435 = vmul.f32 %v5337, %v3112
        %v5436 = vmul.f32 %v5336, %v3116
        %v5437 = vmul.f32 %v5335, %v3120
        %v5438 = vmul.f32 %v5334, %v3124
        %v5439 = vmul.f32 %v5333, %v3128
        %v5440 = vmul.f32 %v5332, %v3132
        %v5441 = vmul.f32 %v5331, %v3136
        %v5442 = vmul.f32 %v5330, %v3140
        %v5443 = vmul.f32 %v5329, %v3144
        %v5444 = vmul.f32 %v5328, %v3148
        %v5445 = vmul.f32 %v5327, %v3152
        %v5446 = vmul.f32 %v5326, %v3156
        %v5447 = vmul.f32 %v5325, %v3160
        %v5448 = vmul.f32 %v5324, %v3164
        %v5449 = vmul.f32 %v5323, %v3168
        %v5450 = vmul.f32 %v5354, %v3172
        %v5451 = vmul.f32 %v5224, %v3208
        %v5452 = vmul.f32 %v5223, %v3212
        %v5453 = vmul.f32 %v5222, %v3216
        %v5454 = vmul.f32 %v5221, %v3220
        %v5455 = vmul.f32 %v5220, %v3224
        %v5456 = vmul.f32 %v5219, %v3228
        %v5457 = vmul.f32 %v5218, %v3232
        %v5458 = vmul.f32 %v5217, %v3236
        %v5459 = vmul.f32 %v5216, %v3240
        %v5460 = vmul.f32 %v5215, %v3244
        %v5461 = vmul.f32 %v5214, %v3248
        %v5462 = vmul.f32 %v5213, %v3252
        %v5463 = vmul.f32 %v5212, %v3256
        %v5464 = vmul.f32 %v5211, %v3260
        %v5465 = vmul.f32 %v5210, %v3264
        %v5466 = vmul.f32 %v5209, %v3268
        %v5467 = vmul.f32 %v5208, %v3272
        %v5468 = vmul.f32 %v5207, %v3276
        %v5469 = vmul.f32 %v5206, %v3280
        %v5470 = vmul.f32 %v5205, %v3284
        %v5471 = vmul.f32 %v5204, %v3288
        %v5472 = vmul.f32 %v5203, %v3292
        %v5473 = vmul.f32 %v5202, %v3296
        %v5474 = vmul.f32 %v5201, %v3300
        %v5475 = vmul.f32 %v5200, %v3304
        %v5476 = vmul.f32 %v5199, %v3308
        %v5477 = vmul.f32 %v5198, %v3312
        %v5478 = vmul.f32 %v5197, %v3316
        %v5479 = vmul.f32 %v5196, %v3320
        %v5480 = vmul.f32 %v5195, %v3324
        %v5481 = vmul.f32 %v5226, %v3328
        %v5482 = vmul.f32 %v5225, %v3332
        %v5483 = vmul.f32 %v5133, %v3368
        %v5484 = vmul.f32 %v5134, %v3372
        %v5485 = vmul.f32 %v5135, %v3376
        %v5486 = vmul.f32 %v5136, %v3380
        %v5487 = vmul.f32 %v5137, %v3384
        %v5488 = vmul.f32 %v5138, %v3388
        %v5489 = vmul.f32 %v5139, %v3392
        %v5490 = vmul.f32 %v5140, %v3396
        %v5491 = vmul.f32 %v5141, %v3400
        %v5492 = vmul.f32 %v5142, %v3404
        %v5493 = vmul.f32 %v5143, %v3408
        %v5494 = vmul.f32 %v5144, %v3412
        %v5495 = vmul.f32 %v5145, %v3416
        %v5496 = vmul.f32 %v5146, %v3420
        %v5497 = vmul.f32 %v5147, %v3424
        %v5498 = vmul.f32 %v5148, %v3428
        %v5499 = vmul.f32 %v5149, %v3432
        %v5500 = vmul.f32 %v5150, %v3436
        %v5501 = vmul.f32 %v5151, %v3440
        %v5502 = vmul.f32 %v5152, %v3444
        %v5503 = vmul.f32 %v5153, %v3448
        %v5504 = vmul.f32 %v5154, %v3452
        %v5505 = vmul.f32 %v5155, %v3456
        %v5506 = vmul.f32 %v5156, %v3460
        %v5507 = vmul.f32 %v5157, %v3464
        %v5508 = vmul.f32 %v5158, %v3468
        %v5509 = vmul.f32 %v5159, %v3472
        %v5510 = vmul.f32 %v5160, %v3476
        %v5511 = vmul.f32 %v5161, %v3480
        %v5512 = vmul.f32 %v5162, %v3484
        %v5513 = vmul.f32 %v5131, %v3488
        %v5514 = vmul.f32 %v5132, %v3492
        %v5515 = vmul.f32 %v5351, %v3528
        %v5516 = vmul.f32 %v5350, %v3532
        %v5517 = vmul.f32 %v5349, %v3536
        %v5518 = vmul.f32 %v5348, %v3540
        %v5519 = vmul.f32 %v5347, %v3544
        %v5520 = vmul.f32 %v5346, %v3548
        %v5521 = vmul.f32 %v5345, %v3552
        %v5522 = vmul.f32 %v5344, %v3556
        %v5523 = vmul.f32 %v5343, %v3560
        %v5524 = vmul.f32 %v5342, %v3564
        %v5525 = vmul.f32 %v5341, %v3568
        %v5526 = vmul.f32 %v5340, %v3572
        %v5527 = vmul.f32 %v5339, %v3576
        %v5528 = vmul.f32 %v5338, %v3580
        %v5529 = vmul.f32 %v5337, %v3584
        %v5530 = vmul.f32 %v5336, %v3588
        %v5531 = vmul.f32 %v5335, %v3592
        %v5532 = vmul.f32 %v5334, %v3596
        %v5533 = vmul.f32 %v5333, %v3600
        %v5534 = vmul.f32 %v5332, %v3604
        %v5535 = vmul.f32 %v5331, %v3608
        %v5536 = vmul.f32 %v5330, %v3612
        %v5537 = vmul.f32 %v5329, %v3616
        %v5538 = vmul.f32 %v5328, %v3620
        %v5539 = vmul.f32 %v5327, %v3624
        %v5540 = vmul.f32 %v5326, %v3628
        %v5541 = vmul.f32 %v5325, %v3632
        %v5542 = vmul.f32 %v5324, %v3636
        %v5543 = vmul.f32 %v5323, %v3640
        %v5544 = vmul.f32 %v5354, %v3644
        %v5545 = vmul.f32 %v5353, %v3648
        %v5546 = vmul.f32 %v5352, %v3652
        %v5547 = vpack.c.bf16 %v5228, %v5227
        %v5548 = vpack.c.bf16 %v5260, %v5259
        %v5549 = vpack.c.bf16 %v5356, %v5355
        %v5550 = vpack.c.bf16 %v5388, %v5387
        %v5551 = vpack.c.bf16 %v5132, %v5131
        %v5552 = vpack.c.bf16 %v5420, %v5419
        %v5553 = vpack.c.bf16 %v5452, %v5451
        %v5554 = vpack.c.bf16 %v5484, %v5483
        %v5555 = vpack.c.bf16 %v5516, %v5515
        %v5556 = vpack.c.bf16 %v5230, %v5229
        %v5557 = vpack.c.bf16 %v5262, %v5261
        %v5558 = vpack.c.bf16 %v5358, %v5357
        %v5559 = vpack.c.bf16 %v5390, %v5389
        %v5560 = vpack.c.bf16 %v5134, %v5133
        %v5561 = vpack.c.bf16 %v5422, %v5421
        %v5562 = vpack.c.bf16 %v5454, %v5453
        %v5563 = vpack.c.bf16 %v5486, %v5485
        %v5564 = vpack.c.bf16 %v5518, %v5517
        %v5565 = vpack.c.bf16 %v5232, %v5231
        %v5566 = vpack.c.bf16 %v5264, %v5263
        %v5567 = vpack.c.bf16 %v5360, %v5359
        %v5568 = vpack.c.bf16 %v5392, %v5391
        %v5569 = vpack.c.bf16 %v5136, %v5135
        %v5570 = vpack.c.bf16 %v5424, %v5423
        %v5571 = vpack.c.bf16 %v5456, %v5455
        %v5572 = vpack.c.bf16 %v5488, %v5487
        %v5573 = vpack.c.bf16 %v5520, %v5519
        %v5574 = vpack.c.bf16 %v5234, %v5233
        %v5575 = vpack.c.bf16 %v5266, %v5265
        %v5576 = vpack.c.bf16 %v5362, %v5361
        %v5577 = vpack.c.bf16 %v5394, %v5393
        %v5578 = vpack.c.bf16 %v5138, %v5137
        %v5579 = vpack.c.bf16 %v5426, %v5425
        %v5580 = vpack.c.bf16 %v5458, %v5457
        %v5581 = vpack.c.bf16 %v5490, %v5489
        %v5582 = vpack.c.bf16 %v5522, %v5521
        %v5583 = vpack.c.bf16 %v5236, %v5235
        %v5584 = vpack.c.bf16 %v5268, %v5267
        %v5585 = vpack.c.bf16 %v5364, %v5363
        %v5586 = vpack.c.bf16 %v5396, %v5395
        %v5587 = vpack.c.bf16 %v5140, %v5139
        %v5588 = vpack.c.bf16 %v5428, %v5427
        %v5589 = vpack.c.bf16 %v5460, %v5459
        %v5590 = vpack.c.bf16 %v5492, %v5491
        %v5591 = vpack.c.bf16 %v5524, %v5523
        %v5592 = vpack.c.bf16 %v5238, %v5237
        %v5593 = vpack.c.bf16 %v5270, %v5269
        %v5594 = vpack.c.bf16 %v5366, %v5365
        %v5595 = vpack.c.bf16 %v5398, %v5397
        %v5596 = vpack.c.bf16 %v5142, %v5141
        %v5597 = vpack.c.bf16 %v5430, %v5429
        %v5598 = vpack.c.bf16 %v5462, %v5461
        %v5599 = vpack.c.bf16 %v5494, %v5493
        %v5600 = vpack.c.bf16 %v5526, %v5525
        %v5601 = vpack.c.bf16 %v5240, %v5239
        %v5602 = vpack.c.bf16 %v5272, %v5271
        %v5603 = vpack.c.bf16 %v5368, %v5367
        %v5604 = vpack.c.bf16 %v5400, %v5399
        %v5605 = vpack.c.bf16 %v5144, %v5143
        %v5606 = vpack.c.bf16 %v5432, %v5431
        %v5607 = vpack.c.bf16 %v5464, %v5463
        %v5608 = vpack.c.bf16 %v5496, %v5495
        %v5609 = vpack.c.bf16 %v5528, %v5527
        %v5610 = vpack.c.bf16 %v5242, %v5241
        %v5611 = vpack.c.bf16 %v5274, %v5273
        %v5612 = vpack.c.bf16 %v5370, %v5369
        %v5613 = vpack.c.bf16 %v5402, %v5401
        %v5614 = vpack.c.bf16 %v5146, %v5145
        %v5615 = vpack.c.bf16 %v5434, %v5433
        %v5616 = vpack.c.bf16 %v5466, %v5465
        %v5617 = vpack.c.bf16 %v5498, %v5497
        %v5618 = vpack.c.bf16 %v5530, %v5529
        %v5619 = vpack.c.bf16 %v5244, %v5243
        %v5620 = vpack.c.bf16 %v5276, %v5275
        %v5621 = vpack.c.bf16 %v5372, %v5371
        %v5622 = vpack.c.bf16 %v5404, %v5403
        %v5623 = vpack.c.bf16 %v5148, %v5147
        %v5624 = vpack.c.bf16 %v5436, %v5435
        %v5625 = vpack.c.bf16 %v5468, %v5467
        %v5626 = vpack.c.bf16 %v5500, %v5499
        %v5627 = vpack.c.bf16 %v5532, %v5531
        %v5628 = vpack.c.bf16 %v5246, %v5245
        %v5629 = vpack.c.bf16 %v5278, %v5277
        %v5630 = vpack.c.bf16 %v5374, %v5373
        %v5631 = vpack.c.bf16 %v5406, %v5405
        %v5632 = vpack.c.bf16 %v5150, %v5149
        %v5633 = vpack.c.bf16 %v5438, %v5437
        %v5634 = vpack.c.bf16 %v5470, %v5469
        %v5635 = vpack.c.bf16 %v5502, %v5501
        %v5636 = vpack.c.bf16 %v5534, %v5533
        %v5637 = vpack.c.bf16 %v5248, %v5247
        %v5638 = vpack.c.bf16 %v5280, %v5279
        %v5639 = vpack.c.bf16 %v5376, %v5375
        %v5640 = vpack.c.bf16 %v5408, %v5407
        %v5641 = vpack.c.bf16 %v5152, %v5151
        %v5642 = vpack.c.bf16 %v5440, %v5439
        %v5643 = vpack.c.bf16 %v5472, %v5471
        %v5644 = vpack.c.bf16 %v5504, %v5503
        %v5645 = vpack.c.bf16 %v5536, %v5535
        %v5646 = vpack.c.bf16 %v5250, %v5249
        %v5647 = vpack.c.bf16 %v5282, %v5281
        %v5648 = vpack.c.bf16 %v5378, %v5377
        %v5649 = vpack.c.bf16 %v5410, %v5409
        %v5650 = vpack.c.bf16 %v5154, %v5153
        %v5651 = vpack.c.bf16 %v5442, %v5441
        %v5652 = vpack.c.bf16 %v5474, %v5473
        %v5653 = vpack.c.bf16 %v5506, %v5505
        %v5654 = vpack.c.bf16 %v5538, %v5537
        %v5655 = vpack.c.bf16 %v5252, %v5251
        %v5656 = vpack.c.bf16 %v5284, %v5283
        %v5657 = vpack.c.bf16 %v5380, %v5379
        %v5658 = vpack.c.bf16 %v5412, %v5411
        %v5659 = vpack.c.bf16 %v5156, %v5155
        %v5660 = vpack.c.bf16 %v5444, %v5443
        %v5661 = vpack.c.bf16 %v5476, %v5475
        %v5662 = vpack.c.bf16 %v5508, %v5507
        %v5663 = vpack.c.bf16 %v5540, %v5539
        %v5664 = vpack.c.bf16 %v5254, %v5253
        %v5665 = vpack.c.bf16 %v5286, %v5285
        %v5666 = vpack.c.bf16 %v5382, %v5381
        %v5667 = vpack.c.bf16 %v5414, %v5413
        %v5668 = vpack.c.bf16 %v5158, %v5157
        %v5669 = vpack.c.bf16 %v5446, %v5445
        %v5670 = vpack.c.bf16 %v5478, %v5477
        %v5671 = vpack.c.bf16 %v5510, %v5509
        %v5672 = vpack.c.bf16 %v5542, %v5541
        %v5673 = vpack.c.bf16 %v5256, %v5255
        %v5674 = vpack.c.bf16 %v5288, %v5287
        %v5675 = vpack.c.bf16 %v5384, %v5383
        %v5676 = vpack.c.bf16 %v5416, %v5415
        %v5677 = vpack.c.bf16 %v5160, %v5159
        %v5678 = vpack.c.bf16 %v5448, %v5447
        %v5679 = vpack.c.bf16 %v5480, %v5479
        %v5680 = vpack.c.bf16 %v5512, %v5511
        %v5681 = vpack.c.bf16 %v5544, %v5543
        %v5682 = vpack.c.bf16 %v5258, %v5257
        %v5683 = vpack.c.bf16 %v5290, %v5289
        %v5684 = vpack.c.bf16 %v5386, %v5385
        %v5685 = vpack.c.bf16 %v5418, %v5417
        %v5686 = vpack.c.bf16 %v5162, %v5161
        %v5687 = vpack.c.bf16 %v5450, %v5449
        %v5688 = vpack.c.bf16 %v5482, %v5481
        %v5689 = vpack.c.bf16 %v5514, %v5513
        %v5690 = vpack.c.bf16 %v5546, %v5545
        %v5691 = vld [vmem:[%s15] sm:$0xf]
        %v5692 = vld [vmem:[%s15 + $0x4] sm:$0xf]
        %v5693 = vld [vmem:[%s15 + $0x8] sm:$0xf]
        %v5694 = vld [vmem:[%s15 + $0xc] sm:$0xf]
        %v5695 = vld [vmem:[%s15 + $0x10] sm:$0xf]
        %v5696 = vld [vmem:[%s15 + $0x14] sm:$0xf]
        %v5697 = vld [vmem:[%s15 + $0x18] sm:$0xf]
        %v5698 = vld [vmem:[%s15 + $0x1c] sm:$0xf]
        %v5699 = vld [vmem:[%s15 + $0x20] sm:$0xf]
        %v5700 = vld [vmem:[%s15 + $0x24] sm:$0xf]
        %v5701 = vld [vmem:[%s15 + $0x28] sm:$0xf]
        %v5702 = vld [vmem:[%s15 + $0x2c] sm:$0xf]
        %v5703 = vld [vmem:[%s15 + $0x30] sm:$0xf]
        %v5704 = vld [vmem:[%s15 + $0x34] sm:$0xf]
        %v5705 = vld [vmem:[%s15 + $0x38] sm:$0xf]
        %v5706 = vld [vmem:[%s15 + $0x3c] sm:$0xf]
        %v5707 = vld [vmem:[%s15 + $0x40] sm:$0xf]
        %v5708 = vld [vmem:[%s15 + $0x44] sm:$0xf]
        %v5709 = vld [vmem:[%s15 + $0x48] sm:$0xf]
        %v5710 = vld [vmem:[%s15 + $0x4c] sm:$0xf]
        %v5711 = vld [vmem:[%s15 + $0x50] sm:$0xf]
        %v5712 = vld [vmem:[%s15 + $0x54] sm:$0xf]
        %v5713 = vld [vmem:[%s15 + $0x58] sm:$0xf]
        %v5714 = vld [vmem:[%s15 + $0x5c] sm:$0xf]
        %v5715 = vld [vmem:[%s15 + $0x60] sm:$0xf]
        %v5716 = vld [vmem:[%s15 + $0x64] sm:$0xf]
        %v5717 = vld [vmem:[%s15 + $0x68] sm:$0xf]
        %v5718 = vld [vmem:[%s15 + $0x6c] sm:$0xf]
        %v5719 = vld [vmem:[%s15 + $0x70] sm:$0xf]
        %v5720 = vld [vmem:[%s15 + $0x74] sm:$0xf]
        %v5721 = vld [vmem:[%s15 + $0x78] sm:$0xf]
        %v5722 = vld [vmem:[%s15 + $0x7c] sm:$0xf]
        %v5723 = vld [vmem:[%s15 + $0x80] sm:$0xf]
        %v5724 = vld [vmem:[%s15 + $0x84] sm:$0xf]
        %v5725 = vld [vmem:[%s15 + $0x88] sm:$0xf]
        %v5726 = vld [vmem:[%s15 + $0x8c] sm:$0xf]
        %v5727 = vld [vmem:[%s15 + $0x90] sm:$0xf]
        %v5728 = vld [vmem:[%s15 + $0x94] sm:$0xf]
        %v5729 = vld [vmem:[%s15 + $0x98] sm:$0xf]
        %v5730 = vld [vmem:[%s15 + $0x9c] sm:$0xf]
        %v5731 = vld [vmem:[%s15 + $0xa0] sm:$0xf]
        %v5732 = vld [vmem:[%s15 + $0xa4] sm:$0xf]
        %v5733 = vld [vmem:[%s15 + $0xa8] sm:$0xf]
        %v5734 = vld [vmem:[%s15 + $0xac] sm:$0xf]
        %v5735 = vld [vmem:[%s15 + $0xb0] sm:$0xf]
        %v5736 = vld [vmem:[%s15 + $0xb4] sm:$0xf]
        %v5737 = vld [vmem:[%s15 + $0xb8] sm:$0xf]
        %v5738 = vld [vmem:[%s15 + $0xbc] sm:$0xf]
        %v5739 = vld [vmem:[%s15 + $0xc0] sm:$0xf]
        %v5740 = vld [vmem:[%s15 + $0xc4] sm:$0xf]
        %v5741 = vld [vmem:[%s15 + $0xc8] sm:$0xf]
        %v5742 = vld [vmem:[%s15 + $0xcc] sm:$0xf]
        %v5743 = vld [vmem:[%s15 + $0xd0] sm:$0xf]
        %v5744 = vld [vmem:[%s15 + $0xd4] sm:$0xf]
        %v5745 = vld [vmem:[%s15 + $0xd8] sm:$0xf]
        %v5746 = vld [vmem:[%s15 + $0xdc] sm:$0xf]
        %v5747 = vld [vmem:[%s15 + $0xe0] sm:$0xf]
        %v5748 = vld [vmem:[%s15 + $0xe4] sm:$0xf]
        %v5749 = vld [vmem:[%s15 + $0xe8] sm:$0xf]
        %v5750 = vld [vmem:[%s15 + $0xec] sm:$0xf]
        %v5751 = vld [vmem:[%s15 + $0xf0] sm:$0xf]
        %v5752 = vld [vmem:[%s15 + $0xf4] sm:$0xf]
        %v5753 = vld [vmem:[%s15 + $0xf8] sm:$0xf]
        %v5754 = vld [vmem:[%s15 + $0xfc] sm:$0xf]
        %v5755 = vld [vmem:[%s15 + $0x100] sm:$0xf]
        %v5756 = vld [vmem:[%s15 + $0x104] sm:$0xf]
        %v5757 = vld [vmem:[%s15 + $0x108] sm:$0xf]
        %v5758 = vld [vmem:[%s15 + $0x10c] sm:$0xf]
        %v5759 = vld [vmem:[%s15 + $0x110] sm:$0xf]
        %v5760 = vld [vmem:[%s15 + $0x114] sm:$0xf]
        %v5761 = vld [vmem:[%s15 + $0x118] sm:$0xf]
        %v5762 = vld [vmem:[%s15 + $0x11c] sm:$0xf]
        %v5763 = vld [vmem:[%s15 + $0x120] sm:$0xf]
        %v5764 = vld [vmem:[%s15 + $0x124] sm:$0xf]
        %v5765 = vld [vmem:[%s15 + $0x128] sm:$0xf]
        %v5766 = vld [vmem:[%s15 + $0x12c] sm:$0xf]
        %v5767 = vld [vmem:[%s15 + $0x130] sm:$0xf]
        %v5768 = vld [vmem:[%s15 + $0x134] sm:$0xf]
        %v5769 = vld [vmem:[%s15 + $0x138] sm:$0xf]
        %v5770 = vld [vmem:[%s15 + $0x13c] sm:$0xf]
        %v5771 = vld [vmem:[%s15 + $0x140] sm:$0xf]
        %v5772 = vld [vmem:[%s15 + $0x144] sm:$0xf]
        %v5773 = vld [vmem:[%s15 + $0x148] sm:$0xf]
        %v5774 = vld [vmem:[%s15 + $0x14c] sm:$0xf]
        %v5775 = vld [vmem:[%s15 + $0x150] sm:$0xf]
        %v5776 = vld [vmem:[%s15 + $0x154] sm:$0xf]
        %v5777 = vld [vmem:[%s15 + $0x158] sm:$0xf]
        %v5778 = vld [vmem:[%s15 + $0x15c] sm:$0xf]
        %v5779 = vld [vmem:[%s15 + $0x160] sm:$0xf]
        %v5780 = vld [vmem:[%s15 + $0x164] sm:$0xf]
        %v5781 = vld [vmem:[%s15 + $0x168] sm:$0xf]
        %v5782 = vld [vmem:[%s15 + $0x16c] sm:$0xf]
        %v5783 = vld [vmem:[%s15 + $0x170] sm:$0xf]
        %v5784 = vld [vmem:[%s15 + $0x174] sm:$0xf]
        %v5785 = vld [vmem:[%s15 + $0x178] sm:$0xf]
        %v5786 = vld [vmem:[%s15 + $0x17c] sm:$0xf]
        %v5787 = vld [vmem:[%s15 + $0x180] sm:$0xf]
        %v5788 = vld [vmem:[%s15 + $0x184] sm:$0xf]
        %v5789 = vld [vmem:[%s15 + $0x188] sm:$0xf]
        %v5790 = vld [vmem:[%s15 + $0x18c] sm:$0xf]
        %v5791 = vld [vmem:[%s15 + $0x190] sm:$0xf]
        %v5792 = vld [vmem:[%s15 + $0x194] sm:$0xf]
        %v5793 = vld [vmem:[%s15 + $0x198] sm:$0xf]
        %v5794 = vld [vmem:[%s15 + $0x19c] sm:$0xf]
        %v5795 = vld [vmem:[%s15 + $0x1a0] sm:$0xf]
        %v5796 = vld [vmem:[%s15 + $0x1a4] sm:$0xf]
        %v5797 = vld [vmem:[%s15 + $0x1a8] sm:$0xf]
        %v5798 = vld [vmem:[%s15 + $0x1ac] sm:$0xf]
        %v5799 = vld [vmem:[%s15 + $0x1b0] sm:$0xf]
        %v5800 = vld [vmem:[%s15 + $0x1b4] sm:$0xf]
        %v5801 = vld [vmem:[%s15 + $0x1b8] sm:$0xf]
        %v5802 = vld [vmem:[%s15 + $0x1bc] sm:$0xf]
        %v5803 = vld [vmem:[%s15 + $0x1c0] sm:$0xf]
        %v5804 = vld [vmem:[%s15 + $0x1c4] sm:$0xf]
        %v5805 = vld [vmem:[%s15 + $0x1c8] sm:$0xf]
        %v5806 = vld [vmem:[%s15 + $0x1cc] sm:$0xf]
        %v5807 = vld [vmem:[%s15 + $0x1d0] sm:$0xf]
        %v5808 = vld [vmem:[%s15 + $0x1d4] sm:$0xf]
        %v5809 = vld [vmem:[%s15 + $0x1d8] sm:$0xf]
        %v5810 = vld [vmem:[%s15 + $0x1dc] sm:$0xf]
        %v5811 = vld [vmem:[%s15 + $0x1e0] sm:$0xf]
        %v5812 = vld [vmem:[%s15 + $0x1e4] sm:$0xf]
        %v5813 = vld [vmem:[%s15 + $0x1e8] sm:$0xf]
        %v5814 = vld [vmem:[%s15 + $0x1ec] sm:$0xf]
        %v5815 = vld [vmem:[%s15 + $0x1f0] sm:$0xf]
        %v5816 = vld [vmem:[%s15 + $0x1f4] sm:$0xf]
        %v5817 = vld [vmem:[%s15 + $0x1f8] sm:$0xf]
        %v5818 = vld [vmem:[%s15 + $0x1fc] sm:$0xf]
        %v5819 = vld [vmem:[%s15 + $0x200] sm:$0xf]
        %v5820 = vld [vmem:[%s15 + $0x204] sm:$0xf]
        %v5821 = vld [vmem:[%s15 + $0x208] sm:$0xf]
        %v5822 = vld [vmem:[%s15 + $0x20c] sm:$0xf]
        %v5823 = vld [vmem:[%s15 + $0x210] sm:$0xf]
        %v5824 = vld [vmem:[%s15 + $0x214] sm:$0xf]
        %v5825 = vld [vmem:[%s15 + $0x218] sm:$0xf]
        %v5826 = vld [vmem:[%s15 + $0x21c] sm:$0xf]
        %v5827 = vld [vmem:[%s15 + $0x220] sm:$0xf]
        %v5828 = vld [vmem:[%s15 + $0x224] sm:$0xf]
        %v5829 = vld [vmem:[%s15 + $0x228] sm:$0xf]
        %v5830 = vld [vmem:[%s15 + $0x22c] sm:$0xf]
        %v5831 = vld [vmem:[%s15 + $0x230] sm:$0xf]
        %v5832 = vld [vmem:[%s15 + $0x234] sm:$0xf]
        %v5833 = vld [vmem:[%s15 + $0x238] sm:$0xf]
        %v5834 = vld [vmem:[%s15 + $0x23c] sm:$0xf]
        %v5835 = vld [vmem:[%s15 + $0x240] sm:$0xf]
        %v5836 = vld [vmem:[%s15 + $0x244] sm:$0xf]
        %v5837 = vld [vmem:[%s16] sm:$0x1]
        %v5839 = vlaneseq
        %v5840 = vshrl.u32 %v5839, 7
        %v5841 = vsub.s32 0, %v5840
        %v5842 = vrot.slane %v5837, %v5841
        %v5990 = vunpack.c.l.b16 %v5691
        %v5991 = vunpack.c.l.b16 %v5692
        %v5992 = vunpack.c.l.b16 %v5693
        %v5993 = vunpack.c.l.b16 %v5694
        %v5994 = vunpack.c.l.b16 %v5695
        %v5995 = vunpack.c.l.b16 %v5696
        %v5996 = vunpack.c.l.b16 %v5697
        %v5997 = vunpack.c.l.b16 %v5698
        %v5998 = vunpack.c.l.b16 %v5699
        %v5999 = vunpack.c.l.b16 %v5700
        %v6000 = vunpack.c.l.b16 %v5701
        %v6001 = vunpack.c.l.b16 %v5702
        %v6002 = vunpack.c.l.b16 %v5703
        %v6003 = vunpack.c.l.b16 %v5704
        %v6004 = vunpack.c.l.b16 %v5705
        %v6005 = vunpack.c.l.b16 %v5706
        %v6006 = vunpack.c.l.b16 %v5707
        %v6007 = vunpack.c.l.b16 %v5708
        %v6008 = vunpack.c.l.b16 %v5709
        %v6009 = vunpack.c.l.b16 %v5710
        %v6010 = vunpack.c.l.b16 %v5711
        %v6011 = vunpack.c.l.b16 %v5712
        %v6012 = vunpack.c.l.b16 %v5713
        %v6013 = vunpack.c.l.b16 %v5714
        %v6014 = vunpack.c.l.b16 %v5715
        %v6015 = vunpack.c.l.b16 %v5716
        %v6016 = vunpack.c.l.b16 %v5717
        %v6017 = vunpack.c.l.b16 %v5718
        %v6018 = vunpack.c.l.b16 %v5719
        %v6019 = vunpack.c.l.b16 %v5720
        %v6020 = vunpack.c.l.b16 %v5721
        %v6021 = vunpack.c.l.b16 %v5722
        %v6022 = vunpack.c.l.b16 %v5723
        %v6023 = vunpack.c.l.b16 %v5724
        %v6024 = vunpack.c.l.b16 %v5725
        %v6025 = vunpack.c.l.b16 %v5726
        %v6026 = vunpack.c.l.b16 %v5727
        %v6027 = vunpack.c.l.b16 %v5728
        %v6028 = vunpack.c.l.b16 %v5729
        %v6029 = vunpack.c.l.b16 %v5730
        %v6030 = vunpack.c.l.b16 %v5731
        %v6031 = vunpack.c.l.b16 %v5732
        %v6032 = vunpack.c.l.b16 %v5733
        %v6033 = vunpack.c.l.b16 %v5734
        %v6034 = vunpack.c.l.b16 %v5735
        %v6035 = vunpack.c.l.b16 %v5736
        %v6036 = vunpack.c.l.b16 %v5737
        %v6037 = vunpack.c.l.b16 %v5738
        %v6038 = vunpack.c.l.b16 %v5739
        %v6039 = vunpack.c.l.b16 %v5740
        %v6040 = vunpack.c.l.b16 %v5741
        %v6041 = vunpack.c.l.b16 %v5742
        %v6042 = vunpack.c.l.b16 %v5743
        %v6043 = vunpack.c.l.b16 %v5744
        %v6044 = vunpack.c.l.b16 %v5745
        %v6045 = vunpack.c.l.b16 %v5746
        %v6046 = vunpack.c.l.b16 %v5747
        %v6047 = vunpack.c.l.b16 %v5748
        %v6048 = vunpack.c.l.b16 %v5749
        %v6049 = vunpack.c.l.b16 %v5750
        %v6050 = vunpack.c.l.b16 %v5751
        %v6051 = vunpack.c.l.b16 %v5752
        %v6052 = vunpack.c.l.b16 %v5753
        %v6053 = vunpack.c.l.b16 %v5754
        %v6054 = vunpack.c.l.b16 %v5755
        %v6055 = vunpack.c.l.b16 %v5756
        %v6056 = vunpack.c.l.b16 %v5757
        %v6057 = vunpack.c.l.b16 %v5758
        %v6058 = vunpack.c.l.b16 %v5759
        %v6059 = vunpack.c.l.b16 %v5760
        %v6060 = vunpack.c.l.b16 %v5761
        %v6061 = vunpack.c.l.b16 %v5762
        %v6062 = vunpack.c.l.b16 %v5763
        %v6063 = vunpack.c.l.b16 %v5764
        %v6064 = vunpack.c.l.b16 %v5765
        %v6065 = vunpack.c.l.b16 %v5766
        %v6066 = vunpack.c.l.b16 %v5767
        %v6067 = vunpack.c.l.b16 %v5768
        %v6068 = vunpack.c.l.b16 %v5769
        %v6069 = vunpack.c.l.b16 %v5770
        %v6070 = vunpack.c.l.b16 %v5771
        %v6071 = vunpack.c.l.b16 %v5772
        %v6072 = vunpack.c.l.b16 %v5773
        %v6073 = vunpack.c.l.b16 %v5774
        %v6074 = vunpack.c.l.b16 %v5775
        %v6075 = vunpack.c.l.b16 %v5776
        %v6076 = vunpack.c.l.b16 %v5777
        %v6077 = vunpack.c.l.b16 %v5778
        %v6078 = vunpack.c.l.b16 %v5779
        %v6079 = vunpack.c.l.b16 %v5780
        %v6080 = vunpack.c.l.b16 %v5781
        %v6081 = vunpack.c.l.b16 %v5782
        %v6082 = vunpack.c.l.b16 %v5783
        %v6083 = vunpack.c.l.b16 %v5784
        %v6084 = vunpack.c.l.b16 %v5785
        %v6085 = vunpack.c.l.b16 %v5786
        %v6086 = vunpack.c.l.b16 %v5787
        %v6087 = vunpack.c.l.b16 %v5788
        %v6088 = vunpack.c.l.b16 %v5789
        %v6089 = vunpack.c.l.b16 %v5790
        %v6090 = vunpack.c.l.b16 %v5791
        %v6091 = vunpack.c.l.b16 %v5792
        %v6092 = vunpack.c.l.b16 %v5793
        %v6093 = vunpack.c.l.b16 %v5794
        %v6094 = vunpack.c.l.b16 %v5795
        %v6095 = vunpack.c.l.b16 %v5796
        %v6096 = vunpack.c.l.b16 %v5797
        %v6097 = vunpack.c.l.b16 %v5798
        %v6098 = vunpack.c.l.b16 %v5799
        %v6099 = vunpack.c.l.b16 %v5800
        %v6100 = vunpack.c.l.b16 %v5801
        %v6101 = vunpack.c.l.b16 %v5802
        %v6102 = vunpack.c.l.b16 %v5803
        %v6103 = vunpack.c.l.b16 %v5804
        %v6104 = vunpack.c.l.b16 %v5805
        %v6105 = vunpack.c.l.b16 %v5806
        %v6106 = vunpack.c.l.b16 %v5807
        %v6107 = vunpack.c.l.b16 %v5808
        %v6108 = vunpack.c.l.b16 %v5809
        %v6109 = vunpack.c.l.b16 %v5810
        %v6110 = vunpack.c.l.b16 %v5811
        %v6111 = vunpack.c.l.b16 %v5812
        %v6112 = vunpack.c.l.b16 %v5813
        %v6113 = vunpack.c.l.b16 %v5814
        %v6114 = vunpack.c.l.b16 %v5815
        %v6115 = vunpack.c.l.b16 %v5816
        %v6116 = vunpack.c.l.b16 %v5817
        %v6117 = vunpack.c.l.b16 %v5818
        %v6118 = vunpack.c.l.b16 %v5819
        %v6119 = vunpack.c.l.b16 %v5820
        %v6120 = vunpack.c.l.b16 %v5821
        %v6121 = vunpack.c.l.b16 %v5822
        %v6122 = vunpack.c.l.b16 %v5823
        %v6123 = vunpack.c.l.b16 %v5824
        %v6124 = vunpack.c.l.b16 %v5825
        %v6125 = vunpack.c.l.b16 %v5826
        %v6126 = vunpack.c.l.b16 %v5827
        %v6127 = vunpack.c.l.b16 %v5828
        %v6128 = vunpack.c.l.b16 %v5829
        %v6129 = vunpack.c.l.b16 %v5830
        %v6130 = vunpack.c.l.b16 %v5831
        %v6131 = vunpack.c.l.b16 %v5832
        %v6132 = vunpack.c.l.b16 %v5833
        %v6133 = vunpack.c.l.b16 %v5834
        %v6134 = vunpack.c.l.b16 %v5835
        %v6135 = vunpack.c.l.b16 %v5836
        %v6136 = vpack.c.b16 %v5991, %v5990
        %v6137 = vpack.c.b16 %v5993, %v5992
        %v6138 = vpack.c.b16 %v5995, %v5994
        %v6139 = vpack.c.b16 %v5997, %v5996
        %v6140 = vpack.c.b16 %v5999, %v5998
        %v6141 = vpack.c.b16 %v6001, %v6000
        %v6142 = vpack.c.b16 %v6003, %v6002
        %v6143 = vpack.c.b16 %v6005, %v6004
        %v6144 = vpack.c.b16 %v6007, %v6006
        %v6145 = vpack.c.b16 %v6009, %v6008
        %v6146 = vpack.c.b16 %v6011, %v6010
        %v6147 = vpack.c.b16 %v6013, %v6012
        %v6148 = vpack.c.b16 %v6015, %v6014
        %v6149 = vpack.c.b16 %v6017, %v6016
        %v6150 = vpack.c.b16 %v6019, %v6018
        %v6151 = vpack.c.b16 %v6021, %v6020
        %v6152 = vpack.c.b16 %v6023, %v6022
        %v6153 = vpack.c.b16 %v6025, %v6024
        %v6154 = vpack.c.b16 %v6027, %v6026
        %v6155 = vpack.c.b16 %v6029, %v6028
        %v6156 = vpack.c.b16 %v6031, %v6030
        %v6157 = vpack.c.b16 %v6033, %v6032
        %v6158 = vpack.c.b16 %v6035, %v6034
        %v6159 = vpack.c.b16 %v6037, %v6036
        %v6160 = vpack.c.b16 %v6039, %v6038
        %v6161 = vpack.c.b16 %v6041, %v6040
        %v6162 = vpack.c.b16 %v6043, %v6042
        %v6163 = vpack.c.b16 %v6045, %v6044
        %v6164 = vpack.c.b16 %v6047, %v6046
        %v6165 = vpack.c.b16 %v6049, %v6048
        %v6166 = vpack.c.b16 %v6051, %v6050
        %v6167 = vpack.c.b16 %v6053, %v6052
        %v6168 = vpack.c.b16 %v6055, %v6054
        %v6169 = vpack.c.b16 %v6057, %v6056
        %v6170 = vpack.c.b16 %v6059, %v6058
        %v6171 = vpack.c.b16 %v6061, %v6060
        %v6172 = vpack.c.b16 %v6063, %v6062
        %v6173 = vpack.c.b16 %v6065, %v6064
        %v6174 = vpack.c.b16 %v6067, %v6066
        %v6175 = vpack.c.b16 %v6069, %v6068
        %v6176 = vpack.c.b16 %v6071, %v6070
        %v6177 = vpack.c.b16 %v6073, %v6072
        %v6178 = vpack.c.b16 %v6075, %v6074
        %v6179 = vpack.c.b16 %v6077, %v6076
        %v6180 = vpack.c.b16 %v6079, %v6078
        %v6181 = vpack.c.b16 %v6081, %v6080
        %v6182 = vpack.c.b16 %v6083, %v6082
        %v6183 = vpack.c.b16 %v6085, %v6084
        %v6184 = vpack.c.b16 %v6087, %v6086
        %v6185 = vpack.c.b16 %v6089, %v6088
        %v6186 = vpack.c.b16 %v6091, %v6090
        %v6187 = vpack.c.b16 %v6093, %v6092
        %v6188 = vpack.c.b16 %v6095, %v6094
        %v6189 = vpack.c.b16 %v6097, %v6096
        %v6190 = vpack.c.b16 %v6099, %v6098
        %v6191 = vpack.c.b16 %v6101, %v6100
        %v6192 = vpack.c.b16 %v6103, %v6102
        %v6193 = vpack.c.b16 %v6105, %v6104
        %v6194 = vpack.c.b16 %v6107, %v6106
        %v6195 = vpack.c.b16 %v6109, %v6108
        %v6196 = vpack.c.b16 %v6111, %v6110
        %v6197 = vpack.c.b16 %v6113, %v6112
        %v6198 = vpack.c.b16 %v6115, %v6114
        %v6199 = vpack.c.b16 %v6117, %v6116
        %v6200 = vpack.c.b16 %v6119, %v6118
        %v6201 = vpack.c.b16 %v6121, %v6120
        %v6202 = vpack.c.b16 %v6123, %v6122
        %v6203 = vpack.c.b16 %v6125, %v6124
        %v6204 = vpack.c.b16 %v6127, %v6126
        %v6205 = vpack.c.b16 %v6129, %v6128
        %v6206 = vpack.c.b16 %v6131, %v6130
        %v6207 = vpack.c.b16 %v6133, %v6132
        %v6208 = vpack.c.b16 %v6135, %v6134
        %6282 = vmatprep.subr.bf16.mxu0 0
        %6283 = vmatpush1.bf16.msra.mxu0 %v6143
        %6284 = vmatprep.subr.bf16.mxu0 0
        %6285 = vmatpush1.bf16.msra.mxu0 %v6142
        %6286 = vmatprep.subr.bf16.mxu0 0
        %6287 = vmatpush1.bf16.msra.mxu0 %v6141
        %6288 = vmatprep.subr.bf16.mxu0 0
        %6289 = vmatpush1.bf16.msra.mxu0 %v6140
        %6290 = vmatprep.subr.bf16.mxu0 0
        %6291 = vmatpush1.bf16.msra.mxu0 %v6139
        %6292 = vmatprep.subr.bf16.mxu0 0
        %6293 = vmatpush1.bf16.msra.mxu0 %v6138
        %6294 = vmatprep.subr.bf16.mxu0 0
        %6295 = vmatpush1.bf16.msra.mxu0 %v6137
        %6296 = vmatprep.subr.bf16.mxu0 0
        %6297 = vmatpush1.bf16.msra.mxu0 %v6136
        %6298 = vmatprep.subr.bf16.mxu0 0
        %6299 = vmatpush2.bf16.msra.mxu0 %v6151
        %6300 = vmatprep.subr.bf16.mxu0 0
        %6301 = vmatpush2.bf16.msra.mxu0 %v6150
        %6302 = vmatprep.subr.bf16.mxu0 0
        %6303 = vmatpush2.bf16.msra.mxu0 %v6149
        %6304 = vmatprep.subr.bf16.mxu0 0
        %6305 = vmatpush2.bf16.msra.mxu0 %v6148
        %6306 = vmatprep.subr.bf16.mxu0 0
        %6307 = vmatpush2.bf16.msra.mxu0 %v6147
        %6308 = vmatprep.subr.bf16.mxu0 0
        %6309 = vmatpush2.bf16.msra.mxu0 %v6146
        %6310 = vmatprep.subr.bf16.mxu0 0
        %6311 = vmatpush2.bf16.msra.mxu0 %v6145
        %6312 = vmatprep.subr.bf16.mxu0 0
        %6313 = vmatpush2.bf16.msra.mxu0 %v6144
        %6314 = vmatprep.mubr.bf16.mxu0 %v5548
        %6315 = vmatmul.mubr.bf16.gmra.mxu0 %v5547
        %v6316 = vpop.f32.mrf.mxu0
        %v6317 = vadd.f32 %v5842, %v6316
        %v6318 = vpop.f32.mrf.mxu0
        %v6319 = vpop.f32.mrf.mxu0
        %v6320 = vadd.f32 %v5842, %v6319
        %v6321 = vpop.f32.mrf.mxu0
        %6322 = vmatprep.mubr.bf16.mxu0 %v5557
        %6323 = vmatmul.mubr.bf16.gmra.mxu0 %v5556
        %v6324 = vpop.f32.mrf.mxu0
        %v6325 = vadd.f32 %v5842, %v6324
        %v6326 = vpop.f32.mrf.mxu0
        %v6327 = vpop.f32.mrf.mxu0
        %v6328 = vadd.f32 %v5842, %v6327
        %v6329 = vpop.f32.mrf.mxu0
        %6330 = vmatprep.mubr.bf16.mxu0 %v5566
        %6331 = vmatmul.mubr.bf16.gmra.mxu0 %v5565
        %v6332 = vpop.f32.mrf.mxu0
        %v6333 = vadd.f32 %v5842, %v6332
        %v6334 = vpop.f32.mrf.mxu0
        %v6335 = vpop.f32.mrf.mxu0
        %v6336 = vadd.f32 %v5842, %v6335
        %v6337 = vpop.f32.mrf.mxu0
        %6338 = vmatprep.mubr.bf16.mxu0 %v5575
        %6339 = vmatmul.mubr.bf16.gmra.mxu0 %v5574
        %v6340 = vpop.f32.mrf.mxu0
        %v6341 = vadd.f32 %v5842, %v6340
        %v6342 = vpop.f32.mrf.mxu0
        %v6343 = vpop.f32.mrf.mxu0
        %v6344 = vadd.f32 %v5842, %v6343
        %v6345 = vpop.f32.mrf.mxu0
        %6346 = vmatprep.mubr.bf16.mxu0 %v5584
        %6347 = vmatmul.mubr.bf16.gmra.mxu0 %v5583
        %v6348 = vpop.f32.mrf.mxu0
        %v6349 = vadd.f32 %v5842, %v6348
        %v6350 = vpop.f32.mrf.mxu0
        %v6351 = vpop.f32.mrf.mxu0
        %v6352 = vadd.f32 %v5842, %v6351
        %v6353 = vpop.f32.mrf.mxu0
        %6354 = vmatprep.mubr.bf16.mxu0 %v5593
        %6355 = vmatmul.mubr.bf16.gmra.mxu0 %v5592
        %v6356 = vpop.f32.mrf.mxu0
        %v6357 = vadd.f32 %v5842, %v6356
        %v6358 = vpop.f32.mrf.mxu0
        %v6359 = vpop.f32.mrf.mxu0
        %v6360 = vadd.f32 %v5842, %v6359
        %v6361 = vpop.f32.mrf.mxu0
        %6362 = vmatprep.mubr.bf16.mxu0 %v5602
        %6363 = vmatmul.mubr.bf16.gmra.mxu0 %v5601
        %v6364 = vpop.f32.mrf.mxu0
        %v6365 = vadd.f32 %v5842, %v6364
        %v6366 = vpop.f32.mrf.mxu0
        %v6367 = vpop.f32.mrf.mxu0
        %v6368 = vadd.f32 %v5842, %v6367
        %v6369 = vpop.f32.mrf.mxu0
        %6370 = vmatprep.mubr.bf16.mxu0 %v5611
        %6371 = vmatmul.mubr.bf16.gmra.mxu0 %v5610
        %v6372 = vpop.f32.mrf.mxu0
        %v6373 = vadd.f32 %v5842, %v6372
        %v6374 = vpop.f32.mrf.mxu0
        %v6375 = vpop.f32.mrf.mxu0
        %v6376 = vadd.f32 %v5842, %v6375
        %v6377 = vpop.f32.mrf.mxu0
        %6378 = vmatprep.mubr.bf16.mxu0 %v5620
        %6379 = vmatmul.mubr.bf16.gmra.mxu0 %v5619
        %v6380 = vpop.f32.mrf.mxu0
        %v6381 = vadd.f32 %v5842, %v6380
        %v6382 = vpop.f32.mrf.mxu0
        %v6383 = vpop.f32.mrf.mxu0
        %v6384 = vadd.f32 %v5842, %v6383
        %v6385 = vpop.f32.mrf.mxu0
        %6386 = vmatprep.mubr.bf16.mxu0 %v5629
        %6387 = vmatmul.mubr.bf16.gmra.mxu0 %v5628
        %v6388 = vpop.f32.mrf.mxu0
        %v6389 = vadd.f32 %v5842, %v6388
        %v6390 = vpop.f32.mrf.mxu0
        %v6391 = vpop.f32.mrf.mxu0
        %v6392 = vadd.f32 %v5842, %v6391
        %v6393 = vpop.f32.mrf.mxu0
        %6394 = vmatprep.mubr.bf16.mxu0 %v5638
        %6395 = vmatmul.mubr.bf16.gmra.mxu0 %v5637
        %v6396 = vpop.f32.mrf.mxu0
        %v6397 = vadd.f32 %v5842, %v6396
        %v6398 = vpop.f32.mrf.mxu0
        %v6399 = vpop.f32.mrf.mxu0
        %v6400 = vadd.f32 %v5842, %v6399
        %v6401 = vpop.f32.mrf.mxu0
        %6402 = vmatprep.mubr.bf16.mxu0 %v5647
        %6403 = vmatmul.mubr.bf16.gmra.mxu0 %v5646
        %v6404 = vpop.f32.mrf.mxu0
        %v6405 = vadd.f32 %v5842, %v6404
        %v6406 = vpop.f32.mrf.mxu0
        %v6407 = vpop.f32.mrf.mxu0
        %v6408 = vadd.f32 %v5842, %v6407
        %v6409 = vpop.f32.mrf.mxu0
        %6410 = vmatprep.mubr.bf16.mxu0 %v5656
        %6411 = vmatmul.mubr.bf16.gmra.mxu0 %v5655
        %v6412 = vpop.f32.mrf.mxu0
        %v6413 = vadd.f32 %v5842, %v6412
        %v6414 = vpop.f32.mrf.mxu0
        %v6415 = vpop.f32.mrf.mxu0
        %v6416 = vadd.f32 %v5842, %v6415
        %v6417 = vpop.f32.mrf.mxu0
        %6418 = vmatprep.mubr.bf16.mxu0 %v5665
        %6419 = vmatmul.mubr.bf16.gmra.mxu0 %v5664
        %v6420 = vpop.f32.mrf.mxu0
        %v6421 = vadd.f32 %v5842, %v6420
        %v6422 = vpop.f32.mrf.mxu0
        %v6423 = vpop.f32.mrf.mxu0
        %v6424 = vadd.f32 %v5842, %v6423
        %v6425 = vpop.f32.mrf.mxu0
        %6426 = vmatprep.mubr.bf16.mxu0 %v5674
        %6427 = vmatmul.mubr.bf16.gmra.mxu0 %v5673
        %v6428 = vpop.f32.mrf.mxu0
        %v6429 = vadd.f32 %v5842, %v6428
        %v6430 = vpop.f32.mrf.mxu0
        %v6431 = vpop.f32.mrf.mxu0
        %v6432 = vadd.f32 %v5842, %v6431
        %v6433 = vpop.f32.mrf.mxu0
        %6434 = vmatprep.mubr.bf16.mxu0 %v5683
        %6435 = vmatmul.mubr.bf16.gmra.mxu0 %v5682
        %v6436 = vpop.f32.mrf.mxu0
        %v6437 = vadd.f32 %v5842, %v6436
        %v6438 = vpop.f32.mrf.mxu0
        %v6439 = vpop.f32.mrf.mxu0
        %v6440 = vadd.f32 %v5842, %v6439
        %v6441 = vpop.f32.mrf.mxu0
        %6442 = vdwg.mxu0
        %6443 = vmatprep.subr.bf16.mxu0 0
        %6444 = vmatpush1.bf16.msra.mxu0 %v6159
        %6445 = vmatprep.subr.bf16.mxu0 0
        %6446 = vmatpush1.bf16.msra.mxu0 %v6158
        %6447 = vmatprep.subr.bf16.mxu0 0
        %6448 = vmatpush1.bf16.msra.mxu0 %v6157
        %6449 = vmatprep.subr.bf16.mxu0 0
        %6450 = vmatpush1.bf16.msra.mxu0 %v6156
        %6451 = vmatprep.subr.bf16.mxu0 0
        %6452 = vmatpush1.bf16.msra.mxu0 %v6155
        %6453 = vmatprep.subr.bf16.mxu0 0
        %6454 = vmatpush1.bf16.msra.mxu0 %v6154
        %6455 = vmatprep.subr.bf16.mxu0 0
        %6456 = vmatpush1.bf16.msra.mxu0 %v6153
        %6457 = vmatprep.subr.bf16.mxu0 0
        %6458 = vmatpush1.bf16.msra.mxu0 %v6152
        %6459 = vmatprep.subr.bf16.mxu0 0
        %6460 = vmatpush2.bf16.msra.mxu0 %v6167
        %6461 = vmatprep.subr.bf16.mxu0 0
        %6462 = vmatpush2.bf16.msra.mxu0 %v6166
        %6463 = vmatprep.subr.bf16.mxu0 0
        %6464 = vmatpush2.bf16.msra.mxu0 %v6165
        %6465 = vmatprep.subr.bf16.mxu0 0
        %6466 = vmatpush2.bf16.msra.mxu0 %v6164
        %6467 = vmatprep.subr.bf16.mxu0 0
        %6468 = vmatpush2.bf16.msra.mxu0 %v6163
        %6469 = vmatprep.subr.bf16.mxu0 0
        %6470 = vmatpush2.bf16.msra.mxu0 %v6162
        %6471 = vmatprep.subr.bf16.mxu0 0
        %6472 = vmatpush2.bf16.msra.mxu0 %v6161
        %6473 = vmatprep.subr.bf16.mxu0 0
        %6474 = vmatpush2.bf16.msra.mxu0 %v6160
        %6475 = vmatprep.mubr.bf16.mxu0 %v5550
        %6476 = vmatmul.mubr.bf16.gmra.mxu0 %v5549
        %v6477 = vpop.f32.mrf.mxu0
        %v6478 = vadd.f32 %v6317, %v6477
        %v6479 = vpop.f32.mrf.mxu0
        %v6480 = vpop.f32.mrf.mxu0
        %v6481 = vadd.f32 %v6320, %v6480
        %v6482 = vpop.f32.mrf.mxu0
        %6483 = vmatprep.mubr.bf16.mxu0 %v5559
        %6484 = vmatmul.mubr.bf16.gmra.mxu0 %v5558
        %v6485 = vpop.f32.mrf.mxu0
        %v6486 = vadd.f32 %v6325, %v6485
        %v6487 = vpop.f32.mrf.mxu0
        %v6488 = vpop.f32.mrf.mxu0
        %v6489 = vadd.f32 %v6328, %v6488
        %v6490 = vpop.f32.mrf.mxu0
        %6491 = vmatprep.mubr.bf16.mxu0 %v5568
        %6492 = vmatmul.mubr.bf16.gmra.mxu0 %v5567
        %v6493 = vpop.f32.mrf.mxu0
        %v6494 = vadd.f32 %v6333, %v6493
        %v6495 = vpop.f32.mrf.mxu0
        %v6496 = vpop.f32.mrf.mxu0
        %v6497 = vadd.f32 %v6336, %v6496
        %v6498 = vpop.f32.mrf.mxu0
        %6499 = vmatprep.mubr.bf16.mxu0 %v5577
        %6500 = vmatmul.mubr.bf16.gmra.mxu0 %v5576
        %v6501 = vpop.f32.mrf.mxu0
        %v6502 = vadd.f32 %v6341, %v6501
        %v6503 = vpop.f32.mrf.mxu0
        %v6504 = vpop.f32.mrf.mxu0
        %v6505 = vadd.f32 %v6344, %v6504
        %v6506 = vpop.f32.mrf.mxu0
        %6507 = vmatprep.mubr.bf16.mxu0 %v5586
        %6508 = vmatmul.mubr.bf16.gmra.mxu0 %v5585
        %v6509 = vpop.f32.mrf.mxu0
        %v6510 = vadd.f32 %v6349, %v6509
        %v6511 = vpop.f32.mrf.mxu0
        %v6512 = vpop.f32.mrf.mxu0
        %v6513 = vadd.f32 %v6352, %v6512
        %v6514 = vpop.f32.mrf.mxu0
        %6515 = vmatprep.mubr.bf16.mxu0 %v5595
        %6516 = vmatmul.mubr.bf16.gmra.mxu0 %v5594
        %v6517 = vpop.f32.mrf.mxu0
        %v6518 = vadd.f32 %v6357, %v6517
        %v6519 = vpop.f32.mrf.mxu0
        %v6520 = vpop.f32.mrf.mxu0
        %v6521 = vadd.f32 %v6360, %v6520
        %v6522 = vpop.f32.mrf.mxu0
        %6523 = vmatprep.mubr.bf16.mxu0 %v5604
        %6524 = vmatmul.mubr.bf16.gmra.mxu0 %v5603
        %v6525 = vpop.f32.mrf.mxu0
        %v6526 = vadd.f32 %v6365, %v6525
        %v6527 = vpop.f32.mrf.mxu0
        %v6528 = vpop.f32.mrf.mxu0
        %v6529 = vadd.f32 %v6368, %v6528
        %v6530 = vpop.f32.mrf.mxu0
        %6531 = vmatprep.mubr.bf16.mxu0 %v5613
        %6532 = vmatmul.mubr.bf16.gmra.mxu0 %v5612
        %v6533 = vpop.f32.mrf.mxu0
        %v6534 = vadd.f32 %v6373, %v6533
        %v6535 = vpop.f32.mrf.mxu0
        %v6536 = vpop.f32.mrf.mxu0
        %v6537 = vadd.f32 %v6376, %v6536
        %v6538 = vpop.f32.mrf.mxu0
        %6539 = vmatprep.mubr.bf16.mxu0 %v5622
        %6540 = vmatmul.mubr.bf16.gmra.mxu0 %v5621
        %v6541 = vpop.f32.mrf.mxu0
        %v6542 = vadd.f32 %v6381, %v6541
        %v6543 = vpop.f32.mrf.mxu0
        %v6544 = vpop.f32.mrf.mxu0
        %v6545 = vadd.f32 %v6384, %v6544
        %v6546 = vpop.f32.mrf.mxu0
        %6547 = vmatprep.mubr.bf16.mxu0 %v5631
        %6548 = vmatmul.mubr.bf16.gmra.mxu0 %v5630
        %v6549 = vpop.f32.mrf.mxu0
        %v6550 = vadd.f32 %v6389, %v6549
        %v6551 = vpop.f32.mrf.mxu0
        %v6552 = vpop.f32.mrf.mxu0
        %v6553 = vadd.f32 %v6392, %v6552
        %v6554 = vpop.f32.mrf.mxu0
        %6555 = vmatprep.mubr.bf16.mxu0 %v5640
        %6556 = vmatmul.mubr.bf16.gmra.mxu0 %v5639
        %v6557 = vpop.f32.mrf.mxu0
        %v6558 = vadd.f32 %v6397, %v6557
        %v6559 = vpop.f32.mrf.mxu0
        %v6560 = vpop.f32.mrf.mxu0
        %v6561 = vadd.f32 %v6400, %v6560
        %v6562 = vpop.f32.mrf.mxu0
        %6563 = vmatprep.mubr.bf16.mxu0 %v5649
        %6564 = vmatmul.mubr.bf16.gmra.mxu0 %v5648
        %v6565 = vpop.f32.mrf.mxu0
        %v6566 = vadd.f32 %v6405, %v6565
        %v6567 = vpop.f32.mrf.mxu0
        %v6568 = vpop.f32.mrf.mxu0
        %v6569 = vadd.f32 %v6408, %v6568
        %v6570 = vpop.f32.mrf.mxu0
        %6571 = vmatprep.mubr.bf16.mxu0 %v5658
        %6572 = vmatmul.mubr.bf16.gmra.mxu0 %v5657
        %v6573 = vpop.f32.mrf.mxu0
        %v6574 = vadd.f32 %v6413, %v6573
        %v6575 = vpop.f32.mrf.mxu0
        %v6576 = vpop.f32.mrf.mxu0
        %v6577 = vadd.f32 %v6416, %v6576
        %v6578 = vpop.f32.mrf.mxu0
        %6579 = vmatprep.mubr.bf16.mxu0 %v5667
        %6580 = vmatmul.mubr.bf16.gmra.mxu0 %v5666
        %v6581 = vpop.f32.mrf.mxu0
        %v6582 = vadd.f32 %v6421, %v6581
        %v6583 = vpop.f32.mrf.mxu0
        %v6584 = vpop.f32.mrf.mxu0
        %v6585 = vadd.f32 %v6424, %v6584
        %v6586 = vpop.f32.mrf.mxu0
        %6587 = vmatprep.mubr.bf16.mxu0 %v5676
        %6588 = vmatmul.mubr.bf16.gmra.mxu0 %v5675
        %v6589 = vpop.f32.mrf.mxu0
        %v6590 = vadd.f32 %v6429, %v6589
        %v6591 = vpop.f32.mrf.mxu0
        %v6592 = vpop.f32.mrf.mxu0
        %v6593 = vadd.f32 %v6432, %v6592
        %v6594 = vpop.f32.mrf.mxu0
        %6595 = vmatprep.mubr.bf16.mxu0 %v5685
        %6596 = vmatmul.mubr.bf16.gmra.mxu0 %v5684
        %v6597 = vpop.f32.mrf.mxu0
        %v6598 = vadd.f32 %v6437, %v6597
        %v6599 = vpop.f32.mrf.mxu0
        %v6600 = vpop.f32.mrf.mxu0
        %v6601 = vadd.f32 %v6440, %v6600
        %v6602 = vpop.f32.mrf.mxu0
        %6603 = vdwg.mxu0
        %6604 = vmatprep.subr.bf16.mxu0 0
        %6605 = vmatpush1.bf16.msra.mxu0 %v6175
        %6606 = vmatprep.subr.bf16.mxu0 0
        %6607 = vmatpush1.bf16.msra.mxu0 %v6174
        %6608 = vmatprep.subr.bf16.mxu0 0
        %6609 = vmatpush1.bf16.msra.mxu0 %v6173
        %6610 = vmatprep.subr.bf16.mxu0 0
        %6611 = vmatpush1.bf16.msra.mxu0 %v6172
        %6612 = vmatprep.subr.bf16.mxu0 0
        %6613 = vmatpush1.bf16.msra.mxu0 %v6171
        %6614 = vmatprep.subr.bf16.mxu0 0
        %6615 = vmatpush1.bf16.msra.mxu0 %v6170
        %6616 = vmatprep.subr.bf16.mxu0 0
        %6617 = vmatpush1.bf16.msra.mxu0 %v6169
        %6618 = vmatprep.subr.bf16.mxu0 0
        %6619 = vmatpush1.bf16.msra.mxu0 %v6168
        %6620 = vmatprep.subr.bf16.mxu0 0
        %6621 = vmatpush2.bf16.msra.mxu0 %v6183
        %6622 = vmatprep.subr.bf16.mxu0 0
        %6623 = vmatpush2.bf16.msra.mxu0 %v6182
        %6624 = vmatprep.subr.bf16.mxu0 0
        %6625 = vmatpush2.bf16.msra.mxu0 %v6181
        %6626 = vmatprep.subr.bf16.mxu0 0
        %6627 = vmatpush2.bf16.msra.mxu0 %v6180
        %6628 = vmatprep.subr.bf16.mxu0 0
        %6629 = vmatpush2.bf16.msra.mxu0 %v6179
        %6630 = vmatprep.subr.bf16.mxu0 0
        %6631 = vmatpush2.bf16.msra.mxu0 %v6178
        %6632 = vmatprep.subr.bf16.mxu0 0
        %6633 = vmatpush2.bf16.msra.mxu0 %v6177
        %6634 = vmatprep.subr.bf16.mxu0 0
        %6635 = vmatpush2.bf16.msra.mxu0 %v6176
        %6636 = vmatprep.mubr.bf16.mxu0 %v5552
        %6637 = vmatmul.mubr.bf16.gmra.mxu0 %v5551
        %v6638 = vpop.f32.mrf.mxu0
        %v6639 = vadd.f32 %v6478, %v6638
        %v6640 = vpop.f32.mrf.mxu0
        %v6641 = vpop.f32.mrf.mxu0
        %v6642 = vadd.f32 %v6481, %v6641
        %v6643 = vpop.f32.mrf.mxu0
        %6644 = vmatprep.mubr.bf16.mxu0 %v5561
        %6645 = vmatmul.mubr.bf16.gmra.mxu0 %v5560
        %v6646 = vpop.f32.mrf.mxu0
        %v6647 = vadd.f32 %v6486, %v6646
        %v6648 = vpop.f32.mrf.mxu0
        %v6649 = vpop.f32.mrf.mxu0
        %v6650 = vadd.f32 %v6489, %v6649
        %v6651 = vpop.f32.mrf.mxu0
        %6652 = vmatprep.mubr.bf16.mxu0 %v5570
        %6653 = vmatmul.mubr.bf16.gmra.mxu0 %v5569
        %v6654 = vpop.f32.mrf.mxu0
        %v6655 = vadd.f32 %v6494, %v6654
        %v6656 = vpop.f32.mrf.mxu0
        %v6657 = vpop.f32.mrf.mxu0
        %v6658 = vadd.f32 %v6497, %v6657
        %v6659 = vpop.f32.mrf.mxu0
        %6660 = vmatprep.mubr.bf16.mxu0 %v5579
        %6661 = vmatmul.mubr.bf16.gmra.mxu0 %v5578
        %v6662 = vpop.f32.mrf.mxu0
        %v6663 = vadd.f32 %v6502, %v6662
        %v6664 = vpop.f32.mrf.mxu0
        %v6665 = vpop.f32.mrf.mxu0
        %v6666 = vadd.f32 %v6505, %v6665
        %v6667 = vpop.f32.mrf.mxu0
        %6668 = vmatprep.mubr.bf16.mxu0 %v5588
        %6669 = vmatmul.mubr.bf16.gmra.mxu0 %v5587
        %v6670 = vpop.f32.mrf.mxu0
        %v6671 = vadd.f32 %v6510, %v6670
        %v6672 = vpop.f32.mrf.mxu0
        %v6673 = vpop.f32.mrf.mxu0
        %v6674 = vadd.f32 %v6513, %v6673
        %v6675 = vpop.f32.mrf.mxu0
        %6676 = vmatprep.mubr.bf16.mxu0 %v5597
        %6677 = vmatmul.mubr.bf16.gmra.mxu0 %v5596
        %v6678 = vpop.f32.mrf.mxu0
        %v6679 = vadd.f32 %v6518, %v6678
        %v6680 = vpop.f32.mrf.mxu0
        %v6681 = vpop.f32.mrf.mxu0
        %v6682 = vadd.f32 %v6521, %v6681
        %v6683 = vpop.f32.mrf.mxu0
        %6684 = vmatprep.mubr.bf16.mxu0 %v5606
        %6685 = vmatmul.mubr.bf16.gmra.mxu0 %v5605
        %v6686 = vpop.f32.mrf.mxu0
        %v6687 = vadd.f32 %v6526, %v6686
        %v6688 = vpop.f32.mrf.mxu0
        %v6689 = vpop.f32.mrf.mxu0
        %v6690 = vadd.f32 %v6529, %v6689
        %v6691 = vpop.f32.mrf.mxu0
        %6692 = vmatprep.mubr.bf16.mxu0 %v5615
        %6693 = vmatmul.mubr.bf16.gmra.mxu0 %v5614
        %v6694 = vpop.f32.mrf.mxu0
        %v6695 = vadd.f32 %v6534, %v6694
        %v6696 = vpop.f32.mrf.mxu0
        %v6697 = vpop.f32.mrf.mxu0
        %v6698 = vadd.f32 %v6537, %v6697
        %v6699 = vpop.f32.mrf.mxu0
        %6700 = vmatprep.mubr.bf16.mxu0 %v5624
        %6701 = vmatmul.mubr.bf16.gmra.mxu0 %v5623
        %v6702 = vpop.f32.mrf.mxu0
        %v6703 = vadd.f32 %v6542, %v6702
        %v6704 = vpop.f32.mrf.mxu0
        %v6705 = vpop.f32.mrf.mxu0
        %v6706 = vadd.f32 %v6545, %v6705
        %v6707 = vpop.f32.mrf.mxu0
        %6708 = vmatprep.mubr.bf16.mxu0 %v5633
        %6709 = vmatmul.mubr.bf16.gmra.mxu0 %v5632
        %v6710 = vpop.f32.mrf.mxu0
        %v6711 = vadd.f32 %v6550, %v6710
        %v6712 = vpop.f32.mrf.mxu0
        %v6713 = vpop.f32.mrf.mxu0
        %v6714 = vadd.f32 %v6553, %v6713
        %v6715 = vpop.f32.mrf.mxu0
        %6716 = vmatprep.mubr.bf16.mxu0 %v5642
        %6717 = vmatmul.mubr.bf16.gmra.mxu0 %v5641
        %v6718 = vpop.f32.mrf.mxu0
        %v6719 = vadd.f32 %v6558, %v6718
        %v6720 = vpop.f32.mrf.mxu0
        %v6721 = vpop.f32.mrf.mxu0
        %v6722 = vadd.f32 %v6561, %v6721
        %v6723 = vpop.f32.mrf.mxu0
        %6724 = vmatprep.mubr.bf16.mxu0 %v5651
        %6725 = vmatmul.mubr.bf16.gmra.mxu0 %v5650
        %v6726 = vpop.f32.mrf.mxu0
        %v6727 = vadd.f32 %v6566, %v6726
        %v6728 = vpop.f32.mrf.mxu0
        %v6729 = vpop.f32.mrf.mxu0
        %v6730 = vadd.f32 %v6569, %v6729
        %v6731 = vpop.f32.mrf.mxu0
        %6732 = vmatprep.mubr.bf16.mxu0 %v5660
        %6733 = vmatmul.mubr.bf16.gmra.mxu0 %v5659
        %v6734 = vpop.f32.mrf.mxu0
        %v6735 = vadd.f32 %v6574, %v6734
        %v6736 = vpop.f32.mrf.mxu0
        %v6737 = vpop.f32.mrf.mxu0
        %v6738 = vadd.f32 %v6577, %v6737
        %v6739 = vpop.f32.mrf.mxu0
        %6740 = vmatprep.mubr.bf16.mxu0 %v5669
        %6741 = vmatmul.mubr.bf16.gmra.mxu0 %v5668
        %v6742 = vpop.f32.mrf.mxu0
        %v6743 = vadd.f32 %v6582, %v6742
        %v6744 = vpop.f32.mrf.mxu0
        %v6745 = vpop.f32.mrf.mxu0
        %v6746 = vadd.f32 %v6585, %v6745
        %v6747 = vpop.f32.mrf.mxu0
        %6748 = vmatprep.mubr.bf16.mxu0 %v5678
        %6749 = vmatmul.mubr.bf16.gmra.mxu0 %v5677
        %v6750 = vpop.f32.mrf.mxu0
        %v6751 = vadd.f32 %v6590, %v6750
        %v6752 = vpop.f32.mrf.mxu0
        %v6753 = vpop.f32.mrf.mxu0
        %v6754 = vadd.f32 %v6593, %v6753
        %v6755 = vpop.f32.mrf.mxu0
        %6756 = vmatprep.mubr.bf16.mxu0 %v5687
        %6757 = vmatmul.mubr.bf16.gmra.mxu0 %v5686
        %v6758 = vpop.f32.mrf.mxu0
        %v6759 = vadd.f32 %v6598, %v6758
        %v6760 = vpop.f32.mrf.mxu0
        %v6761 = vpop.f32.mrf.mxu0
        %v6762 = vadd.f32 %v6601, %v6761
        %v6763 = vpop.f32.mrf.mxu0
        %6764 = vdwg.mxu0
        %6765 = vmatprep.subr.bf16.mxu0 0
        %6766 = vmatpush1.bf16.msra.mxu0 %v6191
        %6767 = vmatprep.subr.bf16.mxu0 0
        %6768 = vmatpush1.bf16.msra.mxu0 %v6190
        %6769 = vmatprep.subr.bf16.mxu0 0
        %6770 = vmatpush1.bf16.msra.mxu0 %v6189
        %6771 = vmatprep.subr.bf16.mxu0 0
        %6772 = vmatpush1.bf16.msra.mxu0 %v6188
        %6773 = vmatprep.subr.bf16.mxu0 0
        %6774 = vmatpush1.bf16.msra.mxu0 %v6187
        %6775 = vmatprep.subr.bf16.mxu0 0
        %6776 = vmatpush1.bf16.msra.mxu0 %v6186
        %6777 = vmatprep.subr.bf16.mxu0 0
        %6778 = vmatpush1.bf16.msra.mxu0 %v6185
        %6779 = vmatprep.subr.bf16.mxu0 0
        %6780 = vmatpush1.bf16.msra.mxu0 %v6184
        %6781 = vmatprep.subr.bf16.mxu0 0
        %6782 = vmatpush2.bf16.msra.mxu0 %v6199
        %6783 = vmatprep.subr.bf16.mxu0 0
        %6784 = vmatpush2.bf16.msra.mxu0 %v6198
        %6785 = vmatprep.subr.bf16.mxu0 0
        %6786 = vmatpush2.bf16.msra.mxu0 %v6197
        %6787 = vmatprep.subr.bf16.mxu0 0
        %6788 = vmatpush2.bf16.msra.mxu0 %v6196
        %6789 = vmatprep.subr.bf16.mxu0 0
        %6790 = vmatpush2.bf16.msra.mxu0 %v6195
        %6791 = vmatprep.subr.bf16.mxu0 0
        %6792 = vmatpush2.bf16.msra.mxu0 %v6194
        %6793 = vmatprep.subr.bf16.mxu0 0
        %6794 = vmatpush2.bf16.msra.mxu0 %v6193
        %6795 = vmatprep.subr.bf16.mxu0 0
        %6796 = vmatpush2.bf16.msra.mxu0 %v6192
        %6797 = vmatprep.mubr.bf16.mxu0 %v5554
        %6798 = vmatmul.mubr.bf16.gmra.mxu0 %v5553
        %v6799 = vpop.f32.mrf.mxu0
        %v6800 = vadd.f32 %v6639, %v6799
        %v6801 = vpop.f32.mrf.mxu0
        %v6802 = vpop.f32.mrf.mxu0
        %v6803 = vadd.f32 %v6642, %v6802
        %v6804 = vpop.f32.mrf.mxu0
        %6805 = vmatprep.mubr.bf16.mxu0 %v5563
        %6806 = vmatmul.mubr.bf16.gmra.mxu0 %v5562
        %v6807 = vpop.f32.mrf.mxu0
        %v6808 = vadd.f32 %v6647, %v6807
        %v6809 = vpop.f32.mrf.mxu0
        %v6810 = vpop.f32.mrf.mxu0
        %v6811 = vadd.f32 %v6650, %v6810
        %v6812 = vpop.f32.mrf.mxu0
        %6813 = vmatprep.mubr.bf16.mxu0 %v5572
        %6814 = vmatmul.mubr.bf16.gmra.mxu0 %v5571
        %v6815 = vpop.f32.mrf.mxu0
        %v6816 = vadd.f32 %v6655, %v6815
        %v6817 = vpop.f32.mrf.mxu0
        %v6818 = vpop.f32.mrf.mxu0
        %v6819 = vadd.f32 %v6658, %v6818
        %v6820 = vpop.f32.mrf.mxu0
        %6821 = vmatprep.mubr.bf16.mxu0 %v5581
        %6822 = vmatmul.mubr.bf16.gmra.mxu0 %v5580
        %v6823 = vpop.f32.mrf.mxu0
        %v6824 = vadd.f32 %v6663, %v6823
        %v6825 = vpop.f32.mrf.mxu0
        %v6826 = vpop.f32.mrf.mxu0
        %v6827 = vadd.f32 %v6666, %v6826
        %v6828 = vpop.f32.mrf.mxu0
        %6829 = vmatprep.mubr.bf16.mxu0 %v5590
        %6830 = vmatmul.mubr.bf16.gmra.mxu0 %v5589
        %v6831 = vpop.f32.mrf.mxu0
        %v6832 = vadd.f32 %v6671, %v6831
        %v6833 = vpop.f32.mrf.mxu0
        %v6834 = vpop.f32.mrf.mxu0
        %v6835 = vadd.f32 %v6674, %v6834
        %v6836 = vpop.f32.mrf.mxu0
        %6837 = vmatprep.mubr.bf16.mxu0 %v5599
        %6838 = vmatmul.mubr.bf16.gmra.mxu0 %v5598
        %v6839 = vpop.f32.mrf.mxu0
        %v6840 = vadd.f32 %v6679, %v6839
        %v6841 = vpop.f32.mrf.mxu0
        %v6842 = vpop.f32.mrf.mxu0
        %v6843 = vadd.f32 %v6682, %v6842
        %v6844 = vpop.f32.mrf.mxu0
        %6845 = vmatprep.mubr.bf16.mxu0 %v5608
        %6846 = vmatmul.mubr.bf16.gmra.mxu0 %v5607
        %v6847 = vpop.f32.mrf.mxu0
        %v6848 = vadd.f32 %v6687, %v6847
        %v6849 = vpop.f32.mrf.mxu0
        %v6850 = vpop.f32.mrf.mxu0
        %v6851 = vadd.f32 %v6690, %v6850
        %v6852 = vpop.f32.mrf.mxu0
        %6853 = vmatprep.mubr.bf16.mxu0 %v5617
        %6854 = vmatmul.mubr.bf16.gmra.mxu0 %v5616
        %v6855 = vpop.f32.mrf.mxu0
        %v6856 = vadd.f32 %v6695, %v6855
        %v6857 = vpop.f32.mrf.mxu0
        %v6858 = vpop.f32.mrf.mxu0
        %v6859 = vadd.f32 %v6698, %v6858
        %v6860 = vpop.f32.mrf.mxu0
        %6861 = vmatprep.mubr.bf16.mxu0 %v5626
        %6862 = vmatmul.mubr.bf16.gmra.mxu0 %v5625
        %v6863 = vpop.f32.mrf.mxu0
        %v6864 = vadd.f32 %v6703, %v6863
        %v6865 = vpop.f32.mrf.mxu0
        %v6866 = vpop.f32.mrf.mxu0
        %v6867 = vadd.f32 %v6706, %v6866
        %v6868 = vpop.f32.mrf.mxu0
        %6869 = vmatprep.mubr.bf16.mxu0 %v5635
        %6870 = vmatmul.mubr.bf16.gmra.mxu0 %v5634
        %v6871 = vpop.f32.mrf.mxu0
        %v6872 = vadd.f32 %v6711, %v6871
        %v6873 = vpop.f32.mrf.mxu0
        %v6874 = vpop.f32.mrf.mxu0
        %v6875 = vadd.f32 %v6714, %v6874
        %v6876 = vpop.f32.mrf.mxu0
        %6877 = vmatprep.mubr.bf16.mxu0 %v5644
        %6878 = vmatmul.mubr.bf16.gmra.mxu0 %v5643
        %v6879 = vpop.f32.mrf.mxu0
        %v6880 = vadd.f32 %v6719, %v6879
        %v6881 = vpop.f32.mrf.mxu0
        %v6882 = vpop.f32.mrf.mxu0
        %v6883 = vadd.f32 %v6722, %v6882
        %v6884 = vpop.f32.mrf.mxu0
        %6885 = vmatprep.mubr.bf16.mxu0 %v5653
        %6886 = vmatmul.mubr.bf16.gmra.mxu0 %v5652
        %v6887 = vpop.f32.mrf.mxu0
        %v6888 = vadd.f32 %v6727, %v6887
        %v6889 = vpop.f32.mrf.mxu0
        %v6890 = vpop.f32.mrf.mxu0
        %v6891 = vadd.f32 %v6730, %v6890
        %v6892 = vpop.f32.mrf.mxu0
        %6893 = vmatprep.mubr.bf16.mxu0 %v5662
        %6894 = vmatmul.mubr.bf16.gmra.mxu0 %v5661
        %v6895 = vpop.f32.mrf.mxu0
        %v6896 = vadd.f32 %v6735, %v6895
        %v6897 = vpop.f32.mrf.mxu0
        %v6898 = vpop.f32.mrf.mxu0
        %v6899 = vadd.f32 %v6738, %v6898
        %v6900 = vpop.f32.mrf.mxu0
        %6901 = vmatprep.mubr.bf16.mxu0 %v5671
        %6902 = vmatmul.mubr.bf16.gmra.mxu0 %v5670
        %v6903 = vpop.f32.mrf.mxu0
        %v6904 = vadd.f32 %v6743, %v6903
        %v6905 = vpop.f32.mrf.mxu0
        %v6906 = vpop.f32.mrf.mxu0
        %v6907 = vadd.f32 %v6746, %v6906
        %v6908 = vpop.f32.mrf.mxu0
        %6909 = vmatprep.mubr.bf16.mxu0 %v5680
        %6910 = vmatmul.mubr.bf16.gmra.mxu0 %v5679
        %v6911 = vpop.f32.mrf.mxu0
        %v6912 = vadd.f32 %v6751, %v6911
        %v6913 = vpop.f32.mrf.mxu0
        %v6914 = vpop.f32.mrf.mxu0
        %v6915 = vadd.f32 %v6754, %v6914
        %v6916 = vpop.f32.mrf.mxu0
        %6917 = vmatprep.mubr.bf16.mxu0 %v5689
        %6918 = vmatmul.mubr.bf16.gmra.mxu0 %v5688
        %v6919 = vpop.f32.mrf.mxu0
        %v6920 = vadd.f32 %v6759, %v6919
        %v6921 = vpop.f32.mrf.mxu0
        %v6922 = vpop.f32.mrf.mxu0
        %v6923 = vadd.f32 %v6762, %v6922
        %v6924 = vpop.f32.mrf.mxu0
        %6925 = vdwg.mxu0
        %6926 = vmatprep.subr.bf16.mxu0 0
        %6927 = vmatpush1.bf16.msra.mxu0 %v6207
        %6928 = vmatprep.subr.bf16.mxu0 0
        %6929 = vmatpush1.bf16.msra.mxu0 %v6206
        %6930 = vmatprep.subr.bf16.mxu0 0
        %6931 = vmatpush1.bf16.msra.mxu0 %v6205
        %6932 = vmatprep.subr.bf16.mxu0 0
        %6933 = vmatpush1.bf16.msra.mxu0 %v6204
        %6934 = vmatprep.subr.bf16.mxu0 0
        %6935 = vmatpush1.bf16.msra.mxu0 %v6203
        %6936 = vmatprep.subr.bf16.mxu0 0
        %6937 = vmatpush1.bf16.msra.mxu0 %v6202
        %6938 = vmatprep.subr.bf16.mxu0 0
        %6939 = vmatpush1.bf16.msra.mxu0 %v6201
        %6940 = vmatprep.subr.bf16.mxu0 0
        %6941 = vmatpush1.bf16.msra.mxu0 %v6200
        %6942 = vmatprep.subr.bf16.mxu0 0
        %6943 = vmatpush2.bf16.msra.mxu0 0
        %6944 = vmatprep.subr.bf16.mxu0 0
        %6945 = vmatpush2.bf16.msra.mxu0 0
        %6946 = vmatprep.subr.bf16.mxu0 0
        %6947 = vmatpush2.bf16.msra.mxu0 0
        %6948 = vmatprep.subr.bf16.mxu0 0
        %6949 = vmatpush2.bf16.msra.mxu0 0
        %6950 = vmatprep.subr.bf16.mxu0 0
        %6951 = vmatpush2.bf16.msra.mxu0 0
        %6952 = vmatprep.subr.bf16.mxu0 0
        %6953 = vmatpush2.bf16.msra.mxu0 0
        %6954 = vmatprep.subr.bf16.mxu0 0
        %6955 = vmatpush2.bf16.msra.mxu0 0
        %6956 = vmatprep.subr.bf16.mxu0 0
        %6957 = vmatpush2.bf16.msra.mxu0 %v6208
        %6958 = vmatprep.mubr.bf16.mxu0 %v1161
        %6959 = vmatmul.mubr.bf16.gmra.mxu0 %v5555
        %v6960 = vpop.f32.mrf.mxu0
        %v6961 = vadd.f32 %v6800, %v6960
        %v6962 = vpop.f32.mrf.mxu0
        %v6963 = vpop.f32.mrf.mxu0
        %v6964 = vadd.f32 %v6803, %v6963
        %v6965 = vpop.f32.mrf.mxu0
        %6966 = vmatprep.mubr.bf16.mxu0 %v1164
        %6967 = vmatmul.mubr.bf16.gmra.mxu0 %v5564
        %v6968 = vpop.f32.mrf.mxu0
        %v6969 = vadd.f32 %v6808, %v6968
        %v6970 = vpop.f32.mrf.mxu0
        %v6971 = vpop.f32.mrf.mxu0
        %v6972 = vadd.f32 %v6811, %v6971
        %v6973 = vpop.f32.mrf.mxu0
        %6974 = vmatprep.mubr.bf16.mxu0 %v1167
        %6975 = vmatmul.mubr.bf16.gmra.mxu0 %v5573
        %v6976 = vpop.f32.mrf.mxu0
        %v6977 = vadd.f32 %v6816, %v6976
        %v6978 = vpop.f32.mrf.mxu0
        %v6979 = vpop.f32.mrf.mxu0
        %v6980 = vadd.f32 %v6819, %v6979
        %v6981 = vpop.f32.mrf.mxu0
        %6982 = vmatprep.mubr.bf16.mxu0 %v1170
        %6983 = vmatmul.mubr.bf16.gmra.mxu0 %v5582
        %v6984 = vpop.f32.mrf.mxu0
        %v6985 = vadd.f32 %v6824, %v6984
        %v6986 = vpop.f32.mrf.mxu0
        %v6987 = vpop.f32.mrf.mxu0
        %v6988 = vadd.f32 %v6827, %v6987
        %v6989 = vpop.f32.mrf.mxu0
        %6990 = vmatprep.mubr.bf16.mxu0 %v1173
        %6991 = vmatmul.mubr.bf16.gmra.mxu0 %v5591
        %v6992 = vpop.f32.mrf.mxu0
        %v6993 = vadd.f32 %v6832, %v6992
        %v6994 = vpop.f32.mrf.mxu0
        %v6995 = vpop.f32.mrf.mxu0
        %v6996 = vadd.f32 %v6835, %v6995
        %v6997 = vpop.f32.mrf.mxu0
        %6998 = vmatprep.mubr.bf16.mxu0 %v1176
        %6999 = vmatmul.mubr.bf16.gmra.mxu0 %v5600
        %v7000 = vpop.f32.mrf.mxu0
        %v7001 = vadd.f32 %v6840, %v7000
        %v7002 = vpop.f32.mrf.mxu0
        %v7003 = vpop.f32.mrf.mxu0
        %v7004 = vadd.f32 %v6843, %v7003
        %v7005 = vpop.f32.mrf.mxu0
        %7006 = vmatprep.mubr.bf16.mxu0 %v1179
        %7007 = vmatmul.mubr.bf16.gmra.mxu0 %v5609
        %v7008 = vpop.f32.mrf.mxu0
        %v7009 = vadd.f32 %v6848, %v7008
        %v7010 = vpop.f32.mrf.mxu0
        %v7011 = vpop.f32.mrf.mxu0
        %v7012 = vadd.f32 %v6851, %v7011
        %v7013 = vpop.f32.mrf.mxu0
        %7014 = vmatprep.mubr.bf16.mxu0 %v1182
        %7015 = vmatmul.mubr.bf16.gmra.mxu0 %v5618
        %v7016 = vpop.f32.mrf.mxu0
        %v7017 = vadd.f32 %v6856, %v7016
        %v7018 = vpop.f32.mrf.mxu0
        %v7019 = vpop.f32.mrf.mxu0
        %v7020 = vadd.f32 %v6859, %v7019
        %v7021 = vpop.f32.mrf.mxu0
        %7022 = vmatprep.mubr.bf16.mxu0 %v1185
        %7023 = vmatmul.mubr.bf16.gmra.mxu0 %v5627
        %v7024 = vpop.f32.mrf.mxu0
        %v7025 = vadd.f32 %v6864, %v7024
        %v7026 = vpop.f32.mrf.mxu0
        %v7027 = vpop.f32.mrf.mxu0
        %v7028 = vadd.f32 %v6867, %v7027
        %v7029 = vpop.f32.mrf.mxu0
        %7030 = vmatprep.mubr.bf16.mxu0 %v1188
        %7031 = vmatmul.mubr.bf16.gmra.mxu0 %v5636
        %v7032 = vpop.f32.mrf.mxu0
        %v7033 = vadd.f32 %v6872, %v7032
        %v7034 = vpop.f32.mrf.mxu0
        %v7035 = vpop.f32.mrf.mxu0
        %v7036 = vadd.f32 %v6875, %v7035
        %v7037 = vpop.f32.mrf.mxu0
        %7038 = vmatprep.mubr.bf16.mxu0 %v1191
        %7039 = vmatmul.mubr.bf16.gmra.mxu0 %v5645
        %v7040 = vpop.f32.mrf.mxu0
        %v7041 = vadd.f32 %v6880, %v7040
        %v7042 = vpop.f32.mrf.mxu0
        %v7043 = vpop.f32.mrf.mxu0
        %v7044 = vadd.f32 %v6883, %v7043
        %v7045 = vpop.f32.mrf.mxu0
        %7046 = vmatprep.mubr.bf16.mxu0 %v1194
        %7047 = vmatmul.mubr.bf16.gmra.mxu0 %v5654
        %v7048 = vpop.f32.mrf.mxu0
        %v7049 = vadd.f32 %v6888, %v7048
        %v7050 = vpop.f32.mrf.mxu0
        %v7051 = vpop.f32.mrf.mxu0
        %v7052 = vadd.f32 %v6891, %v7051
        %v7053 = vpop.f32.mrf.mxu0
        %7054 = vmatprep.mubr.bf16.mxu0 %v1197
        %7055 = vmatmul.mubr.bf16.gmra.mxu0 %v5663
        %v7056 = vpop.f32.mrf.mxu0
        %v7057 = vadd.f32 %v6896, %v7056
        %v7058 = vpop.f32.mrf.mxu0
        %v7059 = vpop.f32.mrf.mxu0
        %v7060 = vadd.f32 %v6899, %v7059
        %v7061 = vpop.f32.mrf.mxu0
        %7062 = vmatprep.mubr.bf16.mxu0 %v1200
        %7063 = vmatmul.mubr.bf16.gmra.mxu0 %v5672
        %v7064 = vpop.f32.mrf.mxu0
        %v7065 = vadd.f32 %v6904, %v7064
        %v7066 = vpop.f32.mrf.mxu0
        %v7067 = vpop.f32.mrf.mxu0
        %v7068 = vadd.f32 %v6907, %v7067
        %v7069 = vpop.f32.mrf.mxu0
        %7070 = vmatprep.mubr.bf16.mxu0 %v1203
        %7071 = vmatmul.mubr.bf16.gmra.mxu0 %v5681
        %v7072 = vpop.f32.mrf.mxu0
        %v7073 = vadd.f32 %v6912, %v7072
        %v7074 = vpop.f32.mrf.mxu0
        %v7075 = vpop.f32.mrf.mxu0
        %v7076 = vadd.f32 %v6915, %v7075
        %v7077 = vpop.f32.mrf.mxu0
        %7078 = vmatprep.mubr.bf16.mxu0 %v1206
        %7079 = vmatmul.mubr.bf16.gmra.mxu0 %v5690
        %v7080 = vpop.f32.mrf.mxu0
        %v7081 = vadd.f32 %v6920, %v7080
        %v7082 = vpop.f32.mrf.mxu0
        %v7083 = vpop.f32.mrf.mxu0
        %v7084 = vadd.f32 %v6923, %v7083
        %v7085 = vpop.f32.mrf.mxu0
        %7086 = vdwg.mxu0
        %v7087 = vmax.f32 %v6961, 0.0
        %v7088 = vmax.f32 %v6964, 0.0
        %v7089 = vmax.f32 %v6969, 0.0
        %v7090 = vmax.f32 %v6972, 0.0
        %v7091 = vmax.f32 %v6977, 0.0
        %v7092 = vmax.f32 %v6980, 0.0
        %v7093 = vmax.f32 %v6985, 0.0
        %v7094 = vmax.f32 %v6988, 0.0
        %v7095 = vmax.f32 %v6993, 0.0
        %v7096 = vmax.f32 %v6996, 0.0
        %v7097 = vmax.f32 %v7001, 0.0
        %v7098 = vmax.f32 %v7004, 0.0
        %v7099 = vmax.f32 %v7009, 0.0
        %v7100 = vmax.f32 %v7012, 0.0
        %v7101 = vmax.f32 %v7017, 0.0
        %v7102 = vmax.f32 %v7020, 0.0
        %v7103 = vmax.f32 %v7025, 0.0
        %v7104 = vmax.f32 %v7028, 0.0
        %v7105 = vmax.f32 %v7033, 0.0
        %v7106 = vmax.f32 %v7036, 0.0
        %v7107 = vmax.f32 %v7041, 0.0
        %v7108 = vmax.f32 %v7044, 0.0
        %v7109 = vmax.f32 %v7049, 0.0
        %v7110 = vmax.f32 %v7052, 0.0
        %v7111 = vmax.f32 %v7057, 0.0
        %v7112 = vmax.f32 %v7060, 0.0
        %v7113 = vmax.f32 %v7065, 0.0
        %v7114 = vmax.f32 %v7068, 0.0
        %v7115 = vmax.f32 %v7073, 0.0
        %v7116 = vmax.f32 %v7076, 0.0
        %v7117 = vmax.f32 %v7081, 0.0
        %v7118 = vmax.f32 %v7084, 0.0
        %v7119 = vld [vmem:[%s17] sm:$0xf]
        %v7121 = vsel %vm1440, %v2241, 0
        %v7124 = vsel %vm2175, %v7119, 0
        %7126 = vmatprep.subr.mxu0 0.0
        %7127 = vmatpush1.msra.mxu0 0.0
        %7128 = vmatprep.subr.mxu0 0.0
        %7129 = vmatpush1.msra.mxu0 0.0
        %7130 = vmatprep.subr.mxu0 0.0
        %7131 = vmatpush1.msra.mxu0 0.0
        %7132 = vmatprep.subr.mxu0 0.0
        %7133 = vmatpush1.msra.mxu0 0.0
        %7134 = vmatprep.subr.mxu0 0.0
        %7135 = vmatpush1.msra.mxu0 0.0
        %7136 = vmatprep.subr.mxu0 0.0
        %7137 = vmatpush1.msra.mxu0 0.0
        %7138 = vmatprep.subr.mxu0 0.0
        %7139 = vmatpush1.msra.mxu0 0.0
        %7140 = vmatprep.subr.mxu0 0.0
        %7141 = vmatpush1.msra.mxu0 0.0
        %7142 = vmatprep.subr.mxu0 0.0
        %7143 = vmatpush1.msra.mxu0 0.0
        %7144 = vmatprep.subr.mxu0 0.0
        %7145 = vmatpush1.msra.mxu0 0.0
        %7146 = vmatprep.subr.mxu0 0.0
        %7147 = vmatpush1.msra.mxu0 0.0
        %7148 = vmatprep.subr.mxu0 0.0
        %7149 = vmatpush1.msra.mxu0 0.0
        %7150 = vmatprep.subr.mxu0 0.0
        %7151 = vmatpush1.msra.mxu0 0.0
        %7152 = vmatprep.subr.mxu0 0.0
        %7153 = vmatpush1.msra.mxu0 0.0
        %7154 = vmatprep.subr.mxu0 0.0
        %7155 = vmatpush1.msra.mxu0 0.0
        %7156 = vmatprep.subr.mxu0 0.0
        %7157 = vmatpush1.msra.mxu0 %v7124
        %7158 = vmatprep.subr.mxu0 0.0
        %7159 = vmatpush2.msra.mxu0 0.0
        %7160 = vmatprep.subr.mxu0 0.0
        %7161 = vmatpush2.msra.mxu0 0.0
        %7162 = vmatprep.subr.mxu0 0.0
        %7163 = vmatpush2.msra.mxu0 0.0
        %7164 = vmatprep.subr.mxu0 0.0
        %7165 = vmatpush2.msra.mxu0 0.0
        %7166 = vmatprep.subr.mxu0 0.0
        %7167 = vmatpush2.msra.mxu0 0.0
        %7168 = vmatprep.subr.mxu0 0.0
        %7169 = vmatpush2.msra.mxu0 0.0
        %7170 = vmatprep.subr.mxu0 0.0
        %7171 = vmatpush2.msra.mxu0 0.0
        %7172 = vmatprep.subr.mxu0 0.0
        %7173 = vmatpush2.msra.mxu0 0.0
        %7174 = vmatprep.subr.mxu0 0.0
        %7175 = vmatpush2.msra.mxu0 0.0
        %7176 = vmatprep.subr.mxu0 0.0
        %7177 = vmatpush2.msra.mxu0 0.0
        %7178 = vmatprep.subr.mxu0 0.0
        %7179 = vmatpush2.msra.mxu0 0.0
        %7180 = vmatprep.subr.mxu0 0.0
        %7181 = vmatpush2.msra.mxu0 0.0
        %7182 = vmatprep.subr.mxu0 0.0
        %7183 = vmatpush2.msra.mxu0 0.0
        %7184 = vmatprep.subr.mxu0 0.0
        %7185 = vmatpush2.msra.mxu0 0.0
        %7186 = vmatprep.subr.mxu0 0.0
        %7187 = vmatpush2.msra.mxu0 0.0
        %7188 = vmatprep.subr.mxu0 0.0
        %7189 = vmatpush2.msra.mxu0 0.0
        %7190 = vmatprep.mubr.f32.mxu0 0.0
        %7191 = vmatmul.mubr.f32.gmra.mxu0 %v7121
        %v7192 = vpop.f32.mrf.mxu0
        %v7193 = vadd.f32 0.0, %v7192
        %v7194 = vpop.f32.mrf.mxu0
        %7195 = vdwg.mxu0
        %v7196 = vlaneseq
        %v7197 = vshrl.u32 %v7196, 7
        %v7198 = vsub.s32 0, %v7197
        %v7199 = vrot.slane %v7193, %v7198
        %v7200 = vmul.f32 %v7087, %v7199
        %v7201 = vmul.f32 %v7088, %v7199
        %v7202 = vmul.f32 %v7089, %v7199
        %v7203 = vmul.f32 %v7090, %v7199
        %v7204 = vmul.f32 %v7091, %v7199
        %v7205 = vmul.f32 %v7092, %v7199
        %v7206 = vmul.f32 %v7093, %v7199
        %v7207 = vmul.f32 %v7094, %v7199
        %v7208 = vmul.f32 %v7095, %v7199
        %v7209 = vmul.f32 %v7096, %v7199
        %v7210 = vmul.f32 %v7097, %v7199
        %v7211 = vmul.f32 %v7098, %v7199
        %v7212 = vmul.f32 %v7099, %v7199
        %v7213 = vmul.f32 %v7100, %v7199
        %v7214 = vmul.f32 %v7101, %v7199
        %v7215 = vmul.f32 %v7102, %v7199
        %v7216 = vmul.f32 %v7103, %v7199
        %v7217 = vmul.f32 %v7104, %v7199
        %v7218 = vmul.f32 %v7105, %v7199
        %v7219 = vmul.f32 %v7106, %v7199
        %v7220 = vmul.f32 %v7107, %v7199
        %v7221 = vmul.f32 %v7108, %v7199
        %v7222 = vmul.f32 %v7109, %v7199
        %v7223 = vmul.f32 %v7110, %v7199
        %v7224 = vmul.f32 %v7111, %v7199
        %v7225 = vmul.f32 %v7112, %v7199
        %v7226 = vmul.f32 %v7113, %v7199
        %v7227 = vmul.f32 %v7114, %v7199
        %v7228 = vmul.f32 %v7115, %v7199
        %v7229 = vmul.f32 %v7116, %v7199
        %v7230 = vmul.f32 %v7117, %v7199
        %v7231 = vmul.f32 %v7118, %v7199
        %v7232 = vpack.c.bf16 %v7201, %v7200
        %v7233 = vpack.c.bf16 %v7203, %v7202
        %v7234 = vpack.c.bf16 %v7205, %v7204
        %v7235 = vpack.c.bf16 %v7207, %v7206
        %v7236 = vpack.c.bf16 %v7209, %v7208
        %v7237 = vpack.c.bf16 %v7211, %v7210
        %v7238 = vpack.c.bf16 %v7213, %v7212
        %v7239 = vpack.c.bf16 %v7215, %v7214
        %v7240 = vpack.c.bf16 %v7217, %v7216
        %v7241 = vpack.c.bf16 %v7219, %v7218
        %v7242 = vpack.c.bf16 %v7221, %v7220
        %v7243 = vpack.c.bf16 %v7223, %v7222
        %v7244 = vpack.c.bf16 %v7225, %v7224
        %v7245 = vpack.c.bf16 %v7227, %v7226
        %v7246 = vpack.c.bf16 %v7229, %v7228
        %v7247 = vpack.c.bf16 %v7231, %v7230
        %v7248 = vld [vmem:[%s18] sm:$0xf]
        %v7249 = vld [vmem:[%s18 + $0x4] sm:$0xf]
        %v7250 = vld [vmem:[%s18 + $0x8] sm:$0xf]
        %v7251 = vld [vmem:[%s18 + $0xc] sm:$0xf]
        %v7252 = vld [vmem:[%s18 + $0x10] sm:$0xf]
        %v7253 = vld [vmem:[%s18 + $0x14] sm:$0xf]
        %v7254 = vld [vmem:[%s18 + $0x18] sm:$0xf]
        %v7255 = vld [vmem:[%s18 + $0x1c] sm:$0xf]
        %v7264 = vunpack.c.l.b16 %v7248
        %v7265 = vunpack.c.l.b16 %v7249
        %v7266 = vunpack.c.l.b16 %v7250
        %v7267 = vunpack.c.l.b16 %v7251
        %v7268 = vunpack.c.l.b16 %v7252
        %v7269 = vunpack.c.l.b16 %v7253
        %v7270 = vunpack.c.l.b16 %v7254
        %v7271 = vunpack.c.l.b16 %v7255
        %v7272 = vpack.c.b16 %v7265, %v7264
        %v7273 = vpack.c.b16 %v7267, %v7266
        %v7274 = vpack.c.b16 %v7269, %v7268
        %v7275 = vpack.c.b16 %v7271, %v7270
        %v7281 = vsel %vm4679, %v7232, 0
        %v7284 = vsel %vm4679, %v7233, 0
        %v7287 = vsel %vm4679, %v7234, 0
        %v7290 = vsel %vm4679, %v7235, 0
        %v7293 = vsel %vm4679, %v7236, 0
        %v7296 = vsel %vm4679, %v7237, 0
        %v7299 = vsel %vm4679, %v7238, 0
        %v7302 = vsel %vm4679, %v7239, 0
        %v7305 = vsel %vm4679, %v7240, 0
        %v7308 = vsel %vm4679, %v7241, 0
        %v7311 = vsel %vm4679, %v7242, 0
        %v7314 = vsel %vm4679, %v7243, 0
        %v7317 = vsel %vm4679, %v7244, 0
        %v7320 = vsel %vm4679, %v7245, 0
        %v7323 = vsel %vm4679, %v7246, 0
        %v7326 = vsel %vm4679, %v7247, 0
        %7328 = vmatprep.subr.bf16.mxu0 0
        %7329 = vmatpush1.bf16.msra.mxu0 0
        %7330 = vmatprep.subr.bf16.mxu0 0
        %7331 = vmatpush1.bf16.msra.mxu0 0
        %7332 = vmatprep.subr.bf16.mxu0 0
        %7333 = vmatpush1.bf16.msra.mxu0 0
        %7334 = vmatprep.subr.bf16.mxu0 0
        %7335 = vmatpush1.bf16.msra.mxu0 0
        %7336 = vmatprep.subr.bf16.mxu0 0
        %7337 = vmatpush1.bf16.msra.mxu0 %v7275
        %7338 = vmatprep.subr.bf16.mxu0 0
        %7339 = vmatpush1.bf16.msra.mxu0 %v7274
        %7340 = vmatprep.subr.bf16.mxu0 0
        %7341 = vmatpush1.bf16.msra.mxu0 %v7273
        %7342 = vmatprep.subr.bf16.mxu0 0
        %7343 = vmatpush1.bf16.msra.mxu0 %v7272
        %7344 = vmatprep.subr.bf16.mxu0 0
        %7345 = vmatpush2.bf16.msra.mxu0 0
        %7346 = vmatprep.subr.bf16.mxu0 0
        %7347 = vmatpush2.bf16.msra.mxu0 0
        %7348 = vmatprep.subr.bf16.mxu0 0
        %7349 = vmatpush2.bf16.msra.mxu0 0
        %7350 = vmatprep.subr.bf16.mxu0 0
        %7351 = vmatpush2.bf16.msra.mxu0 0
        %7352 = vmatprep.subr.bf16.mxu0 0
        %7353 = vmatpush2.bf16.msra.mxu0 0
        %7354 = vmatprep.subr.bf16.mxu0 0
        %7355 = vmatpush2.bf16.msra.mxu0 0
        %7356 = vmatprep.subr.bf16.mxu0 0
        %7357 = vmatpush2.bf16.msra.mxu0 0
        %7358 = vmatprep.subr.bf16.mxu0 0
        %7359 = vmatpush2.bf16.msra.mxu0 0
        %7360 = vmatprep.mubr.bf16.mxu0 0
        %7361 = vmatmul.mubr.bf16.gmra.mxu0 %v7281
        %v7362 = vpop.f32.mrf.mxu0
        %v7363 = vadd.f32 0.0, %v7362
        %v7364 = vpop.f32.mrf.mxu0
        %v7365 = vpop.f32.mrf.mxu0
        %v7366 = vadd.f32 0.0, %v7365
        %v7367 = vpop.f32.mrf.mxu0
        %7368 = vmatprep.mubr.bf16.mxu0 0
        %7369 = vmatmul.mubr.bf16.gmra.mxu0 %v7284
        %v7370 = vpop.f32.mrf.mxu0
        %v7371 = vadd.f32 0.0, %v7370
        %v7372 = vpop.f32.mrf.mxu0
        %v7373 = vpop.f32.mrf.mxu0
        %v7374 = vadd.f32 0.0, %v7373
        %v7375 = vpop.f32.mrf.mxu0
        %7376 = vmatprep.mubr.bf16.mxu0 0
        %7377 = vmatmul.mubr.bf16.gmra.mxu0 %v7287
        %v7378 = vpop.f32.mrf.mxu0
        %v7379 = vadd.f32 0.0, %v7378
        %v7380 = vpop.f32.mrf.mxu0
        %v7381 = vpop.f32.mrf.mxu0
        %v7382 = vadd.f32 0.0, %v7381
        %v7383 = vpop.f32.mrf.mxu0
        %7384 = vmatprep.mubr.bf16.mxu0 0
        %7385 = vmatmul.mubr.bf16.gmra.mxu0 %v7290
        %v7386 = vpop.f32.mrf.mxu0
        %v7387 = vadd.f32 0.0, %v7386
        %v7388 = vpop.f32.mrf.mxu0
        %v7389 = vpop.f32.mrf.mxu0
        %v7390 = vadd.f32 0.0, %v7389
        %v7391 = vpop.f32.mrf.mxu0
        %7392 = vmatprep.mubr.bf16.mxu0 0
        %7393 = vmatmul.mubr.bf16.gmra.mxu0 %v7293
        %v7394 = vpop.f32.mrf.mxu0
        %v7395 = vadd.f32 0.0, %v7394
        %v7396 = vpop.f32.mrf.mxu0
        %v7397 = vpop.f32.mrf.mxu0
        %v7398 = vadd.f32 0.0, %v7397
        %v7399 = vpop.f32.mrf.mxu0
        %7400 = vmatprep.mubr.bf16.mxu0 0
        %7401 = vmatmul.mubr.bf16.gmra.mxu0 %v7296
        %v7402 = vpop.f32.mrf.mxu0
        %v7403 = vadd.f32 0.0, %v7402
        %v7404 = vpop.f32.mrf.mxu0
        %v7405 = vpop.f32.mrf.mxu0
        %v7406 = vadd.f32 0.0, %v7405
        %v7407 = vpop.f32.mrf.mxu0
        %7408 = vmatprep.mubr.bf16.mxu0 0
        %7409 = vmatmul.mubr.bf16.gmra.mxu0 %v7299
        %v7410 = vpop.f32.mrf.mxu0
        %v7411 = vadd.f32 0.0, %v7410
        %v7412 = vpop.f32.mrf.mxu0
        %v7413 = vpop.f32.mrf.mxu0
        %v7414 = vadd.f32 0.0, %v7413
        %v7415 = vpop.f32.mrf.mxu0
        %7416 = vmatprep.mubr.bf16.mxu0 0
        %7417 = vmatmul.mubr.bf16.gmra.mxu0 %v7302
        %v7418 = vpop.f32.mrf.mxu0
        %v7419 = vadd.f32 0.0, %v7418
        %v7420 = vpop.f32.mrf.mxu0
        %v7421 = vpop.f32.mrf.mxu0
        %v7422 = vadd.f32 0.0, %v7421
        %v7423 = vpop.f32.mrf.mxu0
        %7424 = vmatprep.mubr.bf16.mxu0 0
        %7425 = vmatmul.mubr.bf16.gmra.mxu0 %v7305
        %v7426 = vpop.f32.mrf.mxu0
        %v7427 = vadd.f32 0.0, %v7426
        %v7428 = vpop.f32.mrf.mxu0
        %v7429 = vpop.f32.mrf.mxu0
        %v7430 = vadd.f32 0.0, %v7429
        %v7431 = vpop.f32.mrf.mxu0
        %7432 = vmatprep.mubr.bf16.mxu0 0
        %7433 = vmatmul.mubr.bf16.gmra.mxu0 %v7308
        %v7434 = vpop.f32.mrf.mxu0
        %v7435 = vadd.f32 0.0, %v7434
        %v7436 = vpop.f32.mrf.mxu0
        %v7437 = vpop.f32.mrf.mxu0
        %v7438 = vadd.f32 0.0, %v7437
        %v7439 = vpop.f32.mrf.mxu0
        %7440 = vmatprep.mubr.bf16.mxu0 0
        %7441 = vmatmul.mubr.bf16.gmra.mxu0 %v7311
        %v7442 = vpop.f32.mrf.mxu0
        %v7443 = vadd.f32 0.0, %v7442
        %v7444 = vpop.f32.mrf.mxu0
        %v7445 = vpop.f32.mrf.mxu0
        %v7446 = vadd.f32 0.0, %v7445
        %v7447 = vpop.f32.mrf.mxu0
        %7448 = vmatprep.mubr.bf16.mxu0 0
        %7449 = vmatmul.mubr.bf16.gmra.mxu0 %v7314
        %v7450 = vpop.f32.mrf.mxu0
        %v7451 = vadd.f32 0.0, %v7450
        %v7452 = vpop.f32.mrf.mxu0
        %v7453 = vpop.f32.mrf.mxu0
        %v7454 = vadd.f32 0.0, %v7453
        %v7455 = vpop.f32.mrf.mxu0
        %7456 = vmatprep.mubr.bf16.mxu0 0
        %7457 = vmatmul.mubr.bf16.gmra.mxu0 %v7317
        %v7458 = vpop.f32.mrf.mxu0
        %v7459 = vadd.f32 0.0, %v7458
        %v7460 = vpop.f32.mrf.mxu0
        %v7461 = vpop.f32.mrf.mxu0
        %v7462 = vadd.f32 0.0, %v7461
        %v7463 = vpop.f32.mrf.mxu0
        %7464 = vmatprep.mubr.bf16.mxu0 0
        %7465 = vmatmul.mubr.bf16.gmra.mxu0 %v7320
        %v7466 = vpop.f32.mrf.mxu0
        %v7467 = vadd.f32 0.0, %v7466
        %v7468 = vpop.f32.mrf.mxu0
        %v7469 = vpop.f32.mrf.mxu0
        %v7470 = vadd.f32 0.0, %v7469
        %v7471 = vpop.f32.mrf.mxu0
        %7472 = vmatprep.mubr.bf16.mxu0 0
        %7473 = vmatmul.mubr.bf16.gmra.mxu0 %v7323
        %v7474 = vpop.f32.mrf.mxu0
        %v7475 = vadd.f32 0.0, %v7474
        %v7476 = vpop.f32.mrf.mxu0
        %v7477 = vpop.f32.mrf.mxu0
        %v7478 = vadd.f32 0.0, %v7477
        %v7479 = vpop.f32.mrf.mxu0
        %7480 = vmatprep.mubr.bf16.mxu0 0
        %7481 = vmatmul.mubr.bf16.gmra.mxu0 %v7326
        %v7482 = vpop.f32.mrf.mxu0
        %v7483 = vadd.f32 0.0, %v7482
        %v7484 = vpop.f32.mrf.mxu0
        %v7485 = vpop.f32.mrf.mxu0
        %v7486 = vadd.f32 0.0, %v7485
        %v7487 = vpop.f32.mrf.mxu0
        %7488 = vdwg.mxu0
        %v7489 = vrot.slane %v7363, 7
        %v7490 = vrot.slane %v7366, 7
        %v7491 = vrot.slane %v7371, 7
        %v7492 = vrot.slane %v7374, 7
        %v7493 = vrot.slane %v7379, 7
        %v7494 = vrot.slane %v7382, 7
        %v7495 = vrot.slane %v7387, 7
        %v7496 = vrot.slane %v7390, 7
        %v7497 = vrot.slane %v7395, 7
        %v7498 = vrot.slane %v7398, 7
        %v7499 = vrot.slane %v7403, 7
        %v7500 = vrot.slane %v7406, 7
        %v7501 = vrot.slane %v7411, 7
        %v7502 = vrot.slane %v7414, 7
        %v7503 = vrot.slane %v7419, 7
        %v7504 = vrot.slane %v7422, 7
        %v7505 = vrot.slane %v7427, 7
        %v7506 = vrot.slane %v7430, 7
        %v7507 = vrot.slane %v7435, 7
        %v7508 = vrot.slane %v7438, 7
        %v7509 = vrot.slane %v7443, 7
        %v7510 = vrot.slane %v7446, 7
        %v7511 = vrot.slane %v7451, 7
        %v7512 = vrot.slane %v7454, 7
        %v7513 = vrot.slane %v7459, 7
        %v7514 = vrot.slane %v7462, 7
        %v7515 = vrot.slane %v7467, 7
        %v7516 = vrot.slane %v7470, 7
        %v7517 = vrot.slane %v7475, 7
        %v7518 = vrot.slane %v7478, 7
        %v7519 = vrot.slane %v7483, 7
        %v7520 = vrot.slane %v7486, 7
        %v7521 = vsel %vm2276, %v7519, %v7520
        %v7522 = vsel %vm2276, %v7518, %v7519
        %v7523 = vsel %vm2276, %v7517, %v7518
        %v7524 = vsel %vm2276, %v7516, %v7517
        %v7525 = vsel %vm2276, %v7515, %v7516
        %v7526 = vsel %vm2276, %v7514, %v7515
        %v7527 = vsel %vm2276, %v7513, %v7514
        %v7528 = vsel %vm2276, %v7512, %v7513
        %v7529 = vsel %vm2276, %v7511, %v7512
        %v7530 = vsel %vm2276, %v7510, %v7511
        %v7531 = vsel %vm2276, %v7509, %v7510
        %v7532 = vsel %vm2276, %v7508, %v7509
        %v7533 = vsel %vm2276, %v7507, %v7508
        %v7534 = vsel %vm2276, %v7506, %v7507
        %v7535 = vsel %vm2276, %v7505, %v7506
        %v7536 = vsel %vm2276, %v7504, %v7505
        %v7537 = vsel %vm2276, %v7503, %v7504
        %v7538 = vsel %vm2276, %v7502, %v7503
        %v7539 = vsel %vm2276, %v7501, %v7502
        %v7540 = vsel %vm2276, %v7500, %v7501
        %v7541 = vsel %vm2276, %v7499, %v7500
        %v7542 = vsel %vm2276, %v7498, %v7499
        %v7543 = vsel %vm2276, %v7497, %v7498
        %v7544 = vsel %vm2276, %v7496, %v7497
        %v7545 = vsel %vm2276, %v7495, %v7496
        %v7546 = vsel %vm2276, %v7494, %v7495
        %v7547 = vsel %vm2276, %v7493, %v7494
        %v7548 = vsel %vm2276, %v7492, %v7493
        %v7549 = vsel %vm2276, %v7491, %v7492
        %v7550 = vsel %vm2276, %v7490, %v7491
        %v7551 = vsel %vm2276, %v7489, %v7490
        %v7552 = vsel %vm2276, %v7520, %v7489
        %v7553 = vmul.f32 %v7522, %v2312
        %v7554 = vmul.f32 %v7521, %v2317
        %v7555 = vmul.f32 %v7552, %v2322
        %v7556 = vmul.f32 %v7551, %v2327
        %v7557 = vmul.f32 %v7550, %v2332
        %v7558 = vmul.f32 %v7549, %v2337
        %v7559 = vmul.f32 %v7548, %v2342
        %v7560 = vmul.f32 %v7547, %v2347
        %v7561 = vmul.f32 %v7546, %v2352
        %v7562 = vmul.f32 %v7545, %v2357
        %v7563 = vmul.f32 %v7544, %v2362
        %v7564 = vmul.f32 %v7543, %v2367
        %v7565 = vmul.f32 %v7542, %v2372
        %v7566 = vmul.f32 %v7541, %v2377
        %v7567 = vmul.f32 %v7540, %v2382
        %v7568 = vmul.f32 %v7539, %v2387
        %v7569 = vmul.f32 %v7538, %v2392
        %v7570 = vmul.f32 %v7537, %v2397
        %v7571 = vmul.f32 %v7536, %v2402
        %v7572 = vmul.f32 %v7535, %v2407
        %v7573 = vmul.f32 %v7534, %v2412
        %v7574 = vmul.f32 %v7533, %v2417
        %v7575 = vmul.f32 %v7532, %v2422
        %v7576 = vmul.f32 %v7531, %v2427
        %v7577 = vmul.f32 %v7530, %v2432
        %v7578 = vmul.f32 %v7529, %v2437
        %v7579 = vmul.f32 %v7528, %v2442
        %v7580 = vmul.f32 %v7527, %v2447
        %v7581 = vmul.f32 %v7526, %v2452
        %v7582 = vmul.f32 %v7525, %v2457
        %v7583 = vmul.f32 %v7524, %v2462
        %v7584 = vmul.f32 %v7523, %v2467
        %v7585 = vmul.f32 %v7483, %v2503
        %v7586 = vmul.f32 %v7486, %v2507
        %v7587 = vmul.f32 %v7363, %v2511
        %v7588 = vmul.f32 %v7366, %v2515
        %v7589 = vmul.f32 %v7371, %v2519
        %v7590 = vmul.f32 %v7374, %v2523
        %v7591 = vmul.f32 %v7379, %v2527
        %v7592 = vmul.f32 %v7382, %v2531
        %v7593 = vmul.f32 %v7387, %v2535
        %v7594 = vmul.f32 %v7390, %v2539
        %v7595 = vmul.f32 %v7395, %v2543
        %v7596 = vmul.f32 %v7398, %v2547
        %v7597 = vmul.f32 %v7403, %v2551
        %v7598 = vmul.f32 %v7406, %v2555
        %v7599 = vmul.f32 %v7411, %v2559
        %v7600 = vmul.f32 %v7414, %v2563
        %v7601 = vmul.f32 %v7419, %v2567
        %v7602 = vmul.f32 %v7422, %v2571
        %v7603 = vmul.f32 %v7427, %v2575
        %v7604 = vmul.f32 %v7430, %v2579
        %v7605 = vmul.f32 %v7435, %v2583
        %v7606 = vmul.f32 %v7438, %v2587
        %v7607 = vmul.f32 %v7443, %v2591
        %v7608 = vmul.f32 %v7446, %v2595
        %v7609 = vmul.f32 %v7451, %v2599
        %v7610 = vmul.f32 %v7454, %v2603
        %v7611 = vmul.f32 %v7459, %v2607
        %v7612 = vmul.f32 %v7462, %v2611
        %v7613 = vmul.f32 %v7467, %v2615
        %v7614 = vmul.f32 %v7470, %v2619
        %v7615 = vmul.f32 %v7475, %v2623
        %v7616 = vmul.f32 %v7478, %v2627
        %v7617 = vrot.slane %v7363, 1
        %v7618 = vrot.slane %v7366, 1
        %v7619 = vrot.slane %v7371, 1
        %v7620 = vrot.slane %v7374, 1
        %v7621 = vrot.slane %v7379, 1
        %v7622 = vrot.slane %v7382, 1
        %v7623 = vrot.slane %v7387, 1
        %v7624 = vrot.slane %v7390, 1
        %v7625 = vrot.slane %v7395, 1
        %v7626 = vrot.slane %v7398, 1
        %v7627 = vrot.slane %v7403, 1
        %v7628 = vrot.slane %v7406, 1
        %v7629 = vrot.slane %v7411, 1
        %v7630 = vrot.slane %v7414, 1
        %v7631 = vrot.slane %v7419, 1
        %v7632 = vrot.slane %v7422, 1
        %v7633 = vrot.slane %v7427, 1
        %v7634 = vrot.slane %v7430, 1
        %v7635 = vrot.slane %v7435, 1
        %v7636 = vrot.slane %v7438, 1
        %v7637 = vrot.slane %v7443, 1
        %v7638 = vrot.slane %v7446, 1
        %v7639 = vrot.slane %v7451, 1
        %v7640 = vrot.slane %v7454, 1
        %v7641 = vrot.slane %v7459, 1
        %v7642 = vrot.slane %v7462, 1
        %v7643 = vrot.slane %v7467, 1
        %v7644 = vrot.slane %v7470, 1
        %v7645 = vrot.slane %v7475, 1
        %v7646 = vrot.slane %v7478, 1
        %v7647 = vrot.slane %v7483, 1
        %v7648 = vrot.slane %v7486, 1
        %v7649 = vsel %vm2693, %v7647, %v7648
        %v7650 = vsel %vm2693, %v7646, %v7647
        %v7651 = vsel %vm2693, %v7645, %v7646
        %v7652 = vsel %vm2693, %v7644, %v7645
        %v7653 = vsel %vm2693, %v7643, %v7644
        %v7654 = vsel %vm2693, %v7642, %v7643
        %v7655 = vsel %vm2693, %v7641, %v7642
        %v7656 = vsel %vm2693, %v7640, %v7641
        %v7657 = vsel %vm2693, %v7639, %v7640
        %v7658 = vsel %vm2693, %v7638, %v7639
        %v7659 = vsel %vm2693, %v7637, %v7638
        %v7660 = vsel %vm2693, %v7636, %v7637
        %v7661 = vsel %vm2693, %v7635, %v7636
        %v7662 = vsel %vm2693, %v7634, %v7635
        %v7663 = vsel %vm2693, %v7633, %v7634
        %v7664 = vsel %vm2693, %v7632, %v7633
        %v7665 = vsel %vm2693, %v7631, %v7632
        %v7666 = vsel %vm2693, %v7630, %v7631
        %v7667 = vsel %vm2693, %v7629, %v7630
        %v7668 = vsel %vm2693, %v7628, %v7629
        %v7669 = vsel %vm2693, %v7627, %v7628
        %v7670 = vsel %vm2693, %v7626, %v7627
        %v7671 = vsel %vm2693, %v7625, %v7626
        %v7672 = vsel %vm2693, %v7624, %v7625
        %v7673 = vsel %vm2693, %v7623, %v7624
        %v7674 = vsel %vm2693, %v7622, %v7623
        %v7675 = vsel %vm2693, %v7621, %v7622
        %v7676 = vsel %vm2693, %v7620, %v7621
        %v7677 = vsel %vm2693, %v7619, %v7620
        %v7678 = vsel %vm2693, %v7618, %v7619
        %v7679 = vsel %vm2693, %v7617, %v7618
        %v7680 = vsel %vm2693, %v7648, %v7617
        %v7681 = vmul.f32 %v7649, %v2728
        %v7682 = vmul.f32 %v7680, %v2732
        %v7683 = vmul.f32 %v7679, %v2736
        %v7684 = vmul.f32 %v7678, %v2740
        %v7685 = vmul.f32 %v7677, %v2744
        %v7686 = vmul.f32 %v7676, %v2748
        %v7687 = vmul.f32 %v7675, %v2752
        %v7688 = vmul.f32 %v7674, %v2756
        %v7689 = vmul.f32 %v7673, %v2760
        %v7690 = vmul.f32 %v7672, %v2764
        %v7691 = vmul.f32 %v7671, %v2768
        %v7692 = vmul.f32 %v7670, %v2772
        %v7693 = vmul.f32 %v7669, %v2776
        %v7694 = vmul.f32 %v7668, %v2780
        %v7695 = vmul.f32 %v7667, %v2784
        %v7696 = vmul.f32 %v7666, %v2788
        %v7697 = vmul.f32 %v7665, %v2792
        %v7698 = vmul.f32 %v7664, %v2796
        %v7699 = vmul.f32 %v7663, %v2800
        %v7700 = vmul.f32 %v7662, %v2804
        %v7701 = vmul.f32 %v7661, %v2808
        %v7702 = vmul.f32 %v7660, %v2812
        %v7703 = vmul.f32 %v7659, %v2816
        %v7704 = vmul.f32 %v7658, %v2820
        %v7705 = vmul.f32 %v7657, %v2824
        %v7706 = vmul.f32 %v7656, %v2828
        %v7707 = vmul.f32 %v7655, %v2832
        %v7708 = vmul.f32 %v7654, %v2836
        %v7709 = vmul.f32 %v7653, %v2840
        %v7710 = vmul.f32 %v7652, %v2844
        %v7711 = vmul.f32 %v7651, %v2848
        %v7712 = vmul.f32 %v7650, %v2852
        %v7713 = vmul.f32 %v7552, %v2888
        %v7714 = vmul.f32 %v7551, %v2892
        %v7715 = vmul.f32 %v7550, %v2896
        %v7716 = vmul.f32 %v7549, %v2900
        %v7717 = vmul.f32 %v7548, %v2904
        %v7718 = vmul.f32 %v7547, %v2908
        %v7719 = vmul.f32 %v7546, %v2912
        %v7720 = vmul.f32 %v7545, %v2916
        %v7721 = vmul.f32 %v7544, %v2920
        %v7722 = vmul.f32 %v7543, %v2924
        %v7723 = vmul.f32 %v7542, %v2928
        %v7724 = vmul.f32 %v7541, %v2932
        %v7725 = vmul.f32 %v7540, %v2936
        %v7726 = vmul.f32 %v7539, %v2940
        %v7727 = vmul.f32 %v7538, %v2944
        %v7728 = vmul.f32 %v7537, %v2948
        %v7729 = vmul.f32 %v7536, %v2952
        %v7730 = vmul.f32 %v7535, %v2956
        %v7731 = vmul.f32 %v7534, %v2960
        %v7732 = vmul.f32 %v7533, %v2964
        %v7733 = vmul.f32 %v7532, %v2968
        %v7734 = vmul.f32 %v7531, %v2972
        %v7735 = vmul.f32 %v7530, %v2976
        %v7736 = vmul.f32 %v7529, %v2980
        %v7737 = vmul.f32 %v7528, %v2984
        %v7738 = vmul.f32 %v7527, %v2988
        %v7739 = vmul.f32 %v7526, %v2992
        %v7740 = vmul.f32 %v7525, %v2996
        %v7741 = vmul.f32 %v7524, %v3000
        %v7742 = vmul.f32 %v7523, %v3004
        %v7743 = vmul.f32 %v7522, %v3008
        %v7744 = vmul.f32 %v7521, %v3012
        %v7745 = vmul.f32 %v7679, %v3048
        %v7746 = vmul.f32 %v7678, %v3052
        %v7747 = vmul.f32 %v7677, %v3056
        %v7748 = vmul.f32 %v7676, %v3060
        %v7749 = vmul.f32 %v7675, %v3064
        %v7750 = vmul.f32 %v7674, %v3068
        %v7751 = vmul.f32 %v7673, %v3072
        %v7752 = vmul.f32 %v7672, %v3076
        %v7753 = vmul.f32 %v7671, %v3080
        %v7754 = vmul.f32 %v7670, %v3084
        %v7755 = vmul.f32 %v7669, %v3088
        %v7756 = vmul.f32 %v7668, %v3092
        %v7757 = vmul.f32 %v7667, %v3096
        %v7758 = vmul.f32 %v7666, %v3100
        %v7759 = vmul.f32 %v7665, %v3104
        %v7760 = vmul.f32 %v7664, %v3108
        %v7761 = vmul.f32 %v7663, %v3112
        %v7762 = vmul.f32 %v7662, %v3116
        %v7763 = vmul.f32 %v7661, %v3120
        %v7764 = vmul.f32 %v7660, %v3124
        %v7765 = vmul.f32 %v7659, %v3128
        %v7766 = vmul.f32 %v7658, %v3132
        %v7767 = vmul.f32 %v7657, %v3136
        %v7768 = vmul.f32 %v7656, %v3140
        %v7769 = vmul.f32 %v7655, %v3144
        %v7770 = vmul.f32 %v7654, %v3148
        %v7771 = vmul.f32 %v7653, %v3152
        %v7772 = vmul.f32 %v7652, %v3156
        %v7773 = vmul.f32 %v7651, %v3160
        %v7774 = vmul.f32 %v7650, %v3164
        %v7775 = vmul.f32 %v7649, %v3168
        %v7776 = vmul.f32 %v7680, %v3172
        %v7777 = vmul.f32 %v7550, %v3208
        %v7778 = vmul.f32 %v7549, %v3212
        %v7779 = vmul.f32 %v7548, %v3216
        %v7780 = vmul.f32 %v7547, %v3220
        %v7781 = vmul.f32 %v7546, %v3224
        %v7782 = vmul.f32 %v7545, %v3228
        %v7783 = vmul.f32 %v7544, %v3232
        %v7784 = vmul.f32 %v7543, %v3236
        %v7785 = vmul.f32 %v7542, %v3240
        %v7786 = vmul.f32 %v7541, %v3244
        %v7787 = vmul.f32 %v7540, %v3248
        %v7788 = vmul.f32 %v7539, %v3252
        %v7789 = vmul.f32 %v7538, %v3256
        %v7790 = vmul.f32 %v7537, %v3260
        %v7791 = vmul.f32 %v7536, %v3264
        %v7792 = vmul.f32 %v7535, %v3268
        %v7793 = vmul.f32 %v7534, %v3272
        %v7794 = vmul.f32 %v7533, %v3276
        %v7795 = vmul.f32 %v7532, %v3280
        %v7796 = vmul.f32 %v7531, %v3284
        %v7797 = vmul.f32 %v7530, %v3288
        %v7798 = vmul.f32 %v7529, %v3292
        %v7799 = vmul.f32 %v7528, %v3296
        %v7800 = vmul.f32 %v7527, %v3300
        %v7801 = vmul.f32 %v7526, %v3304
        %v7802 = vmul.f32 %v7525, %v3308
        %v7803 = vmul.f32 %v7524, %v3312
        %v7804 = vmul.f32 %v7523, %v3316
        %v7805 = vmul.f32 %v7522, %v3320
        %v7806 = vmul.f32 %v7521, %v3324
        %v7807 = vmul.f32 %v7552, %v3328
        %v7808 = vmul.f32 %v7551, %v3332
        %v7809 = vmul.f32 %v7371, %v3368
        %v7810 = vmul.f32 %v7374, %v3372
        %v7811 = vmul.f32 %v7379, %v3376
        %v7812 = vmul.f32 %v7382, %v3380
        %v7813 = vmul.f32 %v7387, %v3384
        %v7814 = vmul.f32 %v7390, %v3388
        %v7815 = vmul.f32 %v7395, %v3392
        %v7816 = vmul.f32 %v7398, %v3396
        %v7817 = vmul.f32 %v7403, %v3400
        %v7818 = vmul.f32 %v7406, %v3404
        %v7819 = vmul.f32 %v7411, %v3408
        %v7820 = vmul.f32 %v7414, %v3412
        %v7821 = vmul.f32 %v7419, %v3416
        %v7822 = vmul.f32 %v7422, %v3420
        %v7823 = vmul.f32 %v7427, %v3424
        %v7824 = vmul.f32 %v7430, %v3428
        %v7825 = vmul.f32 %v7435, %v3432
        %v7826 = vmul.f32 %v7438, %v3436
        %v7827 = vmul.f32 %v7443, %v3440
        %v7828 = vmul.f32 %v7446, %v3444
        %v7829 = vmul.f32 %v7451, %v3448
        %v7830 = vmul.f32 %v7454, %v3452
        %v7831 = vmul.f32 %v7459, %v3456
        %v7832 = vmul.f32 %v7462, %v3460
        %v7833 = vmul.f32 %v7467, %v3464
        %v7834 = vmul.f32 %v7470, %v3468
        %v7835 = vmul.f32 %v7475, %v3472
        %v7836 = vmul.f32 %v7478, %v3476
        %v7837 = vmul.f32 %v7483, %v3480
        %v7838 = vmul.f32 %v7486, %v3484
        %v7839 = vmul.f32 %v7363, %v3488
        %v7840 = vmul.f32 %v7366, %v3492
        %v7841 = vmul.f32 %v7677, %v3528
        %v7842 = vmul.f32 %v7676, %v3532
        %v7843 = vmul.f32 %v7675, %v3536
        %v7844 = vmul.f32 %v7674, %v3540
        %v7845 = vmul.f32 %v7673, %v3544
        %v7846 = vmul.f32 %v7672, %v3548
        %v7847 = vmul.f32 %v7671, %v3552
        %v7848 = vmul.f32 %v7670, %v3556
        %v7849 = vmul.f32 %v7669, %v3560
        %v7850 = vmul.f32 %v7668, %v3564
        %v7851 = vmul.f32 %v7667, %v3568
        %v7852 = vmul.f32 %v7666, %v3572
        %v7853 = vmul.f32 %v7665, %v3576
        %v7854 = vmul.f32 %v7664, %v3580
        %v7855 = vmul.f32 %v7663, %v3584
        %v7856 = vmul.f32 %v7662, %v3588
        %v7857 = vmul.f32 %v7661, %v3592
        %v7858 = vmul.f32 %v7660, %v3596
        %v7859 = vmul.f32 %v7659, %v3600
        %v7860 = vmul.f32 %v7658, %v3604
        %v7861 = vmul.f32 %v7657, %v3608
        %v7862 = vmul.f32 %v7656, %v3612
        %v7863 = vmul.f32 %v7655, %v3616
        %v7864 = vmul.f32 %v7654, %v3620
        %v7865 = vmul.f32 %v7653, %v3624
        %v7866 = vmul.f32 %v7652, %v3628
        %v7867 = vmul.f32 %v7651, %v3632
        %v7868 = vmul.f32 %v7650, %v3636
        %v7869 = vmul.f32 %v7649, %v3640
        %v7870 = vmul.f32 %v7680, %v3644
        %v7871 = vmul.f32 %v7679, %v3648
        %v7872 = vmul.f32 %v7678, %v3652
        %7905 = vrot.lane.b32.xlu0 %v7585, 16
        %v7906 = vpop.permute.xlu0 %7905
        %7907 = vrot.lane.b32.xlu0 %v7586, 16
        %v7908 = vpop.permute.xlu0 %7907
        %7909 = vrot.lane.b32.xlu0 %v7587, 16
        %v7910 = vpop.permute.xlu0 %7909
        %7911 = vrot.lane.b32.xlu0 %v7588, 16
        %v7912 = vpop.permute.xlu0 %7911
        %7913 = vrot.lane.b32.xlu0 %v7589, 16
        %v7914 = vpop.permute.xlu0 %7913
        %7915 = vrot.lane.b32.xlu0 %v7590, 16
        %v7916 = vpop.permute.xlu0 %7915
        %7917 = vrot.lane.b32.xlu0 %v7591, 16
        %v7918 = vpop.permute.xlu0 %7917
        %7919 = vrot.lane.b32.xlu0 %v7592, 16
        %v7920 = vpop.permute.xlu0 %7919
        %7921 = vrot.lane.b32.xlu0 %v7593, 16
        %v7922 = vpop.permute.xlu0 %7921
        %7923 = vrot.lane.b32.xlu0 %v7594, 16
        %v7924 = vpop.permute.xlu0 %7923
        %7925 = vrot.lane.b32.xlu0 %v7595, 16
        %v7926 = vpop.permute.xlu0 %7925
        %7927 = vrot.lane.b32.xlu0 %v7596, 16
        %v7928 = vpop.permute.xlu0 %7927
        %7929 = vrot.lane.b32.xlu0 %v7597, 16
        %v7930 = vpop.permute.xlu0 %7929
        %7931 = vrot.lane.b32.xlu0 %v7598, 16
        %v7932 = vpop.permute.xlu0 %7931
        %7933 = vrot.lane.b32.xlu0 %v7599, 16
        %v7934 = vpop.permute.xlu0 %7933
        %7935 = vrot.lane.b32.xlu0 %v7600, 16
        %v7936 = vpop.permute.xlu0 %7935
        %7937 = vrot.lane.b32.xlu0 %v7601, 16
        %v7938 = vpop.permute.xlu0 %7937
        %7939 = vrot.lane.b32.xlu0 %v7602, 16
        %v7940 = vpop.permute.xlu0 %7939
        %7941 = vrot.lane.b32.xlu0 %v7603, 16
        %v7942 = vpop.permute.xlu0 %7941
        %7943 = vrot.lane.b32.xlu0 %v7604, 16
        %v7944 = vpop.permute.xlu0 %7943
        %7945 = vrot.lane.b32.xlu0 %v7605, 16
        %v7946 = vpop.permute.xlu0 %7945
        %7947 = vrot.lane.b32.xlu0 %v7606, 16
        %v7948 = vpop.permute.xlu0 %7947
        %7949 = vrot.lane.b32.xlu0 %v7607, 16
        %v7950 = vpop.permute.xlu0 %7949
        %7951 = vrot.lane.b32.xlu0 %v7608, 16
        %v7952 = vpop.permute.xlu0 %7951
        %7953 = vrot.lane.b32.xlu0 %v7609, 16
        %v7954 = vpop.permute.xlu0 %7953
        %7955 = vrot.lane.b32.xlu0 %v7610, 16
        %v7956 = vpop.permute.xlu0 %7955
        %7957 = vrot.lane.b32.xlu0 %v7611, 16
        %v7958 = vpop.permute.xlu0 %7957
        %7959 = vrot.lane.b32.xlu0 %v7612, 16
        %v7960 = vpop.permute.xlu0 %7959
        %7961 = vrot.lane.b32.xlu0 %v7613, 16
        %v7962 = vpop.permute.xlu0 %7961
        %7963 = vrot.lane.b32.xlu0 %v7614, 16
        %v7964 = vpop.permute.xlu0 %7963
        %7965 = vrot.lane.b32.xlu0 %v7615, 16
        %v7966 = vpop.permute.xlu0 %7965
        %7967 = vrot.lane.b32.xlu0 %v7616, 16
        %v7968 = vpop.permute.xlu0 %7967
        %8033 = vrot.lane.b32.xlu0 %v7681, 32
        %v8034 = vpop.permute.xlu0 %8033
        %8035 = vrot.lane.b32.xlu0 %v7682, 32
        %v8036 = vpop.permute.xlu0 %8035
        %8037 = vrot.lane.b32.xlu0 %v7683, 32
        %v8038 = vpop.permute.xlu0 %8037
        %8039 = vrot.lane.b32.xlu0 %v7684, 32
        %v8040 = vpop.permute.xlu0 %8039
        %8041 = vrot.lane.b32.xlu0 %v7685, 32
        %v8042 = vpop.permute.xlu0 %8041
        %8043 = vrot.lane.b32.xlu0 %v7686, 32
        %v8044 = vpop.permute.xlu0 %8043
        %8045 = vrot.lane.b32.xlu0 %v7687, 32
        %v8046 = vpop.permute.xlu0 %8045
        %8047 = vrot.lane.b32.xlu0 %v7688, 32
        %v8048 = vpop.permute.xlu0 %8047
        %8049 = vrot.lane.b32.xlu0 %v7689, 32
        %v8050 = vpop.permute.xlu0 %8049
        %8051 = vrot.lane.b32.xlu0 %v7690, 32
        %v8052 = vpop.permute.xlu0 %8051
        %8053 = vrot.lane.b32.xlu0 %v7691, 32
        %v8054 = vpop.permute.xlu0 %8053
        %8055 = vrot.lane.b32.xlu0 %v7692, 32
        %v8056 = vpop.permute.xlu0 %8055
        %8057 = vrot.lane.b32.xlu0 %v7693, 32
        %v8058 = vpop.permute.xlu0 %8057
        %8059 = vrot.lane.b32.xlu0 %v7694, 32
        %v8060 = vpop.permute.xlu0 %8059
        %8061 = vrot.lane.b32.xlu0 %v7695, 32
        %v8062 = vpop.permute.xlu0 %8061
        %8063 = vrot.lane.b32.xlu0 %v7696, 32
        %v8064 = vpop.permute.xlu0 %8063
        %8065 = vrot.lane.b32.xlu0 %v7697, 32
        %v8066 = vpop.permute.xlu0 %8065
        %8067 = vrot.lane.b32.xlu0 %v7698, 32
        %v8068 = vpop.permute.xlu0 %8067
        %8069 = vrot.lane.b32.xlu0 %v7699, 32
        %v8070 = vpop.permute.xlu0 %8069
        %8071 = vrot.lane.b32.xlu0 %v7700, 32
        %v8072 = vpop.permute.xlu0 %8071
        %8073 = vrot.lane.b32.xlu0 %v7701, 32
        %v8074 = vpop.permute.xlu0 %8073
        %8075 = vrot.lane.b32.xlu0 %v7702, 32
        %v8076 = vpop.permute.xlu0 %8075
        %8077 = vrot.lane.b32.xlu0 %v7703, 32
        %v8078 = vpop.permute.xlu0 %8077
        %8079 = vrot.lane.b32.xlu0 %v7704, 32
        %v8080 = vpop.permute.xlu0 %8079
        %8081 = vrot.lane.b32.xlu0 %v7705, 32
        %v8082 = vpop.permute.xlu0 %8081
        %8083 = vrot.lane.b32.xlu0 %v7706, 32
        %v8084 = vpop.permute.xlu0 %8083
        %8085 = vrot.lane.b32.xlu0 %v7707, 32
        %v8086 = vpop.permute.xlu0 %8085
        %8087 = vrot.lane.b32.xlu0 %v7708, 32
        %v8088 = vpop.permute.xlu0 %8087
        %8089 = vrot.lane.b32.xlu0 %v7709, 32
        %v8090 = vpop.permute.xlu0 %8089
        %8091 = vrot.lane.b32.xlu0 %v7710, 32
        %v8092 = vpop.permute.xlu0 %8091
        %8093 = vrot.lane.b32.xlu0 %v7711, 32
        %v8094 = vpop.permute.xlu0 %8093
        %8095 = vrot.lane.b32.xlu0 %v7712, 32
        %v8096 = vpop.permute.xlu0 %8095
        %8161 = vrot.lane.b32.xlu0 %v7713, 48
        %v8162 = vpop.permute.xlu0 %8161
        %8163 = vrot.lane.b32.xlu0 %v7714, 48
        %v8164 = vpop.permute.xlu0 %8163
        %8165 = vrot.lane.b32.xlu0 %v7715, 48
        %v8166 = vpop.permute.xlu0 %8165
        %8167 = vrot.lane.b32.xlu0 %v7716, 48
        %v8168 = vpop.permute.xlu0 %8167
        %8169 = vrot.lane.b32.xlu0 %v7717, 48
        %v8170 = vpop.permute.xlu0 %8169
        %8171 = vrot.lane.b32.xlu0 %v7718, 48
        %v8172 = vpop.permute.xlu0 %8171
        %8173 = vrot.lane.b32.xlu0 %v7719, 48
        %v8174 = vpop.permute.xlu0 %8173
        %8175 = vrot.lane.b32.xlu0 %v7720, 48
        %v8176 = vpop.permute.xlu0 %8175
        %8177 = vrot.lane.b32.xlu0 %v7721, 48
        %v8178 = vpop.permute.xlu0 %8177
        %8179 = vrot.lane.b32.xlu0 %v7722, 48
        %v8180 = vpop.permute.xlu0 %8179
        %8181 = vrot.lane.b32.xlu0 %v7723, 48
        %v8182 = vpop.permute.xlu0 %8181
        %8183 = vrot.lane.b32.xlu0 %v7724, 48
        %v8184 = vpop.permute.xlu0 %8183
        %8185 = vrot.lane.b32.xlu0 %v7725, 48
        %v8186 = vpop.permute.xlu0 %8185
        %8187 = vrot.lane.b32.xlu0 %v7726, 48
        %v8188 = vpop.permute.xlu0 %8187
        %8189 = vrot.lane.b32.xlu0 %v7727, 48
        %v8190 = vpop.permute.xlu0 %8189
        %8191 = vrot.lane.b32.xlu0 %v7728, 48
        %v8192 = vpop.permute.xlu0 %8191
        %8193 = vrot.lane.b32.xlu0 %v7729, 48
        %v8194 = vpop.permute.xlu0 %8193
        %8195 = vrot.lane.b32.xlu0 %v7730, 48
        %v8196 = vpop.permute.xlu0 %8195
        %8197 = vrot.lane.b32.xlu0 %v7731, 48
        %v8198 = vpop.permute.xlu0 %8197
        %8199 = vrot.lane.b32.xlu0 %v7732, 48
        %v8200 = vpop.permute.xlu0 %8199
        %8201 = vrot.lane.b32.xlu0 %v7733, 48
        %v8202 = vpop.permute.xlu0 %8201
        %8203 = vrot.lane.b32.xlu0 %v7734, 48
        %v8204 = vpop.permute.xlu0 %8203
        %8205 = vrot.lane.b32.xlu0 %v7735, 48
        %v8206 = vpop.permute.xlu0 %8205
        %8207 = vrot.lane.b32.xlu0 %v7736, 48
        %v8208 = vpop.permute.xlu0 %8207
        %8209 = vrot.lane.b32.xlu0 %v7737, 48
        %v8210 = vpop.permute.xlu0 %8209
        %8211 = vrot.lane.b32.xlu0 %v7738, 48
        %v8212 = vpop.permute.xlu0 %8211
        %8213 = vrot.lane.b32.xlu0 %v7739, 48
        %v8214 = vpop.permute.xlu0 %8213
        %8215 = vrot.lane.b32.xlu0 %v7740, 48
        %v8216 = vpop.permute.xlu0 %8215
        %8217 = vrot.lane.b32.xlu0 %v7741, 48
        %v8218 = vpop.permute.xlu0 %8217
        %8219 = vrot.lane.b32.xlu0 %v7742, 48
        %v8220 = vpop.permute.xlu0 %8219
        %8221 = vrot.lane.b32.xlu0 %v7743, 48
        %v8222 = vpop.permute.xlu0 %8221
        %8223 = vrot.lane.b32.xlu0 %v7744, 48
        %v8224 = vpop.permute.xlu0 %8223
        %8289 = vrot.lane.b32.xlu0 %v7363, 64
        %v8290 = vpop.permute.xlu0 %8289
        %8291 = vrot.lane.b32.xlu0 %v7366, 64
        %v8292 = vpop.permute.xlu0 %8291
        %8293 = vrot.lane.b32.xlu0 %v7371, 64
        %v8294 = vpop.permute.xlu0 %8293
        %8295 = vrot.lane.b32.xlu0 %v7374, 64
        %v8296 = vpop.permute.xlu0 %8295
        %8297 = vrot.lane.b32.xlu0 %v7379, 64
        %v8298 = vpop.permute.xlu0 %8297
        %8299 = vrot.lane.b32.xlu0 %v7382, 64
        %v8300 = vpop.permute.xlu0 %8299
        %8301 = vrot.lane.b32.xlu0 %v7387, 64
        %v8302 = vpop.permute.xlu0 %8301
        %8303 = vrot.lane.b32.xlu0 %v7390, 64
        %v8304 = vpop.permute.xlu0 %8303
        %8305 = vrot.lane.b32.xlu0 %v7395, 64
        %v8306 = vpop.permute.xlu0 %8305
        %8307 = vrot.lane.b32.xlu0 %v7398, 64
        %v8308 = vpop.permute.xlu0 %8307
        %8309 = vrot.lane.b32.xlu0 %v7403, 64
        %v8310 = vpop.permute.xlu0 %8309
        %8311 = vrot.lane.b32.xlu0 %v7406, 64
        %v8312 = vpop.permute.xlu0 %8311
        %8313 = vrot.lane.b32.xlu0 %v7411, 64
        %v8314 = vpop.permute.xlu0 %8313
        %8315 = vrot.lane.b32.xlu0 %v7414, 64
        %v8316 = vpop.permute.xlu0 %8315
        %8317 = vrot.lane.b32.xlu0 %v7419, 64
        %v8318 = vpop.permute.xlu0 %8317
        %8319 = vrot.lane.b32.xlu0 %v7422, 64
        %v8320 = vpop.permute.xlu0 %8319
        %8321 = vrot.lane.b32.xlu0 %v7427, 64
        %v8322 = vpop.permute.xlu0 %8321
        %8323 = vrot.lane.b32.xlu0 %v7430, 64
        %v8324 = vpop.permute.xlu0 %8323
        %8325 = vrot.lane.b32.xlu0 %v7435, 64
        %v8326 = vpop.permute.xlu0 %8325
        %8327 = vrot.lane.b32.xlu0 %v7438, 64
        %v8328 = vpop.permute.xlu0 %8327
        %8329 = vrot.lane.b32.xlu0 %v7443, 64
        %v8330 = vpop.permute.xlu0 %8329
        %8331 = vrot.lane.b32.xlu0 %v7446, 64
        %v8332 = vpop.permute.xlu0 %8331
        %8333 = vrot.lane.b32.xlu0 %v7451, 64
        %v8334 = vpop.permute.xlu0 %8333
        %8335 = vrot.lane.b32.xlu0 %v7454, 64
        %v8336 = vpop.permute.xlu0 %8335
        %8337 = vrot.lane.b32.xlu0 %v7459, 64
        %v8338 = vpop.permute.xlu0 %8337
        %8339 = vrot.lane.b32.xlu0 %v7462, 64
        %v8340 = vpop.permute.xlu0 %8339
        %8341 = vrot.lane.b32.xlu0 %v7467, 64
        %v8342 = vpop.permute.xlu0 %8341
        %8343 = vrot.lane.b32.xlu0 %v7470, 64
        %v8344 = vpop.permute.xlu0 %8343
        %8345 = vrot.lane.b32.xlu0 %v7475, 64
        %v8346 = vpop.permute.xlu0 %8345
        %8347 = vrot.lane.b32.xlu0 %v7478, 64
        %v8348 = vpop.permute.xlu0 %8347
        %8349 = vrot.lane.b32.xlu0 %v7483, 64
        %v8350 = vpop.permute.xlu0 %8349
        %8351 = vrot.lane.b32.xlu0 %v7486, 64
        %v8352 = vpop.permute.xlu0 %8351
        %8417 = vrot.lane.b32.xlu0 %v7745, 80
        %v8418 = vpop.permute.xlu0 %8417
        %8419 = vrot.lane.b32.xlu0 %v7746, 80
        %v8420 = vpop.permute.xlu0 %8419
        %8421 = vrot.lane.b32.xlu0 %v7747, 80
        %v8422 = vpop.permute.xlu0 %8421
        %8423 = vrot.lane.b32.xlu0 %v7748, 80
        %v8424 = vpop.permute.xlu0 %8423
        %8425 = vrot.lane.b32.xlu0 %v7749, 80
        %v8426 = vpop.permute.xlu0 %8425
        %8427 = vrot.lane.b32.xlu0 %v7750, 80
        %v8428 = vpop.permute.xlu0 %8427
        %8429 = vrot.lane.b32.xlu0 %v7751, 80
        %v8430 = vpop.permute.xlu0 %8429
        %8431 = vrot.lane.b32.xlu0 %v7752, 80
        %v8432 = vpop.permute.xlu0 %8431
        %8433 = vrot.lane.b32.xlu0 %v7753, 80
        %v8434 = vpop.permute.xlu0 %8433
        %8435 = vrot.lane.b32.xlu0 %v7754, 80
        %v8436 = vpop.permute.xlu0 %8435
        %8437 = vrot.lane.b32.xlu0 %v7755, 80
        %v8438 = vpop.permute.xlu0 %8437
        %8439 = vrot.lane.b32.xlu0 %v7756, 80
        %v8440 = vpop.permute.xlu0 %8439
        %8441 = vrot.lane.b32.xlu0 %v7757, 80
        %v8442 = vpop.permute.xlu0 %8441
        %8443 = vrot.lane.b32.xlu0 %v7758, 80
        %v8444 = vpop.permute.xlu0 %8443
        %8445 = vrot.lane.b32.xlu0 %v7759, 80
        %v8446 = vpop.permute.xlu0 %8445
        %8447 = vrot.lane.b32.xlu0 %v7760, 80
        %v8448 = vpop.permute.xlu0 %8447
        %8449 = vrot.lane.b32.xlu0 %v7761, 80
        %v8450 = vpop.permute.xlu0 %8449
        %8451 = vrot.lane.b32.xlu0 %v7762, 80
        %v8452 = vpop.permute.xlu0 %8451
        %8453 = vrot.lane.b32.xlu0 %v7763, 80
        %v8454 = vpop.permute.xlu0 %8453
        %8455 = vrot.lane.b32.xlu0 %v7764, 80
        %v8456 = vpop.permute.xlu0 %8455
        %8457 = vrot.lane.b32.xlu0 %v7765, 80
        %v8458 = vpop.permute.xlu0 %8457
        %8459 = vrot.lane.b32.xlu0 %v7766, 80
        %v8460 = vpop.permute.xlu0 %8459
        %8461 = vrot.lane.b32.xlu0 %v7767, 80
        %v8462 = vpop.permute.xlu0 %8461
        %8463 = vrot.lane.b32.xlu0 %v7768, 80
        %v8464 = vpop.permute.xlu0 %8463
        %8465 = vrot.lane.b32.xlu0 %v7769, 80
        %v8466 = vpop.permute.xlu0 %8465
        %8467 = vrot.lane.b32.xlu0 %v7770, 80
        %v8468 = vpop.permute.xlu0 %8467
        %8469 = vrot.lane.b32.xlu0 %v7771, 80
        %v8470 = vpop.permute.xlu0 %8469
        %8471 = vrot.lane.b32.xlu0 %v7772, 80
        %v8472 = vpop.permute.xlu0 %8471
        %8473 = vrot.lane.b32.xlu0 %v7773, 80
        %v8474 = vpop.permute.xlu0 %8473
        %8475 = vrot.lane.b32.xlu0 %v7774, 80
        %v8476 = vpop.permute.xlu0 %8475
        %8477 = vrot.lane.b32.xlu0 %v7775, 80
        %v8478 = vpop.permute.xlu0 %8477
        %8479 = vrot.lane.b32.xlu0 %v7776, 80
        %v8480 = vpop.permute.xlu0 %8479
        %8545 = vrot.lane.b32.xlu0 %v7777, 96
        %v8546 = vpop.permute.xlu0 %8545
        %8547 = vrot.lane.b32.xlu0 %v7778, 96
        %v8548 = vpop.permute.xlu0 %8547
        %8549 = vrot.lane.b32.xlu0 %v7779, 96
        %v8550 = vpop.permute.xlu0 %8549
        %8551 = vrot.lane.b32.xlu0 %v7780, 96
        %v8552 = vpop.permute.xlu0 %8551
        %8553 = vrot.lane.b32.xlu0 %v7781, 96
        %v8554 = vpop.permute.xlu0 %8553
        %8555 = vrot.lane.b32.xlu0 %v7782, 96
        %v8556 = vpop.permute.xlu0 %8555
        %8557 = vrot.lane.b32.xlu0 %v7783, 96
        %v8558 = vpop.permute.xlu0 %8557
        %8559 = vrot.lane.b32.xlu0 %v7784, 96
        %v8560 = vpop.permute.xlu0 %8559
        %8561 = vrot.lane.b32.xlu0 %v7785, 96
        %v8562 = vpop.permute.xlu0 %8561
        %8563 = vrot.lane.b32.xlu0 %v7786, 96
        %v8564 = vpop.permute.xlu0 %8563
        %8565 = vrot.lane.b32.xlu0 %v7787, 96
        %v8566 = vpop.permute.xlu0 %8565
        %8567 = vrot.lane.b32.xlu0 %v7788, 96
        %v8568 = vpop.permute.xlu0 %8567
        %8569 = vrot.lane.b32.xlu0 %v7789, 96
        %v8570 = vpop.permute.xlu0 %8569
        %8571 = vrot.lane.b32.xlu0 %v7790, 96
        %v8572 = vpop.permute.xlu0 %8571
        %8573 = vrot.lane.b32.xlu0 %v7791, 96
        %v8574 = vpop.permute.xlu0 %8573
        %8575 = vrot.lane.b32.xlu0 %v7792, 96
        %v8576 = vpop.permute.xlu0 %8575
        %8577 = vrot.lane.b32.xlu0 %v7793, 96
        %v8578 = vpop.permute.xlu0 %8577
        %8579 = vrot.lane.b32.xlu0 %v7794, 96
        %v8580 = vpop.permute.xlu0 %8579
        %8581 = vrot.lane.b32.xlu0 %v7795, 96
        %v8582 = vpop.permute.xlu0 %8581
        %8583 = vrot.lane.b32.xlu0 %v7796, 96
        %v8584 = vpop.permute.xlu0 %8583
        %8585 = vrot.lane.b32.xlu0 %v7797, 96
        %v8586 = vpop.permute.xlu0 %8585
        %8587 = vrot.lane.b32.xlu0 %v7798, 96
        %v8588 = vpop.permute.xlu0 %8587
        %8589 = vrot.lane.b32.xlu0 %v7799, 96
        %v8590 = vpop.permute.xlu0 %8589
        %8591 = vrot.lane.b32.xlu0 %v7800, 96
        %v8592 = vpop.permute.xlu0 %8591
        %8593 = vrot.lane.b32.xlu0 %v7801, 96
        %v8594 = vpop.permute.xlu0 %8593
        %8595 = vrot.lane.b32.xlu0 %v7802, 96
        %v8596 = vpop.permute.xlu0 %8595
        %8597 = vrot.lane.b32.xlu0 %v7803, 96
        %v8598 = vpop.permute.xlu0 %8597
        %8599 = vrot.lane.b32.xlu0 %v7804, 96
        %v8600 = vpop.permute.xlu0 %8599
        %8601 = vrot.lane.b32.xlu0 %v7805, 96
        %v8602 = vpop.permute.xlu0 %8601
        %8603 = vrot.lane.b32.xlu0 %v7806, 96
        %v8604 = vpop.permute.xlu0 %8603
        %8605 = vrot.lane.b32.xlu0 %v7807, 96
        %v8606 = vpop.permute.xlu0 %8605
        %8607 = vrot.lane.b32.xlu0 %v7808, 96
        %v8608 = vpop.permute.xlu0 %8607
        %8673 = vrot.lane.b32.xlu0 %v7809, 112
        %v8674 = vpop.permute.xlu0 %8673
        %8675 = vrot.lane.b32.xlu0 %v7810, 112
        %v8676 = vpop.permute.xlu0 %8675
        %8677 = vrot.lane.b32.xlu0 %v7811, 112
        %v8678 = vpop.permute.xlu0 %8677
        %8679 = vrot.lane.b32.xlu0 %v7812, 112
        %v8680 = vpop.permute.xlu0 %8679
        %8681 = vrot.lane.b32.xlu0 %v7813, 112
        %v8682 = vpop.permute.xlu0 %8681
        %8683 = vrot.lane.b32.xlu0 %v7814, 112
        %v8684 = vpop.permute.xlu0 %8683
        %8685 = vrot.lane.b32.xlu0 %v7815, 112
        %v8686 = vpop.permute.xlu0 %8685
        %8687 = vrot.lane.b32.xlu0 %v7816, 112
        %v8688 = vpop.permute.xlu0 %8687
        %8689 = vrot.lane.b32.xlu0 %v7817, 112
        %v8690 = vpop.permute.xlu0 %8689
        %8691 = vrot.lane.b32.xlu0 %v7818, 112
        %v8692 = vpop.permute.xlu0 %8691
        %8693 = vrot.lane.b32.xlu0 %v7819, 112
        %v8694 = vpop.permute.xlu0 %8693
        %8695 = vrot.lane.b32.xlu0 %v7820, 112
        %v8696 = vpop.permute.xlu0 %8695
        %8697 = vrot.lane.b32.xlu0 %v7821, 112
        %v8698 = vpop.permute.xlu0 %8697
        %8699 = vrot.lane.b32.xlu0 %v7822, 112
        %v8700 = vpop.permute.xlu0 %8699
        %8701 = vrot.lane.b32.xlu0 %v7823, 112
        %v8702 = vpop.permute.xlu0 %8701
        %8703 = vrot.lane.b32.xlu0 %v7824, 112
        %v8704 = vpop.permute.xlu0 %8703
        %8705 = vrot.lane.b32.xlu0 %v7825, 112
        %v8706 = vpop.permute.xlu0 %8705
        %8707 = vrot.lane.b32.xlu0 %v7826, 112
        %v8708 = vpop.permute.xlu0 %8707
        %8709 = vrot.lane.b32.xlu0 %v7827, 112
        %v8710 = vpop.permute.xlu0 %8709
        %8711 = vrot.lane.b32.xlu0 %v7828, 112
        %v8712 = vpop.permute.xlu0 %8711
        %8713 = vrot.lane.b32.xlu0 %v7829, 112
        %v8714 = vpop.permute.xlu0 %8713
        %8715 = vrot.lane.b32.xlu0 %v7830, 112
        %v8716 = vpop.permute.xlu0 %8715
        %8717 = vrot.lane.b32.xlu0 %v7831, 112
        %v8718 = vpop.permute.xlu0 %8717
        %8719 = vrot.lane.b32.xlu0 %v7832, 112
        %v8720 = vpop.permute.xlu0 %8719
        %8721 = vrot.lane.b32.xlu0 %v7833, 112
        %v8722 = vpop.permute.xlu0 %8721
        %8723 = vrot.lane.b32.xlu0 %v7834, 112
        %v8724 = vpop.permute.xlu0 %8723
        %8725 = vrot.lane.b32.xlu0 %v7835, 112
        %v8726 = vpop.permute.xlu0 %8725
        %8727 = vrot.lane.b32.xlu0 %v7836, 112
        %v8728 = vpop.permute.xlu0 %8727
        %8729 = vrot.lane.b32.xlu0 %v7837, 112
        %v8730 = vpop.permute.xlu0 %8729
        %8731 = vrot.lane.b32.xlu0 %v7838, 112
        %v8732 = vpop.permute.xlu0 %8731
        %8733 = vrot.lane.b32.xlu0 %v7839, 112
        %v8734 = vpop.permute.xlu0 %8733
        %8735 = vrot.lane.b32.xlu0 %v7840, 112
        %v8736 = vpop.permute.xlu0 %8735
        %v8769 = vsel %vm1159, %v7553, %v7906
        %v8770 = vsel %vm1159, %v7554, %v7908
        %v8771 = vsel %vm1159, %v7555, %v7910
        %v8772 = vsel %vm1159, %v7556, %v7912
        %v8773 = vsel %vm1159, %v7557, %v7914
        %v8774 = vsel %vm1159, %v7558, %v7916
        %v8775 = vsel %vm1159, %v7559, %v7918
        %v8776 = vsel %vm1159, %v7560, %v7920
        %v8777 = vsel %vm1159, %v7561, %v7922
        %v8778 = vsel %vm1159, %v7562, %v7924
        %v8779 = vsel %vm1159, %v7563, %v7926
        %v8780 = vsel %vm1159, %v7564, %v7928
        %v8781 = vsel %vm1159, %v7565, %v7930
        %v8782 = vsel %vm1159, %v7566, %v7932
        %v8783 = vsel %vm1159, %v7567, %v7934
        %v8784 = vsel %vm1159, %v7568, %v7936
        %v8785 = vsel %vm1159, %v7569, %v7938
        %v8786 = vsel %vm1159, %v7570, %v7940
        %v8787 = vsel %vm1159, %v7571, %v7942
        %v8788 = vsel %vm1159, %v7572, %v7944
        %v8789 = vsel %vm1159, %v7573, %v7946
        %v8790 = vsel %vm1159, %v7574, %v7948
        %v8791 = vsel %vm1159, %v7575, %v7950
        %v8792 = vsel %vm1159, %v7576, %v7952
        %v8793 = vsel %vm1159, %v7577, %v7954
        %v8794 = vsel %vm1159, %v7578, %v7956
        %v8795 = vsel %vm1159, %v7579, %v7958
        %v8796 = vsel %vm1159, %v7580, %v7960
        %v8797 = vsel %vm1159, %v7581, %v7962
        %v8798 = vsel %vm1159, %v7582, %v7964
        %v8799 = vsel %vm1159, %v7583, %v7966
        %v8800 = vsel %vm1159, %v7584, %v7968
        %v8801 = vsel %vm2123, %v8769, %v8034
        %v8802 = vsel %vm2123, %v8770, %v8036
        %v8803 = vsel %vm2123, %v8771, %v8038
        %v8804 = vsel %vm2123, %v8772, %v8040
        %v8805 = vsel %vm2123, %v8773, %v8042
        %v8806 = vsel %vm2123, %v8774, %v8044
        %v8807 = vsel %vm2123, %v8775, %v8046
        %v8808 = vsel %vm2123, %v8776, %v8048
        %v8809 = vsel %vm2123, %v8777, %v8050
        %v8810 = vsel %vm2123, %v8778, %v8052
        %v8811 = vsel %vm2123, %v8779, %v8054
        %v8812 = vsel %vm2123, %v8780, %v8056
        %v8813 = vsel %vm2123, %v8781, %v8058
        %v8814 = vsel %vm2123, %v8782, %v8060
        %v8815 = vsel %vm2123, %v8783, %v8062
        %v8816 = vsel %vm2123, %v8784, %v8064
        %v8817 = vsel %vm2123, %v8785, %v8066
        %v8818 = vsel %vm2123, %v8786, %v8068
        %v8819 = vsel %vm2123, %v8787, %v8070
        %v8820 = vsel %vm2123, %v8788, %v8072
        %v8821 = vsel %vm2123, %v8789, %v8074
        %v8822 = vsel %vm2123, %v8790, %v8076
        %v8823 = vsel %vm2123, %v8791, %v8078
        %v8824 = vsel %vm2123, %v8792, %v8080
        %v8825 = vsel %vm2123, %v8793, %v8082
        %v8826 = vsel %vm2123, %v8794, %v8084
        %v8827 = vsel %vm2123, %v8795, %v8086
        %v8828 = vsel %vm2123, %v8796, %v8088
        %v8829 = vsel %vm2123, %v8797, %v8090
        %v8830 = vsel %vm2123, %v8798, %v8092
        %v8831 = vsel %vm2123, %v8799, %v8094
        %v8832 = vsel %vm2123, %v8800, %v8096
        %v8833 = vsel %vm4646, %v8801, %v8162
        %v8834 = vsel %vm4646, %v8802, %v8164
        %v8835 = vsel %vm4646, %v8803, %v8166
        %v8836 = vsel %vm4646, %v8804, %v8168
        %v8837 = vsel %vm4646, %v8805, %v8170
        %v8838 = vsel %vm4646, %v8806, %v8172
        %v8839 = vsel %vm4646, %v8807, %v8174
        %v8840 = vsel %vm4646, %v8808, %v8176
        %v8841 = vsel %vm4646, %v8809, %v8178
        %v8842 = vsel %vm4646, %v8810, %v8180
        %v8843 = vsel %vm4646, %v8811, %v8182
        %v8844 = vsel %vm4646, %v8812, %v8184
        %v8845 = vsel %vm4646, %v8813, %v8186
        %v8846 = vsel %vm4646, %v8814, %v8188
        %v8847 = vsel %vm4646, %v8815, %v8190
        %v8848 = vsel %vm4646, %v8816, %v8192
        %v8849 = vsel %vm4646, %v8817, %v8194
        %v8850 = vsel %vm4646, %v8818, %v8196
        %v8851 = vsel %vm4646, %v8819, %v8198
        %v8852 = vsel %vm4646, %v8820, %v8200
        %v8853 = vsel %vm4646, %v8821, %v8202
        %v8854 = vsel %vm4646, %v8822, %v8204
        %v8855 = vsel %vm4646, %v8823, %v8206
        %v8856 = vsel %vm4646, %v8824, %v8208
        %v8857 = vsel %vm4646, %v8825, %v8210
        %v8858 = vsel %vm4646, %v8826, %v8212
        %v8859 = vsel %vm4646, %v8827, %v8214
        %v8860 = vsel %vm4646, %v8828, %v8216
        %v8861 = vsel %vm4646, %v8829, %v8218
        %v8862 = vsel %vm4646, %v8830, %v8220
        %v8863 = vsel %vm4646, %v8831, %v8222
        %v8864 = vsel %vm4646, %v8832, %v8224
        %v8865 = vsel %vm4679, %v8833, %v8290
        %v8866 = vsel %vm4679, %v8834, %v8292
        %v8867 = vsel %vm4679, %v8835, %v8294
        %v8868 = vsel %vm4679, %v8836, %v8296
        %v8869 = vsel %vm4679, %v8837, %v8298
        %v8870 = vsel %vm4679, %v8838, %v8300
        %v8871 = vsel %vm4679, %v8839, %v8302
        %v8872 = vsel %vm4679, %v8840, %v8304
        %v8873 = vsel %vm4679, %v8841, %v8306
        %v8874 = vsel %vm4679, %v8842, %v8308
        %v8875 = vsel %vm4679, %v8843, %v8310
        %v8876 = vsel %vm4679, %v8844, %v8312
        %v8877 = vsel %vm4679, %v8845, %v8314
        %v8878 = vsel %vm4679, %v8846, %v8316
        %v8879 = vsel %vm4679, %v8847, %v8318
        %v8880 = vsel %vm4679, %v8848, %v8320
        %v8881 = vsel %vm4679, %v8849, %v8322
        %v8882 = vsel %vm4679, %v8850, %v8324
        %v8883 = vsel %vm4679, %v8851, %v8326
        %v8884 = vsel %vm4679, %v8852, %v8328
        %v8885 = vsel %vm4679, %v8853, %v8330
        %v8886 = vsel %vm4679, %v8854, %v8332
        %v8887 = vsel %vm4679, %v8855, %v8334
        %v8888 = vsel %vm4679, %v8856, %v8336
        %v8889 = vsel %vm4679, %v8857, %v8338
        %v8890 = vsel %vm4679, %v8858, %v8340
        %v8891 = vsel %vm4679, %v8859, %v8342
        %v8892 = vsel %vm4679, %v8860, %v8344
        %v8893 = vsel %vm4679, %v8861, %v8346
        %v8894 = vsel %vm4679, %v8862, %v8348
        %v8895 = vsel %vm4679, %v8863, %v8350
        %v8896 = vsel %vm4679, %v8864, %v8352
        %v8897 = vsel %vm4712, %v8865, %v8418
        %v8898 = vsel %vm4712, %v8866, %v8420
        %v8899 = vsel %vm4712, %v8867, %v8422
        %v8900 = vsel %vm4712, %v8868, %v8424
        %v8901 = vsel %vm4712, %v8869, %v8426
        %v8902 = vsel %vm4712, %v8870, %v8428
        %v8903 = vsel %vm4712, %v8871, %v8430
        %v8904 = vsel %vm4712, %v8872, %v8432
        %v8905 = vsel %vm4712, %v8873, %v8434
        %v8906 = vsel %vm4712, %v8874, %v8436
        %v8907 = vsel %vm4712, %v8875, %v8438
        %v8908 = vsel %vm4712, %v8876, %v8440
        %v8909 = vsel %vm4712, %v8877, %v8442
        %v8910 = vsel %vm4712, %v8878, %v8444
        %v8911 = vsel %vm4712, %v8879, %v8446
        %v8912 = vsel %vm4712, %v8880, %v8448
        %v8913 = vsel %vm4712, %v8881, %v8450
        %v8914 = vsel %vm4712, %v8882, %v8452
        %v8915 = vsel %vm4712, %v8883, %v8454
        %v8916 = vsel %vm4712, %v8884, %v8456
        %v8917 = vsel %vm4712, %v8885, %v8458
        %v8918 = vsel %vm4712, %v8886, %v8460
        %v8919 = vsel %vm4712, %v8887, %v8462
        %v8920 = vsel %vm4712, %v8888, %v8464
        %v8921 = vsel %vm4712, %v8889, %v8466
        %v8922 = vsel %vm4712, %v8890, %v8468
        %v8923 = vsel %vm4712, %v8891, %v8470
        %v8924 = vsel %vm4712, %v8892, %v8472
        %v8925 = vsel %vm4712, %v8893, %v8474
        %v8926 = vsel %vm4712, %v8894, %v8476
        %v8927 = vsel %vm4712, %v8895, %v8478
        %v8928 = vsel %vm4712, %v8896, %v8480
        %v8929 = vsel %vm4745, %v8897, %v8546
        %v8930 = vsel %vm4745, %v8898, %v8548
        %v8931 = vsel %vm4745, %v8899, %v8550
        %v8932 = vsel %vm4745, %v8900, %v8552
        %v8933 = vsel %vm4745, %v8901, %v8554
        %v8934 = vsel %vm4745, %v8902, %v8556
        %v8935 = vsel %vm4745, %v8903, %v8558
        %v8936 = vsel %vm4745, %v8904, %v8560
        %v8937 = vsel %vm4745, %v8905, %v8562
        %v8938 = vsel %vm4745, %v8906, %v8564
        %v8939 = vsel %vm4745, %v8907, %v8566
        %v8940 = vsel %vm4745, %v8908, %v8568
        %v8941 = vsel %vm4745, %v8909, %v8570
        %v8942 = vsel %vm4745, %v8910, %v8572
        %v8943 = vsel %vm4745, %v8911, %v8574
        %v8944 = vsel %vm4745, %v8912, %v8576
        %v8945 = vsel %vm4745, %v8913, %v8578
        %v8946 = vsel %vm4745, %v8914, %v8580
        %v8947 = vsel %vm4745, %v8915, %v8582
        %v8948 = vsel %vm4745, %v8916, %v8584
        %v8949 = vsel %vm4745, %v8917, %v8586
        %v8950 = vsel %vm4745, %v8918, %v8588
        %v8951 = vsel %vm4745, %v8919, %v8590
        %v8952 = vsel %vm4745, %v8920, %v8592
        %v8953 = vsel %vm4745, %v8921, %v8594
        %v8954 = vsel %vm4745, %v8922, %v8596
        %v8955 = vsel %vm4745, %v8923, %v8598
        %v8956 = vsel %vm4745, %v8924, %v8600
        %v8957 = vsel %vm4745, %v8925, %v8602
        %v8958 = vsel %vm4745, %v8926, %v8604
        %v8959 = vsel %vm4745, %v8927, %v8606
        %v8960 = vsel %vm4745, %v8928, %v8608
        %v8961 = vsel %vm4778, %v8929, %v8674
        %v8962 = vsel %vm4778, %v8930, %v8676
        %v8963 = vsel %vm4778, %v8931, %v8678
        %v8964 = vsel %vm4778, %v8932, %v8680
        %v8965 = vsel %vm4778, %v8933, %v8682
        %v8966 = vsel %vm4778, %v8934, %v8684
        %v8967 = vsel %vm4778, %v8935, %v8686
        %v8968 = vsel %vm4778, %v8936, %v8688
        %v8969 = vsel %vm4778, %v8937, %v8690
        %v8970 = vsel %vm4778, %v8938, %v8692
        %v8971 = vsel %vm4778, %v8939, %v8694
        %v8972 = vsel %vm4778, %v8940, %v8696
        %v8973 = vsel %vm4778, %v8941, %v8698
        %v8974 = vsel %vm4778, %v8942, %v8700
        %v8975 = vsel %vm4778, %v8943, %v8702
        %v8976 = vsel %vm4778, %v8944, %v8704
        %v8977 = vsel %vm4778, %v8945, %v8706
        %v8978 = vsel %vm4778, %v8946, %v8708
        %v8979 = vsel %vm4778, %v8947, %v8710
        %v8980 = vsel %vm4778, %v8948, %v8712
        %v8981 = vsel %vm4778, %v8949, %v8714
        %v8982 = vsel %vm4778, %v8950, %v8716
        %v8983 = vsel %vm4778, %v8951, %v8718
        %v8984 = vsel %vm4778, %v8952, %v8720
        %v8985 = vsel %vm4778, %v8953, %v8722
        %v8986 = vsel %vm4778, %v8954, %v8724
        %v8987 = vsel %vm4778, %v8955, %v8726
        %v8988 = vsel %vm4778, %v8956, %v8728
        %v8989 = vsel %vm4778, %v8957, %v8730
        %v8990 = vsel %vm4778, %v8958, %v8732
        %v8991 = vsel %vm4778, %v8959, %v8734
        %v8992 = vsel %vm4778, %v8960, %v8736
        %v8993 = vpack.c.bf16 %v8962, %v8961
        %v8994 = vpack.c.bf16 %v7842, %v7841
        %v8995 = vpack.c.bf16 %v8964, %v8963
        %v8996 = vpack.c.bf16 %v7844, %v7843
        %v8997 = vpack.c.bf16 %v8966, %v8965
        %v8998 = vpack.c.bf16 %v7846, %v7845
        %v8999 = vpack.c.bf16 %v8968, %v8967
        %v9000 = vpack.c.bf16 %v7848, %v7847
        %v9001 = vpack.c.bf16 %v8970, %v8969
        %v9002 = vpack.c.bf16 %v7850, %v7849
        %v9003 = vpack.c.bf16 %v8972, %v8971
        %v9004 = vpack.c.bf16 %v7852, %v7851
        %v9005 = vpack.c.bf16 %v8974, %v8973
        %v9006 = vpack.c.bf16 %v7854, %v7853
        %v9007 = vpack.c.bf16 %v8976, %v8975
        %v9008 = vpack.c.bf16 %v7856, %v7855
        %v9009 = vpack.c.bf16 %v8978, %v8977
        %v9010 = vpack.c.bf16 %v7858, %v7857
        %v9011 = vpack.c.bf16 %v8980, %v8979
        %v9012 = vpack.c.bf16 %v7860, %v7859
        %v9013 = vpack.c.bf16 %v8982, %v8981
        %v9014 = vpack.c.bf16 %v7862, %v7861
        %v9015 = vpack.c.bf16 %v8984, %v8983
        %v9016 = vpack.c.bf16 %v7864, %v7863
        %v9017 = vpack.c.bf16 %v8986, %v8985
        %v9018 = vpack.c.bf16 %v7866, %v7865
        %v9019 = vpack.c.bf16 %v8988, %v8987
        %v9020 = vpack.c.bf16 %v7868, %v7867
        %v9021 = vpack.c.bf16 %v8990, %v8989
        %v9022 = vpack.c.bf16 %v7870, %v7869
        %v9023 = vpack.c.bf16 %v8992, %v8991
        %v9024 = vpack.c.bf16 %v7872, %v7871
        %v9025 = vld [vmem:[%s19] sm:$0xf]
        %v9026 = vld [vmem:[%s19 + $0x4] sm:$0xf]
        %v9027 = vld [vmem:[%s19 + $0x8] sm:$0xf]
        %v9028 = vld [vmem:[%s19 + $0xc] sm:$0xf]
        %v9029 = vld [vmem:[%s19 + $0x10] sm:$0xf]
        %v9030 = vld [vmem:[%s19 + $0x14] sm:$0xf]
        %v9031 = vld [vmem:[%s19 + $0x18] sm:$0xf]
        %v9032 = vld [vmem:[%s19 + $0x1c] sm:$0xf]
        %v9033 = vld [vmem:[%s19 + $0x20] sm:$0xf]
        %v9034 = vld [vmem:[%s19 + $0x24] sm:$0xf]
        %v9035 = vld [vmem:[%s19 + $0x28] sm:$0xf]
        %v9036 = vld [vmem:[%s19 + $0x2c] sm:$0xf]
        %v9037 = vld [vmem:[%s19 + $0x30] sm:$0xf]
        %v9038 = vld [vmem:[%s19 + $0x34] sm:$0xf]
        %v9039 = vld [vmem:[%s19 + $0x38] sm:$0xf]
        %v9040 = vld [vmem:[%s19 + $0x3c] sm:$0xf]
        %v9041 = vld [vmem:[%s19 + $0x40] sm:$0xf]
        %v9042 = vld [vmem:[%s19 + $0x44] sm:$0xf]
        %v9043 = vld [vmem:[%s20] sm:$0x1]
        %v9045 = vlaneseq
        %v9046 = vshrl.u32 %v9045, 7
        %v9047 = vsub.s32 0, %v9046
        %v9048 = vrot.slane %v9043, %v9047
        %v9068 = vunpack.c.l.b16 %v9025
        %v9069 = vunpack.c.l.b16 %v9026
        %v9070 = vunpack.c.l.b16 %v9027
        %v9071 = vunpack.c.l.b16 %v9028
        %v9072 = vunpack.c.l.b16 %v9029
        %v9073 = vunpack.c.l.b16 %v9030
        %v9074 = vunpack.c.l.b16 %v9031
        %v9075 = vunpack.c.l.b16 %v9032
        %v9076 = vunpack.c.l.b16 %v9033
        %v9077 = vunpack.c.l.b16 %v9034
        %v9078 = vunpack.c.l.b16 %v9035
        %v9079 = vunpack.c.l.b16 %v9036
        %v9080 = vunpack.c.l.b16 %v9037
        %v9081 = vunpack.c.l.b16 %v9038
        %v9082 = vunpack.c.l.b16 %v9039
        %v9083 = vunpack.c.l.b16 %v9040
        %v9084 = vunpack.c.l.b16 %v9041
        %v9085 = vunpack.c.l.b16 %v9042
        %v9086 = vpack.c.b16 %v9069, %v9068
        %v9087 = vpack.c.b16 %v9071, %v9070
        %v9088 = vpack.c.b16 %v9073, %v9072
        %v9089 = vpack.c.b16 %v9075, %v9074
        %v9090 = vpack.c.b16 %v9077, %v9076
        %v9091 = vpack.c.b16 %v9079, %v9078
        %v9092 = vpack.c.b16 %v9081, %v9080
        %v9093 = vpack.c.b16 %v9083, %v9082
        %v9094 = vpack.c.b16 %v9085, %v9084
        %v9105 = vsel %vm1159, %v8994, 0
        %v9108 = vsel %vm1159, %v8996, 0
        %v9111 = vsel %vm1159, %v8998, 0
        %v9114 = vsel %vm1159, %v9000, 0
        %v9117 = vsel %vm1159, %v9002, 0
        %v9120 = vsel %vm1159, %v9004, 0
        %v9123 = vsel %vm1159, %v9006, 0
        %v9126 = vsel %vm1159, %v9008, 0
        %v9129 = vsel %vm1159, %v9010, 0
        %v9132 = vsel %vm1159, %v9012, 0
        %v9135 = vsel %vm1159, %v9014, 0
        %v9138 = vsel %vm1159, %v9016, 0
        %v9141 = vsel %vm1159, %v9018, 0
        %v9144 = vsel %vm1159, %v9020, 0
        %v9147 = vsel %vm1159, %v9022, 0
        %v9150 = vsel %vm1159, %v9024, 0
        %9152 = vmatprep.subr.bf16.mxu0 0
        %9153 = vmatpush1.bf16.msra.mxu0 %v9093
        %9154 = vmatprep.subr.bf16.mxu0 0
        %9155 = vmatpush1.bf16.msra.mxu0 %v9092
        %9156 = vmatprep.subr.bf16.mxu0 0
        %9157 = vmatpush1.bf16.msra.mxu0 %v9091
        %9158 = vmatprep.subr.bf16.mxu0 0
        %9159 = vmatpush1.bf16.msra.mxu0 %v9090
        %9160 = vmatprep.subr.bf16.mxu0 0
        %9161 = vmatpush1.bf16.msra.mxu0 %v9089
        %9162 = vmatprep.subr.bf16.mxu0 0
        %9163 = vmatpush1.bf16.msra.mxu0 %v9088
        %9164 = vmatprep.subr.bf16.mxu0 0
        %9165 = vmatpush1.bf16.msra.mxu0 %v9087
        %9166 = vmatprep.subr.bf16.mxu0 0
        %9167 = vmatpush1.bf16.msra.mxu0 %v9086
        %9168 = vmatprep.subr.bf16.mxu0 0
        %9169 = vmatpush2.bf16.msra.mxu0 0
        %9170 = vmatprep.subr.bf16.mxu0 0
        %9171 = vmatpush2.bf16.msra.mxu0 0
        %9172 = vmatprep.subr.bf16.mxu0 0
        %9173 = vmatpush2.bf16.msra.mxu0 0
        %9174 = vmatprep.subr.bf16.mxu0 0
        %9175 = vmatpush2.bf16.msra.mxu0 0
        %9176 = vmatprep.subr.bf16.mxu0 0
        %9177 = vmatpush2.bf16.msra.mxu0 0
        %9178 = vmatprep.subr.bf16.mxu0 0
        %9179 = vmatpush2.bf16.msra.mxu0 0
        %9180 = vmatprep.subr.bf16.mxu0 0
        %9181 = vmatpush2.bf16.msra.mxu0 0
        %9182 = vmatprep.subr.bf16.mxu0 0
        %9183 = vmatpush2.bf16.msra.mxu0 %v9094
        %9184 = vmatprep.mubr.bf16.mxu0 %v9105
        %9185 = vmatmul.mubr.bf16.gmra.mxu0 %v8993
        %v9186 = vpop.f32.mrf.mxu0
        %v9187 = vadd.f32 %v9048, %v9186
        %v9188 = vpop.f32.mrf.mxu0
        %v9189 = vpop.f32.mrf.mxu0
        %v9190 = vadd.f32 %v9048, %v9189
        %v9191 = vpop.f32.mrf.mxu0
        %9192 = vmatprep.mubr.bf16.mxu0 %v9108
        %9193 = vmatmul.mubr.bf16.gmra.mxu0 %v8995
        %v9194 = vpop.f32.mrf.mxu0
        %v9195 = vadd.f32 %v9048, %v9194
        %v9196 = vpop.f32.mrf.mxu0
        %v9197 = vpop.f32.mrf.mxu0
        %v9198 = vadd.f32 %v9048, %v9197
        %v9199 = vpop.f32.mrf.mxu0
        %9200 = vmatprep.mubr.bf16.mxu0 %v9111
        %9201 = vmatmul.mubr.bf16.gmra.mxu0 %v8997
        %v9202 = vpop.f32.mrf.mxu0
        %v9203 = vadd.f32 %v9048, %v9202
        %v9204 = vpop.f32.mrf.mxu0
        %v9205 = vpop.f32.mrf.mxu0
        %v9206 = vadd.f32 %v9048, %v9205
        %v9207 = vpop.f32.mrf.mxu0
        %9208 = vmatprep.mubr.bf16.mxu0 %v9114
        %9209 = vmatmul.mubr.bf16.gmra.mxu0 %v8999
        %v9210 = vpop.f32.mrf.mxu0
        %v9211 = vadd.f32 %v9048, %v9210
        %v9212 = vpop.f32.mrf.mxu0
        %v9213 = vpop.f32.mrf.mxu0
        %v9214 = vadd.f32 %v9048, %v9213
        %v9215 = vpop.f32.mrf.mxu0
        %9216 = vmatprep.mubr.bf16.mxu0 %v9117
        %9217 = vmatmul.mubr.bf16.gmra.mxu0 %v9001
        %v9218 = vpop.f32.mrf.mxu0
        %v9219 = vadd.f32 %v9048, %v9218
        %v9220 = vpop.f32.mrf.mxu0
        %v9221 = vpop.f32.mrf.mxu0
        %v9222 = vadd.f32 %v9048, %v9221
        %v9223 = vpop.f32.mrf.mxu0
        %9224 = vmatprep.mubr.bf16.mxu0 %v9120
        %9225 = vmatmul.mubr.bf16.gmra.mxu0 %v9003
        %v9226 = vpop.f32.mrf.mxu0
        %v9227 = vadd.f32 %v9048, %v9226
        %v9228 = vpop.f32.mrf.mxu0
        %v9229 = vpop.f32.mrf.mxu0
        %v9230 = vadd.f32 %v9048, %v9229
        %v9231 = vpop.f32.mrf.mxu0
        %9232 = vmatprep.mubr.bf16.mxu0 %v9123
        %9233 = vmatmul.mubr.bf16.gmra.mxu0 %v9005
        %v9234 = vpop.f32.mrf.mxu0
        %v9235 = vadd.f32 %v9048, %v9234
        %v9236 = vpop.f32.mrf.mxu0
        %v9237 = vpop.f32.mrf.mxu0
        %v9238 = vadd.f32 %v9048, %v9237
        %v9239 = vpop.f32.mrf.mxu0
        %9240 = vmatprep.mubr.bf16.mxu0 %v9126
        %9241 = vmatmul.mubr.bf16.gmra.mxu0 %v9007
        %v9242 = vpop.f32.mrf.mxu0
        %v9243 = vadd.f32 %v9048, %v9242
        %v9244 = vpop.f32.mrf.mxu0
        %v9245 = vpop.f32.mrf.mxu0
        %v9246 = vadd.f32 %v9048, %v9245
        %v9247 = vpop.f32.mrf.mxu0
        %9248 = vmatprep.mubr.bf16.mxu0 %v9129
        %9249 = vmatmul.mubr.bf16.gmra.mxu0 %v9009
        %v9250 = vpop.f32.mrf.mxu0
        %v9251 = vadd.f32 %v9048, %v9250
        %v9252 = vpop.f32.mrf.mxu0
        %v9253 = vpop.f32.mrf.mxu0
        %v9254 = vadd.f32 %v9048, %v9253
        %v9255 = vpop.f32.mrf.mxu0
        %9256 = vmatprep.mubr.bf16.mxu0 %v9132
        %9257 = vmatmul.mubr.bf16.gmra.mxu0 %v9011
        %v9258 = vpop.f32.mrf.mxu0
        %v9259 = vadd.f32 %v9048, %v9258
        %v9260 = vpop.f32.mrf.mxu0
        %v9261 = vpop.f32.mrf.mxu0
        %v9262 = vadd.f32 %v9048, %v9261
        %v9263 = vpop.f32.mrf.mxu0
        %9264 = vmatprep.mubr.bf16.mxu0 %v9135
        %9265 = vmatmul.mubr.bf16.gmra.mxu0 %v9013
        %v9266 = vpop.f32.mrf.mxu0
        %v9267 = vadd.f32 %v9048, %v9266
        %v9268 = vpop.f32.mrf.mxu0
        %v9269 = vpop.f32.mrf.mxu0
        %v9270 = vadd.f32 %v9048, %v9269
        %v9271 = vpop.f32.mrf.mxu0
        %9272 = vmatprep.mubr.bf16.mxu0 %v9138
        %9273 = vmatmul.mubr.bf16.gmra.mxu0 %v9015
        %v9274 = vpop.f32.mrf.mxu0
        %v9275 = vadd.f32 %v9048, %v9274
        %v9276 = vpop.f32.mrf.mxu0
        %v9277 = vpop.f32.mrf.mxu0
        %v9278 = vadd.f32 %v9048, %v9277
        %v9279 = vpop.f32.mrf.mxu0
        %9280 = vmatprep.mubr.bf16.mxu0 %v9141
        %9281 = vmatmul.mubr.bf16.gmra.mxu0 %v9017
        %v9282 = vpop.f32.mrf.mxu0
        %v9283 = vadd.f32 %v9048, %v9282
        %v9284 = vpop.f32.mrf.mxu0
        %v9285 = vpop.f32.mrf.mxu0
        %v9286 = vadd.f32 %v9048, %v9285
        %v9287 = vpop.f32.mrf.mxu0
        %9288 = vmatprep.mubr.bf16.mxu0 %v9144
        %9289 = vmatmul.mubr.bf16.gmra.mxu0 %v9019
        %v9290 = vpop.f32.mrf.mxu0
        %v9291 = vadd.f32 %v9048, %v9290
        %v9292 = vpop.f32.mrf.mxu0
        %v9293 = vpop.f32.mrf.mxu0
        %v9294 = vadd.f32 %v9048, %v9293
        %v9295 = vpop.f32.mrf.mxu0
        %9296 = vmatprep.mubr.bf16.mxu0 %v9147
        %9297 = vmatmul.mubr.bf16.gmra.mxu0 %v9021
        %v9298 = vpop.f32.mrf.mxu0
        %v9299 = vadd.f32 %v9048, %v9298
        %v9300 = vpop.f32.mrf.mxu0
        %v9301 = vpop.f32.mrf.mxu0
        %v9302 = vadd.f32 %v9048, %v9301
        %v9303 = vpop.f32.mrf.mxu0
        %9304 = vmatprep.mubr.bf16.mxu0 %v9150
        %9305 = vmatmul.mubr.bf16.gmra.mxu0 %v9023
        %v9306 = vpop.f32.mrf.mxu0
        %v9307 = vadd.f32 %v9048, %v9306
        %v9308 = vpop.f32.mrf.mxu0
        %v9309 = vpop.f32.mrf.mxu0
        %v9310 = vadd.f32 %v9048, %v9309
        %v9311 = vpop.f32.mrf.mxu0
        %9312 = vdwg.mxu0
        %v9313 = vmax.f32 %v9187, 0.0
        %v9314 = vmax.f32 %v9190, 0.0
        %v9315 = vmax.f32 %v9195, 0.0
        %v9316 = vmax.f32 %v9198, 0.0
        %v9317 = vmax.f32 %v9203, 0.0
        %v9318 = vmax.f32 %v9206, 0.0
        %v9319 = vmax.f32 %v9211, 0.0
        %v9320 = vmax.f32 %v9214, 0.0
        %v9321 = vmax.f32 %v9219, 0.0
        %v9322 = vmax.f32 %v9222, 0.0
        %v9323 = vmax.f32 %v9227, 0.0
        %v9324 = vmax.f32 %v9230, 0.0
        %v9325 = vmax.f32 %v9235, 0.0
        %v9326 = vmax.f32 %v9238, 0.0
        %v9327 = vmax.f32 %v9243, 0.0
        %v9328 = vmax.f32 %v9246, 0.0
        %v9329 = vmax.f32 %v9251, 0.0
        %v9330 = vmax.f32 %v9254, 0.0
        %v9331 = vmax.f32 %v9259, 0.0
        %v9332 = vmax.f32 %v9262, 0.0
        %v9333 = vmax.f32 %v9267, 0.0
        %v9334 = vmax.f32 %v9270, 0.0
        %v9335 = vmax.f32 %v9275, 0.0
        %v9336 = vmax.f32 %v9278, 0.0
        %v9337 = vmax.f32 %v9283, 0.0
        %v9338 = vmax.f32 %v9286, 0.0
        %v9339 = vmax.f32 %v9291, 0.0
        %v9340 = vmax.f32 %v9294, 0.0
        %v9341 = vmax.f32 %v9299, 0.0
        %v9342 = vmax.f32 %v9302, 0.0
        %v9343 = vmax.f32 %v9307, 0.0
        %v9344 = vmax.f32 %v9310, 0.0
        %v9345 = vsel %vm1159, %v9313, 0.0
        %v9346 = vsel %vm1159, %v9314, 0.0
        %v9347 = vadd.f32 %v9345, %v9346
        %v9348 = vsel %vm1159, %v9315, 0.0
        %v9349 = vadd.f32 %v9347, %v9348
        %v9350 = vsel %vm1159, %v9316, 0.0
        %v9351 = vadd.f32 %v9349, %v9350
        %v9352 = vsel %vm1159, %v9317, 0.0
        %v9353 = vadd.f32 %v9351, %v9352
        %v9354 = vsel %vm1159, %v9318, 0.0
        %v9355 = vadd.f32 %v9353, %v9354
        %v9356 = vsel %vm1159, %v9319, 0.0
        %v9357 = vadd.f32 %v9355, %v9356
        %v9358 = vsel %vm1159, %v9320, 0.0
        %v9359 = vadd.f32 %v9357, %v9358
        %v9360 = vsel %vm1159, %v9321, 0.0
        %v9361 = vadd.f32 %v9359, %v9360
        %v9362 = vsel %vm1159, %v9322, 0.0
        %v9363 = vadd.f32 %v9361, %v9362
        %v9364 = vsel %vm1159, %v9323, 0.0
        %v9365 = vadd.f32 %v9363, %v9364
        %v9366 = vsel %vm1159, %v9324, 0.0
        %v9367 = vadd.f32 %v9365, %v9366
        %v9368 = vsel %vm1159, %v9325, 0.0
        %v9369 = vadd.f32 %v9367, %v9368
        %v9370 = vsel %vm1159, %v9326, 0.0
        %v9371 = vadd.f32 %v9369, %v9370
        %v9372 = vsel %vm1159, %v9327, 0.0
        %v9373 = vadd.f32 %v9371, %v9372
        %v9374 = vsel %vm1159, %v9328, 0.0
        %v9375 = vadd.f32 %v9373, %v9374
        %v9376 = vsel %vm1159, %v9329, 0.0
        %v9377 = vadd.f32 %v9375, %v9376
        %v9378 = vsel %vm1159, %v9330, 0.0
        %v9379 = vadd.f32 %v9377, %v9378
        %v9380 = vsel %vm1159, %v9331, 0.0
        %v9381 = vadd.f32 %v9379, %v9380
        %v9382 = vsel %vm1159, %v9332, 0.0
        %v9383 = vadd.f32 %v9381, %v9382
        %v9384 = vsel %vm1159, %v9333, 0.0
        %v9385 = vadd.f32 %v9383, %v9384
        %v9386 = vsel %vm1159, %v9334, 0.0
        %v9387 = vadd.f32 %v9385, %v9386
        %v9388 = vsel %vm1159, %v9335, 0.0
        %v9389 = vadd.f32 %v9387, %v9388
        %v9390 = vsel %vm1159, %v9336, 0.0
        %v9391 = vadd.f32 %v9389, %v9390
        %v9392 = vsel %vm1159, %v9337, 0.0
        %v9393 = vadd.f32 %v9391, %v9392
        %v9394 = vsel %vm1159, %v9338, 0.0
        %v9395 = vadd.f32 %v9393, %v9394
        %v9396 = vsel %vm1159, %v9339, 0.0
        %v9397 = vadd.f32 %v9395, %v9396
        %v9398 = vsel %vm1159, %v9340, 0.0
        %v9399 = vadd.f32 %v9397, %v9398
        %v9400 = vsel %vm1159, %v9341, 0.0
        %v9401 = vadd.f32 %v9399, %v9400
        %v9402 = vsel %vm1159, %v9342, 0.0
        %v9403 = vadd.f32 %v9401, %v9402
        %v9404 = vsel %vm1159, %v9343, 0.0
        %v9405 = vadd.f32 %v9403, %v9404
        %v9406 = vsel %vm1159, %v9344, 0.0
        %v9407 = vadd.f32 %v9405, %v9406
        %v9408 = vrot.slane %v9407, 4
        %v9409 = vadd.f32 %v9407, %v9408
        %v9410 = vrot.slane %v9409, 2
        %v9411 = vadd.f32 %v9409, %v9410
        %v9412 = vrot.slane %v9411, 1
        %v9413 = vadd.f32 %v9411, %v9412
        %v9414 = vmul.f32 %v9413, %v2029
        %v9415 = vpack.c.bf16 %v9414, %v9414
        %v9416 = vld [vmem:[%s21] sm:$0xf]
        %v9417 = vld [vmem:[%s21 + $0x4] sm:$0xf]
        %v9418 = vld [vmem:[%s22] sm:$0x1]
        %v9421 = vunpack.c.l.b16 %v9416
        %v9422 = vunpack.c.l.b16 %v9417
        %v9423 = vpack.c.b16 %v9422, %v9421
        %v9426 = vsel %vm1159, %v9415, 0
        %9428 = vmatprep.subr.bf16.mxu0 0
        %9429 = vmatpush1.bf16.msra.mxu0 0
        %9430 = vmatprep.subr.bf16.mxu0 0
        %9431 = vmatpush1.bf16.msra.mxu0 0
        %9432 = vmatprep.subr.bf16.mxu0 0
        %9433 = vmatpush1.bf16.msra.mxu0 0
        %9434 = vmatprep.subr.bf16.mxu0 0
        %9435 = vmatpush1.bf16.msra.mxu0 0
        %9436 = vmatprep.subr.bf16.mxu0 0
        %9437 = vmatpush1.bf16.msra.mxu0 0
        %9438 = vmatprep.subr.bf16.mxu0 0
        %9439 = vmatpush1.bf16.msra.mxu0 0
        %9440 = vmatprep.subr.bf16.mxu0 0
        %9441 = vmatpush1.bf16.msra.mxu0 0
        %9442 = vmatprep.subr.bf16.mxu0 0
        %9443 = vmatpush1.bf16.msra.mxu0 %v9423
        %9444 = vmatprep.subr.bf16.mxu0 0
        %9445 = vmatpush2.bf16.msra.mxu0 0
        %9446 = vmatprep.subr.bf16.mxu0 0
        %9447 = vmatpush2.bf16.msra.mxu0 0
        %9448 = vmatprep.subr.bf16.mxu0 0
        %9449 = vmatpush2.bf16.msra.mxu0 0
        %9450 = vmatprep.subr.bf16.mxu0 0
        %9451 = vmatpush2.bf16.msra.mxu0 0
        %9452 = vmatprep.subr.bf16.mxu0 0
        %9453 = vmatpush2.bf16.msra.mxu0 0
        %9454 = vmatprep.subr.bf16.mxu0 0
        %9455 = vmatpush2.bf16.msra.mxu0 0
        %9456 = vmatprep.subr.bf16.mxu0 0
        %9457 = vmatpush2.bf16.msra.mxu0 0
        %9458 = vmatprep.subr.bf16.mxu0 0
        %9459 = vmatpush2.bf16.msra.mxu0 0
        %9460 = vmatprep.mubr.bf16.mxu0 0
        %9461 = vmatmul.mubr.bf16.gmra.mxu0 %v9426
        %v9462 = vpop.f32.mrf.mxu0
        %v9463 = vadd.f32 %v9418, %v9462
        %v9464 = vpop.f32.mrf.mxu0
        %v9465 = vpop.f32.mrf.mxu0
        %v9466 = vpop.f32.mrf.mxu0
        %9467 = vdwg.mxu0
        %vm9468 = vcmask 73728
        %9469 = vst.msk [vmem:[%s706] sm:$0x1] %vm9468, %v9463
        %s9470 = sand.u32 %s537, 1
        %s9471 = scalar_lea.sflag [#allocation5], %s9470
        %s9472 = sand.u32 %s537, 1
        %s9473 = scalar_lea.vmem [#allocation4], %s9472
        // Predicated region
        $region113: #{improved_moe_forward.1} parent=111 // pred_check
          %p9474 = pneg %p547
        $region114: #{improved_moe_forward.1} parent=111 // pred_check_branch
          %9476 = sbr.rel (%p9474) target = $region116
        $region115: #{improved_moe_forward.1} parent=111 // pred_region
          %s9478 = ssub.s32 16, 16
          %9479 = vsyncadd %s9471, %s9478
          %s9480 = smul.addr %s41, 16
          %s9481 = scalar_lea.hbm %s23, %s9480
          %s9483 = sshll.u32 %s9473, 4
          %s9484 = int_to_ptr.vmem [resolvable:$true] %s9483
          %9486 = dma.vmem_to_hbm [thread:$0]  %s9484, 16, %s9481, %s9471
        $region116: #{improved_moe_forward.1} parent=111 // pred_fallthru
          _
      $region112: #{improved_moe_forward.1} parent=5 // pred_fallthru
        _
      %p9487 = scmp.le.s32.totalorder 2, %s36
      // Predicated region
      $region117: #{improved_moe_forward.1} parent=5 // pred_check
        %p9488 = pneg %p9487
      $region118: #{improved_moe_forward.1} parent=5 // pred_check_branch
        %9490 = sbr.rel (%p9488) target = $region120
      $region119: #{improved_moe_forward.1} parent=5 // pred_region
        %s9491 = ssub.s32 %s36, 2
        // Predicated region
        $region121: #{improved_moe_forward.1} parent=119 // pred_check
          %p9492 = pneg %p553
        $region122: #{improved_moe_forward.1} parent=119 // pred_check_branch
          %9494 = sbr.rel (%p9492) target = $region124
        $region123: #{improved_moe_forward.1} parent=119 // pred_region
          %s9495 = sand.u32 %s538, 1
          %s9496 = scalar_lea.sflag [#allocation5], %s9495
          %s9497 = sand.u32 %s538, 1
          %s9498 = scalar_lea.vmem [#allocation4], %s9497
          %9499 = dma.done %s9496, 16
        $region124: #{improved_moe_forward.1} parent=119 // pred_fallthru
          _
      $region120: #{improved_moe_forward.1} parent=5 // pred_fallthru
        _
    $region6: #{improved_moe_forward.1} parent=1 // loop_footer
      %s40 = sadd.s32 1, %s36
    $region7: #{improved_moe_forward.1} parent=1 // loop_footer_branch
      %35 = sbr.rel target = $region3
    $region8: #{improved_moe_forward.1} parent=1 // loop_exit
      _
    %9500 = vsyncpa [#allocation5], 1
    %s9501 = scalar_lea.sflag [#allocation5], 1
    %9502 = vsyncpa %s9501, 1

</llo_original>
